<compile_context>
chip_gen: v6e
topology: v6e:2x2x1
jax: 0.10.0
libtpu: 0.0.40
codegen_flags: <defaults>
</compile_context>

<pallas_src>
import functools

import jax
import jax.numpy as jnp
from jax.experimental import pallas as pl
from jax.experimental.pallas import tpu as pltpu


# < v7x's 64 MiB physical VMEM (headroom for compiler scratch), > the 16/32
# MiB scoped defaults; v5e/v6e have 128 MiB so this is safe everywhere.
_VMEM_LIMIT_BYTES = 56 * 1024 * 1024


def _round_up(x, m):
    return (x + m - 1) // m * m


def _pick_tile(dim, max_tile, align):
    """Choose (tile, padded_dim) for one matmul dimension.

    If the dimension fits in one block, use its exact size (a block dim equal
    to the full array dim is exempt from the (8, 128) divisibility rule), so
    small dims (batch=2, K=9, n_classes) incur zero padding.  Otherwise pick
    an `align`-multiple tile <= max_tile dividing the align-rounded dim.
    """
    if dim <= max_tile:
        return dim, dim
    aligned = _round_up(dim, align)
    top = (max_tile // align) * align
    for cand in range(top, 0, -align):
        if aligned % cand == 0:
            return cand, aligned
    return top, _round_up(dim, top)


# ---------------------------------------------------------------------------
# Fused matmul + (optional) scale + bias + (optional) ReLU Pallas kernel
# ---------------------------------------------------------------------------
def _fused_matmul_kernel(*refs, relu, has_scale):
    if has_scale:
        x_ref, w_ref, s_ref, b_ref, o_ref, acc_ref = refs
    else:
        x_ref, w_ref, b_ref, o_ref, acc_ref = refs
        s_ref = None

    k = pl.program_id(2)

    @pl.when(k == 0)
    def _():
        acc_ref[...] = jnp.zeros_like(acc_ref)

    w = w_ref[...]
    if w.dtype != jnp.bfloat16:
        # int8 weight block: cast on the VPU; per-column dequant scale is
        # folded into s_ref in the epilogue.  HBM traffic is already halved.
        w = w.astype(jnp.bfloat16)
    acc_ref[...] += jnp.dot(x_ref[...], w, preferred_element_type=jnp.float32)

    @pl.when(k == pl.num_programs(2) - 1)
    def _():
        y = acc_ref[...]
        if has_scale:
            y = y * s_ref[...]
        y = y + b_ref[...]
        if relu:
            y = jnp.maximum(y, 0.0)
        o_ref[...] = y.astype(o_ref.dtype)


def fused_matmul(x, w, bias, scale=None, relu=False, out_dtype=jnp.bfloat16,
                 *, tm=512, tn=2048, tk=4096):
    """out = relu_opt((x @ w) * scale + bias).

    x: bf16 (cast if needed).  w: bf16 or int8 (int8 dequant scale must be
    folded into `scale`).  f32 accumulation in a VMEM scratch block.
    """
    M, K = x.shape
    K2, N = w.shape
    assert K == K2, (K, K2)

    tm, Mp = _pick_tile(M, tm, 16)      # 16: bf16 sublane packing
    tk, Kp = _pick_tile(K, tk, 128)
    tn, Np = _pick_tile(N, tn, 128)

    x = x.astype(jnp.bfloat16)
    if w.dtype == jnp.float32:
        w = w.astype(jnp.bfloat16)
    if (Mp, Kp) != (M, K):
        x = jnp.pad(x, ((0, Mp - M), (0, Kp - K)))
    if (Kp, Np) != (K, N):
        w = jnp.pad(w, ((0, Kp - K), (0, Np - N)))

    b = bias.reshape(1, N).astype(jnp.float32)
    if Np != N:
        b = jnp.pad(b, ((0, 0), (0, Np - N)))

    operands = [x, w]
    in_specs = [pl.BlockSpec((tm, tk), lambda i, j, k: (i, k)),
                pl.BlockSpec((tk, tn), lambda i, j, k: (k, j))]
    has_scale = scale is not None
    if has_scale:
        s = scale.reshape(1, N).astype(jnp.float32)
        if Np != N:
            s = jnp.pad(s, ((0, 0), (0, Np - N)))
        operands.append(s)
        in_specs.append(pl.BlockSpec((1, tn), lambda i, j, k: (0, j)))
    operands.append(b)
    in_specs.append(pl.BlockSpec((1, tn), lambda i, j, k: (0, j)))

    out = pl.pallas_call(
        functools.partial(_fused_matmul_kernel, relu=relu, has_scale=has_scale),
        out_shape=jax.ShapeDtypeStruct((Mp, Np), out_dtype),
        grid_spec=pltpu.PrefetchScalarGridSpec(
            num_scalar_prefetch=0,
            grid=(Mp // tm, Np // tn, Kp // tk),
            in_specs=in_specs,
            out_specs=pl.BlockSpec((tm, tn), lambda i, j, k: (i, j)),
            scratch_shapes=[pltpu.VMEM((tm, tn), jnp.float32)]),
        compiler_params=pltpu.CompilerParams(
            dimension_semantics=("parallel", "parallel", "arbitrary"),
            vmem_limit_bytes=_VMEM_LIMIT_BYTES),
    )(*operands)

    if (Mp, Np) != (M, N):
        out = out[:M, :N]
    return out


# ---------------------------------------------------------------------------
# 2x2 MaxPool: two pair-max Pallas kernels over metadata-only reshaped views
# ---------------------------------------------------------------------------
def _pairmax_kernel(x_ref, o_ref):
    # x_ref block: (t, 2, L); o_ref block: (t, L)
    x = x_ref[...]
    o_ref[...] = jnp.maximum(x[:, 0, :], x[:, 1, :])


def _pick_pool_rows(m, cap=256):
    # Largest multiple of 16 dividing m with m // t >= 2 (pipelining /
    # megacore); fall back to a single full block for tiny m.
    limit = min(cap, m // 2)
    limit -= limit % 16
    for t in range(limit, 0, -16):
        if m % t == 0:
            return t
    return m


def _pairmax(x3):
    m, two, l = x3.shape
    assert two == 2
    t = _pick_pool_rows(m)
    return pl.pallas_call(
        _pairmax_kernel,
        out_shape=jax.ShapeDtypeStruct((m, l), x3.dtype),
        grid=(m // t,),
        in_specs=[pl.BlockSpec((t, 2, l), lambda i: (i, 0, 0))],
        out_specs=pl.BlockSpec((t, l), lambda i: (i, 0)),
        compiler_params=pltpu.CompilerParams(
            dimension_semantics=("parallel",),
            vmem_limit_bytes=_VMEM_LIMIT_BYTES),
    )(x3)


def maxpool2x2(x_nhwc):
    N, H, W, C = x_nhwc.shape
    assert H % 2 == 0 and W % 2 == 0, (H, W)
    Ho, Wo = H // 2, W // 2
    # Pass 1: max over width pairs; (N,H,Wo,2,C) view is metadata-only.
    y = _pairmax(x_nhwc.reshape(N * H * Wo, 2, C))        # (N*H*Wo, C)
    # Pass 2: max over height pairs; (N,Ho,2,Wo,C) view is metadata-only.
    y = _pairmax(y.reshape(N * Ho, 2, Wo * C))            # (N*Ho, Wo*C)
    return y.reshape(N, Ho, Wo, C)


# ---------------------------------------------------------------------------
# Conv (3x3, pad=1) = im2col (glue, bf16) + fused Pallas matmul
# ---------------------------------------------------------------------------
def _im2col_3x3(x_nhwc):
    N, H, W, C = x_nhwc.shape
    xp = jnp.pad(x_nhwc.astype(jnp.bfloat16), ((0, 0), (1, 1), (1, 1), (0, 0)))
    cols = [xp[:, di:di + H, dj:dj + W, :] for di in range(3) for dj in range(3)]
    return jnp.concatenate(cols, axis=-1).reshape(N * H * W, 9 * C)


def conv3x3(x_nhwc, w, scale, bias, relu):
    """w: (3, 3, Cin, Cout) (di, dj, cin order); scale may be None."""
    N, H, W, C = x_nhwc.shape
    Cout = w.shape[-1]
    patches = _im2col_3x3(x_nhwc)              # (N*H*W, 9*Cin), bf16
    wmat = w.reshape(9 * C, Cout)              # (9*Cin, Cout), matching order
    # tm capped at 256 so the conv matmuls get >= 2 grid steps.
    out = fused_matmul(patches, wmat, bias, scale=scale, relu=relu,
                       out_dtype=jnp.bfloat16, tm=256, tn=512)
    return out.reshape(N, H, W, Cout)


def _bn_fold(conv_bias, gamma, beta, mean, var, eps=1e-5):
    s = gamma / jnp.sqrt(var + eps)
    return s, (conv_bias - mean) * s + beta


# ---------------------------------------------------------------------------
# Parameters (deterministic init) and full forward pass
# ---------------------------------------------------------------------------
def init_params(key, n_classes, img_size=64, widths=(64, 128, 512, 512),
                fc_dim=4096):
    """Defaults reproduce the PyTorch module; smaller configs keep the same
    architecture (4 convs, BN placement, 3 pools, 3 FCs)."""
    c1, c2, c3, c4 = widths
    ks = jax.random.split(key, 8)

    def conv_w(k, cin, cout):   # bf16 (matmul operand dtype, tiny weights)
        return (jax.random.normal(k, (3, 3, cin, cout), jnp.float32)
                / jnp.sqrt(9.0 * cin)).astype(jnp.bfloat16)

    def lin_w_q(k, din, dout):  # int8 + per-output-channel dequant scale
        w = jax.random.normal(k, (din, dout), jnp.float32) / jnp.sqrt(float(din))
        ws = jnp.maximum(jnp.max(jnp.abs(w), axis=0), 1e-6) / 127.0
        wq = jnp.clip(jnp.round(w / ws), -127, 127).astype(jnp.int8)
        return wq, ws

    def lin_w(k, din, dout):    # bf16 (small final layer)
        return (jax.random.normal(k, (din, dout), jnp.float32)
                / jnp.sqrt(float(din))).astype(jnp.bfloat16)

    def bn(c):  # (gamma, beta, running_mean, running_var) at fresh init
        return (jnp.ones((c,), jnp.float32), jnp.zeros((c,), jnp.float32),
                jnp.zeros((c,), jnp.float32), jnp.ones((c,), jnp.float32))

    hidden_dim = int((img_size / 8) ** 2 * c4)
    fw1, fs1 = lin_w_q(ks[4], hidden_dim, fc_dim)
    fw2, fs2 = lin_w_q(ks[5], fc_dim, fc_dim)
    return dict(
        w1=conv_w(ks[0], 1, c1),   b1=jnp.zeros((c1,), jnp.float32), bn1=bn(c1),
        w2=conv_w(ks[1], c1, c2),  b2=jnp.zeros((c2,), jnp.float32), bn2=bn(c2),
        w3=conv_w(ks[2], c2, c3),  b3=jnp.zeros((c3,), jnp.float32),
        w4=conv_w(ks[3], c3, c4),  b4=jnp.zeros((c4,), jnp.float32), bn4=bn(c4),
        fw1=fw1, fs1=fs1, fb1=jnp.zeros((fc_dim,), jnp.float32),
        fw2=fw2, fs2=fs2, fb2=jnp.zeros((fc_dim,), jnp.float32),
        fw3=lin_w(ks[6], fc_dim, n_classes),
        fb3=jnp.zeros((n_classes,), jnp.float32),
    )


def convnet_forward(x_nchw, params):
    # Input is NCHW (PyTorch convention); convs run internally in NHWC, bf16.
    x = jnp.transpose(x_nchw.astype(jnp.bfloat16), (0, 2, 3, 1))   # NHWC

    # Block 1: Conv(1->c1) + BN + ReLU + MaxPool
    s, b = _bn_fold(params['b1'], *params['bn1'])
    x = conv3x3(x, params['w1'], s, b, relu=True)
    x = maxpool2x2(x)

    # Block 2: Conv(c1->c2) + BN + ReLU + MaxPool
    s, b = _bn_fold(params['b2'], *params['bn2'])
    x = conv3x3(x, params['w2'], s, b, relu=True)
    x = maxpool2x2(x)

    # Block 3: Conv(c2->c3), Conv(c3->c4) + BN + ReLU + MaxPool
    x = conv3x3(x, params['w3'], None, params['b3'], relu=False)
    s, b = _bn_fold(params['b4'], *params['bn4'])
    x = conv3x3(x, params['w4'], s, b, relu=True)
    x = maxpool2x2(x)

    # torch.flatten(x, start_dim=1) on NCHW -> channel-major flatten
    n = x.shape[0]
    x = jnp.transpose(x, (0, 3, 1, 2)).reshape(n, -1)

    # fc: three Linear layers (bias, no activation).  fc1/fc2 use int8 weights
    # whose per-column dequant scale rides the epilogue multiply; fc3 emits
    # the final f32 logits with no scale multiply at all.
    x = fused_matmul(x, params['fw1'], params['fb1'], scale=params['fs1'],
                     out_dtype=jnp.bfloat16)
    x = fused_matmul(x, params['fw2'], params['fb2'], scale=params['fs2'],
                     out_dtype=jnp.bfloat16)
    x = fused_matmul(x, params['fw3'], params['fb3'], scale=None,
                     out_dtype=jnp.float32)
    return x


if __name__ == "__main__":
    n_classes = 10
    # Small configuration (same architecture/layer pattern as the PyTorch
    # module, scaled down) so the script finishes quickly; init_params
    # defaults reproduce the full module (img=64, widths 64/128/512/512,
    # fc_dim=4096).
    img_size, widths, fc_dim = 16, (16, 32, 64, 64), 128

    key = jax.random.PRNGKey(0)
    k_param, k_data = jax.random.split(key)
    params = init_params(k_param, n_classes, img_size=img_size,
                         widths=widths, fc_dim=fc_dim)
    # The module hardcodes Conv2d(1, ...), so input is (N, 1, img, img).
    x = jax.random.normal(k_data, (2, 1, img_size, img_size), jnp.float32)

    fwd = jax.jit(convnet_forward)
    out = jax.block_until_ready(fwd(x, params))

    assert out.shape == (2, n_classes), out.shape
    assert out.dtype == jnp.float32
    assert bool(jnp.all(jnp.isfinite(out)))
    print("KERNEL_OK")
</pallas_src>

<mosaic_0001>
module attributes {stable_mosaic.version = 11 : i64} {
  func.func @_fused_matmul_kernel(%arg0: i32, %arg1: i32, %arg2: i32, %arg3: memref<256x9xbf16, #tpu.memory_space<vmem>>, %arg4: memref<9x16xbf16, #tpu.memory_space<vmem>>, %arg5: memref<1x16xf32, #tpu.memory_space<vmem>>, %arg6: memref<1x16xf32, #tpu.memory_space<vmem>>, %arg7: memref<256x16xbf16, #tpu.memory_space<vmem>>, %arg8: memref<256x16xf32, #tpu.memory_space<vmem>>) attributes {dimension_semantics = [#tpu.dimension_semantics<parallel>, #tpu.dimension_semantics<parallel>, #tpu.dimension_semantics<arbitrary>], iteration_bounds = array<i64: 2, 1, 1>, scalar_prefetch = 0 : i64, scratch_operands = 1 : i64, tpu.core_type = #tpu.core_type<tc>, window_params = [{transform_indices = @transform_0, window_bounds = array<i64: 256, 9>}, {transform_indices = @transform_1, window_bounds = array<i64: 9, 16>}, {transform_indices = @transform_2, window_bounds = array<i64: 1, 16>}, {transform_indices = @transform_3, window_bounds = array<i64: 1, 16>}, {transform_indices = @transform_4, window_bounds = array<i64: 256, 16>}]} {
    %c0_i32 = arith.constant 0 : i32
    %0 = arith.cmpi eq, %arg2, %c0_i32 : i32
    %1 = arith.extui %0 : i1 to i32
    %c0_i32_0 = arith.constant 0 : i32
    %2 = arith.cmpi ne, %1, %c0_i32_0 : i32
    scf.if %2 {
      %cst_10 = arith.constant 0.000000e+00 : f32
      %12 = vector.broadcast %cst_10 : f32 to vector<256x16xf32>
      %c0_11 = arith.constant 0 : index
      %c0_12 = arith.constant 0 : index
      %13 = vector.load %arg8[%c0_11, %c0_12] : memref<256x16xf32, #tpu.memory_space<vmem>>, vector<256x16xf32>
      tpu.vector_store %arg8[%c0_11, %c0_12], %12 {strides = array<i32>} : memref<256x16xf32, #tpu.memory_space<vmem>>, vector<256x16xf32>,
    } else {
    }
    %c0 = arith.constant 0 : index
    %c0_1 = arith.constant 0 : index
    %3 = vector.load %arg4[%c0, %c0_1] : memref<9x16xbf16, #tpu.memory_space<vmem>>, vector<9x16xbf16>
    %c0_2 = arith.constant 0 : index
    %c0_3 = arith.constant 0 : index
    %4 = vector.load %arg8[%c0_2, %c0_3] : memref<256x16xf32, #tpu.memory_space<vmem>>, vector<256x16xf32>
    %c0_4 = arith.constant 0 : index
    %c0_5 = arith.constant 0 : index
    %5 = vector.load %arg3[%c0_4, %c0_5] : memref<256x9xbf16, #tpu.memory_space<vmem>>, vector<256x9xbf16>
    %cst = arith.constant dense<0.000000e+00> : vector<256x16xf32>
    %6 = tpu.matmul %5, %3, %cst {dimension_numbers = #tpu.dot_dimension_numbers<[1], [0], [0], [1], [0, 0, 1, 1], [], []>} : vector<256x9xbf16>, vector<9x16xbf16>, vector<256x16xf32> -> vector<256x16xf32>
    %7 = arith.addf %4, %6 : vector<256x16xf32>
    %c0_6 = arith.constant 0 : index
    %c0_7 = arith.constant 0 : index
    %8 = vector.load %arg8[%c0_6, %c0_7] : memref<256x16xf32, #tpu.memory_space<vmem>>, vector<256x16xf32>
    tpu.vector_store %arg8[%c0_6, %c0_7], %7 {strides = array<i32>} : memref<256x16xf32, #tpu.memory_space<vmem>>, vector<256x16xf32>,
    %c0_i32_8 = arith.constant 0 : i32
    %9 = arith.cmpi eq, %arg2, %c0_i32_8 : i32
    %10 = arith.extui %9 : i1 to i32
    %c0_i32_9 = arith.constant 0 : i32
    %11 = arith.cmpi ne, %10, %c0_i32_9 : i32
    scf.if %11 {
      %c0_10 = arith.constant 0 : index
      %c0_11 = arith.constant 0 : index
      %12 = vector.load %arg8[%c0_10, %c0_11] : memref<256x16xf32, #tpu.memory_space<vmem>>, vector<256x16xf32>
      %c0_12 = arith.constant 0 : index
      %c0_13 = arith.constant 0 : index
      %13 = vector.load %arg5[%c0_12, %c0_13] : memref<1x16xf32, #tpu.memory_space<vmem>>, vector<1x16xf32>
      %14 = vector.broadcast %13 : vector<1x16xf32> to vector<256x16xf32>
      %15 = arith.mulf %12, %14 : vector<256x16xf32>
      %c0_14 = arith.constant 0 : index
      %c0_15 = arith.constant 0 : index
      %16 = vector.load %arg6[%c0_14, %c0_15] : memref<1x16xf32, #tpu.memory_space<vmem>>, vector<1x16xf32>
      %17 = vector.broadcast %16 : vector<1x16xf32> to vector<256x16xf32>
      %18 = arith.addf %15, %17 : vector<256x16xf32>
      %cst_16 = arith.constant 0.000000e+00 : f32
      %19 = vector.broadcast %cst_16 : f32 to vector<256x16xf32>
      %20 = arith.maximumf %18, %19 : vector<256x16xf32>
      %21 = arith.truncf %20 : vector<256x16xf32> to vector<256x16xbf16>
      %c0_17 = arith.constant 0 : index
      %c0_18 = arith.constant 0 : index
      %22 = vector.load %arg7[%c0_17, %c0_18] : memref<256x16xbf16, #tpu.memory_space<vmem>>, vector<256x16xbf16>
      tpu.vector_store %arg7[%c0_17, %c0_18], %21 {strides = array<i32>} : memref<256x16xbf16, #tpu.memory_space<vmem>>, vector<256x16xbf16>,
    } else {
    }
    return
  }
  func.func @transform_0(%arg0: i32, %arg1: i32, %arg2: i32) -> (i32, i32) {
    %c0_i32 = arith.constant 0 : i32
    return %arg0, %arg2 : i32, i32
  }
  func.func @transform_1(%arg0: i32, %arg1: i32, %arg2: i32) -> (i32, i32) {
    %c0_i32 = arith.constant 0 : i32
    return %arg2, %arg1 : i32, i32
  }
  func.func @transform_2(%arg0: i32, %arg1: i32, %arg2: i32) -> (i32, i32) {
    %c0_i32 = arith.constant 0 : i32
    %c0_i32_0 = arith.constant 0 : i32
    return %c0_i32, %arg1 : i32, i32
  }
  func.func @transform_3(%arg0: i32, %arg1: i32, %arg2: i32) -> (i32, i32) {
    %c0_i32 = arith.constant 0 : i32
    %c0_i32_0 = arith.constant 0 : i32
    return %c0_i32, %arg1 : i32, i32
  }
  func.func @transform_4(%arg0: i32, %arg1: i32, %arg2: i32) -> (i32, i32) {
    %c0_i32 = arith.constant 0 : i32
    return %arg0, %arg1 : i32, i32
  }
}

module attributes {stable_mosaic.version = 11 : i64} {
  func.func @_pairmax_kernel(%arg0: i32, %arg1: memref<128x2x16xbf16, #tpu.memory_space<vmem>>, %arg2: memref<128x16xbf16, #tpu.memory_space<vmem>>) attributes {dimension_semantics = [#tpu.dimension_semantics<parallel>], iteration_bounds = array<i64: 2>, scalar_prefetch = 0 : i64, scratch_operands = 0 : i64, tpu.core_type = #tpu.core_type<tc>, window_params = [{transform_indices = @transform_0, window_bounds = array<i64: 128, 2, 16>}, {transform_indices = @transform_1, window_bounds = array<i64: 128, 16>}]} {
    %c0 = arith.constant 0 : index
    %c0_0 = arith.constant 0 : index
    %c0_1 = arith.constant 0 : index
    %0 = vector.load %arg1[%c0, %c0_0, %c0_1] : memref<128x2x16xbf16, #tpu.memory_space<vmem>>, vector<128x2x16xbf16>
    %1 = vector.extract_strided_slice %0 {offsets = [0, 0, 0], sizes = [128, 1, 16], strides = [1, 1, 1]} : vector<128x2x16xbf16> to vector<128x1x16xbf16>
    %2 = vector.shape_cast %1 : vector<128x1x16xbf16> to vector<128x16xbf16>
    %3 = vector.extract_strided_slice %0 {offsets = [0, 1, 0], sizes = [128, 1, 16], strides = [1, 1, 1]} : vector<128x2x16xbf16> to vector<128x1x16xbf16>
    %4 = vector.shape_cast %3 : vector<128x1x16xbf16> to vector<128x16xbf16>
    %5 = arith.maximumf %2, %4 : vector<128x16xbf16>
    %c0_2 = arith.constant 0 : index
    %c0_3 = arith.constant 0 : index
    %6 = vector.load %arg2[%c0_2, %c0_3] : memref<128x16xbf16, #tpu.memory_space<vmem>>, vector<128x16xbf16>
    tpu.vector_store %arg2[%c0_2, %c0_3], %5 {strides = array<i32>} : memref<128x16xbf16, #tpu.memory_space<vmem>>, vector<128x16xbf16>,
    return
  }
  func.func @transform_0(%arg0: i32) -> (i32, i32, i32) {
    %c0_i32 = arith.constant 0 : i32
    %c0_i32_0 = arith.constant 0 : i32
    %c0_i32_1 = arith.constant 0 : i32
    return %arg0, %c0_i32, %c0_i32_0 : i32, i32, i32
  }
  func.func @transform_1(%arg0: i32) -> (i32, i32) {
    %c0_i32 = arith.constant 0 : i32
    %c0_i32_0 = arith.constant 0 : i32
    return %arg0, %c0_i32 : i32, i32
  }
}

module attributes {stable_mosaic.version = 11 : i64} {
  func.func @_pairmax_kernel(%arg0: i32, %arg1: memref<16x2x128xbf16, #tpu.memory_space<vmem>>, %arg2: memref<16x128xbf16, #tpu.memory_space<vmem>>) attributes {dimension_semantics = [#tpu.dimension_semantics<parallel>], iteration_bounds = array<i64: 1>, scalar_prefetch = 0 : i64, scratch_operands = 0 : i64, tpu.core_type = #tpu.core_type<tc>, window_params = [{transform_indices = @transform_0, window_bounds = array<i64: 16, 2, 128>}, {transform_indices = @transform_1, window_bounds = array<i64: 16, 128>}]} {
    %c0 = arith.constant 0 : index
    %c0_0 = arith.constant 0 : index
    %c0_1 = arith.constant 0 : index
    %0 = vector.load %arg1[%c0, %c0_0, %c0_1] : memref<16x2x128xbf16, #tpu.memory_space<vmem>>, vector<16x2x128xbf16>
    %1 = vector.extract_strided_slice %0 {offsets = [0, 0, 0], sizes = [16, 1, 128], strides = [1, 1, 1]} : vector<16x2x128xbf16> to vector<16x1x128xbf16>
    %2 = vector.shape_cast %1 : vector<16x1x128xbf16> to vector<16x128xbf16>
    %3 = vector.extract_strided_slice %0 {offsets = [0, 1, 0], sizes = [16, 1, 128], strides = [1, 1, 1]} : vector<16x2x128xbf16> to vector<16x1x128xbf16>
    %4 = vector.shape_cast %3 : vector<16x1x128xbf16> to vector<16x128xbf16>
    %5 = arith.maximumf %2, %4 : vector<16x128xbf16>
    %c0_2 = arith.constant 0 : index
    %c0_3 = arith.constant 0 : index
    %6 = vector.load %arg2[%c0_2, %c0_3] : memref<16x128xbf16, #tpu.memory_space<vmem>>, vector<16x128xbf16>
    tpu.vector_store %arg2[%c0_2, %c0_3], %5 {strides = array<i32>} : memref<16x128xbf16, #tpu.memory_space<vmem>>, vector<16x128xbf16>,
    return
  }
  func.func @transform_0(%arg0: i32) -> (i32, i32, i32) {
    %c0_i32 = arith.constant 0 : i32
    %c0_i32_0 = arith.constant 0 : i32
    %c0_i32_1 = arith.constant 0 : i32
    return %arg0, %c0_i32, %c0_i32_0 : i32, i32, i32
  }
  func.func @transform_1(%arg0: i32) -> (i32, i32) {
    %c0_i32 = arith.constant 0 : i32
    %c0_i32_0 = arith.constant 0 : i32
    return %arg0, %c0_i32 : i32, i32
  }
}

module attributes {stable_mosaic.version = 11 : i64} {
  func.func @_fused_matmul_kernel(%arg0: i32, %arg1: i32, %arg2: i32, %arg3: memref<128x144xbf16, #tpu.memory_space<vmem>>, %arg4: memref<144x32xbf16, #tpu.memory_space<vmem>>, %arg5: memref<1x32xf32, #tpu.memory_space<vmem>>, %arg6: memref<1x32xf32, #tpu.memory_space<vmem>>, %arg7: memref<128x32xbf16, #tpu.memory_space<vmem>>, %arg8: memref<128x32xf32, #tpu.memory_space<vmem>>) attributes {dimension_semantics = [#tpu.dimension_semantics<parallel>, #tpu.dimension_semantics<parallel>, #tpu.dimension_semantics<arbitrary>], iteration_bounds = array<i64: 1, 1, 1>, scalar_prefetch = 0 : i64, scratch_operands = 1 : i64, tpu.core_type = #tpu.core_type<tc>, window_params = [{transform_indices = @transform_0, window_bounds = array<i64: 128, 144>}, {transform_indices = @transform_1, window_bounds = array<i64: 144, 32>}, {transform_indices = @transform_2, window_bounds = array<i64: 1, 32>}, {transform_indices = @transform_3, window_bounds = array<i64: 1, 32>}, {transform_indices = @transform_4, window_bounds = array<i64: 128, 32>}]} {
    %c0_i32 = arith.constant 0 : i32
    %0 = arith.cmpi eq, %arg2, %c0_i32 : i32
    %1 = arith.extui %0 : i1 to i32
    %c0_i32_0 = arith.constant 0 : i32
    %2 = arith.cmpi ne, %1, %c0_i32_0 : i32
    scf.if %2 {
      %cst_10 = arith.constant 0.000000e+00 : f32
      %12 = vector.broadcast %cst_10 : f32 to vector<128x32xf32>
      %c0_11 = arith.constant 0 : index
      %c0_12 = arith.constant 0 : index
      %13 = vector.load %arg8[%c0_11, %c0_12] : memref<128x32xf32, #tpu.memory_space<vmem>>, vector<128x32xf32>
      tpu.vector_store %arg8[%c0_11, %c0_12], %12 {strides = array<i32>} : memref<128x32xf32, #tpu.memory_space<vmem>>, vector<128x32xf32>,
    } else {
    }
    %c0 = arith.constant 0 : index
    %c0_1 = arith.constant 0 : index
    %3 = vector.load %arg4[%c0, %c0_1] : memref<144x32xbf16, #tpu.memory_space<vmem>>, vector<144x32xbf16>
    %c0_2 = arith.constant 0 : index
    %c0_3 = arith.constant 0 : index
    %4 = vector.load %arg8[%c0_2, %c0_3] : memref<128x32xf32, #tpu.memory_space<vmem>>, vector<128x32xf32>
    %c0_4 = arith.constant 0 : index
    %c0_5 = arith.constant 0 : index
    %5 = vector.load %arg3[%c0_4, %c0_5] : memref<128x144xbf16, #tpu.memory_space<vmem>>, vector<128x144xbf16>
    %cst = arith.constant dense<0.000000e+00> : vector<128x32xf32>
    %6 = tpu.matmul %5, %3, %cst {dimension_numbers = #tpu.dot_dimension_numbers<[1], [0], [0], [1], [0, 0, 1, 1], [], []>} : vector<128x144xbf16>, vector<144x32xbf16>, vector<128x32xf32> -> vector<128x32xf32>
    %7 = arith.addf %4, %6 : vector<128x32xf32>
    %c0_6 = arith.constant 0 : index
    %c0_7 = arith.constant 0 : index
    %8 = vector.load %arg8[%c0_6, %c0_7] : memref<128x32xf32, #tpu.memory_space<vmem>>, vector<128x32xf32>
    tpu.vector_store %arg8[%c0_6, %c0_7], %7 {strides = array<i32>} : memref<128x32xf32, #tpu.memory_space<vmem>>, vector<128x32xf32>,
    %c0_i32_8 = arith.constant 0 : i32
    %9 = arith.cmpi eq, %arg2, %c0_i32_8 : i32
    %10 = arith.extui %9 : i1 to i32
    %c0_i32_9 = arith.constant 0 : i32
    %11 = arith.cmpi ne, %10, %c0_i32_9 : i32
    scf.if %11 {
      %c0_10 = arith.constant 0 : index
      %c0_11 = arith.constant 0 : index
      %12 = vector.load %arg8[%c0_10, %c0_11] : memref<128x32xf32, #tpu.memory_space<vmem>>, vector<128x32xf32>
      %c0_12 = arith.constant 0 : index
      %c0_13 = arith.constant 0 : index
      %13 = vector.load %arg5[%c0_12, %c0_13] : memref<1x32xf32, #tpu.memory_space<vmem>>, vector<1x32xf32>
      %14 = vector.broadcast %13 : vector<1x32xf32> to vector<128x32xf32>
      %15 = arith.mulf %12, %14 : vector<128x32xf32>
      %c0_14 = arith.constant 0 : index
      %c0_15 = arith.constant 0 : index
      %16 = vector.load %arg6[%c0_14, %c0_15] : memref<1x32xf32, #tpu.memory_space<vmem>>, vector<1x32xf32>
      %17 = vector.broadcast %16 : vector<1x32xf32> to vector<128x32xf32>
      %18 = arith.addf %15, %17 : vector<128x32xf32>
      %cst_16 = arith.constant 0.000000e+00 : f32
      %19 = vector.broadcast %cst_16 : f32 to vector<128x32xf32>
      %20 = arith.maximumf %18, %19 : vector<128x32xf32>
      %21 = arith.truncf %20 : vector<128x32xf32> to vector<128x32xbf16>
      %c0_17 = arith.constant 0 : index
      %c0_18 = arith.constant 0 : index
      %22 = vector.load %arg7[%c0_17, %c0_18] : memref<128x32xbf16, #tpu.memory_space<vmem>>, vector<128x32xbf16>
      tpu.vector_store %arg7[%c0_17, %c0_18], %21 {strides = array<i32>} : memref<128x32xbf16, #tpu.memory_space<vmem>>, vector<128x32xbf16>,
    } else {
    }
    return
  }
  func.func @transform_0(%arg0: i32, %arg1: i32, %arg2: i32) -> (i32, i32) {
    %c0_i32 = arith.constant 0 : i32
    return %arg0, %arg2 : i32, i32
  }
  func.func @transform_1(%arg0: i32, %arg1: i32, %arg2: i32) -> (i32, i32) {
    %c0_i32 = arith.constant 0 : i32
    return %arg2, %arg1 : i32, i32
  }
  func.func @transform_2(%arg0: i32, %arg1: i32, %arg2: i32) -> (i32, i32) {
    %c0_i32 = arith.constant 0 : i32
    %c0_i32_0 = arith.constant 0 : i32
    return %c0_i32, %arg1 : i32, i32
  }
  func.func @transform_3(%arg0: i32, %arg1: i32, %arg2: i32) -> (i32, i32) {
    %c0_i32 = arith.constant 0 : i32
    %c0_i32_0 = arith.constant 0 : i32
    return %c0_i32, %arg1 : i32, i32
  }
  func.func @transform_4(%arg0: i32, %arg1: i32, %arg2: i32) -> (i32, i32) {
    %c0_i32 = arith.constant 0 : i32
    return %arg0, %arg1 : i32, i32
  }
}

module attributes {stable_mosaic.version = 11 : i64} {
  func.func @_pairmax_kernel(%arg0: i32, %arg1: memref<32x2x32xbf16, #tpu.memory_space<vmem>>, %arg2: memref<32x32xbf16, #tpu.memory_space<vmem>>) attributes {dimension_semantics = [#tpu.dimension_semantics<parallel>], iteration_bounds = array<i64: 2>, scalar_prefetch = 0 : i64, scratch_operands = 0 : i64, tpu.core_type = #tpu.core_type<tc>, window_params = [{transform_indices = @transform_0, window_bounds = array<i64: 32, 2, 32>}, {transform_indices = @transform_1, window_bounds = array<i64: 32, 32>}]} {
    %c0 = arith.constant 0 : index
    %c0_0 = arith.constant 0 : index
    %c0_1 = arith.constant 0 : index
    %0 = vector.load %arg1[%c0, %c0_0, %c0_1] : memref<32x2x32xbf16, #tpu.memory_space<vmem>>, vector<32x2x32xbf16>
    %1 = vector.extract_strided_slice %0 {offsets = [0, 0, 0], sizes = [32, 1, 32], strides = [1, 1, 1]} : vector<32x2x32xbf16> to vector<32x1x32xbf16>
    %2 = vector.shape_cast %1 : vector<32x1x32xbf16> to vector<32x32xbf16>
    %3 = vector.extract_strided_slice %0 {offsets = [0, 1, 0], sizes = [32, 1, 32], strides = [1, 1, 1]} : vector<32x2x32xbf16> to vector<32x1x32xbf16>
    %4 = vector.shape_cast %3 : vector<32x1x32xbf16> to vector<32x32xbf16>
    %5 = arith.maximumf %2, %4 : vector<32x32xbf16>
    %c0_2 = arith.constant 0 : index
    %c0_3 = arith.constant 0 : index
    %6 = vector.load %arg2[%c0_2, %c0_3] : memref<32x32xbf16, #tpu.memory_space<vmem>>, vector<32x32xbf16>
    tpu.vector_store %arg2[%c0_2, %c0_3], %5 {strides = array<i32>} : memref<32x32xbf16, #tpu.memory_space<vmem>>, vector<32x32xbf16>,
    return
  }
  func.func @transform_0(%arg0: i32) -> (i32, i32, i32) {
    %c0_i32 = arith.constant 0 : i32
    %c0_i32_0 = arith.constant 0 : i32
    %c0_i32_1 = arith.constant 0 : i32
    return %arg0, %c0_i32, %c0_i32_0 : i32, i32, i32
  }
  func.func @transform_1(%arg0: i32) -> (i32, i32) {
    %c0_i32 = arith.constant 0 : i32
    %c0_i32_0 = arith.constant 0 : i32
    return %arg0, %c0_i32 : i32, i32
  }
}

module attributes {stable_mosaic.version = 11 : i64} {
  func.func @_pairmax_kernel(%arg0: i32, %arg1: memref<8x2x128xbf16, #tpu.memory_space<vmem>>, %arg2: memref<8x128xbf16, #tpu.memory_space<vmem>>) attributes {dimension_semantics = [#tpu.dimension_semantics<parallel>], iteration_bounds = array<i64: 1>, scalar_prefetch = 0 : i64, scratch_operands = 0 : i64, tpu.core_type = #tpu.core_type<tc>, window_params = [{transform_indices = @transform_0, window_bounds = array<i64: 8, 2, 128>}, {transform_indices = @transform_1, window_bounds = array<i64: 8, 128>}]} {
    %c0 = arith.constant 0 : index
    %c0_0 = arith.constant 0 : index
    %c0_1 = arith.constant 0 : index
    %0 = vector.load %arg1[%c0, %c0_0, %c0_1] : memref<8x2x128xbf16, #tpu.memory_space<vmem>>, vector<8x2x128xbf16>
    %1 = vector.extract_strided_slice %0 {offsets = [0, 0, 0], sizes = [8, 1, 128], strides = [1, 1, 1]} : vector<8x2x128xbf16> to vector<8x1x128xbf16>
    %2 = vector.shape_cast %1 : vector<8x1x128xbf16> to vector<8x128xbf16>
    %3 = vector.extract_strided_slice %0 {offsets = [0, 1, 0], sizes = [8, 1, 128], strides = [1, 1, 1]} : vector<8x2x128xbf16> to vector<8x1x128xbf16>
    %4 = vector.shape_cast %3 : vector<8x1x128xbf16> to vector<8x128xbf16>
    %5 = arith.maximumf %2, %4 : vector<8x128xbf16>
    %c0_2 = arith.constant 0 : index
    %c0_3 = arith.constant 0 : index
    %6 = vector.load %arg2[%c0_2, %c0_3] : memref<8x128xbf16, #tpu.memory_space<vmem>>, vector<8x128xbf16>
    tpu.vector_store %arg2[%c0_2, %c0_3], %5 {strides = array<i32>} : memref<8x128xbf16, #tpu.memory_space<vmem>>, vector<8x128xbf16>,
    return
  }
  func.func @transform_0(%arg0: i32) -> (i32, i32, i32) {
    %c0_i32 = arith.constant 0 : i32
    %c0_i32_0 = arith.constant 0 : i32
    %c0_i32_1 = arith.constant 0 : i32
    return %arg0, %c0_i32, %c0_i32_0 : i32, i32, i32
  }
  func.func @transform_1(%arg0: i32) -> (i32, i32) {
    %c0_i32 = arith.constant 0 : i32
    %c0_i32_0 = arith.constant 0 : i32
    return %arg0, %c0_i32 : i32, i32
  }
}

module attributes {stable_mosaic.version = 11 : i64} {
  func.func @_fused_matmul_kernel(%arg0: i32, %arg1: i32, %arg2: i32, %arg3: memref<32x288xbf16, #tpu.memory_space<vmem>>, %arg4: memref<288x64xbf16, #tpu.memory_space<vmem>>, %arg5: memref<1x64xf32, #tpu.memory_space<vmem>>, %arg6: memref<32x64xbf16, #tpu.memory_space<vmem>>, %arg7: memref<32x64xf32, #tpu.memory_space<vmem>>) attributes {dimension_semantics = [#tpu.dimension_semantics<parallel>, #tpu.dimension_semantics<parallel>, #tpu.dimension_semantics<arbitrary>], iteration_bounds = array<i64: 1, 1, 1>, scalar_prefetch = 0 : i64, scratch_operands = 1 : i64, tpu.core_type = #tpu.core_type<tc>, window_params = [{transform_indices = @transform_0, window_bounds = array<i64: 32, 288>}, {transform_indices = @transform_1, window_bounds = array<i64: 288, 64>}, {transform_indices = @transform_2, window_bounds = array<i64: 1, 64>}, {transform_indices = @transform_3, window_bounds = array<i64: 32, 64>}]} {
    %c0_i32 = arith.constant 0 : i32
    %0 = arith.cmpi eq, %arg2, %c0_i32 : i32
    %1 = arith.extui %0 : i1 to i32
    %c0_i32_0 = arith.constant 0 : i32
    %2 = arith.cmpi ne, %1, %c0_i32_0 : i32
    scf.if %2 {
      %cst_10 = arith.constant 0.000000e+00 : f32
      %12 = vector.broadcast %cst_10 : f32 to vector<32x64xf32>
      %c0_11 = arith.constant 0 : index
      %c0_12 = arith.constant 0 : index
      %13 = vector.load %arg7[%c0_11, %c0_12] : memref<32x64xf32, #tpu.memory_space<vmem>>, vector<32x64xf32>
      tpu.vector_store %arg7[%c0_11, %c0_12], %12 {strides = array<i32>} : memref<32x64xf32, #tpu.memory_space<vmem>>, vector<32x64xf32>,
    } else {
    }
    %c0 = arith.constant 0 : index
    %c0_1 = arith.constant 0 : index
    %3 = vector.load %arg4[%c0, %c0_1] : memref<288x64xbf16, #tpu.memory_space<vmem>>, vector<288x64xbf16>
    %c0_2 = arith.constant 0 : index
    %c0_3 = arith.constant 0 : index
    %4 = vector.load %arg7[%c0_2, %c0_3] : memref<32x64xf32, #tpu.memory_space<vmem>>, vector<32x64xf32>
    %c0_4 = arith.constant 0 : index
    %c0_5 = arith.constant 0 : index
    %5 = vector.load %arg3[%c0_4, %c0_5] : memref<32x288xbf16, #tpu.memory_space<vmem>>, vector<32x288xbf16>
    %cst = arith.constant dense<0.000000e+00> : vector<32x64xf32>
    %6 = tpu.matmul %5, %3, %cst {dimension_numbers = #tpu.dot_dimension_numbers<[1], [0], [0], [1], [0, 0, 1, 1], [], []>} : vector<32x288xbf16>, vector<288x64xbf16>, vector<32x64xf32> -> vector<32x64xf32>
    %7 = arith.addf %4, %6 : vector<32x64xf32>
    %c0_6 = arith.constant 0 : index
    %c0_7 = arith.constant 0 : index
    %8 = vector.load %arg7[%c0_6, %c0_7] : memref<32x64xf32, #tpu.memory_space<vmem>>, vector<32x64xf32>
    tpu.vector_store %arg7[%c0_6, %c0_7], %7 {strides = array<i32>} : memref<32x64xf32, #tpu.memory_space<vmem>>, vector<32x64xf32>,
    %c0_i32_8 = arith.constant 0 : i32
    %9 = arith.cmpi eq, %arg2, %c0_i32_8 : i32
    %10 = arith.extui %9 : i1 to i32
    %c0_i32_9 = arith.constant 0 : i32
    %11 = arith.cmpi ne, %10, %c0_i32_9 : i32
    scf.if %11 {
      %c0_10 = arith.constant 0 : index
      %c0_11 = arith.constant 0 : index
      %12 = vector.load %arg7[%c0_10, %c0_11] : memref<32x64xf32, #tpu.memory_space<vmem>>, vector<32x64xf32>
      %c0_12 = arith.constant 0 : index
      %c0_13 = arith.constant 0 : index
      %13 = vector.load %arg5[%c0_12, %c0_13] : memref<1x64xf32, #tpu.memory_space<vmem>>, vector<1x64xf32>
      %14 = vector.broadcast %13 : vector<1x64xf32> to vector<32x64xf32>
      %15 = arith.addf %12, %14 : vector<32x64xf32>
      %16 = arith.truncf %15 : vector<32x64xf32> to vector<32x64xbf16>
      %c0_14 = arith.constant 0 : index
      %c0_15 = arith.constant 0 : index
      %17 = vector.load %arg6[%c0_14, %c0_15] : memref<32x64xbf16, #tpu.memory_space<vmem>>, vector<32x64xbf16>
      tpu.vector_store %arg6[%c0_14, %c0_15], %16 {strides = array<i32>} : memref<32x64xbf16, #tpu.memory_space<vmem>>, vector<32x64xbf16>,
    } else {
    }
    return
  }
  func.func @transform_0(%arg0: i32, %arg1: i32, %arg2: i32) -> (i32, i32) {
    %c0_i32 = arith.constant 0 : i32
    return %arg0, %arg2 : i32, i32
  }
  func.func @transform_1(%arg0: i32, %arg1: i32, %arg2: i32) -> (i32, i32) {
    %c0_i32 = arith.constant 0 : i32
    return %arg2, %arg1 : i32, i32
  }
  func.func @transform_2(%arg0: i32, %arg1: i32, %arg2: i32) -> (i32, i32) {
    %c0_i32 = arith.constant 0 : i32
    %c0_i32_0 = arith.constant 0 : i32
    return %c0_i32, %arg1 : i32, i32
  }
  func.func @transform_3(%arg0: i32, %arg1: i32, %arg2: i32) -> (i32, i32) {
    %c0_i32 = arith.constant 0 : i32
    return %arg0, %arg1 : i32, i32
  }
}

module attributes {stable_mosaic.version = 11 : i64} {
  func.func @_fused_matmul_kernel(%arg0: i32, %arg1: i32, %arg2: i32, %arg3: memref<32x576xbf16, #tpu.memory_space<vmem>>, %arg4: memref<576x64xbf16, #tpu.memory_space<vmem>>, %arg5: memref<1x64xf32, #tpu.memory_space<vmem>>, %arg6: memref<1x64xf32, #tpu.memory_space<vmem>>, %arg7: memref<32x64xbf16, #tpu.memory_space<vmem>>, %arg8: memref<32x64xf32, #tpu.memory_space<vmem>>) attributes {dimension_semantics = [#tpu.dimension_semantics<parallel>, #tpu.dimension_semantics<parallel>, #tpu.dimension_semantics<arbitrary>], iteration_bounds = array<i64: 1, 1, 1>, scalar_prefetch = 0 : i64, scratch_operands = 1 : i64, tpu.core_type = #tpu.core_type<tc>, window_params = [{transform_indices = @transform_0, window_bounds = array<i64: 32, 576>}, {transform_indices = @transform_1, window_bounds = array<i64: 576, 64>}, {transform_indices = @transform_2, window_bounds = array<i64: 1, 64>}, {transform_indices = @transform_3, window_bounds = array<i64: 1, 64>}, {transform_indices = @transform_4, window_bounds = array<i64: 32, 64>}]} {
    %c0_i32 = arith.constant 0 : i32
    %0 = arith.cmpi eq, %arg2, %c0_i32 : i32
    %1 = arith.extui %0 : i1 to i32
    %c0_i32_0 = arith.constant 0 : i32
    %2 = arith.cmpi ne, %1, %c0_i32_0 : i32
    scf.if %2 {
      %cst_10 = arith.constant 0.000000e+00 : f32
      %12 = vector.broadcast %cst_10 : f32 to vector<32x64xf32>
      %c0_11 = arith.constant 0 : index
      %c0_12 = arith.constant 0 : index
      %13 = vector.load %arg8[%c0_11, %c0_12] : memref<32x64xf32, #tpu.memory_space<vmem>>, vector<32x64xf32>
      tpu.vector_store %arg8[%c0_11, %c0_12], %12 {strides = array<i32>} : memref<32x64xf32, #tpu.memory_space<vmem>>, vector<32x64xf32>,
    } else {
    }
    %c0 = arith.constant 0 : index
    %c0_1 = arith.constant 0 : index
    %3 = vector.load %arg4[%c0, %c0_1] : memref<576x64xbf16, #tpu.memory_space<vmem>>, vector<576x64xbf16>
    %c0_2 = arith.constant 0 : index
    %c0_3 = arith.constant 0 : index
    %4 = vector.load %arg8[%c0_2, %c0_3] : memref<32x64xf32, #tpu.memory_space<vmem>>, vector<32x64xf32>
    %c0_4 = arith.constant 0 : index
    %c0_5 = arith.constant 0 : index
    %5 = vector.load %arg3[%c0_4, %c0_5] : memref<32x576xbf16, #tpu.memory_space<vmem>>, vector<32x576xbf16>
    %cst = arith.constant dense<0.000000e+00> : vector<32x64xf32>
    %6 = tpu.matmul %5, %3, %cst {dimension_numbers = #tpu.dot_dimension_numbers<[1], [0], [0], [1], [0, 0, 1, 1], [], []>} : vector<32x576xbf16>, vector<576x64xbf16>, vector<32x64xf32> -> vector<32x64xf32>
    %7 = arith.addf %4, %6 : vector<32x64xf32>
    %c0_6 = arith.constant 0 : index
    %c0_7 = arith.constant 0 : index
    %8 = vector.load %arg8[%c0_6, %c0_7] : memref<32x64xf32, #tpu.memory_space<vmem>>, vector<32x64xf32>
    tpu.vector_store %arg8[%c0_6, %c0_7], %7 {strides = array<i32>} : memref<32x64xf32, #tpu.memory_space<vmem>>, vector<32x64xf32>,
    %c0_i32_8 = arith.constant 0 : i32
    %9 = arith.cmpi eq, %arg2, %c0_i32_8 : i32
    %10 = arith.extui %9 : i1 to i32
    %c0_i32_9 = arith.constant 0 : i32
    %11 = arith.cmpi ne, %10, %c0_i32_9 : i32
    scf.if %11 {
      %c0_10 = arith.constant 0 : index
      %c0_11 = arith.constant 0 : index
      %12 = vector.load %arg8[%c0_10, %c0_11] : memref<32x64xf32, #tpu.memory_space<vmem>>, vector<32x64xf32>
      %c0_12 = arith.constant 0 : index
      %c0_13 = arith.constant 0 : index
      %13 = vector.load %arg5[%c0_12, %c0_13] : memref<1x64xf32, #tpu.memory_space<vmem>>, vector<1x64xf32>
      %14 = vector.broadcast %13 : vector<1x64xf32> to vector<32x64xf32>
      %15 = arith.mulf %12, %14 : vector<32x64xf32>
      %c0_14 = arith.constant 0 : index
      %c0_15 = arith.constant 0 : index
      %16 = vector.load %arg6[%c0_14, %c0_15] : memref<1x64xf32, #tpu.memory_space<vmem>>, vector<1x64xf32>
      %17 = vector.broadcast %16 : vector<1x64xf32> to vector<32x64xf32>
      %18 = arith.addf %15, %17 : vector<32x64xf32>
      %cst_16 = arith.constant 0.000000e+00 : f32
      %19 = vector.broadcast %cst_16 : f32 to vector<32x64xf32>
      %20 = arith.maximumf %18, %19 : vector<32x64xf32>
      %21 = arith.truncf %20 : vector<32x64xf32> to vector<32x64xbf16>
      %c0_17 = arith.constant 0 : index
      %c0_18 = arith.constant 0 : index
      %22 = vector.load %arg7[%c0_17, %c0_18] : memref<32x64xbf16, #tpu.memory_space<vmem>>, vector<32x64xbf16>
      tpu.vector_store %arg7[%c0_17, %c0_18], %21 {strides = array<i32>} : memref<32x64xbf16, #tpu.memory_space<vmem>>, vector<32x64xbf16>,
    } else {
    }
    return
  }
  func.func @transform_0(%arg0: i32, %arg1: i32, %arg2: i32) -> (i32, i32) {
    %c0_i32 = arith.constant 0 : i32
    return %arg0, %arg2 : i32, i32
  }
  func.func @transform_1(%arg0: i32, %arg1: i32, %arg2: i32) -> (i32, i32) {
    %c0_i32 = arith.constant 0 : i32
    return %arg2, %arg1 : i32, i32
  }
  func.func @transform_2(%arg0: i32, %arg1: i32, %arg2: i32) -> (i32, i32) {
    %c0_i32 = arith.constant 0 : i32
    %c0_i32_0 = arith.constant 0 : i32
    return %c0_i32, %arg1 : i32, i32
  }
  func.func @transform_3(%arg0: i32, %arg1: i32, %arg2: i32) -> (i32, i32) {
    %c0_i32 = arith.constant 0 : i32
    %c0_i32_0 = arith.constant 0 : i32
    return %c0_i32, %arg1 : i32, i32
  }
  func.func @transform_4(%arg0: i32, %arg1: i32, %arg2: i32) -> (i32, i32) {
    %c0_i32 = arith.constant 0 : i32
    return %arg0, %arg1 : i32, i32
  }
}

module attributes {stable_mosaic.version = 11 : i64} {
  func.func @_pairmax_kernel(%arg0: i32, %arg1: memref<16x2x64xbf16, #tpu.memory_space<vmem>>, %arg2: memref<16x64xbf16, #tpu.memory_space<vmem>>) attributes {dimension_semantics = [#tpu.dimension_semantics<parallel>], iteration_bounds = array<i64: 1>, scalar_prefetch = 0 : i64, scratch_operands = 0 : i64, tpu.core_type = #tpu.core_type<tc>, window_params = [{transform_indices = @transform_0, window_bounds = array<i64: 16, 2, 64>}, {transform_indices = @transform_1, window_bounds = array<i64: 16, 64>}]} {
    %c0 = arith.constant 0 : index
    %c0_0 = arith.constant 0 : index
    %c0_1 = arith.constant 0 : index
    %0 = vector.load %arg1[%c0, %c0_0, %c0_1] : memref<16x2x64xbf16, #tpu.memory_space<vmem>>, vector<16x2x64xbf16>
    %1 = vector.extract_strided_slice %0 {offsets = [0, 0, 0], sizes = [16, 1, 64], strides = [1, 1, 1]} : vector<16x2x64xbf16> to vector<16x1x64xbf16>
    %2 = vector.shape_cast %1 : vector<16x1x64xbf16> to vector<16x64xbf16>
    %3 = vector.extract_strided_slice %0 {offsets = [0, 1, 0], sizes = [16, 1, 64], strides = [1, 1, 1]} : vector<16x2x64xbf16> to vector<16x1x64xbf16>
    %4 = vector.shape_cast %3 : vector<16x1x64xbf16> to vector<16x64xbf16>
    %5 = arith.maximumf %2, %4 : vector<16x64xbf16>
    %c0_2 = arith.constant 0 : index
    %c0_3 = arith.constant 0 : index
    %6 = vector.load %arg2[%c0_2, %c0_3] : memref<16x64xbf16, #tpu.memory_space<vmem>>, vector<16x64xbf16>
    tpu.vector_store %arg2[%c0_2, %c0_3], %5 {strides = array<i32>} : memref<16x64xbf16, #tpu.memory_space<vmem>>, vector<16x64xbf16>,
    return
  }
  func.func @transform_0(%arg0: i32) -> (i32, i32, i32) {
    %c0_i32 = arith.constant 0 : i32
    %c0_i32_0 = arith.constant 0 : i32
    %c0_i32_1 = arith.constant 0 : i32
    return %arg0, %c0_i32, %c0_i32_0 : i32, i32, i32
  }
  func.func @transform_1(%arg0: i32) -> (i32, i32) {
    %c0_i32 = arith.constant 0 : i32
    %c0_i32_0 = arith.constant 0 : i32
    return %arg0, %c0_i32 : i32, i32
  }
}

module attributes {stable_mosaic.version = 11 : i64} {
  func.func @_pairmax_kernel(%arg0: i32, %arg1: memref<4x2x128xbf16, #tpu.memory_space<vmem>>, %arg2: memref<4x128xbf16, #tpu.memory_space<vmem>>) attributes {dimension_semantics = [#tpu.dimension_semantics<parallel>], iteration_bounds = array<i64: 1>, scalar_prefetch = 0 : i64, scratch_operands = 0 : i64, tpu.core_type = #tpu.core_type<tc>, window_params = [{transform_indices = @transform_0, window_bounds = array<i64: 4, 2, 128>}, {transform_indices = @transform_1, window_bounds = array<i64: 4, 128>}]} {
    %c0 = arith.constant 0 : index
    %c0_0 = arith.constant 0 : index
    %c0_1 = arith.constant 0 : index
    %0 = vector.load %arg1[%c0, %c0_0, %c0_1] : memref<4x2x128xbf16, #tpu.memory_space<vmem>>, vector<4x2x128xbf16>
    %1 = vector.extract_strided_slice %0 {offsets = [0, 0, 0], sizes = [4, 1, 128], strides = [1, 1, 1]} : vector<4x2x128xbf16> to vector<4x1x128xbf16>
    %2 = vector.shape_cast %1 : vector<4x1x128xbf16> to vector<4x128xbf16>
    %3 = vector.extract_strided_slice %0 {offsets = [0, 1, 0], sizes = [4, 1, 128], strides = [1, 1, 1]} : vector<4x2x128xbf16> to vector<4x1x128xbf16>
    %4 = vector.shape_cast %3 : vector<4x1x128xbf16> to vector<4x128xbf16>
    %5 = arith.maximumf %2, %4 : vector<4x128xbf16>
    %c0_2 = arith.constant 0 : index
    %c0_3 = arith.constant 0 : index
    %6 = vector.load %arg2[%c0_2, %c0_3] : memref<4x128xbf16, #tpu.memory_space<vmem>>, vector<4x128xbf16>
    tpu.vector_store %arg2[%c0_2, %c0_3], %5 {strides = array<i32>} : memref<4x128xbf16, #tpu.memory_space<vmem>>, vector<4x128xbf16>,
    return
  }
  func.func @transform_0(%arg0: i32) -> (i32, i32, i32) {
    %c0_i32 = arith.constant 0 : i32
    %c0_i32_0 = arith.constant 0 : i32
    %c0_i32_1 = arith.constant 0 : i32
    return %arg0, %c0_i32, %c0_i32_0 : i32, i32, i32
  }
  func.func @transform_1(%arg0: i32) -> (i32, i32) {
    %c0_i32 = arith.constant 0 : i32
    %c0_i32_0 = arith.constant 0 : i32
    return %arg0, %c0_i32 : i32, i32
  }
}

module attributes {stable_mosaic.version = 11 : i64} {
  func.func @_fused_matmul_kernel(%arg0: i32, %arg1: i32, %arg2: i32, %arg3: memref<2x128xbf16, #tpu.memory_space<vmem>>, %arg4: memref<128x128xi8, #tpu.memory_space<vmem>>, %arg5: memref<1x128xf32, #tpu.memory_space<vmem>>, %arg6: memref<1x128xf32, #tpu.memory_space<vmem>>, %arg7: memref<2x128xbf16, #tpu.memory_space<vmem>>, %arg8: memref<2x128xf32, #tpu.memory_space<vmem>>) attributes {dimension_semantics = [#tpu.dimension_semantics<parallel>, #tpu.dimension_semantics<parallel>, #tpu.dimension_semantics<arbitrary>], iteration_bounds = array<i64: 1, 1, 1>, scalar_prefetch = 0 : i64, scratch_operands = 1 : i64, tpu.core_type = #tpu.core_type<tc>, window_params = [{transform_indices = @transform_0, window_bounds = array<i64: 2, 128>}, {transform_indices = @transform_1, window_bounds = array<i64: 128, 128>}, {transform_indices = @transform_2, window_bounds = array<i64: 1, 128>}, {transform_indices = @transform_3, window_bounds = array<i64: 1, 128>}, {transform_indices = @transform_4, window_bounds = array<i64: 2, 128>}]} {
    %c0_i32 = arith.constant 0 : i32
    %0 = arith.cmpi eq, %arg2, %c0_i32 : i32
    %1 = arith.extui %0 : i1 to i32
    %c0_i32_0 = arith.constant 0 : i32
    %2 = arith.cmpi ne, %1, %c0_i32_0 : i32
    scf.if %2 {
      %cst_10 = arith.constant 0.000000e+00 : f32
      %13 = vector.broadcast %cst_10 : f32 to vector<2x128xf32>
      %c0_11 = arith.constant 0 : index
      %c0_12 = arith.constant 0 : index
      %14 = vector.load %arg8[%c0_11, %c0_12] : memref<2x128xf32, #tpu.memory_space<vmem>>, vector<2x128xf32>
      tpu.vector_store %arg8[%c0_11, %c0_12], %13 {strides = array<i32>} : memref<2x128xf32, #tpu.memory_space<vmem>>, vector<2x128xf32>,
    } else {
    }
    %c0 = arith.constant 0 : index
    %c0_1 = arith.constant 0 : index
    %3 = vector.load %arg4[%c0, %c0_1] : memref<128x128xi8, #tpu.memory_space<vmem>>, vector<128x128xi8>
    %4 = arith.sitofp %3 : vector<128x128xi8> to vector<128x128xbf16>
    %c0_2 = arith.constant 0 : index
    %c0_3 = arith.constant 0 : index
    %5 = vector.load %arg8[%c0_2, %c0_3] : memref<2x128xf32, #tpu.memory_space<vmem>>, vector<2x128xf32>
    %c0_4 = arith.constant 0 : index
    %c0_5 = arith.constant 0 : index
    %6 = vector.load %arg3[%c0_4, %c0_5] : memref<2x128xbf16, #tpu.memory_space<vmem>>, vector<2x128xbf16>
    %cst = arith.constant dense<0.000000e+00> : vector<2x128xf32>
    %7 = tpu.matmul %6, %4, %cst {dimension_numbers = #tpu.dot_dimension_numbers<[1], [0], [0], [1], [0, 0, 1, 1], [], []>} : vector<2x128xbf16>, vector<128x128xbf16>, vector<2x128xf32> -> vector<2x128xf32>
    %8 = arith.addf %5, %7 : vector<2x128xf32>
    %c0_6 = arith.constant 0 : index
    %c0_7 = arith.constant 0 : index
    %9 = vector.load %arg8[%c0_6, %c0_7] : memref<2x128xf32, #tpu.memory_space<vmem>>, vector<2x128xf32>
    tpu.vector_store %arg8[%c0_6, %c0_7], %8 {strides = array<i32>} : memref<2x128xf32, #tpu.memory_space<vmem>>, vector<2x128xf32>,
    %c0_i32_8 = arith.constant 0 : i32
    %10 = arith.cmpi eq, %arg2, %c0_i32_8 : i32
    %11 = arith.extui %10 : i1 to i32
    %c0_i32_9 = arith.constant 0 : i32
    %12 = arith.cmpi ne, %11, %c0_i32_9 : i32
    scf.if %12 {
      %c0_10 = arith.constant 0 : index
      %c0_11 = arith.constant 0 : index
      %13 = vector.load %arg8[%c0_10, %c0_11] : memref<2x128xf32, #tpu.memory_space<vmem>>, vector<2x128xf32>
      %c0_12 = arith.constant 0 : index
      %c0_13 = arith.constant 0 : index
      %14 = vector.load %arg5[%c0_12, %c0_13] : memref<1x128xf32, #tpu.memory_space<vmem>>, vector<1x128xf32>
      %15 = vector.broadcast %14 : vector<1x128xf32> to vector<2x128xf32>
      %16 = arith.mulf %13, %15 : vector<2x128xf32>
      %c0_14 = arith.constant 0 : index
      %c0_15 = arith.constant 0 : index
      %17 = vector.load %arg6[%c0_14, %c0_15] : memref<1x128xf32, #tpu.memory_space<vmem>>, vector<1x128xf32>
      %18 = vector.broadcast %17 : vector<1x128xf32> to vector<2x128xf32>
      %19 = arith.addf %16, %18 : vector<2x128xf32>
      %20 = arith.truncf %19 : vector<2x128xf32> to vector<2x128xbf16>
      %c0_16 = arith.constant 0 : index
      %c0_17 = arith.constant 0 : index
      %21 = vector.load %arg7[%c0_16, %c0_17] : memref<2x128xbf16, #tpu.memory_space<vmem>>, vector<2x128xbf16>
      tpu.vector_store %arg7[%c0_16, %c0_17], %20 {strides = array<i32>} : memref<2x128xbf16, #tpu.memory_space<vmem>>, vector<2x128xbf16>,
    } else {
    }
    return
  }
  func.func @transform_0(%arg0: i32, %arg1: i32, %arg2: i32) -> (i32, i32) {
    %c0_i32 = arith.constant 0 : i32
    return %arg0, %arg2 : i32, i32
  }
  func.func @transform_1(%arg0: i32, %arg1: i32, %arg2: i32) -> (i32, i32) {
    %c0_i32 = arith.constant 0 : i32
    return %arg2, %arg1 : i32, i32
  }
  func.func @transform_2(%arg0: i32, %arg1: i32, %arg2: i32) -> (i32, i32) {
    %c0_i32 = arith.constant 0 : i32
    %c0_i32_0 = arith.constant 0 : i32
    return %c0_i32, %arg1 : i32, i32
  }
  func.func @transform_3(%arg0: i32, %arg1: i32, %arg2: i32) -> (i32, i32) {
    %c0_i32 = arith.constant 0 : i32
    %c0_i32_0 = arith.constant 0 : i32
    return %c0_i32, %arg1 : i32, i32
  }
  func.func @transform_4(%arg0: i32, %arg1: i32, %arg2: i32) -> (i32, i32) {
    %c0_i32 = arith.constant 0 : i32
    return %arg0, %arg1 : i32, i32
  }
}

module attributes {stable_mosaic.version = 11 : i64} {
  func.func @_fused_matmul_kernel(%arg0: i32, %arg1: i32, %arg2: i32, %arg3: memref<2x256xbf16, #tpu.memory_space<vmem>>, %arg4: memref<256x128xi8, #tpu.memory_space<vmem>>, %arg5: memref<1x128xf32, #tpu.memory_space<vmem>>, %arg6: memref<1x128xf32, #tpu.memory_space<vmem>>, %arg7: memref<2x128xbf16, #tpu.memory_space<vmem>>, %arg8: memref<2x128xf32, #tpu.memory_space<vmem>>) attributes {dimension_semantics = [#tpu.dimension_semantics<parallel>, #tpu.dimension_semantics<parallel>, #tpu.dimension_semantics<arbitrary>], iteration_bounds = array<i64: 1, 1, 1>, scalar_prefetch = 0 : i64, scratch_operands = 1 : i64, tpu.core_type = #tpu.core_type<tc>, window_params = [{transform_indices = @transform_0, window_bounds = array<i64: 2, 256>}, {transform_indices = @transform_1, window_bounds = array<i64: 256, 128>}, {transform_indices = @transform_2, window_bounds = array<i64: 1, 128>}, {transform_indices = @transform_3, window_bounds = array<i64: 1, 128>}, {transform_indices = @transform_4, window_bounds = array<i64: 2, 128>}]} {
    %c0_i32 = arith.constant 0 : i32
    %0 = arith.cmpi eq, %arg2, %c0_i32 : i32
    %1 = arith.extui %0 : i1 to i32
    %c0_i32_0 = arith.constant 0 : i32
    %2 = arith.cmpi ne, %1, %c0_i32_0 : i32
    scf.if %2 {
      %cst_10 = arith.constant 0.000000e+00 : f32
      %13 = vector.broadcast %cst_10 : f32 to vector<2x128xf32>
      %c0_11 = arith.constant 0 : index
      %c0_12 = arith.constant 0 : index
      %14 = vector.load %arg8[%c0_11, %c0_12] : memref<2x128xf32, #tpu.memory_space<vmem>>, vector<2x128xf32>
      tpu.vector_store %arg8[%c0_11, %c0_12], %13 {strides = array<i32>} : memref<2x128xf32, #tpu.memory_space<vmem>>, vector<2x128xf32>,
    } else {
    }
    %c0 = arith.constant 0 : index
    %c0_1 = arith.constant 0 : index
    %3 = vector.load %arg4[%c0, %c0_1] : memref<256x128xi8, #tpu.memory_space<vmem>>, vector<256x128xi8>
    %4 = arith.sitofp %3 : vector<256x128xi8> to vector<256x128xbf16>
    %c0_2 = arith.constant 0 : index
    %c0_3 = arith.constant 0 : index
    %5 = vector.load %arg8[%c0_2, %c0_3] : memref<2x128xf32, #tpu.memory_space<vmem>>, vector<2x128xf32>
    %c0_4 = arith.constant 0 : index
    %c0_5 = arith.constant 0 : index
    %6 = vector.load %arg3[%c0_4, %c0_5] : memref<2x256xbf16, #tpu.memory_space<vmem>>, vector<2x256xbf16>
    %cst = arith.constant dense<0.000000e+00> : vector<2x128xf32>
    %7 = tpu.matmul %6, %4, %cst {dimension_numbers = #tpu.dot_dimension_numbers<[1], [0], [0], [1], [0, 0, 1, 1], [], []>} : vector<2x256xbf16>, vector<256x128xbf16>, vector<2x128xf32> -> vector<2x128xf32>
    %8 = arith.addf %5, %7 : vector<2x128xf32>
    %c0_6 = arith.constant 0 : index
    %c0_7 = arith.constant 0 : index
    %9 = vector.load %arg8[%c0_6, %c0_7] : memref<2x128xf32, #tpu.memory_space<vmem>>, vector<2x128xf32>
    tpu.vector_store %arg8[%c0_6, %c0_7], %8 {strides = array<i32>} : memref<2x128xf32, #tpu.memory_space<vmem>>, vector<2x128xf32>,
    %c0_i32_8 = arith.constant 0 : i32
    %10 = arith.cmpi eq, %arg2, %c0_i32_8 : i32
    %11 = arith.extui %10 : i1 to i32
    %c0_i32_9 = arith.constant 0 : i32
    %12 = arith.cmpi ne, %11, %c0_i32_9 : i32
    scf.if %12 {
      %c0_10 = arith.constant 0 : index
      %c0_11 = arith.constant 0 : index
      %13 = vector.load %arg8[%c0_10, %c0_11] : memref<2x128xf32, #tpu.memory_space<vmem>>, vector<2x128xf32>
      %c0_12 = arith.constant 0 : index
      %c0_13 = arith.constant 0 : index
      %14 = vector.load %arg5[%c0_12, %c0_13] : memref<1x128xf32, #tpu.memory_space<vmem>>, vector<1x128xf32>
      %15 = vector.broadcast %14 : vector<1x128xf32> to vector<2x128xf32>
      %16 = arith.mulf %13, %15 : vector<2x128xf32>
      %c0_14 = arith.constant 0 : index
      %c0_15 = arith.constant 0 : index
      %17 = vector.load %arg6[%c0_14, %c0_15] : memref<1x128xf32, #tpu.memory_space<vmem>>, vector<1x128xf32>
      %18 = vector.broadcast %17 : vector<1x128xf32> to vector<2x128xf32>
      %19 = arith.addf %16, %18 : vector<2x128xf32>
      %20 = arith.truncf %19 : vector<2x128xf32> to vector<2x128xbf16>
      %c0_16 = arith.constant 0 : index
      %c0_17 = arith.constant 0 : index
      %21 = vector.load %arg7[%c0_16, %c0_17] : memref<2x128xbf16, #tpu.memory_space<vmem>>, vector<2x128xbf16>
      tpu.vector_store %arg7[%c0_16, %c0_17], %20 {strides = array<i32>} : memref<2x128xbf16, #tpu.memory_space<vmem>>, vector<2x128xbf16>,
    } else {
    }
    return
  }
  func.func @transform_0(%arg0: i32, %arg1: i32, %arg2: i32) -> (i32, i32) {
    %c0_i32 = arith.constant 0 : i32
    return %arg0, %arg2 : i32, i32
  }
  func.func @transform_1(%arg0: i32, %arg1: i32, %arg2: i32) -> (i32, i32) {
    %c0_i32 = arith.constant 0 : i32
    return %arg2, %arg1 : i32, i32
  }
  func.func @transform_2(%arg0: i32, %arg1: i32, %arg2: i32) -> (i32, i32) {
    %c0_i32 = arith.constant 0 : i32
    %c0_i32_0 = arith.constant 0 : i32
    return %c0_i32, %arg1 : i32, i32
  }
  func.func @transform_3(%arg0: i32, %arg1: i32, %arg2: i32) -> (i32, i32) {
    %c0_i32 = arith.constant 0 : i32
    %c0_i32_0 = arith.constant 0 : i32
    return %c0_i32, %arg1 : i32, i32
  }
  func.func @transform_4(%arg0: i32, %arg1: i32, %arg2: i32) -> (i32, i32) {
    %c0_i32 = arith.constant 0 : i32
    return %arg0, %arg1 : i32, i32
  }
}

module attributes {stable_mosaic.version = 11 : i64} {
  func.func @_fused_matmul_kernel(%arg0: i32, %arg1: i32, %arg2: i32, %arg3: memref<2x128xbf16, #tpu.memory_space<vmem>>, %arg4: memref<128x10xbf16, #tpu.memory_space<vmem>>, %arg5: memref<1x10xf32, #tpu.memory_space<vmem>>, %arg6: memref<2x10xf32, #tpu.memory_space<vmem>>, %arg7: memref<2x10xf32, #tpu.memory_space<vmem>>) attributes {dimension_semantics = [#tpu.dimension_semantics<parallel>, #tpu.dimension_semantics<parallel>, #tpu.dimension_semantics<arbitrary>], iteration_bounds = array<i64: 1, 1, 1>, scalar_prefetch = 0 : i64, scratch_operands = 1 : i64, tpu.core_type = #tpu.core_type<tc>, window_params = [{transform_indices = @transform_0, window_bounds = array<i64: 2, 128>}, {transform_indices = @transform_1, window_bounds = array<i64: 128, 10>}, {transform_indices = @transform_2, window_bounds = array<i64: 1, 10>}, {transform_indices = @transform_3, window_bounds = array<i64: 2, 10>}]} {
    %c0_i32 = arith.constant 0 : i32
    %0 = arith.cmpi eq, %arg2, %c0_i32 : i32
    %1 = arith.extui %0 : i1 to i32
    %c0_i32_0 = arith.constant 0 : i32
    %2 = arith.cmpi ne, %1, %c0_i32_0 : i32
    scf.if %2 {
      %cst_10 = arith.constant 0.000000e+00 : f32
      %12 = vector.broadcast %cst_10 : f32 to vector<2x10xf32>
      %c0_11 = arith.constant 0 : index
      %c0_12 = arith.constant 0 : index
      %13 = vector.load %arg7[%c0_11, %c0_12] : memref<2x10xf32, #tpu.memory_space<vmem>>, vector<2x10xf32>
      tpu.vector_store %arg7[%c0_11, %c0_12], %12 {strides = array<i32>} : memref<2x10xf32, #tpu.memory_space<vmem>>, vector<2x10xf32>,
    } else {
    }
    %c0 = arith.constant 0 : index
    %c0_1 = arith.constant 0 : index
    %3 = vector.load %arg4[%c0, %c0_1] : memref<128x10xbf16, #tpu.memory_space<vmem>>, vector<128x10xbf16>
    %c0_2 = arith.constant 0 : index
    %c0_3 = arith.constant 0 : index
    %4 = vector.load %arg7[%c0_2, %c0_3] : memref<2x10xf32, #tpu.memory_space<vmem>>, vector<2x10xf32>
    %c0_4 = arith.constant 0 : index
    %c0_5 = arith.constant 0 : index
    %5 = vector.load %arg3[%c0_4, %c0_5] : memref<2x128xbf16, #tpu.memory_space<vmem>>, vector<2x128xbf16>
    %cst = arith.constant dense<0.000000e+00> : vector<2x10xf32>
    %6 = tpu.matmul %5, %3, %cst {dimension_numbers = #tpu.dot_dimension_numbers<[1], [0], [0], [1], [0, 0, 1, 1], [], []>} : vector<2x128xbf16>, vector<128x10xbf16>, vector<2x10xf32> -> vector<2x10xf32>
    %7 = arith.addf %4, %6 : vector<2x10xf32>
    %c0_6 = arith.constant 0 : index
    %c0_7 = arith.constant 0 : index
    %8 = vector.load %arg7[%c0_6, %c0_7] : memref<2x10xf32, #tpu.memory_space<vmem>>, vector<2x10xf32>
    tpu.vector_store %arg7[%c0_6, %c0_7], %7 {strides = array<i32>} : memref<2x10xf32, #tpu.memory_space<vmem>>, vector<2x10xf32>,
    %c0_i32_8 = arith.constant 0 : i32
    %9 = arith.cmpi eq, %arg2, %c0_i32_8 : i32
    %10 = arith.extui %9 : i1 to i32
    %c0_i32_9 = arith.constant 0 : i32
    %11 = arith.cmpi ne, %10, %c0_i32_9 : i32
    scf.if %11 {
      %c0_10 = arith.constant 0 : index
      %c0_11 = arith.constant 0 : index
      %12 = vector.load %arg7[%c0_10, %c0_11] : memref<2x10xf32, #tpu.memory_space<vmem>>, vector<2x10xf32>
      %c0_12 = arith.constant 0 : index
      %c0_13 = arith.constant 0 : index
      %13 = vector.load %arg5[%c0_12, %c0_13] : memref<1x10xf32, #tpu.memory_space<vmem>>, vector<1x10xf32>
      %14 = vector.broadcast %13 : vector<1x10xf32> to vector<2x10xf32>
      %15 = arith.addf %12, %14 : vector<2x10xf32>
      %c0_14 = arith.constant 0 : index
      %c0_15 = arith.constant 0 : index
      %16 = vector.load %arg6[%c0_14, %c0_15] : memref<2x10xf32, #tpu.memory_space<vmem>>, vector<2x10xf32>
      tpu.vector_store %arg6[%c0_14, %c0_15], %15 {strides = array<i32>} : memref<2x10xf32, #tpu.memory_space<vmem>>, vector<2x10xf32>,
    } else {
    }
    return
  }
  func.func @transform_0(%arg0: i32, %arg1: i32, %arg2: i32) -> (i32, i32) {
    %c0_i32 = arith.constant 0 : i32
    return %arg0, %arg2 : i32, i32
  }
  func.func @transform_1(%arg0: i32, %arg1: i32, %arg2: i32) -> (i32, i32) {
    %c0_i32 = arith.constant 0 : i32
    return %arg2, %arg1 : i32, i32
  }
  func.func @transform_2(%arg0: i32, %arg1: i32, %arg2: i32) -> (i32, i32) {
    %c0_i32 = arith.constant 0 : i32
    %c0_i32_0 = arith.constant 0 : i32
    return %c0_i32, %arg1 : i32, i32
  }
  func.func @transform_3(%arg0: i32, %arg1: i32, %arg2: i32) -> (i32, i32) {
    %c0_i32 = arith.constant 0 : i32
    return %arg0, %arg1 : i32, i32
  }
}

</mosaic_0001>

<llo_original>
// kernel: convnet_forward.15
$region0: #{convnet_forward.15}
  #allocation0 [shape = 'u32[]', space=smem, size = 0x4, offset = 0x4, fixed_abs, tag = 'smem constant byte address 0x4 - core index']
  #allocation1 [shape = 'u32[144,128]{1,0:T(1,128)}', space=vmem, size = 0x12000, scoped, tag = 'internal scratch']
  %s0 = inlined_call_operand.vmem [shape: bf16[16,2,128], index: 0, kind: input, shape index: {}]
  %s1 = inlined_call_operand.vmem [shape: bf16[16,128], index: 1, kind: output, shape index: {}]
  %s2 = sld [smem:[#allocation0]]
  $region14: #{convnet_forward.15} parent=0
    _
  %s4 = ssub.s32 1, %s2
  %s5 = scalar_select 0, %s4, %s2
  // Predicated region
  $region2: #{convnet_forward.15} parent=0 // pred_check
    _
  $region3: #{convnet_forward.15} parent=0 // pred_check_branch
    %7 = sbr.rel (0) target = $region5
  $region4: #{convnet_forward.15} parent=0 // pred_region
    _
  $region5: #{convnet_forward.15} parent=0 // pred_fallthru
    _
  %v8 = vld [vmem:[%s0] sm:$0x1]
  %v9 = vld [vmem:[%s0 + $0x1] sm:$0x1]
  %v10 = vld [vmem:[%s0 + $0x2] sm:$0x1]
  %v11 = vld [vmem:[%s0 + $0x3] sm:$0x1]
  %v12 = vld [vmem:[%s0 + $0x4] sm:$0x1]
  %v13 = vld [vmem:[%s0 + $0x5] sm:$0x1]
  %v14 = vld [vmem:[%s0 + $0x6] sm:$0x1]
  %v15 = vld [vmem:[%s0 + $0x7] sm:$0x1]
  %v16 = vld [vmem:[%s0 + $0x8] sm:$0x1]
  %v17 = vld [vmem:[%s0 + $0x9] sm:$0x1]
  %v18 = vld [vmem:[%s0 + $0xa] sm:$0x1]
  %v19 = vld [vmem:[%s0 + $0xb] sm:$0x1]
  %v20 = vld [vmem:[%s0 + $0xc] sm:$0x1]
  %v21 = vld [vmem:[%s0 + $0xd] sm:$0x1]
  %v22 = vld [vmem:[%s0 + $0xe] sm:$0x1]
  %v23 = vld [vmem:[%s0 + $0xf] sm:$0x1]
  %v25 = vshrl.u32 %v8, 16
  %v27 = vrot.slane %v25, 7
  %v28 = vrot.slane %v27, 1
  %v30 = vshrl.u32 %v9, 16
  %v32 = vrot.slane %v30, 7
  %v33 = vrot.slane %v32, 1
  %v35 = vshrl.u32 %v10, 16
  %v37 = vrot.slane %v35, 7
  %v38 = vrot.slane %v37, 1
  %v40 = vshrl.u32 %v11, 16
  %v42 = vrot.slane %v40, 7
  %v43 = vrot.slane %v42, 1
  %v45 = vshrl.u32 %v12, 16
  %v47 = vrot.slane %v45, 7
  %v48 = vrot.slane %v47, 1
  %v50 = vshrl.u32 %v13, 16
  %v52 = vrot.slane %v50, 7
  %v53 = vrot.slane %v52, 1
  %v55 = vshrl.u32 %v14, 16
  %v57 = vrot.slane %v55, 7
  %v58 = vrot.slane %v57, 1
  %v60 = vshrl.u32 %v15, 16
  %v62 = vrot.slane %v60, 7
  %v63 = vrot.slane %v62, 1
  %v65 = vshrl.u32 %v16, 16
  %v67 = vrot.slane %v65, 7
  %v68 = vrot.slane %v67, 1
  %v70 = vshrl.u32 %v17, 16
  %v72 = vrot.slane %v70, 7
  %v73 = vrot.slane %v72, 1
  %v75 = vshrl.u32 %v18, 16
  %v77 = vrot.slane %v75, 7
  %v78 = vrot.slane %v77, 1
  %v80 = vshrl.u32 %v19, 16
  %v82 = vrot.slane %v80, 7
  %v83 = vrot.slane %v82, 1
  %v85 = vshrl.u32 %v20, 16
  %v87 = vrot.slane %v85, 7
  %v88 = vrot.slane %v87, 1
  %v90 = vshrl.u32 %v21, 16
  %v92 = vrot.slane %v90, 7
  %v93 = vrot.slane %v92, 1
  %v95 = vshrl.u32 %v22, 16
  %v97 = vrot.slane %v95, 7
  %v98 = vrot.slane %v97, 1
  %v100 = vshrl.u32 %v23, 16
  %v102 = vrot.slane %v100, 7
  %v103 = vrot.slane %v102, 1
  %v120 = vmax.bf16 %v8, %v28
  %v121 = vmax.bf16 %v9, %v33
  %v122 = vmax.bf16 %v10, %v38
  %v123 = vmax.bf16 %v11, %v43
  %v124 = vmax.bf16 %v12, %v48
  %v125 = vmax.bf16 %v13, %v53
  %v126 = vmax.bf16 %v14, %v58
  %v127 = vmax.bf16 %v15, %v63
  %v128 = vmax.bf16 %v16, %v68
  %v129 = vmax.bf16 %v17, %v73
  %v130 = vmax.bf16 %v18, %v78
  %v131 = vmax.bf16 %v19, %v83
  %v132 = vmax.bf16 %v20, %v88
  %v133 = vmax.bf16 %v21, %v93
  %v134 = vmax.bf16 %v22, %v98
  %v135 = vmax.bf16 %v23, %v103
  %v153 = vunpack.c.l.s4 1935823168
  %v154 = vunpack.c.0.s8 %v153
  %v155 = vlaneseq
  %v156 = vshrl.u32 %v155, 7
  %v157 = vsub.s32 %v154, %v156
  %v158 = vrot.slane %v120, %v157
  %v160 = vunpack.c.l.s4 1935823168
  %v161 = vunpack.c.0.s8 %v160
  %v162 = vlaneseq
  %v163 = vshrl.u32 %v162, 7
  %v164 = vsub.s32 %v161, %v163
  %v165 = vrot.slane %v158, %v164
  %v167 = vunpack.c.l.s4 1935823168
  %v168 = vunpack.c.0.s8 %v167
  %v169 = vlaneseq
  %v170 = vshrl.u32 %v169, 7
  %v171 = vsub.s32 %v168, %v170
  %v172 = vrot.slane %v121, %v171
  %v174 = vunpack.c.l.s4 1935823168
  %v175 = vunpack.c.0.s8 %v174
  %v176 = vlaneseq
  %v177 = vshrl.u32 %v176, 7
  %v178 = vsub.s32 %v175, %v177
  %v179 = vrot.slane %v172, %v178
  %v181 = vunpack.c.l.s4 1935823168
  %v182 = vunpack.c.0.s8 %v181
  %v183 = vlaneseq
  %v184 = vshrl.u32 %v183, 7
  %v185 = vsub.s32 %v182, %v184
  %v186 = vrot.slane %v122, %v185
  %v188 = vunpack.c.l.s4 1935823168
  %v189 = vunpack.c.0.s8 %v188
  %v190 = vlaneseq
  %v191 = vshrl.u32 %v190, 7
  %v192 = vsub.s32 %v189, %v191
  %v193 = vrot.slane %v186, %v192
  %v195 = vunpack.c.l.s4 1935823168
  %v196 = vunpack.c.0.s8 %v195
  %v197 = vlaneseq
  %v198 = vshrl.u32 %v197, 7
  %v199 = vsub.s32 %v196, %v198
  %v200 = vrot.slane %v123, %v199
  %v202 = vunpack.c.l.s4 1935823168
  %v203 = vunpack.c.0.s8 %v202
  %v204 = vlaneseq
  %v205 = vshrl.u32 %v204, 7
  %v206 = vsub.s32 %v203, %v205
  %v207 = vrot.slane %v200, %v206
  %v209 = vunpack.c.l.s4 1935823168
  %v210 = vunpack.c.0.s8 %v209
  %v211 = vlaneseq
  %v212 = vshrl.u32 %v211, 7
  %v213 = vsub.s32 %v210, %v212
  %v214 = vrot.slane %v124, %v213
  %v216 = vunpack.c.l.s4 1935823168
  %v217 = vunpack.c.0.s8 %v216
  %v218 = vlaneseq
  %v219 = vshrl.u32 %v218, 7
  %v220 = vsub.s32 %v217, %v219
  %v221 = vrot.slane %v214, %v220
  %v223 = vunpack.c.l.s4 1935823168
  %v224 = vunpack.c.0.s8 %v223
  %v225 = vlaneseq
  %v226 = vshrl.u32 %v225, 7
  %v227 = vsub.s32 %v224, %v226
  %v228 = vrot.slane %v125, %v227
  %v230 = vunpack.c.l.s4 1935823168
  %v231 = vunpack.c.0.s8 %v230
  %v232 = vlaneseq
  %v233 = vshrl.u32 %v232, 7
  %v234 = vsub.s32 %v231, %v233
  %v235 = vrot.slane %v228, %v234
  %v237 = vunpack.c.l.s4 1935823168
  %v238 = vunpack.c.0.s8 %v237
  %v239 = vlaneseq
  %v240 = vshrl.u32 %v239, 7
  %v241 = vsub.s32 %v238, %v240
  %v242 = vrot.slane %v126, %v241
  %v244 = vunpack.c.l.s4 1935823168
  %v245 = vunpack.c.0.s8 %v244
  %v246 = vlaneseq
  %v247 = vshrl.u32 %v246, 7
  %v248 = vsub.s32 %v245, %v247
  %v249 = vrot.slane %v242, %v248
  %v251 = vunpack.c.l.s4 1935823168
  %v252 = vunpack.c.0.s8 %v251
  %v253 = vlaneseq
  %v254 = vshrl.u32 %v253, 7
  %v255 = vsub.s32 %v252, %v254
  %v256 = vrot.slane %v127, %v255
  %v258 = vunpack.c.l.s4 1935823168
  %v259 = vunpack.c.0.s8 %v258
  %v260 = vlaneseq
  %v261 = vshrl.u32 %v260, 7
  %v262 = vsub.s32 %v259, %v261
  %v263 = vrot.slane %v256, %v262
  %v265 = vunpack.c.l.s4 1935823168
  %v266 = vunpack.c.0.s8 %v265
  %v267 = vlaneseq
  %v268 = vshrl.u32 %v267, 7
  %v269 = vsub.s32 %v266, %v268
  %v270 = vrot.slane %v128, %v269
  %v272 = vunpack.c.l.s4 1935823168
  %v273 = vunpack.c.0.s8 %v272
  %v274 = vlaneseq
  %v275 = vshrl.u32 %v274, 7
  %v276 = vsub.s32 %v273, %v275
  %v277 = vrot.slane %v270, %v276
  %v279 = vunpack.c.l.s4 1935823168
  %v280 = vunpack.c.0.s8 %v279
  %v281 = vlaneseq
  %v282 = vshrl.u32 %v281, 7
  %v283 = vsub.s32 %v280, %v282
  %v284 = vrot.slane %v129, %v283
  %v286 = vunpack.c.l.s4 1935823168
  %v287 = vunpack.c.0.s8 %v286
  %v288 = vlaneseq
  %v289 = vshrl.u32 %v288, 7
  %v290 = vsub.s32 %v287, %v289
  %v291 = vrot.slane %v284, %v290
  %v293 = vunpack.c.l.s4 1935823168
  %v294 = vunpack.c.0.s8 %v293
  %v295 = vlaneseq
  %v296 = vshrl.u32 %v295, 7
  %v297 = vsub.s32 %v294, %v296
  %v298 = vrot.slane %v130, %v297
  %v300 = vunpack.c.l.s4 1935823168
  %v301 = vunpack.c.0.s8 %v300
  %v302 = vlaneseq
  %v303 = vshrl.u32 %v302, 7
  %v304 = vsub.s32 %v301, %v303
  %v305 = vrot.slane %v298, %v304
  %v307 = vunpack.c.l.s4 1935823168
  %v308 = vunpack.c.0.s8 %v307
  %v309 = vlaneseq
  %v310 = vshrl.u32 %v309, 7
  %v311 = vsub.s32 %v308, %v310
  %v312 = vrot.slane %v131, %v311
  %v314 = vunpack.c.l.s4 1935823168
  %v315 = vunpack.c.0.s8 %v314
  %v316 = vlaneseq
  %v317 = vshrl.u32 %v316, 7
  %v318 = vsub.s32 %v315, %v317
  %v319 = vrot.slane %v312, %v318
  %v321 = vunpack.c.l.s4 1935823168
  %v322 = vunpack.c.0.s8 %v321
  %v323 = vlaneseq
  %v324 = vshrl.u32 %v323, 7
  %v325 = vsub.s32 %v322, %v324
  %v326 = vrot.slane %v132, %v325
  %v328 = vunpack.c.l.s4 1935823168
  %v329 = vunpack.c.0.s8 %v328
  %v330 = vlaneseq
  %v331 = vshrl.u32 %v330, 7
  %v332 = vsub.s32 %v329, %v331
  %v333 = vrot.slane %v326, %v332
  %v335 = vunpack.c.l.s4 1935823168
  %v336 = vunpack.c.0.s8 %v335
  %v337 = vlaneseq
  %v338 = vshrl.u32 %v337, 7
  %v339 = vsub.s32 %v336, %v338
  %v340 = vrot.slane %v133, %v339
  %v342 = vunpack.c.l.s4 1935823168
  %v343 = vunpack.c.0.s8 %v342
  %v344 = vlaneseq
  %v345 = vshrl.u32 %v344, 7
  %v346 = vsub.s32 %v343, %v345
  %v347 = vrot.slane %v340, %v346
  %v349 = vunpack.c.l.s4 1935823168
  %v350 = vunpack.c.0.s8 %v349
  %v351 = vlaneseq
  %v352 = vshrl.u32 %v351, 7
  %v353 = vsub.s32 %v350, %v352
  %v354 = vrot.slane %v134, %v353
  %v356 = vunpack.c.l.s4 1935823168
  %v357 = vunpack.c.0.s8 %v356
  %v358 = vlaneseq
  %v359 = vshrl.u32 %v358, 7
  %v360 = vsub.s32 %v357, %v359
  %v361 = vrot.slane %v354, %v360
  %v363 = vunpack.c.l.s4 1935823168
  %v364 = vunpack.c.0.s8 %v363
  %v365 = vlaneseq
  %v366 = vshrl.u32 %v365, 7
  %v367 = vsub.s32 %v364, %v366
  %v368 = vrot.slane %v135, %v367
  %v370 = vunpack.c.l.s4 1935823168
  %v371 = vunpack.c.0.s8 %v370
  %v372 = vlaneseq
  %v373 = vshrl.u32 %v372, 7
  %v374 = vsub.s32 %v371, %v373
  %v375 = vrot.slane %v368, %v374
  %v376 = vunpack.c.l.b16 %v165
  %v377 = vunpack.c.l.b16 %v179
  %v378 = vunpack.c.l.b16 %v193
  %v379 = vunpack.c.l.b16 %v207
  %v380 = vunpack.c.l.b16 %v221
  %v381 = vunpack.c.l.b16 %v235
  %v382 = vunpack.c.l.b16 %v249
  %v383 = vunpack.c.l.b16 %v263
  %v384 = vunpack.c.l.b16 %v277
  %v385 = vunpack.c.l.b16 %v291
  %v386 = vunpack.c.l.b16 %v305
  %v387 = vunpack.c.l.b16 %v319
  %v388 = vunpack.c.l.b16 %v333
  %v389 = vunpack.c.l.b16 %v347
  %v390 = vunpack.c.l.b16 %v361
  %v391 = vunpack.c.l.b16 %v375
  %v392 = vrot.slane %v377, 7
  %vm393 = vcmask 1041409
  %v394 = vsel %vm393, %v392, %v376
  %v395 = vrot.slane %v378, 6
  %vm396 = vcmask 1042434
  %v397 = vsel %vm396, %v395, %v394
  %v398 = vrot.slane %v379, 5
  %vm399 = vcmask 1043459
  %v400 = vsel %vm399, %v398, %v397
  %v401 = vrot.slane %v380, 4
  %vm402 = vcmask 1044484
  %v403 = vsel %vm402, %v401, %v400
  %v404 = vrot.slane %v381, 3
  %vm405 = vcmask 1045509
  %v406 = vsel %vm405, %v404, %v403
  %v407 = vrot.slane %v382, 2
  %vm408 = vcmask 1046534
  %v409 = vsel %vm408, %v407, %v406
  %v410 = vrot.slane %v383, 1
  %vm411 = vcmask 1047559
  %v412 = vsel %vm411, %v410, %v409
  %v413 = vrot.slane %v385, 7
  %v414 = vsel %vm393, %v413, %v384
  %v415 = vrot.slane %v386, 6
  %v416 = vsel %vm396, %v415, %v414
  %v417 = vrot.slane %v387, 5
  %v418 = vsel %vm399, %v417, %v416
  %v419 = vrot.slane %v388, 4
  %v420 = vsel %vm402, %v419, %v418
  %v421 = vrot.slane %v389, 3
  %v422 = vsel %vm405, %v421, %v420
  %v423 = vrot.slane %v390, 2
  %v424 = vsel %vm408, %v423, %v422
  %v425 = vrot.slane %v391, 1
  %v426 = vsel %vm411, %v425, %v424
  %v427 = vpack.c.b16 %v412, %v412
  %v428 = vpack.c.b16 %v426, %v426
  %431 = vst [vmem:[%s1] sm:$0xf] %v427
  %432 = vst [vmem:[%s1 + $0x4] sm:$0xf] %v428
  // Predicated region
  $region6: #{convnet_forward.15} parent=0 // pred_check
    _
  $region7: #{convnet_forward.15} parent=0 // pred_check_branch
    %434 = sbr.rel (0) target = $region9
  $region8: #{convnet_forward.15} parent=0 // pred_region
    _
  $region9: #{convnet_forward.15} parent=0 // pred_fallthru
    _
  // Predicated region
  $region10: #{convnet_forward.15} parent=0 // pred_check
    _
  $region11: #{convnet_forward.15} parent=0 // pred_check_branch
    %436 = sbr.rel (0) target = $region13
  $region12: #{convnet_forward.15} parent=0 // pred_region
    _
  $region13: #{convnet_forward.15} parent=0 // pred_fallthru
    _

// kernel: convnet_forward.13
$region0: #{convnet_forward.13}
  #allocation0 [shape = 'u32[]', space=smem, size = 0x4, offset = 0x4, fixed_abs, tag = 'smem constant byte address 0x4 - core index']
  #allocation1 [shape = 'u32[144,128]{1,0:T(1,128)}', space=vmem, size = 0x12000, scoped, tag = 'internal scratch']
  #allocation2 [shape = 'f32[256,16]{1,0:T(8,128)}', space=vmem, size = 0x20000, scoped, tag = 'scratch operand']
  %s0 = inlined_call_operand.vmem [shape: bf16[512,9], index: 0, kind: input, shape index: {}]
  %s1 = inlined_call_operand.vmem [shape: bf16[9,16], index: 1, kind: input, shape index: {}]
  %s2 = inlined_call_operand.vmem [shape: f32[1,16], index: 2, kind: input, shape index: {}]
  %s3 = inlined_call_operand.vmem [shape: f32[1,16], index: 3, kind: input, shape index: {}]
  %s4 = inlined_call_operand.vmem [shape: bf16[512,16], index: 4, kind: output, shape index: {}]
  %s5 = sld [smem:[#allocation0]]
  $region57: #{convnet_forward.13} parent=0
    _
  %s7 = ssub.s32 1, %s5
  %s8 = scalar_select 0, %s7, %s5
  loop: start=0, step=1, limit=4
  $region2: #{convnet_forward.13} parent=0 // loop_pre_header
    _
  $region3: #{convnet_forward.13} parent=0 // loop_header
    %s10 = sphi 0, %s14
    %p11 = scmp.ge.s32.totalorder %s10, 4
    %s17 = sphi 0, %s36
    %s18 = sphi 0, %s32
    %s19 = sphi 0, %s28
    %s20 = sphi 0, %s17
    %s21 = sphi 0, %s18
    %s22 = sphi 0, %s19
    %s23 = sphi 0, %s20
    %s24 = sphi 0, %s21
    %s25 = sphi 0, %s22
    %s41 = sphi 0, %s43
    %s44 = sphi 0, %s41
    %s45 = sphi 0, %s44
    %s61 = sphi 0, %s45
    %s69 = sphi 0, %s71
    %s72 = sphi 0, %s69
    %s73 = sphi 0, %s72
    %s89 = sphi 0, %s73
    %s95 = sphi 0, %s97
    %s98 = sphi 0, %s95
    %s99 = sphi 0, %s98
    %s115 = sphi 0, %s99
    %s121 = sphi 0, %s123
    %s124 = sphi 0, %s121
    %s125 = sphi 0, %s124
    %s141 = sphi 0, %s125
    %s149 = sphi 0, %s151
    %s152 = sphi 0, %s149
    %s153 = sphi 0, %s152
    %s169 = sphi 0, %s153
  $region4: #{convnet_forward.13} parent=0 // loop_header_branch
    %13 = sbr.rel (%p11) target = $region8
  $region5: #{convnet_forward.13} parent=0 // loop_body
    %s15 = ssub.s32 %s10, 1
    %s16 = ssub.s32 %s10, 2
    %s26 = sadd.s32 1, %s19
    %p27 = scmp.ge.s32.totalorder %s26, 1
    %s28 = scalar_select %p27, 0, %s26
    %s29 = sadd.s32 1, %s18
    %s30 = scalar_select %p27, %s29, %s18
    %p31 = scmp.ge.s32.totalorder %s30, 1
    %s32 = scalar_select %p31, 0, %s30
    %s33 = sadd.s32 1, %s17
    %s34 = scalar_select %p31, %s33, %s17
    %p35 = scmp.ge.s32.totalorder %s34, 2
    %s36 = scalar_select %p35, 0, %s34
    %s37 = ssub.s32 %s17, %s36
    %s38 = ssub.s32 %s19, %s28
    %s39 = sor.u32 %s37, %s38
    %p40 = scmp.eq.s32.totalorder %s39, 0
    %s42 = sadd.s32 %s41, 1
    %s43 = scalar_select %p40, %s41, %s42
    %p46 = pneg %p40
    %p47 = scmp.eq.s32.totalorder %s10, 1
    %p48 = por %p46, %p47
    %p49 = scmp.ne.s32.totalorder %s41, %s44
    %p50 = scmp.eq.s32.totalorder %s10, 0
    %p51 = por %p49, %p50
    %p52 = scmp.ne.s32.totalorder %s41, %s44
    %p53 = scmp.eq.s32.totalorder %s15, 1
    %p54 = por %p52, %p53
    %p55 = scmp.ne.s32.totalorder %s44, %s45
    %p56 = scmp.eq.s32.totalorder %s15, 0
    %p57 = por %p55, %p56
    %p58 = scmp.ne.s32.totalorder %s44, %s45
    %p59 = scmp.eq.s32.totalorder %s16, 1
    %p60 = por %p58, %p59
    %p62 = scmp.ne.s32.totalorder %s45, %s61
    %p63 = scmp.eq.s32.totalorder %s16, 0
    %p64 = por %p62, %p63
    %s65 = ssub.s32 %s19, %s28
    %s66 = ssub.s32 %s18, %s32
    %s67 = sor.u32 %s65, %s66
    %p68 = scmp.eq.s32.totalorder %s67, 0
    %s70 = sadd.s32 %s69, 1
    %s71 = scalar_select %p68, %s69, %s70
    %p74 = pneg %p68
    %p75 = scmp.eq.s32.totalorder %s10, 1
    %p76 = por %p74, %p75
    %p77 = scmp.ne.s32.totalorder %s69, %s72
    %p78 = scmp.eq.s32.totalorder %s10, 0
    %p79 = por %p77, %p78
    %p80 = scmp.ne.s32.totalorder %s69, %s72
    %p81 = scmp.eq.s32.totalorder %s15, 1
    %p82 = por %p80, %p81
    %p83 = scmp.ne.s32.totalorder %s72, %s73
    %p84 = scmp.eq.s32.totalorder %s15, 0
    %p85 = por %p83, %p84
    %p86 = scmp.ne.s32.totalorder %s72, %s73
    %p87 = scmp.eq.s32.totalorder %s16, 1
    %p88 = por %p86, %p87
    %p90 = scmp.ne.s32.totalorder %s73, %s89
    %p91 = scmp.eq.s32.totalorder %s16, 0
    %p92 = por %p90, %p91
    %s93 = ssub.s32 %s18, %s32
    %p94 = scmp.eq.s32.totalorder %s93, 0
    %s96 = sadd.s32 %s95, 1
    %s97 = scalar_select %p94, %s95, %s96
    %p100 = pneg %p94
    %p101 = scmp.eq.s32.totalorder %s10, 1
    %p102 = por %p100, %p101
    %p103 = scmp.ne.s32.totalorder %s95, %s98
    %p104 = scmp.eq.s32.totalorder %s10, 0
    %p105 = por %p103, %p104
    %p106 = scmp.ne.s32.totalorder %s95, %s98
    %p107 = scmp.eq.s32.totalorder %s15, 1
    %p108 = por %p106, %p107
    %p109 = scmp.ne.s32.totalorder %s98, %s99
    %p110 = scmp.eq.s32.totalorder %s15, 0
    %p111 = por %p109, %p110
    %p112 = scmp.ne.s32.totalorder %s98, %s99
    %p113 = scmp.eq.s32.totalorder %s16, 1
    %p114 = por %p112, %p113
    %p116 = scmp.ne.s32.totalorder %s99, %s115
    %p117 = scmp.eq.s32.totalorder %s16, 0
    %p118 = por %p116, %p117
    %s119 = ssub.s32 %s18, %s32
    %p120 = scmp.eq.s32.totalorder %s119, 0
    %s122 = sadd.s32 %s121, 1
    %s123 = scalar_select %p120, %s121, %s122
    %p126 = pneg %p120
    %p127 = scmp.eq.s32.totalorder %s10, 1
    %p128 = por %p126, %p127
    %p129 = scmp.ne.s32.totalorder %s121, %s124
    %p130 = scmp.eq.s32.totalorder %s10, 0
    %p131 = por %p129, %p130
    %p132 = scmp.ne.s32.totalorder %s121, %s124
    %p133 = scmp.eq.s32.totalorder %s15, 1
    %p134 = por %p132, %p133
    %p135 = scmp.ne.s32.totalorder %s124, %s125
    %p136 = scmp.eq.s32.totalorder %s15, 0
    %p137 = por %p135, %p136
    %p138 = scmp.ne.s32.totalorder %s124, %s125
    %p139 = scmp.eq.s32.totalorder %s16, 1
    %p140 = por %p138, %p139
    %p142 = scmp.ne.s32.totalorder %s125, %s141
    %p143 = scmp.eq.s32.totalorder %s16, 0
    %p144 = por %p142, %p143
    %s145 = ssub.s32 %s17, %s36
    %s146 = ssub.s32 %s18, %s32
    %s147 = sor.u32 %s145, %s146
    %p148 = scmp.eq.s32.totalorder %s147, 0
    %s150 = sadd.s32 %s149, 1
    %s151 = scalar_select %p148, %s149, %s150
    %p154 = pneg %p148
    %p155 = scmp.eq.s32.totalorder %s10, 1
    %p156 = por %p154, %p155
    %p157 = scmp.ne.s32.totalorder %s149, %s152
    %p158 = scmp.eq.s32.totalorder %s10, 0
    %p159 = por %p157, %p158
    %p160 = scmp.ne.s32.totalorder %s149, %s152
    %p161 = scmp.eq.s32.totalorder %s15, 1
    %p162 = por %p160, %p161
    %p163 = scmp.ne.s32.totalorder %s152, %s153
    %p164 = scmp.eq.s32.totalorder %s15, 0
    %p165 = por %p163, %p164
    %p166 = scmp.ne.s32.totalorder %s152, %s153
    %p167 = scmp.eq.s32.totalorder %s16, 1
    %p168 = por %p166, %p167
    %p170 = scmp.ne.s32.totalorder %s153, %s169
    %p171 = scmp.eq.s32.totalorder %s16, 0
    %p172 = por %p170, %p171
    %p173 = scmp.le.s32.totalorder 1, %s10
    %p174 = scmp.lt.s32.totalorder %s10, 3
    %p175 = pnand %p173, %p174
    %p176 = pneg %p175
    // Predicated region
    $region9: #{convnet_forward.13} parent=5 // pred_check
      _
    $region10: #{convnet_forward.13} parent=5 // pred_check_branch
      %178 = sbr.rel (%p175) target = $region12
    $region11: #{convnet_forward.13} parent=5 // pred_region
      %s179 = ssub.s32 %s10, 1
      // Predicated region
      $region13: #{convnet_forward.13} parent=11 // pred_check
        %p180 = pneg %p85
      $region14: #{convnet_forward.13} parent=11 // pred_check_branch
        %182 = sbr.rel (%p180) target = $region16
      $region15: #{convnet_forward.13} parent=11 // pred_region
        %s183 = smul.u32 2, %s22
        %p184 = scmp.lt.s32.totalorder %s183, 1
        %s185 = scalar_select %p184, %s183, 1
        %p186 = scmp.lt.s32.totalorder %s21, 0
        %s187 = scalar_select %p186, %s21, 0
        %s188 = sadd.s32 %s187, %s185
        %s189 = smul.addr %s188, 4
        %s190 = scalar_lea.vmem %s1, %s189
        %s191 = smul.u32 2, %s22
      $region16: #{convnet_forward.13} parent=11 // pred_fallthru
        _
      // Predicated region
      $region17: #{convnet_forward.13} parent=11 // pred_check
        %p192 = pneg %p111
      $region18: #{convnet_forward.13} parent=11 // pred_check_branch
        %194 = sbr.rel (%p192) target = $region20
      $region19: #{convnet_forward.13} parent=11 // pred_region
        %p195 = scmp.lt.s32.totalorder %s21, 0
        %s196 = scalar_select %p195, %s21, 0
        %s197 = scalar_lea.vmem %s2, %s196
      $region20: #{convnet_forward.13} parent=11 // pred_fallthru
        _
      // Predicated region
      $region21: #{convnet_forward.13} parent=11 // pred_check
        %p198 = pneg %p137
      $region22: #{convnet_forward.13} parent=11 // pred_check_branch
        %200 = sbr.rel (%p198) target = $region24
      $region23: #{convnet_forward.13} parent=11 // pred_region
        %p201 = scmp.lt.s32.totalorder %s21, 0
        %s202 = scalar_select %p201, %s21, 0
        %s203 = scalar_lea.vmem %s3, %s202
      $region24: #{convnet_forward.13} parent=11 // pred_fallthru
        _
    $region12: #{convnet_forward.13} parent=5 // pred_fallthru
      _
    %p204 = scmp.lt.s32.totalorder %s10, 2
    // Predicated region
    $region25: #{convnet_forward.13} parent=5 // pred_check
      %p205 = pneg %p204
    $region26: #{convnet_forward.13} parent=5 // pred_check_branch
      %207 = sbr.rel (%p205) target = $region28
    $region27: #{convnet_forward.13} parent=5 // pred_region
      // Predicated region
      $region29: #{convnet_forward.13} parent=27 // pred_check
        %p208 = pneg %p51
      $region30: #{convnet_forward.13} parent=27 // pred_check_branch
        %210 = sbr.rel (%p208) target = $region32
      $region31: #{convnet_forward.13} parent=27 // pred_region
        %s211 = smul.u32 32, %s17
        %p212 = scmp.lt.s32.totalorder %s211, 63
        %s213 = scalar_select %p212, %s211, 63
        %p214 = scmp.lt.s32.totalorder %s19, 0
        %s215 = scalar_select %p214, %s19, 0
        %s216 = sadd.s32 %s215, %s213
        %s217 = smul.addr %s216, 4
        %s218 = scalar_lea.vmem %s0, %s217
        %s219 = smul.u32 32, %s17
      $region32: #{convnet_forward.13} parent=27 // pred_fallthru
        _
    $region28: #{convnet_forward.13} parent=5 // pred_fallthru
      _
    %p220 = scmp.le.s32.totalorder 1, %s10
    %p221 = scmp.lt.s32.totalorder %s10, 3
    %p222 = pnand %p220, %p221
    %p223 = pneg %p222
    // Predicated region
    $region33: #{convnet_forward.13} parent=5 // pred_check
      _
    $region34: #{convnet_forward.13} parent=5 // pred_check_branch
      %225 = sbr.rel (%p222) target = $region36
    $region35: #{convnet_forward.13} parent=5 // pred_region
      %s226 = ssub.s32 %s10, 1
      %s227 = smul.u32 32, %s20
      %p228 = scmp.lt.s32.totalorder %s227, 63
      %s229 = scalar_select %p228, %s227, 63
      %p230 = scmp.lt.s32.totalorder %s22, 0
      %s231 = scalar_select %p230, %s22, 0
      %s232 = sadd.s32 %s231, %s229
      %s233 = smul.addr %s232, 4
      %s234 = scalar_lea.vmem %s0, %s233
      %p235 = pneg %p57
      %p236 = pneg %p54
      %s237 = smul.u32 2, %s22
      %p238 = scmp.lt.s32.totalorder %s237, 1
      %s239 = scalar_select %p238, %s237, 1
      %p240 = scmp.lt.s32.totalorder %s21, 0
      %s241 = scalar_select %p240, %s21, 0
      %s242 = sadd.s32 %s241, %s239
      %s243 = smul.addr %s242, 4
      %s244 = scalar_lea.vmem %s1, %s243
      %p245 = pneg %p85
      %p246 = pneg %p82
      %p247 = scmp.lt.s32.totalorder %s21, 0
      %s248 = scalar_select %p247, %s21, 0
      %s249 = scalar_lea.vmem %s2, %s248
      %p250 = pneg %p111
      %p251 = pneg %p108
      %p252 = scmp.lt.s32.totalorder %s21, 0
      %s253 = scalar_select %p252, %s21, 0
      %s254 = scalar_lea.vmem %s3, %s253
      %p255 = pneg %p137
      %p256 = pneg %p134
      %p257 = pneg %p165
      %p258 = pneg %p162
      %s259 = smul.u32 32, %s20
      %p260 = scmp.lt.s32.totalorder %s259, 63
      %s261 = scalar_select %p260, %s259, 63
      %p262 = scmp.lt.s32.totalorder %s21, 0
      %s263 = scalar_select %p262, %s21, 0
      %s264 = sadd.s32 %s263, %s261
      %s265 = smul.addr %s264, 4
      %s266 = scalar_lea.vmem %s4, %s265
      %s267 = smul.u32 32, %s20
      %p268 = scmp.lt.s32.totalorder %s267, 63
      %s269 = scalar_select %p268, %s267, 63
      %p270 = scmp.lt.s32.totalorder %s22, 0
      %s271 = scalar_select %p270, %s22, 0
      %s272 = sadd.s32 %s271, %s269
      %s273 = smul.addr %s272, 4
      %s274 = scalar_lea.vmem %s0, %s273
      %s275 = smul.u32 32, %s20
      %s276 = smul.u32 2, %s22
      %p277 = scmp.lt.s32.totalorder %s276, 1
      %s278 = scalar_select %p277, %s276, 1
      %p279 = scmp.lt.s32.totalorder %s21, 0
      %s280 = scalar_select %p279, %s21, 0
      %s281 = sadd.s32 %s280, %s278
      %s282 = smul.addr %s281, 4
      %s283 = scalar_lea.vmem %s1, %s282
      %s284 = smul.u32 2, %s22
      %p285 = scmp.lt.s32.totalorder %s21, 0
      %s286 = scalar_select %p285, %s21, 0
      %s287 = scalar_lea.vmem %s2, %s286
      %p288 = scmp.lt.s32.totalorder %s21, 0
      %s289 = scalar_select %p288, %s21, 0
      %s290 = scalar_lea.vmem %s3, %s289
      %s291 = smul.u32 32, %s20
      %p292 = scmp.lt.s32.totalorder %s291, 63
      %s293 = scalar_select %p292, %s291, 63
      %p294 = scmp.lt.s32.totalorder %s21, 0
      %s295 = scalar_select %p294, %s21, 0
      %s296 = sadd.s32 %s295, %s293
      %s297 = smul.addr %s296, 4
      %s298 = scalar_lea.vmem %s4, %s297
      %s299 = smul.u32 32, %s20
      %p301 = scmp.eq.s32.totalorder %s22, 0
      // Predicated region
      $region37: #{convnet_forward.13} parent=35 // pred_check
        %p302 = pneg %p301
      $region38: #{convnet_forward.13} parent=35 // pred_check_branch
        %304 = sbr.rel (%p302) target = $region40
      $region39: #{convnet_forward.13} parent=35 // pred_region
        %vm305 = vcmask 130048
        %306 = vst.msk [vmem:[#allocation2] sm:$0xff] %vm305, 0.0
        %307 = vst.msk [vmem:[#allocation2 + $0x8] sm:$0xff] %vm305, 0.0
        %308 = vst.msk [vmem:[#allocation2 + $0x10] sm:$0xff] %vm305, 0.0
        %309 = vst.msk [vmem:[#allocation2 + $0x18] sm:$0xff] %vm305, 0.0
        %310 = vst.msk [vmem:[#allocation2 + $0x20] sm:$0xff] %vm305, 0.0
        %311 = vst.msk [vmem:[#allocation2 + $0x28] sm:$0xff] %vm305, 0.0
        %312 = vst.msk [vmem:[#allocation2 + $0x30] sm:$0xff] %vm305, 0.0
        %313 = vst.msk [vmem:[#allocation2 + $0x38] sm:$0xff] %vm305, 0.0
        %314 = vst.msk [vmem:[#allocation2 + $0x40] sm:$0xff] %vm305, 0.0
        %315 = vst.msk [vmem:[#allocation2 + $0x48] sm:$0xff] %vm305, 0.0
        %316 = vst.msk [vmem:[#allocation2 + $0x50] sm:$0xff] %vm305, 0.0
        %317 = vst.msk [vmem:[#allocation2 + $0x58] sm:$0xff] %vm305, 0.0
        %318 = vst.msk [vmem:[#allocation2 + $0x60] sm:$0xff] %vm305, 0.0
        %319 = vst.msk [vmem:[#allocation2 + $0x68] sm:$0xff] %vm305, 0.0
        %320 = vst.msk [vmem:[#allocation2 + $0x70] sm:$0xff] %vm305, 0.0
        %321 = vst.msk [vmem:[#allocation2 + $0x78] sm:$0xff] %vm305, 0.0
        %322 = vst.msk [vmem:[#allocation2 + $0x80] sm:$0xff] %vm305, 0.0
        %323 = vst.msk [vmem:[#allocation2 + $0x88] sm:$0xff] %vm305, 0.0
        %324 = vst.msk [vmem:[#allocation2 + $0x90] sm:$0xff] %vm305, 0.0
        %325 = vst.msk [vmem:[#allocation2 + $0x98] sm:$0xff] %vm305, 0.0
        %326 = vst.msk [vmem:[#allocation2 + $0xa0] sm:$0xff] %vm305, 0.0
        %327 = vst.msk [vmem:[#allocation2 + $0xa8] sm:$0xff] %vm305, 0.0
        %328 = vst.msk [vmem:[#allocation2 + $0xb0] sm:$0xff] %vm305, 0.0
        %329 = vst.msk [vmem:[#allocation2 + $0xb8] sm:$0xff] %vm305, 0.0
        %330 = vst.msk [vmem:[#allocation2 + $0xc0] sm:$0xff] %vm305, 0.0
        %331 = vst.msk [vmem:[#allocation2 + $0xc8] sm:$0xff] %vm305, 0.0
        %332 = vst.msk [vmem:[#allocation2 + $0xd0] sm:$0xff] %vm305, 0.0
        %333 = vst.msk [vmem:[#allocation2 + $0xd8] sm:$0xff] %vm305, 0.0
        %334 = vst.msk [vmem:[#allocation2 + $0xe0] sm:$0xff] %vm305, 0.0
        %335 = vst.msk [vmem:[#allocation2 + $0xe8] sm:$0xff] %vm305, 0.0
        %336 = vst.msk [vmem:[#allocation2 + $0xf0] sm:$0xff] %vm305, 0.0
        %337 = vst.msk [vmem:[#allocation2 + $0xf8] sm:$0xff] %vm305, 0.0
      $region40: #{convnet_forward.13} parent=35 // pred_fallthru
        _
      %v338 = vld [vmem:[%s283] sm:$0xf]
      %v339 = vld [vmem:[%s283 + $0x4] sm:$0x1]
      %v340 = vld [vmem:[#allocation2] sm:$0xff]
      %v341 = vld [vmem:[#allocation2 + $0x8] sm:$0xff]
      %v342 = vld [vmem:[#allocation2 + $0x10] sm:$0xff]
      %v343 = vld [vmem:[#allocation2 + $0x18] sm:$0xff]
      %v344 = vld [vmem:[#allocation2 + $0x20] sm:$0xff]
      %v345 = vld [vmem:[#allocation2 + $0x28] sm:$0xff]
      %v346 = vld [vmem:[#allocation2 + $0x30] sm:$0xff]
      %v347 = vld [vmem:[#allocation2 + $0x38] sm:$0xff]
      %v348 = vld [vmem:[#allocation2 + $0x40] sm:$0xff]
      %v349 = vld [vmem:[#allocation2 + $0x48] sm:$0xff]
      %v350 = vld [vmem:[#allocation2 + $0x50] sm:$0xff]
      %v351 = vld [vmem:[#allocation2 + $0x58] sm:$0xff]
      %v352 = vld [vmem:[#allocation2 + $0x60] sm:$0xff]
      %v353 = vld [vmem:[#allocation2 + $0x68] sm:$0xff]
      %v354 = vld [vmem:[#allocation2 + $0x70] sm:$0xff]
      %v355 = vld [vmem:[#allocation2 + $0x78] sm:$0xff]
      %v356 = vld [vmem:[#allocation2 + $0x80] sm:$0xff]
      %v357 = vld [vmem:[#allocation2 + $0x88] sm:$0xff]
      %v358 = vld [vmem:[#allocation2 + $0x90] sm:$0xff]
      %v359 = vld [vmem:[#allocation2 + $0x98] sm:$0xff]
      %v360 = vld [vmem:[#allocation2 + $0xa0] sm:$0xff]
      %v361 = vld [vmem:[#allocation2 + $0xa8] sm:$0xff]
      %v362 = vld [vmem:[#allocation2 + $0xb0] sm:$0xff]
      %v363 = vld [vmem:[#allocation2 + $0xb8] sm:$0xff]
      %v364 = vld [vmem:[#allocation2 + $0xc0] sm:$0xff]
      %v365 = vld [vmem:[#allocation2 + $0xc8] sm:$0xff]
      %v366 = vld [vmem:[#allocation2 + $0xd0] sm:$0xff]
      %v367 = vld [vmem:[#allocation2 + $0xd8] sm:$0xff]
      %v368 = vld [vmem:[#allocation2 + $0xe0] sm:$0xff]
      %v369 = vld [vmem:[#allocation2 + $0xe8] sm:$0xff]
      %v370 = vld [vmem:[#allocation2 + $0xf0] sm:$0xff]
      %v371 = vld [vmem:[#allocation2 + $0xf8] sm:$0xff]
      %v372 = vld [vmem:[%s274] sm:$0xf]
      %v373 = vld [vmem:[%s274 + $0x4] sm:$0xf]
      %v374 = vld [vmem:[%s274 + $0x8] sm:$0xf]
      %v375 = vld [vmem:[%s274 + $0xc] sm:$0xf]
      %v376 = vld [vmem:[%s274 + $0x10] sm:$0xf]
      %v377 = vld [vmem:[%s274 + $0x14] sm:$0xf]
      %v378 = vld [vmem:[%s274 + $0x18] sm:$0xf]
      %v379 = vld [vmem:[%s274 + $0x1c] sm:$0xf]
      %v380 = vld [vmem:[%s274 + $0x20] sm:$0xf]
      %v381 = vld [vmem:[%s274 + $0x24] sm:$0xf]
      %v382 = vld [vmem:[%s274 + $0x28] sm:$0xf]
      %v383 = vld [vmem:[%s274 + $0x2c] sm:$0xf]
      %v384 = vld [vmem:[%s274 + $0x30] sm:$0xf]
      %v385 = vld [vmem:[%s274 + $0x34] sm:$0xf]
      %v386 = vld [vmem:[%s274 + $0x38] sm:$0xf]
      %v387 = vld [vmem:[%s274 + $0x3c] sm:$0xf]
      %v388 = vld [vmem:[%s274 + $0x40] sm:$0xf]
      %v389 = vld [vmem:[%s274 + $0x44] sm:$0xf]
      %v390 = vld [vmem:[%s274 + $0x48] sm:$0xf]
      %v391 = vld [vmem:[%s274 + $0x4c] sm:$0xf]
      %v392 = vld [vmem:[%s274 + $0x50] sm:$0xf]
      %v393 = vld [vmem:[%s274 + $0x54] sm:$0xf]
      %v394 = vld [vmem:[%s274 + $0x58] sm:$0xf]
      %v395 = vld [vmem:[%s274 + $0x5c] sm:$0xf]
      %v396 = vld [vmem:[%s274 + $0x60] sm:$0xf]
      %v397 = vld [vmem:[%s274 + $0x64] sm:$0xf]
      %v398 = vld [vmem:[%s274 + $0x68] sm:$0xf]
      %v399 = vld [vmem:[%s274 + $0x6c] sm:$0xf]
      %v400 = vld [vmem:[%s274 + $0x70] sm:$0xf]
      %v401 = vld [vmem:[%s274 + $0x74] sm:$0xf]
      %v402 = vld [vmem:[%s274 + $0x78] sm:$0xf]
      %v403 = vld [vmem:[%s274 + $0x7c] sm:$0xf]
      %v436 = vunpack.c.l.b16 %v372
      %v437 = vunpack.c.l.b16 %v373
      %v438 = vunpack.c.l.b16 %v374
      %v439 = vunpack.c.l.b16 %v375
      %v440 = vunpack.c.l.b16 %v376
      %v441 = vunpack.c.l.b16 %v377
      %v442 = vunpack.c.l.b16 %v378
      %v443 = vunpack.c.l.b16 %v379
      %v444 = vunpack.c.l.b16 %v380
      %v445 = vunpack.c.l.b16 %v381
      %v446 = vunpack.c.l.b16 %v382
      %v447 = vunpack.c.l.b16 %v383
      %v448 = vunpack.c.l.b16 %v384
      %v449 = vunpack.c.l.b16 %v385
      %v450 = vunpack.c.l.b16 %v386
      %v451 = vunpack.c.l.b16 %v387
      %v452 = vunpack.c.l.b16 %v388
      %v453 = vunpack.c.l.b16 %v389
      %v454 = vunpack.c.l.b16 %v390
      %v455 = vunpack.c.l.b16 %v391
      %v456 = vunpack.c.l.b16 %v392
      %v457 = vunpack.c.l.b16 %v393
      %v458 = vunpack.c.l.b16 %v394
      %v459 = vunpack.c.l.b16 %v395
      %v460 = vunpack.c.l.b16 %v396
      %v461 = vunpack.c.l.b16 %v397
      %v462 = vunpack.c.l.b16 %v398
      %v463 = vunpack.c.l.b16 %v399
      %v464 = vunpack.c.l.b16 %v400
      %v465 = vunpack.c.l.b16 %v401
      %v466 = vunpack.c.l.b16 %v402
      %v467 = vunpack.c.l.b16 %v403
      %v468 = vpack.c.b16 %v437, %v436
      %v469 = vpack.c.b16 %v439, %v438
      %v470 = vpack.c.b16 %v441, %v440
      %v471 = vpack.c.b16 %v443, %v442
      %v472 = vpack.c.b16 %v445, %v444
      %v473 = vpack.c.b16 %v447, %v446
      %v474 = vpack.c.b16 %v449, %v448
      %v475 = vpack.c.b16 %v451, %v450
      %v476 = vpack.c.b16 %v453, %v452
      %v477 = vpack.c.b16 %v455, %v454
      %v478 = vpack.c.b16 %v457, %v456
      %v479 = vpack.c.b16 %v459, %v458
      %v480 = vpack.c.b16 %v461, %v460
      %v481 = vpack.c.b16 %v463, %v462
      %v482 = vpack.c.b16 %v465, %v464
      %v483 = vpack.c.b16 %v467, %v466
      %v486 = vunpack.c.l.b16 %v338
      %v487 = vunpack.c.l.b16 %v339
      %v488 = vpack.c.b16 %v487, %v486
      %vm489 = vcmask 72704
      %v491 = vsel %vm489, %v468, 0
      %v494 = vsel %vm489, %v469, 0
      %v497 = vsel %vm489, %v470, 0
      %v500 = vsel %vm489, %v471, 0
      %v503 = vsel %vm489, %v472, 0
      %v506 = vsel %vm489, %v473, 0
      %v509 = vsel %vm489, %v474, 0
      %v512 = vsel %vm489, %v475, 0
      %v515 = vsel %vm489, %v476, 0
      %v518 = vsel %vm489, %v477, 0
      %v521 = vsel %vm489, %v478, 0
      %v524 = vsel %vm489, %v479, 0
      %v527 = vsel %vm489, %v480, 0
      %v530 = vsel %vm489, %v481, 0
      %v533 = vsel %vm489, %v482, 0
      %v536 = vsel %vm489, %v483, 0
      %vm538 = vcmask 1043456
      %vm539 = vcmask 1044480
      %v540 = vsel %vm538, 4294967295, 65535
      %v541 = vsel %vm539, %v540, 0
      %v543 = vand.u32 %v488, %v541
      %545 = vmatprep.subr.bf16.mxu0 0
      %546 = vmatpush1.bf16.msra.mxu0 0
      %547 = vmatprep.subr.bf16.mxu0 0
      %548 = vmatpush1.bf16.msra.mxu0 0
      %549 = vmatprep.subr.bf16.mxu0 0
      %550 = vmatpush1.bf16.msra.mxu0 0
      %551 = vmatprep.subr.bf16.mxu0 0
      %552 = vmatpush1.bf16.msra.mxu0 0
      %553 = vmatprep.subr.bf16.mxu0 0
      %554 = vmatpush1.bf16.msra.mxu0 0
      %555 = vmatprep.subr.bf16.mxu0 0
      %556 = vmatpush1.bf16.msra.mxu0 0
      %557 = vmatprep.subr.bf16.mxu0 0
      %558 = vmatpush1.bf16.msra.mxu0 0
      %559 = vmatprep.subr.bf16.mxu0 0
      %560 = vmatpush1.bf16.msra.mxu0 %v543
      %561 = vmatprep.subr.bf16.mxu0 0
      %562 = vmatpush2.bf16.msra.mxu0 0
      %563 = vmatprep.subr.bf16.mxu0 0
      %564 = vmatpush2.bf16.msra.mxu0 0
      %565 = vmatprep.subr.bf16.mxu0 0
      %566 = vmatpush2.bf16.msra.mxu0 0
      %567 = vmatprep.subr.bf16.mxu0 0
      %568 = vmatpush2.bf16.msra.mxu0 0
      %569 = vmatprep.subr.bf16.mxu0 0
      %570 = vmatpush2.bf16.msra.mxu0 0
      %571 = vmatprep.subr.bf16.mxu0 0
      %572 = vmatpush2.bf16.msra.mxu0 0
      %573 = vmatprep.subr.bf16.mxu0 0
      %574 = vmatpush2.bf16.msra.mxu0 0
      %575 = vmatprep.subr.bf16.mxu0 0
      %576 = vmatpush2.bf16.msra.mxu0 0
      %577 = vmatprep.mubr.bf16.mxu0 0
      %578 = vmatmul.mubr.bf16.gmra.mxu0 %v491
      %v579 = vpop.f32.mrf.mxu0
      %v580 = vadd.f32 0.0, %v579
      %v581 = vpop.f32.mrf.mxu0
      %v582 = vpop.f32.mrf.mxu0
      %v583 = vadd.f32 0.0, %v582
      %v584 = vpop.f32.mrf.mxu0
      %585 = vmatprep.mubr.bf16.mxu0 0
      %586 = vmatmul.mubr.bf16.gmra.mxu0 %v494
      %v587 = vpop.f32.mrf.mxu0
      %v588 = vadd.f32 0.0, %v587
      %v589 = vpop.f32.mrf.mxu0
      %v590 = vpop.f32.mrf.mxu0
      %v591 = vadd.f32 0.0, %v590
      %v592 = vpop.f32.mrf.mxu0
      %593 = vmatprep.mubr.bf16.mxu0 0
      %594 = vmatmul.mubr.bf16.gmra.mxu0 %v497
      %v595 = vpop.f32.mrf.mxu0
      %v596 = vadd.f32 0.0, %v595
      %v597 = vpop.f32.mrf.mxu0
      %v598 = vpop.f32.mrf.mxu0
      %v599 = vadd.f32 0.0, %v598
      %v600 = vpop.f32.mrf.mxu0
      %601 = vmatprep.mubr.bf16.mxu0 0
      %602 = vmatmul.mubr.bf16.gmra.mxu0 %v500
      %v603 = vpop.f32.mrf.mxu0
      %v604 = vadd.f32 0.0, %v603
      %v605 = vpop.f32.mrf.mxu0
      %v606 = vpop.f32.mrf.mxu0
      %v607 = vadd.f32 0.0, %v606
      %v608 = vpop.f32.mrf.mxu0
      %609 = vmatprep.mubr.bf16.mxu0 0
      %610 = vmatmul.mubr.bf16.gmra.mxu0 %v503
      %v611 = vpop.f32.mrf.mxu0
      %v612 = vadd.f32 0.0, %v611
      %v613 = vpop.f32.mrf.mxu0
      %v614 = vpop.f32.mrf.mxu0
      %v615 = vadd.f32 0.0, %v614
      %v616 = vpop.f32.mrf.mxu0
      %617 = vmatprep.mubr.bf16.mxu0 0
      %618 = vmatmul.mubr.bf16.gmra.mxu0 %v506
      %v619 = vpop.f32.mrf.mxu0
      %v620 = vadd.f32 0.0, %v619
      %v621 = vpop.f32.mrf.mxu0
      %v622 = vpop.f32.mrf.mxu0
      %v623 = vadd.f32 0.0, %v622
      %v624 = vpop.f32.mrf.mxu0
      %625 = vmatprep.mubr.bf16.mxu0 0
      %626 = vmatmul.mubr.bf16.gmra.mxu0 %v509
      %v627 = vpop.f32.mrf.mxu0
      %v628 = vadd.f32 0.0, %v627
      %v629 = vpop.f32.mrf.mxu0
      %v630 = vpop.f32.mrf.mxu0
      %v631 = vadd.f32 0.0, %v630
      %v632 = vpop.f32.mrf.mxu0
      %633 = vmatprep.mubr.bf16.mxu0 0
      %634 = vmatmul.mubr.bf16.gmra.mxu0 %v512
      %v635 = vpop.f32.mrf.mxu0
      %v636 = vadd.f32 0.0, %v635
      %v637 = vpop.f32.mrf.mxu0
      %v638 = vpop.f32.mrf.mxu0
      %v639 = vadd.f32 0.0, %v638
      %v640 = vpop.f32.mrf.mxu0
      %641 = vmatprep.mubr.bf16.mxu0 0
      %642 = vmatmul.mubr.bf16.gmra.mxu0 %v515
      %v643 = vpop.f32.mrf.mxu0
      %v644 = vadd.f32 0.0, %v643
      %v645 = vpop.f32.mrf.mxu0
      %v646 = vpop.f32.mrf.mxu0
      %v647 = vadd.f32 0.0, %v646
      %v648 = vpop.f32.mrf.mxu0
      %649 = vmatprep.mubr.bf16.mxu0 0
      %650 = vmatmul.mubr.bf16.gmra.mxu0 %v518
      %v651 = vpop.f32.mrf.mxu0
      %v652 = vadd.f32 0.0, %v651
      %v653 = vpop.f32.mrf.mxu0
      %v654 = vpop.f32.mrf.mxu0
      %v655 = vadd.f32 0.0, %v654
      %v656 = vpop.f32.mrf.mxu0
      %657 = vmatprep.mubr.bf16.mxu0 0
      %658 = vmatmul.mubr.bf16.gmra.mxu0 %v521
      %v659 = vpop.f32.mrf.mxu0
      %v660 = vadd.f32 0.0, %v659
      %v661 = vpop.f32.mrf.mxu0
      %v662 = vpop.f32.mrf.mxu0
      %v663 = vadd.f32 0.0, %v662
      %v664 = vpop.f32.mrf.mxu0
      %665 = vmatprep.mubr.bf16.mxu0 0
      %666 = vmatmul.mubr.bf16.gmra.mxu0 %v524
      %v667 = vpop.f32.mrf.mxu0
      %v668 = vadd.f32 0.0, %v667
      %v669 = vpop.f32.mrf.mxu0
      %v670 = vpop.f32.mrf.mxu0
      %v671 = vadd.f32 0.0, %v670
      %v672 = vpop.f32.mrf.mxu0
      %673 = vmatprep.mubr.bf16.mxu0 0
      %674 = vmatmul.mubr.bf16.gmra.mxu0 %v527
      %v675 = vpop.f32.mrf.mxu0
      %v676 = vadd.f32 0.0, %v675
      %v677 = vpop.f32.mrf.mxu0
      %v678 = vpop.f32.mrf.mxu0
      %v679 = vadd.f32 0.0, %v678
      %v680 = vpop.f32.mrf.mxu0
      %681 = vmatprep.mubr.bf16.mxu0 0
      %682 = vmatmul.mubr.bf16.gmra.mxu0 %v530
      %v683 = vpop.f32.mrf.mxu0
      %v684 = vadd.f32 0.0, %v683
      %v685 = vpop.f32.mrf.mxu0
      %v686 = vpop.f32.mrf.mxu0
      %v687 = vadd.f32 0.0, %v686
      %v688 = vpop.f32.mrf.mxu0
      %689 = vmatprep.mubr.bf16.mxu0 0
      %690 = vmatmul.mubr.bf16.gmra.mxu0 %v533
      %v691 = vpop.f32.mrf.mxu0
      %v692 = vadd.f32 0.0, %v691
      %v693 = vpop.f32.mrf.mxu0
      %v694 = vpop.f32.mrf.mxu0
      %v695 = vadd.f32 0.0, %v694
      %v696 = vpop.f32.mrf.mxu0
      %697 = vmatprep.mubr.bf16.mxu0 0
      %698 = vmatmul.mubr.bf16.gmra.mxu0 %v536
      %v699 = vpop.f32.mrf.mxu0
      %v700 = vadd.f32 0.0, %v699
      %v701 = vpop.f32.mrf.mxu0
      %v702 = vpop.f32.mrf.mxu0
      %v703 = vadd.f32 0.0, %v702
      %v704 = vpop.f32.mrf.mxu0
      %705 = vdwg.mxu0
      %v706 = vadd.f32 %v340, %v580
      %v707 = vadd.f32 %v341, %v583
      %v708 = vadd.f32 %v342, %v588
      %v709 = vadd.f32 %v343, %v591
      %v710 = vadd.f32 %v344, %v596
      %v711 = vadd.f32 %v345, %v599
      %v712 = vadd.f32 %v346, %v604
      %v713 = vadd.f32 %v347, %v607
      %v714 = vadd.f32 %v348, %v612
      %v715 = vadd.f32 %v349, %v615
      %v716 = vadd.f32 %v350, %v620
      %v717 = vadd.f32 %v351, %v623
      %v718 = vadd.f32 %v352, %v628
      %v719 = vadd.f32 %v353, %v631
      %v720 = vadd.f32 %v354, %v636
      %v721 = vadd.f32 %v355, %v639
      %v722 = vadd.f32 %v356, %v644
      %v723 = vadd.f32 %v357, %v647
      %v724 = vadd.f32 %v358, %v652
      %v725 = vadd.f32 %v359, %v655
      %v726 = vadd.f32 %v360, %v660
      %v727 = vadd.f32 %v361, %v663
      %v728 = vadd.f32 %v362, %v668
      %v729 = vadd.f32 %v363, %v671
      %v730 = vadd.f32 %v364, %v676
      %v731 = vadd.f32 %v365, %v679
      %v732 = vadd.f32 %v366, %v684
      %v733 = vadd.f32 %v367, %v687
      %v734 = vadd.f32 %v368, %v692
      %v735 = vadd.f32 %v369, %v695
      %v736 = vadd.f32 %v370, %v700
      %v737 = vadd.f32 %v371, %v703
      %vm738 = vcmask 130048
      %739 = vst.msk [vmem:[#allocation2] sm:$0xff] %vm738, %v706
      %740 = vst.msk [vmem:[#allocation2 + $0x8] sm:$0xff] %vm738, %v707
      %741 = vst.msk [vmem:[#allocation2 + $0x10] sm:$0xff] %vm738, %v708
      %742 = vst.msk [vmem:[#allocation2 + $0x18] sm:$0xff] %vm738, %v709
      %743 = vst.msk [vmem:[#allocation2 + $0x20] sm:$0xff] %vm738, %v710
      %744 = vst.msk [vmem:[#allocation2 + $0x28] sm:$0xff] %vm738, %v711
      %745 = vst.msk [vmem:[#allocation2 + $0x30] sm:$0xff] %vm738, %v712
      %746 = vst.msk [vmem:[#allocation2 + $0x38] sm:$0xff] %vm738, %v713
      %747 = vst.msk [vmem:[#allocation2 + $0x40] sm:$0xff] %vm738, %v714
      %748 = vst.msk [vmem:[#allocation2 + $0x48] sm:$0xff] %vm738, %v715
      %749 = vst.msk [vmem:[#allocation2 + $0x50] sm:$0xff] %vm738, %v716
      %750 = vst.msk [vmem:[#allocation2 + $0x58] sm:$0xff] %vm738, %v717
      %751 = vst.msk [vmem:[#allocation2 + $0x60] sm:$0xff] %vm738, %v718
      %752 = vst.msk [vmem:[#allocation2 + $0x68] sm:$0xff] %vm738, %v719
      %753 = vst.msk [vmem:[#allocation2 + $0x70] sm:$0xff] %vm738, %v720
      %754 = vst.msk [vmem:[#allocation2 + $0x78] sm:$0xff] %vm738, %v721
      %755 = vst.msk [vmem:[#allocation2 + $0x80] sm:$0xff] %vm738, %v722
      %756 = vst.msk [vmem:[#allocation2 + $0x88] sm:$0xff] %vm738, %v723
      %757 = vst.msk [vmem:[#allocation2 + $0x90] sm:$0xff] %vm738, %v724
      %758 = vst.msk [vmem:[#allocation2 + $0x98] sm:$0xff] %vm738, %v725
      %759 = vst.msk [vmem:[#allocation2 + $0xa0] sm:$0xff] %vm738, %v726
      %760 = vst.msk [vmem:[#allocation2 + $0xa8] sm:$0xff] %vm738, %v727
      %761 = vst.msk [vmem:[#allocation2 + $0xb0] sm:$0xff] %vm738, %v728
      %762 = vst.msk [vmem:[#allocation2 + $0xb8] sm:$0xff] %vm738, %v729
      %763 = vst.msk [vmem:[#allocation2 + $0xc0] sm:$0xff] %vm738, %v730
      %764 = vst.msk [vmem:[#allocation2 + $0xc8] sm:$0xff] %vm738, %v731
      %765 = vst.msk [vmem:[#allocation2 + $0xd0] sm:$0xff] %vm738, %v732
      %766 = vst.msk [vmem:[#allocation2 + $0xd8] sm:$0xff] %vm738, %v733
      %767 = vst.msk [vmem:[#allocation2 + $0xe0] sm:$0xff] %vm738, %v734
      %768 = vst.msk [vmem:[#allocation2 + $0xe8] sm:$0xff] %vm738, %v735
      %769 = vst.msk [vmem:[#allocation2 + $0xf0] sm:$0xff] %vm738, %v736
      %770 = vst.msk [vmem:[#allocation2 + $0xf8] sm:$0xff] %vm738, %v737
      // Predicated region
      $region41: #{convnet_forward.13} parent=35 // pred_check
        %p771 = pneg %p301
      $region42: #{convnet_forward.13} parent=35 // pred_check_branch
        %773 = sbr.rel (%p771) target = $region44
      $region43: #{convnet_forward.13} parent=35 // pred_region
        %v774 = vld [vmem:[#allocation2] sm:$0xff]
        %v775 = vld [vmem:[#allocation2 + $0x8] sm:$0xff]
        %v776 = vld [vmem:[#allocation2 + $0x10] sm:$0xff]
        %v777 = vld [vmem:[#allocation2 + $0x18] sm:$0xff]
        %v778 = vld [vmem:[#allocation2 + $0x20] sm:$0xff]
        %v779 = vld [vmem:[#allocation2 + $0x28] sm:$0xff]
        %v780 = vld [vmem:[#allocation2 + $0x30] sm:$0xff]
        %v781 = vld [vmem:[#allocation2 + $0x38] sm:$0xff]
        %v782 = vld [vmem:[#allocation2 + $0x40] sm:$0xff]
        %v783 = vld [vmem:[#allocation2 + $0x48] sm:$0xff]
        %v784 = vld [vmem:[#allocation2 + $0x50] sm:$0xff]
        %v785 = vld [vmem:[#allocation2 + $0x58] sm:$0xff]
        %v786 = vld [vmem:[#allocation2 + $0x60] sm:$0xff]
        %v787 = vld [vmem:[#allocation2 + $0x68] sm:$0xff]
        %v788 = vld [vmem:[#allocation2 + $0x70] sm:$0xff]
        %v789 = vld [vmem:[#allocation2 + $0x78] sm:$0xff]
        %v790 = vld [vmem:[#allocation2 + $0x80] sm:$0xff]
        %v791 = vld [vmem:[#allocation2 + $0x88] sm:$0xff]
        %v792 = vld [vmem:[#allocation2 + $0x90] sm:$0xff]
        %v793 = vld [vmem:[#allocation2 + $0x98] sm:$0xff]
        %v794 = vld [vmem:[#allocation2 + $0xa0] sm:$0xff]
        %v795 = vld [vmem:[#allocation2 + $0xa8] sm:$0xff]
        %v796 = vld [vmem:[#allocation2 + $0xb0] sm:$0xff]
        %v797 = vld [vmem:[#allocation2 + $0xb8] sm:$0xff]
        %v798 = vld [vmem:[#allocation2 + $0xc0] sm:$0xff]
        %v799 = vld [vmem:[#allocation2 + $0xc8] sm:$0xff]
        %v800 = vld [vmem:[#allocation2 + $0xd0] sm:$0xff]
        %v801 = vld [vmem:[#allocation2 + $0xd8] sm:$0xff]
        %v802 = vld [vmem:[#allocation2 + $0xe0] sm:$0xff]
        %v803 = vld [vmem:[#allocation2 + $0xe8] sm:$0xff]
        %v804 = vld [vmem:[#allocation2 + $0xf0] sm:$0xff]
        %v805 = vld [vmem:[#allocation2 + $0xf8] sm:$0xff]
        %v806 = vld [vmem:[%s287] sm:$0x1]
        %v808 = vlaneseq
        %v809 = vshrl.u32 %v808, 7
        %v810 = vsub.s32 0, %v809
        %v811 = vrot.slane %v806, %v810
        %v813 = vmul.f32 %v774, %v811
        %v814 = vmul.f32 %v775, %v811
        %v815 = vmul.f32 %v776, %v811
        %v816 = vmul.f32 %v777, %v811
        %v817 = vmul.f32 %v778, %v811
        %v818 = vmul.f32 %v779, %v811
        %v819 = vmul.f32 %v780, %v811
        %v820 = vmul.f32 %v781, %v811
        %v821 = vmul.f32 %v782, %v811
        %v822 = vmul.f32 %v783, %v811
        %v823 = vmul.f32 %v784, %v811
        %v824 = vmul.f32 %v785, %v811
        %v825 = vmul.f32 %v786, %v811
        %v826 = vmul.f32 %v787, %v811
        %v827 = vmul.f32 %v788, %v811
        %v828 = vmul.f32 %v789, %v811
        %v829 = vmul.f32 %v790, %v811
        %v830 = vmul.f32 %v791, %v811
        %v831 = vmul.f32 %v792, %v811
        %v832 = vmul.f32 %v793, %v811
        %v833 = vmul.f32 %v794, %v811
        %v834 = vmul.f32 %v795, %v811
        %v835 = vmul.f32 %v796, %v811
        %v836 = vmul.f32 %v797, %v811
        %v837 = vmul.f32 %v798, %v811
        %v838 = vmul.f32 %v799, %v811
        %v839 = vmul.f32 %v800, %v811
        %v840 = vmul.f32 %v801, %v811
        %v841 = vmul.f32 %v802, %v811
        %v842 = vmul.f32 %v803, %v811
        %v843 = vmul.f32 %v804, %v811
        %v844 = vmul.f32 %v805, %v811
        %v845 = vld [vmem:[%s290] sm:$0x1]
        %v847 = vlaneseq
        %v848 = vshrl.u32 %v847, 7
        %v849 = vsub.s32 0, %v848
        %v850 = vrot.slane %v845, %v849
        %v852 = vadd.f32 %v813, %v850
        %v853 = vadd.f32 %v814, %v850
        %v854 = vadd.f32 %v815, %v850
        %v855 = vadd.f32 %v816, %v850
        %v856 = vadd.f32 %v817, %v850
        %v857 = vadd.f32 %v818, %v850
        %v858 = vadd.f32 %v819, %v850
        %v859 = vadd.f32 %v820, %v850
        %v860 = vadd.f32 %v821, %v850
        %v861 = vadd.f32 %v822, %v850
        %v862 = vadd.f32 %v823, %v850
        %v863 = vadd.f32 %v824, %v850
        %v864 = vadd.f32 %v825, %v850
        %v865 = vadd.f32 %v826, %v850
        %v866 = vadd.f32 %v827, %v850
        %v867 = vadd.f32 %v828, %v850
        %v868 = vadd.f32 %v829, %v850
        %v869 = vadd.f32 %v830, %v850
        %v870 = vadd.f32 %v831, %v850
        %v871 = vadd.f32 %v832, %v850
        %v872 = vadd.f32 %v833, %v850
        %v873 = vadd.f32 %v834, %v850
        %v874 = vadd.f32 %v835, %v850
        %v875 = vadd.f32 %v836, %v850
        %v876 = vadd.f32 %v837, %v850
        %v877 = vadd.f32 %v838, %v850
        %v878 = vadd.f32 %v839, %v850
        %v879 = vadd.f32 %v840, %v850
        %v880 = vadd.f32 %v841, %v850
        %v881 = vadd.f32 %v842, %v850
        %v882 = vadd.f32 %v843, %v850
        %v883 = vadd.f32 %v844, %v850
        %v884 = vmax.f32 %v852, 0.0
        %v885 = vmax.f32 %v853, 0.0
        %v886 = vmax.f32 %v854, 0.0
        %v887 = vmax.f32 %v855, 0.0
        %v888 = vmax.f32 %v856, 0.0
        %v889 = vmax.f32 %v857, 0.0
        %v890 = vmax.f32 %v858, 0.0
        %v891 = vmax.f32 %v859, 0.0
        %v892 = vmax.f32 %v860, 0.0
        %v893 = vmax.f32 %v861, 0.0
        %v894 = vmax.f32 %v862, 0.0
        %v895 = vmax.f32 %v863, 0.0
        %v896 = vmax.f32 %v864, 0.0
        %v897 = vmax.f32 %v865, 0.0
        %v898 = vmax.f32 %v866, 0.0
        %v899 = vmax.f32 %v867, 0.0
        %v900 = vmax.f32 %v868, 0.0
        %v901 = vmax.f32 %v869, 0.0
        %v902 = vmax.f32 %v870, 0.0
        %v903 = vmax.f32 %v871, 0.0
        %v904 = vmax.f32 %v872, 0.0
        %v905 = vmax.f32 %v873, 0.0
        %v906 = vmax.f32 %v874, 0.0
        %v907 = vmax.f32 %v875, 0.0
        %v908 = vmax.f32 %v876, 0.0
        %v909 = vmax.f32 %v877, 0.0
        %v910 = vmax.f32 %v878, 0.0
        %v911 = vmax.f32 %v879, 0.0
        %v912 = vmax.f32 %v880, 0.0
        %v913 = vmax.f32 %v881, 0.0
        %v914 = vmax.f32 %v882, 0.0
        %v915 = vmax.f32 %v883, 0.0
        %v916 = vpack.c.bf16 %v885, %v884
        %v917 = vpack.c.bf16 %v887, %v886
        %v918 = vpack.c.bf16 %v889, %v888
        %v919 = vpack.c.bf16 %v891, %v890
        %v920 = vpack.c.bf16 %v893, %v892
        %v921 = vpack.c.bf16 %v895, %v894
        %v922 = vpack.c.bf16 %v897, %v896
        %v923 = vpack.c.bf16 %v899, %v898
        %v924 = vpack.c.bf16 %v901, %v900
        %v925 = vpack.c.bf16 %v903, %v902
        %v926 = vpack.c.bf16 %v905, %v904
        %v927 = vpack.c.bf16 %v907, %v906
        %v928 = vpack.c.bf16 %v909, %v908
        %v929 = vpack.c.bf16 %v911, %v910
        %v930 = vpack.c.bf16 %v913, %v912
        %v931 = vpack.c.bf16 %v915, %v914
        %v948 = vunpack.c.l.b16 %v916
        %v949 = vunpack.c.h.b16 %v916
        %v950 = vunpack.c.l.b16 %v917
        %v951 = vunpack.c.h.b16 %v917
        %v952 = vunpack.c.l.b16 %v918
        %v953 = vunpack.c.h.b16 %v918
        %v954 = vunpack.c.l.b16 %v919
        %v955 = vunpack.c.h.b16 %v919
        %v956 = vunpack.c.l.b16 %v920
        %v957 = vunpack.c.h.b16 %v920
        %v958 = vunpack.c.l.b16 %v921
        %v959 = vunpack.c.h.b16 %v921
        %v960 = vunpack.c.l.b16 %v922
        %v961 = vunpack.c.h.b16 %v922
        %v962 = vunpack.c.l.b16 %v923
        %v963 = vunpack.c.h.b16 %v923
        %v964 = vunpack.c.l.b16 %v924
        %v965 = vunpack.c.h.b16 %v924
        %v966 = vunpack.c.l.b16 %v925
        %v967 = vunpack.c.h.b16 %v925
        %v968 = vunpack.c.l.b16 %v926
        %v969 = vunpack.c.h.b16 %v926
        %v970 = vunpack.c.l.b16 %v927
        %v971 = vunpack.c.h.b16 %v927
        %v972 = vunpack.c.l.b16 %v928
        %v973 = vunpack.c.h.b16 %v928
        %v974 = vunpack.c.l.b16 %v929
        %v975 = vunpack.c.h.b16 %v929
        %v976 = vunpack.c.l.b16 %v930
        %v977 = vunpack.c.h.b16 %v930
        %v978 = vunpack.c.l.b16 %v931
        %v979 = vunpack.c.h.b16 %v931
        %v980 = vpack.c.b16 %v948, %v948
        %v981 = vpack.c.b16 %v949, %v949
        %v982 = vpack.c.b16 %v950, %v950
        %v983 = vpack.c.b16 %v951, %v951
        %v984 = vpack.c.b16 %v952, %v952
        %v985 = vpack.c.b16 %v953, %v953
        %v986 = vpack.c.b16 %v954, %v954
        %v987 = vpack.c.b16 %v955, %v955
        %v988 = vpack.c.b16 %v956, %v956
        %v989 = vpack.c.b16 %v957, %v957
        %v990 = vpack.c.b16 %v958, %v958
        %v991 = vpack.c.b16 %v959, %v959
        %v992 = vpack.c.b16 %v960, %v960
        %v993 = vpack.c.b16 %v961, %v961
        %v994 = vpack.c.b16 %v962, %v962
        %v995 = vpack.c.b16 %v963, %v963
        %v996 = vpack.c.b16 %v964, %v964
        %v997 = vpack.c.b16 %v965, %v965
        %v998 = vpack.c.b16 %v966, %v966
        %v999 = vpack.c.b16 %v967, %v967
        %v1000 = vpack.c.b16 %v968, %v968
        %v1001 = vpack.c.b16 %v969, %v969
        %v1002 = vpack.c.b16 %v970, %v970
        %v1003 = vpack.c.b16 %v971, %v971
        %v1004 = vpack.c.b16 %v972, %v972
        %v1005 = vpack.c.b16 %v973, %v973
        %v1006 = vpack.c.b16 %v974, %v974
        %v1007 = vpack.c.b16 %v975, %v975
        %v1008 = vpack.c.b16 %v976, %v976
        %v1009 = vpack.c.b16 %v977, %v977
        %v1010 = vpack.c.b16 %v978, %v978
        %v1011 = vpack.c.b16 %v979, %v979
        %vm1044 = vcmask 125952
        %1045 = vst.msk [vmem:[%s298] sm:$0xf] %vm1044, %v980
        %1046 = vst.msk [vmem:[%s298 + $0x4] sm:$0xf] %vm1044, %v981
        %1047 = vst.msk [vmem:[%s298 + $0x8] sm:$0xf] %vm1044, %v982
        %1048 = vst.msk [vmem:[%s298 + $0xc] sm:$0xf] %vm1044, %v983
        %1049 = vst.msk [vmem:[%s298 + $0x10] sm:$0xf] %vm1044, %v984
        %1050 = vst.msk [vmem:[%s298 + $0x14] sm:$0xf] %vm1044, %v985
        %1051 = vst.msk [vmem:[%s298 + $0x18] sm:$0xf] %vm1044, %v986
        %1052 = vst.msk [vmem:[%s298 + $0x1c] sm:$0xf] %vm1044, %v987
        %1053 = vst.msk [vmem:[%s298 + $0x20] sm:$0xf] %vm1044, %v988
        %1054 = vst.msk [vmem:[%s298 + $0x24] sm:$0xf] %vm1044, %v989
        %1055 = vst.msk [vmem:[%s298 + $0x28] sm:$0xf] %vm1044, %v990
        %1056 = vst.msk [vmem:[%s298 + $0x2c] sm:$0xf] %vm1044, %v991
        %1057 = vst.msk [vmem:[%s298 + $0x30] sm:$0xf] %vm1044, %v992
        %1058 = vst.msk [vmem:[%s298 + $0x34] sm:$0xf] %vm1044, %v993
        %1059 = vst.msk [vmem:[%s298 + $0x38] sm:$0xf] %vm1044, %v994
        %1060 = vst.msk [vmem:[%s298 + $0x3c] sm:$0xf] %vm1044, %v995
        %1061 = vst.msk [vmem:[%s298 + $0x40] sm:$0xf] %vm1044, %v996
        %1062 = vst.msk [vmem:[%s298 + $0x44] sm:$0xf] %vm1044, %v997
        %1063 = vst.msk [vmem:[%s298 + $0x48] sm:$0xf] %vm1044, %v998
        %1064 = vst.msk [vmem:[%s298 + $0x4c] sm:$0xf] %vm1044, %v999
        %1065 = vst.msk [vmem:[%s298 + $0x50] sm:$0xf] %vm1044, %v1000
        %1066 = vst.msk [vmem:[%s298 + $0x54] sm:$0xf] %vm1044, %v1001
        %1067 = vst.msk [vmem:[%s298 + $0x58] sm:$0xf] %vm1044, %v1002
        %1068 = vst.msk [vmem:[%s298 + $0x5c] sm:$0xf] %vm1044, %v1003
        %1069 = vst.msk [vmem:[%s298 + $0x60] sm:$0xf] %vm1044, %v1004
        %1070 = vst.msk [vmem:[%s298 + $0x64] sm:$0xf] %vm1044, %v1005
        %1071 = vst.msk [vmem:[%s298 + $0x68] sm:$0xf] %vm1044, %v1006
        %1072 = vst.msk [vmem:[%s298 + $0x6c] sm:$0xf] %vm1044, %v1007
        %1073 = vst.msk [vmem:[%s298 + $0x70] sm:$0xf] %vm1044, %v1008
        %1074 = vst.msk [vmem:[%s298 + $0x74] sm:$0xf] %vm1044, %v1009
        %1075 = vst.msk [vmem:[%s298 + $0x78] sm:$0xf] %vm1044, %v1010
        %1076 = vst.msk [vmem:[%s298 + $0x7c] sm:$0xf] %vm1044, %v1011
      $region44: #{convnet_forward.13} parent=35 // pred_fallthru
        _
      %s1077 = smul.u32 32, %s20
      %p1078 = scmp.lt.s32.totalorder %s1077, 63
      %s1079 = scalar_select %p1078, %s1077, 63
      %p1080 = scmp.lt.s32.totalorder %s21, 0
      %s1081 = scalar_select %p1080, %s21, 0
      %s1082 = sadd.s32 %s1081, %s1079
      %s1083 = smul.addr %s1082, 4
      %s1084 = scalar_lea.vmem %s4, %s1083
      // Predicated region
      $region45: #{convnet_forward.13} parent=35 // pred_check
        %p1085 = pneg %p162
      $region46: #{convnet_forward.13} parent=35 // pred_check_branch
        %1087 = sbr.rel (%p1085) target = $region48
      $region47: #{convnet_forward.13} parent=35 // pred_region
        %s1088 = smul.u32 32, %s20
      $region48: #{convnet_forward.13} parent=35 // pred_fallthru
        _
    $region36: #{convnet_forward.13} parent=5 // pred_fallthru
      _
    %p1089 = scmp.le.s32.totalorder 2, %s10
    // Predicated region
    $region49: #{convnet_forward.13} parent=5 // pred_check
      %p1090 = pneg %p1089
    $region50: #{convnet_forward.13} parent=5 // pred_check_branch
      %1092 = sbr.rel (%p1090) target = $region52
    $region51: #{convnet_forward.13} parent=5 // pred_region
      %s1093 = ssub.s32 %s10, 2
      // Predicated region
      $region53: #{convnet_forward.13} parent=51 // pred_check
        %p1094 = pneg %p168
      $region54: #{convnet_forward.13} parent=51 // pred_check_branch
        %1096 = sbr.rel (%p1094) target = $region56
      $region55: #{convnet_forward.13} parent=51 // pred_region
        %s1097 = smul.u32 32, %s23
        %p1098 = scmp.lt.s32.totalorder %s1097, 63
        %s1099 = scalar_select %p1098, %s1097, 63
        %p1100 = scmp.lt.s32.totalorder %s24, 0
        %s1101 = scalar_select %p1100, %s24, 0
        %s1102 = sadd.s32 %s1101, %s1099
        %s1103 = smul.addr %s1102, 4
        %s1104 = scalar_lea.vmem %s4, %s1103
      $region56: #{convnet_forward.13} parent=51 // pred_fallthru
        _
    $region52: #{convnet_forward.13} parent=5 // pred_fallthru
      _
  $region6: #{convnet_forward.13} parent=0 // loop_footer
    %s14 = sadd.s32 1, %s10
  $region7: #{convnet_forward.13} parent=0 // loop_footer_branch
    %9 = sbr.rel target = $region3
  $region8: #{convnet_forward.13} parent=0 // loop_exit
    _

// kernel: convnet_forward.14
$region0: #{convnet_forward.14}
  #allocation0 [shape = 'u32[]', space=smem, size = 0x4, offset = 0x4, fixed_abs, tag = 'smem constant byte address 0x4 - core index']
  #allocation1 [shape = 'u32[144,128]{1,0:T(1,128)}', space=vmem, size = 0x12000, scoped, tag = 'internal scratch']
  %s0 = inlined_call_operand.vmem [shape: bf16[256,2,16], index: 0, kind: input, shape index: {}]
  %s1 = inlined_call_operand.vmem [shape: bf16[256,16], index: 1, kind: output, shape index: {}]
  %s2 = sld [smem:[#allocation0]]
  $region37: #{convnet_forward.14} parent=0
    _
  %s4 = ssub.s32 1, %s2
  %s5 = scalar_select 0, %s4, %s2
  loop: start=0, step=1, limit=4
  $region2: #{convnet_forward.14} parent=0 // loop_pre_header
    _
  $region3: #{convnet_forward.14} parent=0 // loop_header
    %s7 = sphi 0, %s11
    %p8 = scmp.ge.s32.totalorder %s7, 4
    %s17 = sphi 0, %s19
    %s20 = sphi 0, %s17
    %s21 = sphi 0, %s20
    %s37 = sphi 0, %s21
    %s43 = sphi 0, %s45
    %s46 = sphi 0, %s43
    %s47 = sphi 0, %s46
    %s63 = sphi 0, %s47
  $region4: #{convnet_forward.14} parent=0 // loop_header_branch
    %10 = sbr.rel (%p8) target = $region8
  $region5: #{convnet_forward.14} parent=0 // loop_body
    %s12 = ssub.s32 %s7, 1
    %s13 = ssub.s32 %s7, 2
    %s14 = sadd.s32 %s7, 1
    %s15 = ssub.s32 %s7, %s14
    %p16 = scmp.eq.s32.totalorder %s15, 0
    %s18 = sadd.s32 %s17, 1
    %s19 = scalar_select %p16, %s17, %s18
    %p22 = pneg %p16
    %p23 = scmp.eq.s32.totalorder %s7, 1
    %p24 = por %p22, %p23
    %p25 = scmp.ne.s32.totalorder %s17, %s20
    %p26 = scmp.eq.s32.totalorder %s7, 0
    %p27 = por %p25, %p26
    %p28 = scmp.ne.s32.totalorder %s17, %s20
    %p29 = scmp.eq.s32.totalorder %s12, 1
    %p30 = por %p28, %p29
    %p31 = scmp.ne.s32.totalorder %s20, %s21
    %p32 = scmp.eq.s32.totalorder %s12, 0
    %p33 = por %p31, %p32
    %p34 = scmp.ne.s32.totalorder %s20, %s21
    %p35 = scmp.eq.s32.totalorder %s13, 1
    %p36 = por %p34, %p35
    %p38 = scmp.ne.s32.totalorder %s21, %s37
    %p39 = scmp.eq.s32.totalorder %s13, 0
    %p40 = por %p38, %p39
    %s41 = ssub.s32 %s7, %s14
    %p42 = scmp.eq.s32.totalorder %s41, 0
    %s44 = sadd.s32 %s43, 1
    %s45 = scalar_select %p42, %s43, %s44
    %p48 = pneg %p42
    %p49 = scmp.eq.s32.totalorder %s7, 1
    %p50 = por %p48, %p49
    %p51 = scmp.ne.s32.totalorder %s43, %s46
    %p52 = scmp.eq.s32.totalorder %s7, 0
    %p53 = por %p51, %p52
    %p54 = scmp.ne.s32.totalorder %s43, %s46
    %p55 = scmp.eq.s32.totalorder %s12, 1
    %p56 = por %p54, %p55
    %p57 = scmp.ne.s32.totalorder %s46, %s47
    %p58 = scmp.eq.s32.totalorder %s12, 0
    %p59 = por %p57, %p58
    %p60 = scmp.ne.s32.totalorder %s46, %s47
    %p61 = scmp.eq.s32.totalorder %s13, 1
    %p62 = por %p60, %p61
    %p64 = scmp.ne.s32.totalorder %s47, %s63
    %p65 = scmp.eq.s32.totalorder %s13, 0
    %p66 = por %p64, %p65
    %p67 = scmp.le.s32.totalorder 1, %s7
    %p68 = scmp.lt.s32.totalorder %s7, 3
    %p69 = pnand %p67, %p68
    %p70 = pneg %p69
    // Predicated region
    $region9: #{convnet_forward.14} parent=5 // pred_check
      _
    $region10: #{convnet_forward.14} parent=5 // pred_check_branch
      %72 = sbr.rel (%p69) target = $region12
    $region11: #{convnet_forward.14} parent=5 // pred_region
      %s73 = ssub.s32 %s7, 1
    $region12: #{convnet_forward.14} parent=5 // pred_fallthru
      _
    %p74 = scmp.lt.s32.totalorder %s7, 2
    // Predicated region
    $region13: #{convnet_forward.14} parent=5 // pred_check
      %p75 = pneg %p74
    $region14: #{convnet_forward.14} parent=5 // pred_check_branch
      %77 = sbr.rel (%p75) target = $region16
    $region15: #{convnet_forward.14} parent=5 // pred_region
      // Predicated region
      $region17: #{convnet_forward.14} parent=15 // pred_check
        %p78 = pneg %p27
      $region18: #{convnet_forward.14} parent=15 // pred_check_branch
        %80 = sbr.rel (%p78) target = $region20
      $region19: #{convnet_forward.14} parent=15 // pred_region
        %s81 = smul.u32 128, %s7
        %p82 = scmp.lt.s32.totalorder %s81, 255
        %s83 = scalar_select %p82, %s81, 255
        %s84 = scalar_lea.vmem %s0, %s83
        %s85 = smul.u32 128, %s7
      $region20: #{convnet_forward.14} parent=15 // pred_fallthru
        _
    $region16: #{convnet_forward.14} parent=5 // pred_fallthru
      _
    %p86 = scmp.le.s32.totalorder 1, %s7
    %p87 = scmp.lt.s32.totalorder %s7, 3
    %p88 = pnand %p86, %p87
    %p89 = pneg %p88
    // Predicated region
    $region21: #{convnet_forward.14} parent=5 // pred_check
      _
    $region22: #{convnet_forward.14} parent=5 // pred_check_branch
      %91 = sbr.rel (%p88) target = $region24
    $region23: #{convnet_forward.14} parent=5 // pred_region
      %s92 = ssub.s32 %s7, 1
      %s93 = smul.u32 128, %s12
      %p94 = scmp.lt.s32.totalorder %s93, 255
      %s95 = scalar_select %p94, %s93, 255
      %s96 = scalar_lea.vmem %s0, %s95
      %p97 = pneg %p33
      %p98 = pneg %p30
      %p99 = pneg %p59
      %p100 = pneg %p56
      %s101 = smul.u32 16, %s12
      %p102 = scmp.lt.s32.totalorder %s101, 31
      %s103 = scalar_select %p102, %s101, 31
      %s104 = smul.addr %s103, 4
      %s105 = scalar_lea.vmem %s1, %s104
      %s106 = smul.u32 128, %s12
      %p107 = scmp.lt.s32.totalorder %s106, 255
      %s108 = scalar_select %p107, %s106, 255
      %s109 = scalar_lea.vmem %s0, %s108
      %s110 = smul.u32 128, %s12
      %s111 = smul.u32 16, %s12
      %p112 = scmp.lt.s32.totalorder %s111, 31
      %s113 = scalar_select %p112, %s111, 31
      %s114 = smul.addr %s113, 4
      %s115 = scalar_lea.vmem %s1, %s114
      %s116 = smul.u32 16, %s12
      %v117 = vld [vmem:[%s109] sm:$0x1]
      %v118 = vld [vmem:[%s109 + $0x1] sm:$0x1]
      %v119 = vld [vmem:[%s109 + $0x2] sm:$0x1]
      %v120 = vld [vmem:[%s109 + $0x3] sm:$0x1]
      %v121 = vld [vmem:[%s109 + $0x4] sm:$0x1]
      %v122 = vld [vmem:[%s109 + $0x5] sm:$0x1]
      %v123 = vld [vmem:[%s109 + $0x6] sm:$0x1]
      %v124 = vld [vmem:[%s109 + $0x7] sm:$0x1]
      %v125 = vld [vmem:[%s109 + $0x8] sm:$0x1]
      %v126 = vld [vmem:[%s109 + $0x9] sm:$0x1]
      %v127 = vld [vmem:[%s109 + $0xa] sm:$0x1]
      %v128 = vld [vmem:[%s109 + $0xb] sm:$0x1]
      %v129 = vld [vmem:[%s109 + $0xc] sm:$0x1]
      %v130 = vld [vmem:[%s109 + $0xd] sm:$0x1]
      %v131 = vld [vmem:[%s109 + $0xe] sm:$0x1]
      %v132 = vld [vmem:[%s109 + $0xf] sm:$0x1]
      %v133 = vld [vmem:[%s109 + $0x10] sm:$0x1]
      %v134 = vld [vmem:[%s109 + $0x11] sm:$0x1]
      %v135 = vld [vmem:[%s109 + $0x12] sm:$0x1]
      %v136 = vld [vmem:[%s109 + $0x13] sm:$0x1]
      %v137 = vld [vmem:[%s109 + $0x14] sm:$0x1]
      %v138 = vld [vmem:[%s109 + $0x15] sm:$0x1]
      %v139 = vld [vmem:[%s109 + $0x16] sm:$0x1]
      %v140 = vld [vmem:[%s109 + $0x17] sm:$0x1]
      %v141 = vld [vmem:[%s109 + $0x18] sm:$0x1]
      %v142 = vld [vmem:[%s109 + $0x19] sm:$0x1]
      %v143 = vld [vmem:[%s109 + $0x1a] sm:$0x1]
      %v144 = vld [vmem:[%s109 + $0x1b] sm:$0x1]
      %v145 = vld [vmem:[%s109 + $0x1c] sm:$0x1]
      %v146 = vld [vmem:[%s109 + $0x1d] sm:$0x1]
      %v147 = vld [vmem:[%s109 + $0x1e] sm:$0x1]
      %v148 = vld [vmem:[%s109 + $0x1f] sm:$0x1]
      %v149 = vld [vmem:[%s109 + $0x20] sm:$0x1]
      %v150 = vld [vmem:[%s109 + $0x21] sm:$0x1]
      %v151 = vld [vmem:[%s109 + $0x22] sm:$0x1]
      %v152 = vld [vmem:[%s109 + $0x23] sm:$0x1]
      %v153 = vld [vmem:[%s109 + $0x24] sm:$0x1]
      %v154 = vld [vmem:[%s109 + $0x25] sm:$0x1]
      %v155 = vld [vmem:[%s109 + $0x26] sm:$0x1]
      %v156 = vld [vmem:[%s109 + $0x27] sm:$0x1]
      %v157 = vld [vmem:[%s109 + $0x28] sm:$0x1]
      %v158 = vld [vmem:[%s109 + $0x29] sm:$0x1]
      %v159 = vld [vmem:[%s109 + $0x2a] sm:$0x1]
      %v160 = vld [vmem:[%s109 + $0x2b] sm:$0x1]
      %v161 = vld [vmem:[%s109 + $0x2c] sm:$0x1]
      %v162 = vld [vmem:[%s109 + $0x2d] sm:$0x1]
      %v163 = vld [vmem:[%s109 + $0x2e] sm:$0x1]
      %v164 = vld [vmem:[%s109 + $0x2f] sm:$0x1]
      %v165 = vld [vmem:[%s109 + $0x30] sm:$0x1]
      %v166 = vld [vmem:[%s109 + $0x31] sm:$0x1]
      %v167 = vld [vmem:[%s109 + $0x32] sm:$0x1]
      %v168 = vld [vmem:[%s109 + $0x33] sm:$0x1]
      %v169 = vld [vmem:[%s109 + $0x34] sm:$0x1]
      %v170 = vld [vmem:[%s109 + $0x35] sm:$0x1]
      %v171 = vld [vmem:[%s109 + $0x36] sm:$0x1]
      %v172 = vld [vmem:[%s109 + $0x37] sm:$0x1]
      %v173 = vld [vmem:[%s109 + $0x38] sm:$0x1]
      %v174 = vld [vmem:[%s109 + $0x39] sm:$0x1]
      %v175 = vld [vmem:[%s109 + $0x3a] sm:$0x1]
      %v176 = vld [vmem:[%s109 + $0x3b] sm:$0x1]
      %v177 = vld [vmem:[%s109 + $0x3c] sm:$0x1]
      %v178 = vld [vmem:[%s109 + $0x3d] sm:$0x1]
      %v179 = vld [vmem:[%s109 + $0x3e] sm:$0x1]
      %v180 = vld [vmem:[%s109 + $0x3f] sm:$0x1]
      %v181 = vld [vmem:[%s109 + $0x40] sm:$0x1]
      %v182 = vld [vmem:[%s109 + $0x41] sm:$0x1]
      %v183 = vld [vmem:[%s109 + $0x42] sm:$0x1]
      %v184 = vld [vmem:[%s109 + $0x43] sm:$0x1]
      %v185 = vld [vmem:[%s109 + $0x44] sm:$0x1]
      %v186 = vld [vmem:[%s109 + $0x45] sm:$0x1]
      %v187 = vld [vmem:[%s109 + $0x46] sm:$0x1]
      %v188 = vld [vmem:[%s109 + $0x47] sm:$0x1]
      %v189 = vld [vmem:[%s109 + $0x48] sm:$0x1]
      %v190 = vld [vmem:[%s109 + $0x49] sm:$0x1]
      %v191 = vld [vmem:[%s109 + $0x4a] sm:$0x1]
      %v192 = vld [vmem:[%s109 + $0x4b] sm:$0x1]
      %v193 = vld [vmem:[%s109 + $0x4c] sm:$0x1]
      %v194 = vld [vmem:[%s109 + $0x4d] sm:$0x1]
      %v195 = vld [vmem:[%s109 + $0x4e] sm:$0x1]
      %v196 = vld [vmem:[%s109 + $0x4f] sm:$0x1]
      %v197 = vld [vmem:[%s109 + $0x50] sm:$0x1]
      %v198 = vld [vmem:[%s109 + $0x51] sm:$0x1]
      %v199 = vld [vmem:[%s109 + $0x52] sm:$0x1]
      %v200 = vld [vmem:[%s109 + $0x53] sm:$0x1]
      %v201 = vld [vmem:[%s109 + $0x54] sm:$0x1]
      %v202 = vld [vmem:[%s109 + $0x55] sm:$0x1]
      %v203 = vld [vmem:[%s109 + $0x56] sm:$0x1]
      %v204 = vld [vmem:[%s109 + $0x57] sm:$0x1]
      %v205 = vld [vmem:[%s109 + $0x58] sm:$0x1]
      %v206 = vld [vmem:[%s109 + $0x59] sm:$0x1]
      %v207 = vld [vmem:[%s109 + $0x5a] sm:$0x1]
      %v208 = vld [vmem:[%s109 + $0x5b] sm:$0x1]
      %v209 = vld [vmem:[%s109 + $0x5c] sm:$0x1]
      %v210 = vld [vmem:[%s109 + $0x5d] sm:$0x1]
      %v211 = vld [vmem:[%s109 + $0x5e] sm:$0x1]
      %v212 = vld [vmem:[%s109 + $0x5f] sm:$0x1]
      %v213 = vld [vmem:[%s109 + $0x60] sm:$0x1]
      %v214 = vld [vmem:[%s109 + $0x61] sm:$0x1]
      %v215 = vld [vmem:[%s109 + $0x62] sm:$0x1]
      %v216 = vld [vmem:[%s109 + $0x63] sm:$0x1]
      %v217 = vld [vmem:[%s109 + $0x64] sm:$0x1]
      %v218 = vld [vmem:[%s109 + $0x65] sm:$0x1]
      %v219 = vld [vmem:[%s109 + $0x66] sm:$0x1]
      %v220 = vld [vmem:[%s109 + $0x67] sm:$0x1]
      %v221 = vld [vmem:[%s109 + $0x68] sm:$0x1]
      %v222 = vld [vmem:[%s109 + $0x69] sm:$0x1]
      %v223 = vld [vmem:[%s109 + $0x6a] sm:$0x1]
      %v224 = vld [vmem:[%s109 + $0x6b] sm:$0x1]
      %v225 = vld [vmem:[%s109 + $0x6c] sm:$0x1]
      %v226 = vld [vmem:[%s109 + $0x6d] sm:$0x1]
      %v227 = vld [vmem:[%s109 + $0x6e] sm:$0x1]
      %v228 = vld [vmem:[%s109 + $0x6f] sm:$0x1]
      %v229 = vld [vmem:[%s109 + $0x70] sm:$0x1]
      %v230 = vld [vmem:[%s109 + $0x71] sm:$0x1]
      %v231 = vld [vmem:[%s109 + $0x72] sm:$0x1]
      %v232 = vld [vmem:[%s109 + $0x73] sm:$0x1]
      %v233 = vld [vmem:[%s109 + $0x74] sm:$0x1]
      %v234 = vld [vmem:[%s109 + $0x75] sm:$0x1]
      %v235 = vld [vmem:[%s109 + $0x76] sm:$0x1]
      %v236 = vld [vmem:[%s109 + $0x77] sm:$0x1]
      %v237 = vld [vmem:[%s109 + $0x78] sm:$0x1]
      %v238 = vld [vmem:[%s109 + $0x79] sm:$0x1]
      %v239 = vld [vmem:[%s109 + $0x7a] sm:$0x1]
      %v240 = vld [vmem:[%s109 + $0x7b] sm:$0x1]
      %v241 = vld [vmem:[%s109 + $0x7c] sm:$0x1]
      %v242 = vld [vmem:[%s109 + $0x7d] sm:$0x1]
      %v243 = vld [vmem:[%s109 + $0x7e] sm:$0x1]
      %v244 = vld [vmem:[%s109 + $0x7f] sm:$0x1]
      %v246 = vshrl.u32 %v117, 16
      %v248 = vrot.slane %v246, 7
      %v249 = vrot.slane %v248, 1
      %v251 = vshrl.u32 %v118, 16
      %v253 = vrot.slane %v251, 7
      %v254 = vrot.slane %v253, 1
      %v256 = vshrl.u32 %v119, 16
      %v258 = vrot.slane %v256, 7
      %v259 = vrot.slane %v258, 1
      %v261 = vshrl.u32 %v120, 16
      %v263 = vrot.slane %v261, 7
      %v264 = vrot.slane %v263, 1
      %v266 = vshrl.u32 %v121, 16
      %v268 = vrot.slane %v266, 7
      %v269 = vrot.slane %v268, 1
      %v271 = vshrl.u32 %v122, 16
      %v273 = vrot.slane %v271, 7
      %v274 = vrot.slane %v273, 1
      %v276 = vshrl.u32 %v123, 16
      %v278 = vrot.slane %v276, 7
      %v279 = vrot.slane %v278, 1
      %v281 = vshrl.u32 %v124, 16
      %v283 = vrot.slane %v281, 7
      %v284 = vrot.slane %v283, 1
      %v286 = vshrl.u32 %v125, 16
      %v288 = vrot.slane %v286, 7
      %v289 = vrot.slane %v288, 1
      %v291 = vshrl.u32 %v126, 16
      %v293 = vrot.slane %v291, 7
      %v294 = vrot.slane %v293, 1
      %v296 = vshrl.u32 %v127, 16
      %v298 = vrot.slane %v296, 7
      %v299 = vrot.slane %v298, 1
      %v301 = vshrl.u32 %v128, 16
      %v303 = vrot.slane %v301, 7
      %v304 = vrot.slane %v303, 1
      %v306 = vshrl.u32 %v129, 16
      %v308 = vrot.slane %v306, 7
      %v309 = vrot.slane %v308, 1
      %v311 = vshrl.u32 %v130, 16
      %v313 = vrot.slane %v311, 7
      %v314 = vrot.slane %v313, 1
      %v316 = vshrl.u32 %v131, 16
      %v318 = vrot.slane %v316, 7
      %v319 = vrot.slane %v318, 1
      %v321 = vshrl.u32 %v132, 16
      %v323 = vrot.slane %v321, 7
      %v324 = vrot.slane %v323, 1
      %v326 = vshrl.u32 %v133, 16
      %v328 = vrot.slane %v326, 7
      %v329 = vrot.slane %v328, 1
      %v331 = vshrl.u32 %v134, 16
      %v333 = vrot.slane %v331, 7
      %v334 = vrot.slane %v333, 1
      %v336 = vshrl.u32 %v135, 16
      %v338 = vrot.slane %v336, 7
      %v339 = vrot.slane %v338, 1
      %v341 = vshrl.u32 %v136, 16
      %v343 = vrot.slane %v341, 7
      %v344 = vrot.slane %v343, 1
      %v346 = vshrl.u32 %v137, 16
      %v348 = vrot.slane %v346, 7
      %v349 = vrot.slane %v348, 1
      %v351 = vshrl.u32 %v138, 16
      %v353 = vrot.slane %v351, 7
      %v354 = vrot.slane %v353, 1
      %v356 = vshrl.u32 %v139, 16
      %v358 = vrot.slane %v356, 7
      %v359 = vrot.slane %v358, 1
      %v361 = vshrl.u32 %v140, 16
      %v363 = vrot.slane %v361, 7
      %v364 = vrot.slane %v363, 1
      %v366 = vshrl.u32 %v141, 16
      %v368 = vrot.slane %v366, 7
      %v369 = vrot.slane %v368, 1
      %v371 = vshrl.u32 %v142, 16
      %v373 = vrot.slane %v371, 7
      %v374 = vrot.slane %v373, 1
      %v376 = vshrl.u32 %v143, 16
      %v378 = vrot.slane %v376, 7
      %v379 = vrot.slane %v378, 1
      %v381 = vshrl.u32 %v144, 16
      %v383 = vrot.slane %v381, 7
      %v384 = vrot.slane %v383, 1
      %v386 = vshrl.u32 %v145, 16
      %v388 = vrot.slane %v386, 7
      %v389 = vrot.slane %v388, 1
      %v391 = vshrl.u32 %v146, 16
      %v393 = vrot.slane %v391, 7
      %v394 = vrot.slane %v393, 1
      %v396 = vshrl.u32 %v147, 16
      %v398 = vrot.slane %v396, 7
      %v399 = vrot.slane %v398, 1
      %v401 = vshrl.u32 %v148, 16
      %v403 = vrot.slane %v401, 7
      %v404 = vrot.slane %v403, 1
      %v406 = vshrl.u32 %v149, 16
      %v408 = vrot.slane %v406, 7
      %v409 = vrot.slane %v408, 1
      %v411 = vshrl.u32 %v150, 16
      %v413 = vrot.slane %v411, 7
      %v414 = vrot.slane %v413, 1
      %v416 = vshrl.u32 %v151, 16
      %v418 = vrot.slane %v416, 7
      %v419 = vrot.slane %v418, 1
      %v421 = vshrl.u32 %v152, 16
      %v423 = vrot.slane %v421, 7
      %v424 = vrot.slane %v423, 1
      %v426 = vshrl.u32 %v153, 16
      %v428 = vrot.slane %v426, 7
      %v429 = vrot.slane %v428, 1
      %v431 = vshrl.u32 %v154, 16
      %v433 = vrot.slane %v431, 7
      %v434 = vrot.slane %v433, 1
      %v436 = vshrl.u32 %v155, 16
      %v438 = vrot.slane %v436, 7
      %v439 = vrot.slane %v438, 1
      %v441 = vshrl.u32 %v156, 16
      %v443 = vrot.slane %v441, 7
      %v444 = vrot.slane %v443, 1
      %v446 = vshrl.u32 %v157, 16
      %v448 = vrot.slane %v446, 7
      %v449 = vrot.slane %v448, 1
      %v451 = vshrl.u32 %v158, 16
      %v453 = vrot.slane %v451, 7
      %v454 = vrot.slane %v453, 1
      %v456 = vshrl.u32 %v159, 16
      %v458 = vrot.slane %v456, 7
      %v459 = vrot.slane %v458, 1
      %v461 = vshrl.u32 %v160, 16
      %v463 = vrot.slane %v461, 7
      %v464 = vrot.slane %v463, 1
      %v466 = vshrl.u32 %v161, 16
      %v468 = vrot.slane %v466, 7
      %v469 = vrot.slane %v468, 1
      %v471 = vshrl.u32 %v162, 16
      %v473 = vrot.slane %v471, 7
      %v474 = vrot.slane %v473, 1
      %v476 = vshrl.u32 %v163, 16
      %v478 = vrot.slane %v476, 7
      %v479 = vrot.slane %v478, 1
      %v481 = vshrl.u32 %v164, 16
      %v483 = vrot.slane %v481, 7
      %v484 = vrot.slane %v483, 1
      %v486 = vshrl.u32 %v165, 16
      %v488 = vrot.slane %v486, 7
      %v489 = vrot.slane %v488, 1
      %v491 = vshrl.u32 %v166, 16
      %v493 = vrot.slane %v491, 7
      %v494 = vrot.slane %v493, 1
      %v496 = vshrl.u32 %v167, 16
      %v498 = vrot.slane %v496, 7
      %v499 = vrot.slane %v498, 1
      %v501 = vshrl.u32 %v168, 16
      %v503 = vrot.slane %v501, 7
      %v504 = vrot.slane %v503, 1
      %v506 = vshrl.u32 %v169, 16
      %v508 = vrot.slane %v506, 7
      %v509 = vrot.slane %v508, 1
      %v511 = vshrl.u32 %v170, 16
      %v513 = vrot.slane %v511, 7
      %v514 = vrot.slane %v513, 1
      %v516 = vshrl.u32 %v171, 16
      %v518 = vrot.slane %v516, 7
      %v519 = vrot.slane %v518, 1
      %v521 = vshrl.u32 %v172, 16
      %v523 = vrot.slane %v521, 7
      %v524 = vrot.slane %v523, 1
      %v526 = vshrl.u32 %v173, 16
      %v528 = vrot.slane %v526, 7
      %v529 = vrot.slane %v528, 1
      %v531 = vshrl.u32 %v174, 16
      %v533 = vrot.slane %v531, 7
      %v534 = vrot.slane %v533, 1
      %v536 = vshrl.u32 %v175, 16
      %v538 = vrot.slane %v536, 7
      %v539 = vrot.slane %v538, 1
      %v541 = vshrl.u32 %v176, 16
      %v543 = vrot.slane %v541, 7
      %v544 = vrot.slane %v543, 1
      %v546 = vshrl.u32 %v177, 16
      %v548 = vrot.slane %v546, 7
      %v549 = vrot.slane %v548, 1
      %v551 = vshrl.u32 %v178, 16
      %v553 = vrot.slane %v551, 7
      %v554 = vrot.slane %v553, 1
      %v556 = vshrl.u32 %v179, 16
      %v558 = vrot.slane %v556, 7
      %v559 = vrot.slane %v558, 1
      %v561 = vshrl.u32 %v180, 16
      %v563 = vrot.slane %v561, 7
      %v564 = vrot.slane %v563, 1
      %v566 = vshrl.u32 %v181, 16
      %v568 = vrot.slane %v566, 7
      %v569 = vrot.slane %v568, 1
      %v571 = vshrl.u32 %v182, 16
      %v573 = vrot.slane %v571, 7
      %v574 = vrot.slane %v573, 1
      %v576 = vshrl.u32 %v183, 16
      %v578 = vrot.slane %v576, 7
      %v579 = vrot.slane %v578, 1
      %v581 = vshrl.u32 %v184, 16
      %v583 = vrot.slane %v581, 7
      %v584 = vrot.slane %v583, 1
      %v586 = vshrl.u32 %v185, 16
      %v588 = vrot.slane %v586, 7
      %v589 = vrot.slane %v588, 1
      %v591 = vshrl.u32 %v186, 16
      %v593 = vrot.slane %v591, 7
      %v594 = vrot.slane %v593, 1
      %v596 = vshrl.u32 %v187, 16
      %v598 = vrot.slane %v596, 7
      %v599 = vrot.slane %v598, 1
      %v601 = vshrl.u32 %v188, 16
      %v603 = vrot.slane %v601, 7
      %v604 = vrot.slane %v603, 1
      %v606 = vshrl.u32 %v189, 16
      %v608 = vrot.slane %v606, 7
      %v609 = vrot.slane %v608, 1
      %v611 = vshrl.u32 %v190, 16
      %v613 = vrot.slane %v611, 7
      %v614 = vrot.slane %v613, 1
      %v616 = vshrl.u32 %v191, 16
      %v618 = vrot.slane %v616, 7
      %v619 = vrot.slane %v618, 1
      %v621 = vshrl.u32 %v192, 16
      %v623 = vrot.slane %v621, 7
      %v624 = vrot.slane %v623, 1
      %v626 = vshrl.u32 %v193, 16
      %v628 = vrot.slane %v626, 7
      %v629 = vrot.slane %v628, 1
      %v631 = vshrl.u32 %v194, 16
      %v633 = vrot.slane %v631, 7
      %v634 = vrot.slane %v633, 1
      %v636 = vshrl.u32 %v195, 16
      %v638 = vrot.slane %v636, 7
      %v639 = vrot.slane %v638, 1
      %v641 = vshrl.u32 %v196, 16
      %v643 = vrot.slane %v641, 7
      %v644 = vrot.slane %v643, 1
      %v646 = vshrl.u32 %v197, 16
      %v648 = vrot.slane %v646, 7
      %v649 = vrot.slane %v648, 1
      %v651 = vshrl.u32 %v198, 16
      %v653 = vrot.slane %v651, 7
      %v654 = vrot.slane %v653, 1
      %v656 = vshrl.u32 %v199, 16
      %v658 = vrot.slane %v656, 7
      %v659 = vrot.slane %v658, 1
      %v661 = vshrl.u32 %v200, 16
      %v663 = vrot.slane %v661, 7
      %v664 = vrot.slane %v663, 1
      %v666 = vshrl.u32 %v201, 16
      %v668 = vrot.slane %v666, 7
      %v669 = vrot.slane %v668, 1
      %v671 = vshrl.u32 %v202, 16
      %v673 = vrot.slane %v671, 7
      %v674 = vrot.slane %v673, 1
      %v676 = vshrl.u32 %v203, 16
      %v678 = vrot.slane %v676, 7
      %v679 = vrot.slane %v678, 1
      %v681 = vshrl.u32 %v204, 16
      %v683 = vrot.slane %v681, 7
      %v684 = vrot.slane %v683, 1
      %v686 = vshrl.u32 %v205, 16
      %v688 = vrot.slane %v686, 7
      %v689 = vrot.slane %v688, 1
      %v691 = vshrl.u32 %v206, 16
      %v693 = vrot.slane %v691, 7
      %v694 = vrot.slane %v693, 1
      %v696 = vshrl.u32 %v207, 16
      %v698 = vrot.slane %v696, 7
      %v699 = vrot.slane %v698, 1
      %v701 = vshrl.u32 %v208, 16
      %v703 = vrot.slane %v701, 7
      %v704 = vrot.slane %v703, 1
      %v706 = vshrl.u32 %v209, 16
      %v708 = vrot.slane %v706, 7
      %v709 = vrot.slane %v708, 1
      %v711 = vshrl.u32 %v210, 16
      %v713 = vrot.slane %v711, 7
      %v714 = vrot.slane %v713, 1
      %v716 = vshrl.u32 %v211, 16
      %v718 = vrot.slane %v716, 7
      %v719 = vrot.slane %v718, 1
      %v721 = vshrl.u32 %v212, 16
      %v723 = vrot.slane %v721, 7
      %v724 = vrot.slane %v723, 1
      %v726 = vshrl.u32 %v213, 16
      %v728 = vrot.slane %v726, 7
      %v729 = vrot.slane %v728, 1
      %v731 = vshrl.u32 %v214, 16
      %v733 = vrot.slane %v731, 7
      %v734 = vrot.slane %v733, 1
      %v736 = vshrl.u32 %v215, 16
      %v738 = vrot.slane %v736, 7
      %v739 = vrot.slane %v738, 1
      %v741 = vshrl.u32 %v216, 16
      %v743 = vrot.slane %v741, 7
      %v744 = vrot.slane %v743, 1
      %v746 = vshrl.u32 %v217, 16
      %v748 = vrot.slane %v746, 7
      %v749 = vrot.slane %v748, 1
      %v751 = vshrl.u32 %v218, 16
      %v753 = vrot.slane %v751, 7
      %v754 = vrot.slane %v753, 1
      %v756 = vshrl.u32 %v219, 16
      %v758 = vrot.slane %v756, 7
      %v759 = vrot.slane %v758, 1
      %v761 = vshrl.u32 %v220, 16
      %v763 = vrot.slane %v761, 7
      %v764 = vrot.slane %v763, 1
      %v766 = vshrl.u32 %v221, 16
      %v768 = vrot.slane %v766, 7
      %v769 = vrot.slane %v768, 1
      %v771 = vshrl.u32 %v222, 16
      %v773 = vrot.slane %v771, 7
      %v774 = vrot.slane %v773, 1
      %v776 = vshrl.u32 %v223, 16
      %v778 = vrot.slane %v776, 7
      %v779 = vrot.slane %v778, 1
      %v781 = vshrl.u32 %v224, 16
      %v783 = vrot.slane %v781, 7
      %v784 = vrot.slane %v783, 1
      %v786 = vshrl.u32 %v225, 16
      %v788 = vrot.slane %v786, 7
      %v789 = vrot.slane %v788, 1
      %v791 = vshrl.u32 %v226, 16
      %v793 = vrot.slane %v791, 7
      %v794 = vrot.slane %v793, 1
      %v796 = vshrl.u32 %v227, 16
      %v798 = vrot.slane %v796, 7
      %v799 = vrot.slane %v798, 1
      %v801 = vshrl.u32 %v228, 16
      %v803 = vrot.slane %v801, 7
      %v804 = vrot.slane %v803, 1
      %v806 = vshrl.u32 %v229, 16
      %v808 = vrot.slane %v806, 7
      %v809 = vrot.slane %v808, 1
      %v811 = vshrl.u32 %v230, 16
      %v813 = vrot.slane %v811, 7
      %v814 = vrot.slane %v813, 1
      %v816 = vshrl.u32 %v231, 16
      %v818 = vrot.slane %v816, 7
      %v819 = vrot.slane %v818, 1
      %v821 = vshrl.u32 %v232, 16
      %v823 = vrot.slane %v821, 7
      %v824 = vrot.slane %v823, 1
      %v826 = vshrl.u32 %v233, 16
      %v828 = vrot.slane %v826, 7
      %v829 = vrot.slane %v828, 1
      %v831 = vshrl.u32 %v234, 16
      %v833 = vrot.slane %v831, 7
      %v834 = vrot.slane %v833, 1
      %v836 = vshrl.u32 %v235, 16
      %v838 = vrot.slane %v836, 7
      %v839 = vrot.slane %v838, 1
      %v841 = vshrl.u32 %v236, 16
      %v843 = vrot.slane %v841, 7
      %v844 = vrot.slane %v843, 1
      %v846 = vshrl.u32 %v237, 16
      %v848 = vrot.slane %v846, 7
      %v849 = vrot.slane %v848, 1
      %v851 = vshrl.u32 %v238, 16
      %v853 = vrot.slane %v851, 7
      %v854 = vrot.slane %v853, 1
      %v856 = vshrl.u32 %v239, 16
      %v858 = vrot.slane %v856, 7
      %v859 = vrot.slane %v858, 1
      %v861 = vshrl.u32 %v240, 16
      %v863 = vrot.slane %v861, 7
      %v864 = vrot.slane %v863, 1
      %v866 = vshrl.u32 %v241, 16
      %v868 = vrot.slane %v866, 7
      %v869 = vrot.slane %v868, 1
      %v871 = vshrl.u32 %v242, 16
      %v873 = vrot.slane %v871, 7
      %v874 = vrot.slane %v873, 1
      %v876 = vshrl.u32 %v243, 16
      %v878 = vrot.slane %v876, 7
      %v879 = vrot.slane %v878, 1
      %v881 = vshrl.u32 %v244, 16
      %v883 = vrot.slane %v881, 7
      %v884 = vrot.slane %v883, 1
      %v1013 = vmax.bf16 %v117, %v249
      %v1014 = vmax.bf16 %v118, %v254
      %v1015 = vmax.bf16 %v119, %v259
      %v1016 = vmax.bf16 %v120, %v264
      %v1017 = vmax.bf16 %v121, %v269
      %v1018 = vmax.bf16 %v122, %v274
      %v1019 = vmax.bf16 %v123, %v279
      %v1020 = vmax.bf16 %v124, %v284
      %v1021 = vmax.bf16 %v125, %v289
      %v1022 = vmax.bf16 %v126, %v294
      %v1023 = vmax.bf16 %v127, %v299
      %v1024 = vmax.bf16 %v128, %v304
      %v1025 = vmax.bf16 %v129, %v309
      %v1026 = vmax.bf16 %v130, %v314
      %v1027 = vmax.bf16 %v131, %v319
      %v1028 = vmax.bf16 %v132, %v324
      %v1029 = vmax.bf16 %v133, %v329
      %v1030 = vmax.bf16 %v134, %v334
      %v1031 = vmax.bf16 %v135, %v339
      %v1032 = vmax.bf16 %v136, %v344
      %v1033 = vmax.bf16 %v137, %v349
      %v1034 = vmax.bf16 %v138, %v354
      %v1035 = vmax.bf16 %v139, %v359
      %v1036 = vmax.bf16 %v140, %v364
      %v1037 = vmax.bf16 %v141, %v369
      %v1038 = vmax.bf16 %v142, %v374
      %v1039 = vmax.bf16 %v143, %v379
      %v1040 = vmax.bf16 %v144, %v384
      %v1041 = vmax.bf16 %v145, %v389
      %v1042 = vmax.bf16 %v146, %v394
      %v1043 = vmax.bf16 %v147, %v399
      %v1044 = vmax.bf16 %v148, %v404
      %v1045 = vmax.bf16 %v149, %v409
      %v1046 = vmax.bf16 %v150, %v414
      %v1047 = vmax.bf16 %v151, %v419
      %v1048 = vmax.bf16 %v152, %v424
      %v1049 = vmax.bf16 %v153, %v429
      %v1050 = vmax.bf16 %v154, %v434
      %v1051 = vmax.bf16 %v155, %v439
      %v1052 = vmax.bf16 %v156, %v444
      %v1053 = vmax.bf16 %v157, %v449
      %v1054 = vmax.bf16 %v158, %v454
      %v1055 = vmax.bf16 %v159, %v459
      %v1056 = vmax.bf16 %v160, %v464
      %v1057 = vmax.bf16 %v161, %v469
      %v1058 = vmax.bf16 %v162, %v474
      %v1059 = vmax.bf16 %v163, %v479
      %v1060 = vmax.bf16 %v164, %v484
      %v1061 = vmax.bf16 %v165, %v489
      %v1062 = vmax.bf16 %v166, %v494
      %v1063 = vmax.bf16 %v167, %v499
      %v1064 = vmax.bf16 %v168, %v504
      %v1065 = vmax.bf16 %v169, %v509
      %v1066 = vmax.bf16 %v170, %v514
      %v1067 = vmax.bf16 %v171, %v519
      %v1068 = vmax.bf16 %v172, %v524
      %v1069 = vmax.bf16 %v173, %v529
      %v1070 = vmax.bf16 %v174, %v534
      %v1071 = vmax.bf16 %v175, %v539
      %v1072 = vmax.bf16 %v176, %v544
      %v1073 = vmax.bf16 %v177, %v549
      %v1074 = vmax.bf16 %v178, %v554
      %v1075 = vmax.bf16 %v179, %v559
      %v1076 = vmax.bf16 %v180, %v564
      %v1077 = vmax.bf16 %v181, %v569
      %v1078 = vmax.bf16 %v182, %v574
      %v1079 = vmax.bf16 %v183, %v579
      %v1080 = vmax.bf16 %v184, %v584
      %v1081 = vmax.bf16 %v185, %v589
      %v1082 = vmax.bf16 %v186, %v594
      %v1083 = vmax.bf16 %v187, %v599
      %v1084 = vmax.bf16 %v188, %v604
      %v1085 = vmax.bf16 %v189, %v609
      %v1086 = vmax.bf16 %v190, %v614
      %v1087 = vmax.bf16 %v191, %v619
      %v1088 = vmax.bf16 %v192, %v624
      %v1089 = vmax.bf16 %v193, %v629
      %v1090 = vmax.bf16 %v194, %v634
      %v1091 = vmax.bf16 %v195, %v639
      %v1092 = vmax.bf16 %v196, %v644
      %v1093 = vmax.bf16 %v197, %v649
      %v1094 = vmax.bf16 %v198, %v654
      %v1095 = vmax.bf16 %v199, %v659
      %v1096 = vmax.bf16 %v200, %v664
      %v1097 = vmax.bf16 %v201, %v669
      %v1098 = vmax.bf16 %v202, %v674
      %v1099 = vmax.bf16 %v203, %v679
      %v1100 = vmax.bf16 %v204, %v684
      %v1101 = vmax.bf16 %v205, %v689
      %v1102 = vmax.bf16 %v206, %v694
      %v1103 = vmax.bf16 %v207, %v699
      %v1104 = vmax.bf16 %v208, %v704
      %v1105 = vmax.bf16 %v209, %v709
      %v1106 = vmax.bf16 %v210, %v714
      %v1107 = vmax.bf16 %v211, %v719
      %v1108 = vmax.bf16 %v212, %v724
      %v1109 = vmax.bf16 %v213, %v729
      %v1110 = vmax.bf16 %v214, %v734
      %v1111 = vmax.bf16 %v215, %v739
      %v1112 = vmax.bf16 %v216, %v744
      %v1113 = vmax.bf16 %v217, %v749
      %v1114 = vmax.bf16 %v218, %v754
      %v1115 = vmax.bf16 %v219, %v759
      %v1116 = vmax.bf16 %v220, %v764
      %v1117 = vmax.bf16 %v221, %v769
      %v1118 = vmax.bf16 %v222, %v774
      %v1119 = vmax.bf16 %v223, %v779
      %v1120 = vmax.bf16 %v224, %v784
      %v1121 = vmax.bf16 %v225, %v789
      %v1122 = vmax.bf16 %v226, %v794
      %v1123 = vmax.bf16 %v227, %v799
      %v1124 = vmax.bf16 %v228, %v804
      %v1125 = vmax.bf16 %v229, %v809
      %v1126 = vmax.bf16 %v230, %v814
      %v1127 = vmax.bf16 %v231, %v819
      %v1128 = vmax.bf16 %v232, %v824
      %v1129 = vmax.bf16 %v233, %v829
      %v1130 = vmax.bf16 %v234, %v834
      %v1131 = vmax.bf16 %v235, %v839
      %v1132 = vmax.bf16 %v236, %v844
      %v1133 = vmax.bf16 %v237, %v849
      %v1134 = vmax.bf16 %v238, %v854
      %v1135 = vmax.bf16 %v239, %v859
      %v1136 = vmax.bf16 %v240, %v864
      %v1137 = vmax.bf16 %v241, %v869
      %v1138 = vmax.bf16 %v242, %v874
      %v1139 = vmax.bf16 %v243, %v879
      %v1140 = vmax.bf16 %v244, %v884
      %v1270 = vunpack.c.l.s4 1935823168
      %v1271 = vunpack.c.0.s8 %v1270
      %v1272 = vlaneseq
      %v1273 = vshrl.u32 %v1272, 7
      %v1274 = vsub.s32 %v1271, %v1273
      %v1275 = vrot.slane %v1013, %v1274
      %v1277 = vunpack.c.l.s4 1935823168
      %v1278 = vunpack.c.0.s8 %v1277
      %v1279 = vlaneseq
      %v1280 = vshrl.u32 %v1279, 7
      %v1281 = vsub.s32 %v1278, %v1280
      %v1282 = vrot.slane %v1275, %v1281
      %v1284 = vunpack.c.l.s4 1935823168
      %v1285 = vunpack.c.0.s8 %v1284
      %v1286 = vlaneseq
      %v1287 = vshrl.u32 %v1286, 7
      %v1288 = vsub.s32 %v1285, %v1287
      %v1289 = vrot.slane %v1014, %v1288
      %v1291 = vunpack.c.l.s4 1935823168
      %v1292 = vunpack.c.0.s8 %v1291
      %v1293 = vlaneseq
      %v1294 = vshrl.u32 %v1293, 7
      %v1295 = vsub.s32 %v1292, %v1294
      %v1296 = vrot.slane %v1289, %v1295
      %v1298 = vunpack.c.l.s4 1935823168
      %v1299 = vunpack.c.0.s8 %v1298
      %v1300 = vlaneseq
      %v1301 = vshrl.u32 %v1300, 7
      %v1302 = vsub.s32 %v1299, %v1301
      %v1303 = vrot.slane %v1015, %v1302
      %v1305 = vunpack.c.l.s4 1935823168
      %v1306 = vunpack.c.0.s8 %v1305
      %v1307 = vlaneseq
      %v1308 = vshrl.u32 %v1307, 7
      %v1309 = vsub.s32 %v1306, %v1308
      %v1310 = vrot.slane %v1303, %v1309
      %v1312 = vunpack.c.l.s4 1935823168
      %v1313 = vunpack.c.0.s8 %v1312
      %v1314 = vlaneseq
      %v1315 = vshrl.u32 %v1314, 7
      %v1316 = vsub.s32 %v1313, %v1315
      %v1317 = vrot.slane %v1016, %v1316
      %v1319 = vunpack.c.l.s4 1935823168
      %v1320 = vunpack.c.0.s8 %v1319
      %v1321 = vlaneseq
      %v1322 = vshrl.u32 %v1321, 7
      %v1323 = vsub.s32 %v1320, %v1322
      %v1324 = vrot.slane %v1317, %v1323
      %v1326 = vunpack.c.l.s4 1935823168
      %v1327 = vunpack.c.0.s8 %v1326
      %v1328 = vlaneseq
      %v1329 = vshrl.u32 %v1328, 7
      %v1330 = vsub.s32 %v1327, %v1329
      %v1331 = vrot.slane %v1017, %v1330
      %v1333 = vunpack.c.l.s4 1935823168
      %v1334 = vunpack.c.0.s8 %v1333
      %v1335 = vlaneseq
      %v1336 = vshrl.u32 %v1335, 7
      %v1337 = vsub.s32 %v1334, %v1336
      %v1338 = vrot.slane %v1331, %v1337
      %v1340 = vunpack.c.l.s4 1935823168
      %v1341 = vunpack.c.0.s8 %v1340
      %v1342 = vlaneseq
      %v1343 = vshrl.u32 %v1342, 7
      %v1344 = vsub.s32 %v1341, %v1343
      %v1345 = vrot.slane %v1018, %v1344
      %v1347 = vunpack.c.l.s4 1935823168
      %v1348 = vunpack.c.0.s8 %v1347
      %v1349 = vlaneseq
      %v1350 = vshrl.u32 %v1349, 7
      %v1351 = vsub.s32 %v1348, %v1350
      %v1352 = vrot.slane %v1345, %v1351
      %v1354 = vunpack.c.l.s4 1935823168
      %v1355 = vunpack.c.0.s8 %v1354
      %v1356 = vlaneseq
      %v1357 = vshrl.u32 %v1356, 7
      %v1358 = vsub.s32 %v1355, %v1357
      %v1359 = vrot.slane %v1019, %v1358
      %v1361 = vunpack.c.l.s4 1935823168
      %v1362 = vunpack.c.0.s8 %v1361
      %v1363 = vlaneseq
      %v1364 = vshrl.u32 %v1363, 7
      %v1365 = vsub.s32 %v1362, %v1364
      %v1366 = vrot.slane %v1359, %v1365
      %v1368 = vunpack.c.l.s4 1935823168
      %v1369 = vunpack.c.0.s8 %v1368
      %v1370 = vlaneseq
      %v1371 = vshrl.u32 %v1370, 7
      %v1372 = vsub.s32 %v1369, %v1371
      %v1373 = vrot.slane %v1020, %v1372
      %v1375 = vunpack.c.l.s4 1935823168
      %v1376 = vunpack.c.0.s8 %v1375
      %v1377 = vlaneseq
      %v1378 = vshrl.u32 %v1377, 7
      %v1379 = vsub.s32 %v1376, %v1378
      %v1380 = vrot.slane %v1373, %v1379
      %v1382 = vunpack.c.l.s4 1935823168
      %v1383 = vunpack.c.0.s8 %v1382
      %v1384 = vlaneseq
      %v1385 = vshrl.u32 %v1384, 7
      %v1386 = vsub.s32 %v1383, %v1385
      %v1387 = vrot.slane %v1021, %v1386
      %v1389 = vunpack.c.l.s4 1935823168
      %v1390 = vunpack.c.0.s8 %v1389
      %v1391 = vlaneseq
      %v1392 = vshrl.u32 %v1391, 7
      %v1393 = vsub.s32 %v1390, %v1392
      %v1394 = vrot.slane %v1387, %v1393
      %v1396 = vunpack.c.l.s4 1935823168
      %v1397 = vunpack.c.0.s8 %v1396
      %v1398 = vlaneseq
      %v1399 = vshrl.u32 %v1398, 7
      %v1400 = vsub.s32 %v1397, %v1399
      %v1401 = vrot.slane %v1022, %v1400
      %v1403 = vunpack.c.l.s4 1935823168
      %v1404 = vunpack.c.0.s8 %v1403
      %v1405 = vlaneseq
      %v1406 = vshrl.u32 %v1405, 7
      %v1407 = vsub.s32 %v1404, %v1406
      %v1408 = vrot.slane %v1401, %v1407
      %v1410 = vunpack.c.l.s4 1935823168
      %v1411 = vunpack.c.0.s8 %v1410
      %v1412 = vlaneseq
      %v1413 = vshrl.u32 %v1412, 7
      %v1414 = vsub.s32 %v1411, %v1413
      %v1415 = vrot.slane %v1023, %v1414
      %v1417 = vunpack.c.l.s4 1935823168
      %v1418 = vunpack.c.0.s8 %v1417
      %v1419 = vlaneseq
      %v1420 = vshrl.u32 %v1419, 7
      %v1421 = vsub.s32 %v1418, %v1420
      %v1422 = vrot.slane %v1415, %v1421
      %v1424 = vunpack.c.l.s4 1935823168
      %v1425 = vunpack.c.0.s8 %v1424
      %v1426 = vlaneseq
      %v1427 = vshrl.u32 %v1426, 7
      %v1428 = vsub.s32 %v1425, %v1427
      %v1429 = vrot.slane %v1024, %v1428
      %v1431 = vunpack.c.l.s4 1935823168
      %v1432 = vunpack.c.0.s8 %v1431
      %v1433 = vlaneseq
      %v1434 = vshrl.u32 %v1433, 7
      %v1435 = vsub.s32 %v1432, %v1434
      %v1436 = vrot.slane %v1429, %v1435
      %v1438 = vunpack.c.l.s4 1935823168
      %v1439 = vunpack.c.0.s8 %v1438
      %v1440 = vlaneseq
      %v1441 = vshrl.u32 %v1440, 7
      %v1442 = vsub.s32 %v1439, %v1441
      %v1443 = vrot.slane %v1025, %v1442
      %v1445 = vunpack.c.l.s4 1935823168
      %v1446 = vunpack.c.0.s8 %v1445
      %v1447 = vlaneseq
      %v1448 = vshrl.u32 %v1447, 7
      %v1449 = vsub.s32 %v1446, %v1448
      %v1450 = vrot.slane %v1443, %v1449
      %v1452 = vunpack.c.l.s4 1935823168
      %v1453 = vunpack.c.0.s8 %v1452
      %v1454 = vlaneseq
      %v1455 = vshrl.u32 %v1454, 7
      %v1456 = vsub.s32 %v1453, %v1455
      %v1457 = vrot.slane %v1026, %v1456
      %v1459 = vunpack.c.l.s4 1935823168
      %v1460 = vunpack.c.0.s8 %v1459
      %v1461 = vlaneseq
      %v1462 = vshrl.u32 %v1461, 7
      %v1463 = vsub.s32 %v1460, %v1462
      %v1464 = vrot.slane %v1457, %v1463
      %v1466 = vunpack.c.l.s4 1935823168
      %v1467 = vunpack.c.0.s8 %v1466
      %v1468 = vlaneseq
      %v1469 = vshrl.u32 %v1468, 7
      %v1470 = vsub.s32 %v1467, %v1469
      %v1471 = vrot.slane %v1027, %v1470
      %v1473 = vunpack.c.l.s4 1935823168
      %v1474 = vunpack.c.0.s8 %v1473
      %v1475 = vlaneseq
      %v1476 = vshrl.u32 %v1475, 7
      %v1477 = vsub.s32 %v1474, %v1476
      %v1478 = vrot.slane %v1471, %v1477
      %v1480 = vunpack.c.l.s4 1935823168
      %v1481 = vunpack.c.0.s8 %v1480
      %v1482 = vlaneseq
      %v1483 = vshrl.u32 %v1482, 7
      %v1484 = vsub.s32 %v1481, %v1483
      %v1485 = vrot.slane %v1028, %v1484
      %v1487 = vunpack.c.l.s4 1935823168
      %v1488 = vunpack.c.0.s8 %v1487
      %v1489 = vlaneseq
      %v1490 = vshrl.u32 %v1489, 7
      %v1491 = vsub.s32 %v1488, %v1490
      %v1492 = vrot.slane %v1485, %v1491
      %v1494 = vunpack.c.l.s4 1935823168
      %v1495 = vunpack.c.0.s8 %v1494
      %v1496 = vlaneseq
      %v1497 = vshrl.u32 %v1496, 7
      %v1498 = vsub.s32 %v1495, %v1497
      %v1499 = vrot.slane %v1029, %v1498
      %v1501 = vunpack.c.l.s4 1935823168
      %v1502 = vunpack.c.0.s8 %v1501
      %v1503 = vlaneseq
      %v1504 = vshrl.u32 %v1503, 7
      %v1505 = vsub.s32 %v1502, %v1504
      %v1506 = vrot.slane %v1499, %v1505
      %v1508 = vunpack.c.l.s4 1935823168
      %v1509 = vunpack.c.0.s8 %v1508
      %v1510 = vlaneseq
      %v1511 = vshrl.u32 %v1510, 7
      %v1512 = vsub.s32 %v1509, %v1511
      %v1513 = vrot.slane %v1030, %v1512
      %v1515 = vunpack.c.l.s4 1935823168
      %v1516 = vunpack.c.0.s8 %v1515
      %v1517 = vlaneseq
      %v1518 = vshrl.u32 %v1517, 7
      %v1519 = vsub.s32 %v1516, %v1518
      %v1520 = vrot.slane %v1513, %v1519
      %v1522 = vunpack.c.l.s4 1935823168
      %v1523 = vunpack.c.0.s8 %v1522
      %v1524 = vlaneseq
      %v1525 = vshrl.u32 %v1524, 7
      %v1526 = vsub.s32 %v1523, %v1525
      %v1527 = vrot.slane %v1031, %v1526
      %v1529 = vunpack.c.l.s4 1935823168
      %v1530 = vunpack.c.0.s8 %v1529
      %v1531 = vlaneseq
      %v1532 = vshrl.u32 %v1531, 7
      %v1533 = vsub.s32 %v1530, %v1532
      %v1534 = vrot.slane %v1527, %v1533
      %v1536 = vunpack.c.l.s4 1935823168
      %v1537 = vunpack.c.0.s8 %v1536
      %v1538 = vlaneseq
      %v1539 = vshrl.u32 %v1538, 7
      %v1540 = vsub.s32 %v1537, %v1539
      %v1541 = vrot.slane %v1032, %v1540
      %v1543 = vunpack.c.l.s4 1935823168
      %v1544 = vunpack.c.0.s8 %v1543
      %v1545 = vlaneseq
      %v1546 = vshrl.u32 %v1545, 7
      %v1547 = vsub.s32 %v1544, %v1546
      %v1548 = vrot.slane %v1541, %v1547
      %v1550 = vunpack.c.l.s4 1935823168
      %v1551 = vunpack.c.0.s8 %v1550
      %v1552 = vlaneseq
      %v1553 = vshrl.u32 %v1552, 7
      %v1554 = vsub.s32 %v1551, %v1553
      %v1555 = vrot.slane %v1033, %v1554
      %v1557 = vunpack.c.l.s4 1935823168
      %v1558 = vunpack.c.0.s8 %v1557
      %v1559 = vlaneseq
      %v1560 = vshrl.u32 %v1559, 7
      %v1561 = vsub.s32 %v1558, %v1560
      %v1562 = vrot.slane %v1555, %v1561
      %v1564 = vunpack.c.l.s4 1935823168
      %v1565 = vunpack.c.0.s8 %v1564
      %v1566 = vlaneseq
      %v1567 = vshrl.u32 %v1566, 7
      %v1568 = vsub.s32 %v1565, %v1567
      %v1569 = vrot.slane %v1034, %v1568
      %v1571 = vunpack.c.l.s4 1935823168
      %v1572 = vunpack.c.0.s8 %v1571
      %v1573 = vlaneseq
      %v1574 = vshrl.u32 %v1573, 7
      %v1575 = vsub.s32 %v1572, %v1574
      %v1576 = vrot.slane %v1569, %v1575
      %v1578 = vunpack.c.l.s4 1935823168
      %v1579 = vunpack.c.0.s8 %v1578
      %v1580 = vlaneseq
      %v1581 = vshrl.u32 %v1580, 7
      %v1582 = vsub.s32 %v1579, %v1581
      %v1583 = vrot.slane %v1035, %v1582
      %v1585 = vunpack.c.l.s4 1935823168
      %v1586 = vunpack.c.0.s8 %v1585
      %v1587 = vlaneseq
      %v1588 = vshrl.u32 %v1587, 7
      %v1589 = vsub.s32 %v1586, %v1588
      %v1590 = vrot.slane %v1583, %v1589
      %v1592 = vunpack.c.l.s4 1935823168
      %v1593 = vunpack.c.0.s8 %v1592
      %v1594 = vlaneseq
      %v1595 = vshrl.u32 %v1594, 7
      %v1596 = vsub.s32 %v1593, %v1595
      %v1597 = vrot.slane %v1036, %v1596
      %v1599 = vunpack.c.l.s4 1935823168
      %v1600 = vunpack.c.0.s8 %v1599
      %v1601 = vlaneseq
      %v1602 = vshrl.u32 %v1601, 7
      %v1603 = vsub.s32 %v1600, %v1602
      %v1604 = vrot.slane %v1597, %v1603
      %v1606 = vunpack.c.l.s4 1935823168
      %v1607 = vunpack.c.0.s8 %v1606
      %v1608 = vlaneseq
      %v1609 = vshrl.u32 %v1608, 7
      %v1610 = vsub.s32 %v1607, %v1609
      %v1611 = vrot.slane %v1037, %v1610
      %v1613 = vunpack.c.l.s4 1935823168
      %v1614 = vunpack.c.0.s8 %v1613
      %v1615 = vlaneseq
      %v1616 = vshrl.u32 %v1615, 7
      %v1617 = vsub.s32 %v1614, %v1616
      %v1618 = vrot.slane %v1611, %v1617
      %v1620 = vunpack.c.l.s4 1935823168
      %v1621 = vunpack.c.0.s8 %v1620
      %v1622 = vlaneseq
      %v1623 = vshrl.u32 %v1622, 7
      %v1624 = vsub.s32 %v1621, %v1623
      %v1625 = vrot.slane %v1038, %v1624
      %v1627 = vunpack.c.l.s4 1935823168
      %v1628 = vunpack.c.0.s8 %v1627
      %v1629 = vlaneseq
      %v1630 = vshrl.u32 %v1629, 7
      %v1631 = vsub.s32 %v1628, %v1630
      %v1632 = vrot.slane %v1625, %v1631
      %v1634 = vunpack.c.l.s4 1935823168
      %v1635 = vunpack.c.0.s8 %v1634
      %v1636 = vlaneseq
      %v1637 = vshrl.u32 %v1636, 7
      %v1638 = vsub.s32 %v1635, %v1637
      %v1639 = vrot.slane %v1039, %v1638
      %v1641 = vunpack.c.l.s4 1935823168
      %v1642 = vunpack.c.0.s8 %v1641
      %v1643 = vlaneseq
      %v1644 = vshrl.u32 %v1643, 7
      %v1645 = vsub.s32 %v1642, %v1644
      %v1646 = vrot.slane %v1639, %v1645
      %v1648 = vunpack.c.l.s4 1935823168
      %v1649 = vunpack.c.0.s8 %v1648
      %v1650 = vlaneseq
      %v1651 = vshrl.u32 %v1650, 7
      %v1652 = vsub.s32 %v1649, %v1651
      %v1653 = vrot.slane %v1040, %v1652
      %v1655 = vunpack.c.l.s4 1935823168
      %v1656 = vunpack.c.0.s8 %v1655
      %v1657 = vlaneseq
      %v1658 = vshrl.u32 %v1657, 7
      %v1659 = vsub.s32 %v1656, %v1658
      %v1660 = vrot.slane %v1653, %v1659
      %v1662 = vunpack.c.l.s4 1935823168
      %v1663 = vunpack.c.0.s8 %v1662
      %v1664 = vlaneseq
      %v1665 = vshrl.u32 %v1664, 7
      %v1666 = vsub.s32 %v1663, %v1665
      %v1667 = vrot.slane %v1041, %v1666
      %v1669 = vunpack.c.l.s4 1935823168
      %v1670 = vunpack.c.0.s8 %v1669
      %v1671 = vlaneseq
      %v1672 = vshrl.u32 %v1671, 7
      %v1673 = vsub.s32 %v1670, %v1672
      %v1674 = vrot.slane %v1667, %v1673
      %v1676 = vunpack.c.l.s4 1935823168
      %v1677 = vunpack.c.0.s8 %v1676
      %v1678 = vlaneseq
      %v1679 = vshrl.u32 %v1678, 7
      %v1680 = vsub.s32 %v1677, %v1679
      %v1681 = vrot.slane %v1042, %v1680
      %v1683 = vunpack.c.l.s4 1935823168
      %v1684 = vunpack.c.0.s8 %v1683
      %v1685 = vlaneseq
      %v1686 = vshrl.u32 %v1685, 7
      %v1687 = vsub.s32 %v1684, %v1686
      %v1688 = vrot.slane %v1681, %v1687
      %v1690 = vunpack.c.l.s4 1935823168
      %v1691 = vunpack.c.0.s8 %v1690
      %v1692 = vlaneseq
      %v1693 = vshrl.u32 %v1692, 7
      %v1694 = vsub.s32 %v1691, %v1693
      %v1695 = vrot.slane %v1043, %v1694
      %v1697 = vunpack.c.l.s4 1935823168
      %v1698 = vunpack.c.0.s8 %v1697
      %v1699 = vlaneseq
      %v1700 = vshrl.u32 %v1699, 7
      %v1701 = vsub.s32 %v1698, %v1700
      %v1702 = vrot.slane %v1695, %v1701
      %v1704 = vunpack.c.l.s4 1935823168
      %v1705 = vunpack.c.0.s8 %v1704
      %v1706 = vlaneseq
      %v1707 = vshrl.u32 %v1706, 7
      %v1708 = vsub.s32 %v1705, %v1707
      %v1709 = vrot.slane %v1044, %v1708
      %v1711 = vunpack.c.l.s4 1935823168
      %v1712 = vunpack.c.0.s8 %v1711
      %v1713 = vlaneseq
      %v1714 = vshrl.u32 %v1713, 7
      %v1715 = vsub.s32 %v1712, %v1714
      %v1716 = vrot.slane %v1709, %v1715
      %v1718 = vunpack.c.l.s4 1935823168
      %v1719 = vunpack.c.0.s8 %v1718
      %v1720 = vlaneseq
      %v1721 = vshrl.u32 %v1720, 7
      %v1722 = vsub.s32 %v1719, %v1721
      %v1723 = vrot.slane %v1045, %v1722
      %v1725 = vunpack.c.l.s4 1935823168
      %v1726 = vunpack.c.0.s8 %v1725
      %v1727 = vlaneseq
      %v1728 = vshrl.u32 %v1727, 7
      %v1729 = vsub.s32 %v1726, %v1728
      %v1730 = vrot.slane %v1723, %v1729
      %v1732 = vunpack.c.l.s4 1935823168
      %v1733 = vunpack.c.0.s8 %v1732
      %v1734 = vlaneseq
      %v1735 = vshrl.u32 %v1734, 7
      %v1736 = vsub.s32 %v1733, %v1735
      %v1737 = vrot.slane %v1046, %v1736
      %v1739 = vunpack.c.l.s4 1935823168
      %v1740 = vunpack.c.0.s8 %v1739
      %v1741 = vlaneseq
      %v1742 = vshrl.u32 %v1741, 7
      %v1743 = vsub.s32 %v1740, %v1742
      %v1744 = vrot.slane %v1737, %v1743
      %v1746 = vunpack.c.l.s4 1935823168
      %v1747 = vunpack.c.0.s8 %v1746
      %v1748 = vlaneseq
      %v1749 = vshrl.u32 %v1748, 7
      %v1750 = vsub.s32 %v1747, %v1749
      %v1751 = vrot.slane %v1047, %v1750
      %v1753 = vunpack.c.l.s4 1935823168
      %v1754 = vunpack.c.0.s8 %v1753
      %v1755 = vlaneseq
      %v1756 = vshrl.u32 %v1755, 7
      %v1757 = vsub.s32 %v1754, %v1756
      %v1758 = vrot.slane %v1751, %v1757
      %v1760 = vunpack.c.l.s4 1935823168
      %v1761 = vunpack.c.0.s8 %v1760
      %v1762 = vlaneseq
      %v1763 = vshrl.u32 %v1762, 7
      %v1764 = vsub.s32 %v1761, %v1763
      %v1765 = vrot.slane %v1048, %v1764
      %v1767 = vunpack.c.l.s4 1935823168
      %v1768 = vunpack.c.0.s8 %v1767
      %v1769 = vlaneseq
      %v1770 = vshrl.u32 %v1769, 7
      %v1771 = vsub.s32 %v1768, %v1770
      %v1772 = vrot.slane %v1765, %v1771
      %v1774 = vunpack.c.l.s4 1935823168
      %v1775 = vunpack.c.0.s8 %v1774
      %v1776 = vlaneseq
      %v1777 = vshrl.u32 %v1776, 7
      %v1778 = vsub.s32 %v1775, %v1777
      %v1779 = vrot.slane %v1049, %v1778
      %v1781 = vunpack.c.l.s4 1935823168
      %v1782 = vunpack.c.0.s8 %v1781
      %v1783 = vlaneseq
      %v1784 = vshrl.u32 %v1783, 7
      %v1785 = vsub.s32 %v1782, %v1784
      %v1786 = vrot.slane %v1779, %v1785
      %v1788 = vunpack.c.l.s4 1935823168
      %v1789 = vunpack.c.0.s8 %v1788
      %v1790 = vlaneseq
      %v1791 = vshrl.u32 %v1790, 7
      %v1792 = vsub.s32 %v1789, %v1791
      %v1793 = vrot.slane %v1050, %v1792
      %v1795 = vunpack.c.l.s4 1935823168
      %v1796 = vunpack.c.0.s8 %v1795
      %v1797 = vlaneseq
      %v1798 = vshrl.u32 %v1797, 7
      %v1799 = vsub.s32 %v1796, %v1798
      %v1800 = vrot.slane %v1793, %v1799
      %v1802 = vunpack.c.l.s4 1935823168
      %v1803 = vunpack.c.0.s8 %v1802
      %v1804 = vlaneseq
      %v1805 = vshrl.u32 %v1804, 7
      %v1806 = vsub.s32 %v1803, %v1805
      %v1807 = vrot.slane %v1051, %v1806
      %v1809 = vunpack.c.l.s4 1935823168
      %v1810 = vunpack.c.0.s8 %v1809
      %v1811 = vlaneseq
      %v1812 = vshrl.u32 %v1811, 7
      %v1813 = vsub.s32 %v1810, %v1812
      %v1814 = vrot.slane %v1807, %v1813
      %v1816 = vunpack.c.l.s4 1935823168
      %v1817 = vunpack.c.0.s8 %v1816
      %v1818 = vlaneseq
      %v1819 = vshrl.u32 %v1818, 7
      %v1820 = vsub.s32 %v1817, %v1819
      %v1821 = vrot.slane %v1052, %v1820
      %v1823 = vunpack.c.l.s4 1935823168
      %v1824 = vunpack.c.0.s8 %v1823
      %v1825 = vlaneseq
      %v1826 = vshrl.u32 %v1825, 7
      %v1827 = vsub.s32 %v1824, %v1826
      %v1828 = vrot.slane %v1821, %v1827
      %v1830 = vunpack.c.l.s4 1935823168
      %v1831 = vunpack.c.0.s8 %v1830
      %v1832 = vlaneseq
      %v1833 = vshrl.u32 %v1832, 7
      %v1834 = vsub.s32 %v1831, %v1833
      %v1835 = vrot.slane %v1053, %v1834
      %v1837 = vunpack.c.l.s4 1935823168
      %v1838 = vunpack.c.0.s8 %v1837
      %v1839 = vlaneseq
      %v1840 = vshrl.u32 %v1839, 7
      %v1841 = vsub.s32 %v1838, %v1840
      %v1842 = vrot.slane %v1835, %v1841
      %v1844 = vunpack.c.l.s4 1935823168
      %v1845 = vunpack.c.0.s8 %v1844
      %v1846 = vlaneseq
      %v1847 = vshrl.u32 %v1846, 7
      %v1848 = vsub.s32 %v1845, %v1847
      %v1849 = vrot.slane %v1054, %v1848
      %v1851 = vunpack.c.l.s4 1935823168
      %v1852 = vunpack.c.0.s8 %v1851
      %v1853 = vlaneseq
      %v1854 = vshrl.u32 %v1853, 7
      %v1855 = vsub.s32 %v1852, %v1854
      %v1856 = vrot.slane %v1849, %v1855
      %v1858 = vunpack.c.l.s4 1935823168
      %v1859 = vunpack.c.0.s8 %v1858
      %v1860 = vlaneseq
      %v1861 = vshrl.u32 %v1860, 7
      %v1862 = vsub.s32 %v1859, %v1861
      %v1863 = vrot.slane %v1055, %v1862
      %v1865 = vunpack.c.l.s4 1935823168
      %v1866 = vunpack.c.0.s8 %v1865
      %v1867 = vlaneseq
      %v1868 = vshrl.u32 %v1867, 7
      %v1869 = vsub.s32 %v1866, %v1868
      %v1870 = vrot.slane %v1863, %v1869
      %v1872 = vunpack.c.l.s4 1935823168
      %v1873 = vunpack.c.0.s8 %v1872
      %v1874 = vlaneseq
      %v1875 = vshrl.u32 %v1874, 7
      %v1876 = vsub.s32 %v1873, %v1875
      %v1877 = vrot.slane %v1056, %v1876
      %v1879 = vunpack.c.l.s4 1935823168
      %v1880 = vunpack.c.0.s8 %v1879
      %v1881 = vlaneseq
      %v1882 = vshrl.u32 %v1881, 7
      %v1883 = vsub.s32 %v1880, %v1882
      %v1884 = vrot.slane %v1877, %v1883
      %v1886 = vunpack.c.l.s4 1935823168
      %v1887 = vunpack.c.0.s8 %v1886
      %v1888 = vlaneseq
      %v1889 = vshrl.u32 %v1888, 7
      %v1890 = vsub.s32 %v1887, %v1889
      %v1891 = vrot.slane %v1057, %v1890
      %v1893 = vunpack.c.l.s4 1935823168
      %v1894 = vunpack.c.0.s8 %v1893
      %v1895 = vlaneseq
      %v1896 = vshrl.u32 %v1895, 7
      %v1897 = vsub.s32 %v1894, %v1896
      %v1898 = vrot.slane %v1891, %v1897
      %v1900 = vunpack.c.l.s4 1935823168
      %v1901 = vunpack.c.0.s8 %v1900
      %v1902 = vlaneseq
      %v1903 = vshrl.u32 %v1902, 7
      %v1904 = vsub.s32 %v1901, %v1903
      %v1905 = vrot.slane %v1058, %v1904
      %v1907 = vunpack.c.l.s4 1935823168
      %v1908 = vunpack.c.0.s8 %v1907
      %v1909 = vlaneseq
      %v1910 = vshrl.u32 %v1909, 7
      %v1911 = vsub.s32 %v1908, %v1910
      %v1912 = vrot.slane %v1905, %v1911
      %v1914 = vunpack.c.l.s4 1935823168
      %v1915 = vunpack.c.0.s8 %v1914
      %v1916 = vlaneseq
      %v1917 = vshrl.u32 %v1916, 7
      %v1918 = vsub.s32 %v1915, %v1917
      %v1919 = vrot.slane %v1059, %v1918
      %v1921 = vunpack.c.l.s4 1935823168
      %v1922 = vunpack.c.0.s8 %v1921
      %v1923 = vlaneseq
      %v1924 = vshrl.u32 %v1923, 7
      %v1925 = vsub.s32 %v1922, %v1924
      %v1926 = vrot.slane %v1919, %v1925
      %v1928 = vunpack.c.l.s4 1935823168
      %v1929 = vunpack.c.0.s8 %v1928
      %v1930 = vlaneseq
      %v1931 = vshrl.u32 %v1930, 7
      %v1932 = vsub.s32 %v1929, %v1931
      %v1933 = vrot.slane %v1060, %v1932
      %v1935 = vunpack.c.l.s4 1935823168
      %v1936 = vunpack.c.0.s8 %v1935
      %v1937 = vlaneseq
      %v1938 = vshrl.u32 %v1937, 7
      %v1939 = vsub.s32 %v1936, %v1938
      %v1940 = vrot.slane %v1933, %v1939
      %v1942 = vunpack.c.l.s4 1935823168
      %v1943 = vunpack.c.0.s8 %v1942
      %v1944 = vlaneseq
      %v1945 = vshrl.u32 %v1944, 7
      %v1946 = vsub.s32 %v1943, %v1945
      %v1947 = vrot.slane %v1061, %v1946
      %v1949 = vunpack.c.l.s4 1935823168
      %v1950 = vunpack.c.0.s8 %v1949
      %v1951 = vlaneseq
      %v1952 = vshrl.u32 %v1951, 7
      %v1953 = vsub.s32 %v1950, %v1952
      %v1954 = vrot.slane %v1947, %v1953
      %v1956 = vunpack.c.l.s4 1935823168
      %v1957 = vunpack.c.0.s8 %v1956
      %v1958 = vlaneseq
      %v1959 = vshrl.u32 %v1958, 7
      %v1960 = vsub.s32 %v1957, %v1959
      %v1961 = vrot.slane %v1062, %v1960
      %v1963 = vunpack.c.l.s4 1935823168
      %v1964 = vunpack.c.0.s8 %v1963
      %v1965 = vlaneseq
      %v1966 = vshrl.u32 %v1965, 7
      %v1967 = vsub.s32 %v1964, %v1966
      %v1968 = vrot.slane %v1961, %v1967
      %v1970 = vunpack.c.l.s4 1935823168
      %v1971 = vunpack.c.0.s8 %v1970
      %v1972 = vlaneseq
      %v1973 = vshrl.u32 %v1972, 7
      %v1974 = vsub.s32 %v1971, %v1973
      %v1975 = vrot.slane %v1063, %v1974
      %v1977 = vunpack.c.l.s4 1935823168
      %v1978 = vunpack.c.0.s8 %v1977
      %v1979 = vlaneseq
      %v1980 = vshrl.u32 %v1979, 7
      %v1981 = vsub.s32 %v1978, %v1980
      %v1982 = vrot.slane %v1975, %v1981
      %v1984 = vunpack.c.l.s4 1935823168
      %v1985 = vunpack.c.0.s8 %v1984
      %v1986 = vlaneseq
      %v1987 = vshrl.u32 %v1986, 7
      %v1988 = vsub.s32 %v1985, %v1987
      %v1989 = vrot.slane %v1064, %v1988
      %v1991 = vunpack.c.l.s4 1935823168
      %v1992 = vunpack.c.0.s8 %v1991
      %v1993 = vlaneseq
      %v1994 = vshrl.u32 %v1993, 7
      %v1995 = vsub.s32 %v1992, %v1994
      %v1996 = vrot.slane %v1989, %v1995
      %v1998 = vunpack.c.l.s4 1935823168
      %v1999 = vunpack.c.0.s8 %v1998
      %v2000 = vlaneseq
      %v2001 = vshrl.u32 %v2000, 7
      %v2002 = vsub.s32 %v1999, %v2001
      %v2003 = vrot.slane %v1065, %v2002
      %v2005 = vunpack.c.l.s4 1935823168
      %v2006 = vunpack.c.0.s8 %v2005
      %v2007 = vlaneseq
      %v2008 = vshrl.u32 %v2007, 7
      %v2009 = vsub.s32 %v2006, %v2008
      %v2010 = vrot.slane %v2003, %v2009
      %v2012 = vunpack.c.l.s4 1935823168
      %v2013 = vunpack.c.0.s8 %v2012
      %v2014 = vlaneseq
      %v2015 = vshrl.u32 %v2014, 7
      %v2016 = vsub.s32 %v2013, %v2015
      %v2017 = vrot.slane %v1066, %v2016
      %v2019 = vunpack.c.l.s4 1935823168
      %v2020 = vunpack.c.0.s8 %v2019
      %v2021 = vlaneseq
      %v2022 = vshrl.u32 %v2021, 7
      %v2023 = vsub.s32 %v2020, %v2022
      %v2024 = vrot.slane %v2017, %v2023
      %v2026 = vunpack.c.l.s4 1935823168
      %v2027 = vunpack.c.0.s8 %v2026
      %v2028 = vlaneseq
      %v2029 = vshrl.u32 %v2028, 7
      %v2030 = vsub.s32 %v2027, %v2029
      %v2031 = vrot.slane %v1067, %v2030
      %v2033 = vunpack.c.l.s4 1935823168
      %v2034 = vunpack.c.0.s8 %v2033
      %v2035 = vlaneseq
      %v2036 = vshrl.u32 %v2035, 7
      %v2037 = vsub.s32 %v2034, %v2036
      %v2038 = vrot.slane %v2031, %v2037
      %v2040 = vunpack.c.l.s4 1935823168
      %v2041 = vunpack.c.0.s8 %v2040
      %v2042 = vlaneseq
      %v2043 = vshrl.u32 %v2042, 7
      %v2044 = vsub.s32 %v2041, %v2043
      %v2045 = vrot.slane %v1068, %v2044
      %v2047 = vunpack.c.l.s4 1935823168
      %v2048 = vunpack.c.0.s8 %v2047
      %v2049 = vlaneseq
      %v2050 = vshrl.u32 %v2049, 7
      %v2051 = vsub.s32 %v2048, %v2050
      %v2052 = vrot.slane %v2045, %v2051
      %v2054 = vunpack.c.l.s4 1935823168
      %v2055 = vunpack.c.0.s8 %v2054
      %v2056 = vlaneseq
      %v2057 = vshrl.u32 %v2056, 7
      %v2058 = vsub.s32 %v2055, %v2057
      %v2059 = vrot.slane %v1069, %v2058
      %v2061 = vunpack.c.l.s4 1935823168
      %v2062 = vunpack.c.0.s8 %v2061
      %v2063 = vlaneseq
      %v2064 = vshrl.u32 %v2063, 7
      %v2065 = vsub.s32 %v2062, %v2064
      %v2066 = vrot.slane %v2059, %v2065
      %v2068 = vunpack.c.l.s4 1935823168
      %v2069 = vunpack.c.0.s8 %v2068
      %v2070 = vlaneseq
      %v2071 = vshrl.u32 %v2070, 7
      %v2072 = vsub.s32 %v2069, %v2071
      %v2073 = vrot.slane %v1070, %v2072
      %v2075 = vunpack.c.l.s4 1935823168
      %v2076 = vunpack.c.0.s8 %v2075
      %v2077 = vlaneseq
      %v2078 = vshrl.u32 %v2077, 7
      %v2079 = vsub.s32 %v2076, %v2078
      %v2080 = vrot.slane %v2073, %v2079
      %v2082 = vunpack.c.l.s4 1935823168
      %v2083 = vunpack.c.0.s8 %v2082
      %v2084 = vlaneseq
      %v2085 = vshrl.u32 %v2084, 7
      %v2086 = vsub.s32 %v2083, %v2085
      %v2087 = vrot.slane %v1071, %v2086
      %v2089 = vunpack.c.l.s4 1935823168
      %v2090 = vunpack.c.0.s8 %v2089
      %v2091 = vlaneseq
      %v2092 = vshrl.u32 %v2091, 7
      %v2093 = vsub.s32 %v2090, %v2092
      %v2094 = vrot.slane %v2087, %v2093
      %v2096 = vunpack.c.l.s4 1935823168
      %v2097 = vunpack.c.0.s8 %v2096
      %v2098 = vlaneseq
      %v2099 = vshrl.u32 %v2098, 7
      %v2100 = vsub.s32 %v2097, %v2099
      %v2101 = vrot.slane %v1072, %v2100
      %v2103 = vunpack.c.l.s4 1935823168
      %v2104 = vunpack.c.0.s8 %v2103
      %v2105 = vlaneseq
      %v2106 = vshrl.u32 %v2105, 7
      %v2107 = vsub.s32 %v2104, %v2106
      %v2108 = vrot.slane %v2101, %v2107
      %v2110 = vunpack.c.l.s4 1935823168
      %v2111 = vunpack.c.0.s8 %v2110
      %v2112 = vlaneseq
      %v2113 = vshrl.u32 %v2112, 7
      %v2114 = vsub.s32 %v2111, %v2113
      %v2115 = vrot.slane %v1073, %v2114
      %v2117 = vunpack.c.l.s4 1935823168
      %v2118 = vunpack.c.0.s8 %v2117
      %v2119 = vlaneseq
      %v2120 = vshrl.u32 %v2119, 7
      %v2121 = vsub.s32 %v2118, %v2120
      %v2122 = vrot.slane %v2115, %v2121
      %v2124 = vunpack.c.l.s4 1935823168
      %v2125 = vunpack.c.0.s8 %v2124
      %v2126 = vlaneseq
      %v2127 = vshrl.u32 %v2126, 7
      %v2128 = vsub.s32 %v2125, %v2127
      %v2129 = vrot.slane %v1074, %v2128
      %v2131 = vunpack.c.l.s4 1935823168
      %v2132 = vunpack.c.0.s8 %v2131
      %v2133 = vlaneseq
      %v2134 = vshrl.u32 %v2133, 7
      %v2135 = vsub.s32 %v2132, %v2134
      %v2136 = vrot.slane %v2129, %v2135
      %v2138 = vunpack.c.l.s4 1935823168
      %v2139 = vunpack.c.0.s8 %v2138
      %v2140 = vlaneseq
      %v2141 = vshrl.u32 %v2140, 7
      %v2142 = vsub.s32 %v2139, %v2141
      %v2143 = vrot.slane %v1075, %v2142
      %v2145 = vunpack.c.l.s4 1935823168
      %v2146 = vunpack.c.0.s8 %v2145
      %v2147 = vlaneseq
      %v2148 = vshrl.u32 %v2147, 7
      %v2149 = vsub.s32 %v2146, %v2148
      %v2150 = vrot.slane %v2143, %v2149
      %v2152 = vunpack.c.l.s4 1935823168
      %v2153 = vunpack.c.0.s8 %v2152
      %v2154 = vlaneseq
      %v2155 = vshrl.u32 %v2154, 7
      %v2156 = vsub.s32 %v2153, %v2155
      %v2157 = vrot.slane %v1076, %v2156
      %v2159 = vunpack.c.l.s4 1935823168
      %v2160 = vunpack.c.0.s8 %v2159
      %v2161 = vlaneseq
      %v2162 = vshrl.u32 %v2161, 7
      %v2163 = vsub.s32 %v2160, %v2162
      %v2164 = vrot.slane %v2157, %v2163
      %v2166 = vunpack.c.l.s4 1935823168
      %v2167 = vunpack.c.0.s8 %v2166
      %v2168 = vlaneseq
      %v2169 = vshrl.u32 %v2168, 7
      %v2170 = vsub.s32 %v2167, %v2169
      %v2171 = vrot.slane %v1077, %v2170
      %v2173 = vunpack.c.l.s4 1935823168
      %v2174 = vunpack.c.0.s8 %v2173
      %v2175 = vlaneseq
      %v2176 = vshrl.u32 %v2175, 7
      %v2177 = vsub.s32 %v2174, %v2176
      %v2178 = vrot.slane %v2171, %v2177
      %v2180 = vunpack.c.l.s4 1935823168
      %v2181 = vunpack.c.0.s8 %v2180
      %v2182 = vlaneseq
      %v2183 = vshrl.u32 %v2182, 7
      %v2184 = vsub.s32 %v2181, %v2183
      %v2185 = vrot.slane %v1078, %v2184
      %v2187 = vunpack.c.l.s4 1935823168
      %v2188 = vunpack.c.0.s8 %v2187
      %v2189 = vlaneseq
      %v2190 = vshrl.u32 %v2189, 7
      %v2191 = vsub.s32 %v2188, %v2190
      %v2192 = vrot.slane %v2185, %v2191
      %v2194 = vunpack.c.l.s4 1935823168
      %v2195 = vunpack.c.0.s8 %v2194
      %v2196 = vlaneseq
      %v2197 = vshrl.u32 %v2196, 7
      %v2198 = vsub.s32 %v2195, %v2197
      %v2199 = vrot.slane %v1079, %v2198
      %v2201 = vunpack.c.l.s4 1935823168
      %v2202 = vunpack.c.0.s8 %v2201
      %v2203 = vlaneseq
      %v2204 = vshrl.u32 %v2203, 7
      %v2205 = vsub.s32 %v2202, %v2204
      %v2206 = vrot.slane %v2199, %v2205
      %v2208 = vunpack.c.l.s4 1935823168
      %v2209 = vunpack.c.0.s8 %v2208
      %v2210 = vlaneseq
      %v2211 = vshrl.u32 %v2210, 7
      %v2212 = vsub.s32 %v2209, %v2211
      %v2213 = vrot.slane %v1080, %v2212
      %v2215 = vunpack.c.l.s4 1935823168
      %v2216 = vunpack.c.0.s8 %v2215
      %v2217 = vlaneseq
      %v2218 = vshrl.u32 %v2217, 7
      %v2219 = vsub.s32 %v2216, %v2218
      %v2220 = vrot.slane %v2213, %v2219
      %v2222 = vunpack.c.l.s4 1935823168
      %v2223 = vunpack.c.0.s8 %v2222
      %v2224 = vlaneseq
      %v2225 = vshrl.u32 %v2224, 7
      %v2226 = vsub.s32 %v2223, %v2225
      %v2227 = vrot.slane %v1081, %v2226
      %v2229 = vunpack.c.l.s4 1935823168
      %v2230 = vunpack.c.0.s8 %v2229
      %v2231 = vlaneseq
      %v2232 = vshrl.u32 %v2231, 7
      %v2233 = vsub.s32 %v2230, %v2232
      %v2234 = vrot.slane %v2227, %v2233
      %v2236 = vunpack.c.l.s4 1935823168
      %v2237 = vunpack.c.0.s8 %v2236
      %v2238 = vlaneseq
      %v2239 = vshrl.u32 %v2238, 7
      %v2240 = vsub.s32 %v2237, %v2239
      %v2241 = vrot.slane %v1082, %v2240
      %v2243 = vunpack.c.l.s4 1935823168
      %v2244 = vunpack.c.0.s8 %v2243
      %v2245 = vlaneseq
      %v2246 = vshrl.u32 %v2245, 7
      %v2247 = vsub.s32 %v2244, %v2246
      %v2248 = vrot.slane %v2241, %v2247
      %v2250 = vunpack.c.l.s4 1935823168
      %v2251 = vunpack.c.0.s8 %v2250
      %v2252 = vlaneseq
      %v2253 = vshrl.u32 %v2252, 7
      %v2254 = vsub.s32 %v2251, %v2253
      %v2255 = vrot.slane %v1083, %v2254
      %v2257 = vunpack.c.l.s4 1935823168
      %v2258 = vunpack.c.0.s8 %v2257
      %v2259 = vlaneseq
      %v2260 = vshrl.u32 %v2259, 7
      %v2261 = vsub.s32 %v2258, %v2260
      %v2262 = vrot.slane %v2255, %v2261
      %v2264 = vunpack.c.l.s4 1935823168
      %v2265 = vunpack.c.0.s8 %v2264
      %v2266 = vlaneseq
      %v2267 = vshrl.u32 %v2266, 7
      %v2268 = vsub.s32 %v2265, %v2267
      %v2269 = vrot.slane %v1084, %v2268
      %v2271 = vunpack.c.l.s4 1935823168
      %v2272 = vunpack.c.0.s8 %v2271
      %v2273 = vlaneseq
      %v2274 = vshrl.u32 %v2273, 7
      %v2275 = vsub.s32 %v2272, %v2274
      %v2276 = vrot.slane %v2269, %v2275
      %v2278 = vunpack.c.l.s4 1935823168
      %v2279 = vunpack.c.0.s8 %v2278
      %v2280 = vlaneseq
      %v2281 = vshrl.u32 %v2280, 7
      %v2282 = vsub.s32 %v2279, %v2281
      %v2283 = vrot.slane %v1085, %v2282
      %v2285 = vunpack.c.l.s4 1935823168
      %v2286 = vunpack.c.0.s8 %v2285
      %v2287 = vlaneseq
      %v2288 = vshrl.u32 %v2287, 7
      %v2289 = vsub.s32 %v2286, %v2288
      %v2290 = vrot.slane %v2283, %v2289
      %v2292 = vunpack.c.l.s4 1935823168
      %v2293 = vunpack.c.0.s8 %v2292
      %v2294 = vlaneseq
      %v2295 = vshrl.u32 %v2294, 7
      %v2296 = vsub.s32 %v2293, %v2295
      %v2297 = vrot.slane %v1086, %v2296
      %v2299 = vunpack.c.l.s4 1935823168
      %v2300 = vunpack.c.0.s8 %v2299
      %v2301 = vlaneseq
      %v2302 = vshrl.u32 %v2301, 7
      %v2303 = vsub.s32 %v2300, %v2302
      %v2304 = vrot.slane %v2297, %v2303
      %v2306 = vunpack.c.l.s4 1935823168
      %v2307 = vunpack.c.0.s8 %v2306
      %v2308 = vlaneseq
      %v2309 = vshrl.u32 %v2308, 7
      %v2310 = vsub.s32 %v2307, %v2309
      %v2311 = vrot.slane %v1087, %v2310
      %v2313 = vunpack.c.l.s4 1935823168
      %v2314 = vunpack.c.0.s8 %v2313
      %v2315 = vlaneseq
      %v2316 = vshrl.u32 %v2315, 7
      %v2317 = vsub.s32 %v2314, %v2316
      %v2318 = vrot.slane %v2311, %v2317
      %v2320 = vunpack.c.l.s4 1935823168
      %v2321 = vunpack.c.0.s8 %v2320
      %v2322 = vlaneseq
      %v2323 = vshrl.u32 %v2322, 7
      %v2324 = vsub.s32 %v2321, %v2323
      %v2325 = vrot.slane %v1088, %v2324
      %v2327 = vunpack.c.l.s4 1935823168
      %v2328 = vunpack.c.0.s8 %v2327
      %v2329 = vlaneseq
      %v2330 = vshrl.u32 %v2329, 7
      %v2331 = vsub.s32 %v2328, %v2330
      %v2332 = vrot.slane %v2325, %v2331
      %v2334 = vunpack.c.l.s4 1935823168
      %v2335 = vunpack.c.0.s8 %v2334
      %v2336 = vlaneseq
      %v2337 = vshrl.u32 %v2336, 7
      %v2338 = vsub.s32 %v2335, %v2337
      %v2339 = vrot.slane %v1089, %v2338
      %v2341 = vunpack.c.l.s4 1935823168
      %v2342 = vunpack.c.0.s8 %v2341
      %v2343 = vlaneseq
      %v2344 = vshrl.u32 %v2343, 7
      %v2345 = vsub.s32 %v2342, %v2344
      %v2346 = vrot.slane %v2339, %v2345
      %v2348 = vunpack.c.l.s4 1935823168
      %v2349 = vunpack.c.0.s8 %v2348
      %v2350 = vlaneseq
      %v2351 = vshrl.u32 %v2350, 7
      %v2352 = vsub.s32 %v2349, %v2351
      %v2353 = vrot.slane %v1090, %v2352
      %v2355 = vunpack.c.l.s4 1935823168
      %v2356 = vunpack.c.0.s8 %v2355
      %v2357 = vlaneseq
      %v2358 = vshrl.u32 %v2357, 7
      %v2359 = vsub.s32 %v2356, %v2358
      %v2360 = vrot.slane %v2353, %v2359
      %v2362 = vunpack.c.l.s4 1935823168
      %v2363 = vunpack.c.0.s8 %v2362
      %v2364 = vlaneseq
      %v2365 = vshrl.u32 %v2364, 7
      %v2366 = vsub.s32 %v2363, %v2365
      %v2367 = vrot.slane %v1091, %v2366
      %v2369 = vunpack.c.l.s4 1935823168
      %v2370 = vunpack.c.0.s8 %v2369
      %v2371 = vlaneseq
      %v2372 = vshrl.u32 %v2371, 7
      %v2373 = vsub.s32 %v2370, %v2372
      %v2374 = vrot.slane %v2367, %v2373
      %v2376 = vunpack.c.l.s4 1935823168
      %v2377 = vunpack.c.0.s8 %v2376
      %v2378 = vlaneseq
      %v2379 = vshrl.u32 %v2378, 7
      %v2380 = vsub.s32 %v2377, %v2379
      %v2381 = vrot.slane %v1092, %v2380
      %v2383 = vunpack.c.l.s4 1935823168
      %v2384 = vunpack.c.0.s8 %v2383
      %v2385 = vlaneseq
      %v2386 = vshrl.u32 %v2385, 7
      %v2387 = vsub.s32 %v2384, %v2386
      %v2388 = vrot.slane %v2381, %v2387
      %v2390 = vunpack.c.l.s4 1935823168
      %v2391 = vunpack.c.0.s8 %v2390
      %v2392 = vlaneseq
      %v2393 = vshrl.u32 %v2392, 7
      %v2394 = vsub.s32 %v2391, %v2393
      %v2395 = vrot.slane %v1093, %v2394
      %v2397 = vunpack.c.l.s4 1935823168
      %v2398 = vunpack.c.0.s8 %v2397
      %v2399 = vlaneseq
      %v2400 = vshrl.u32 %v2399, 7
      %v2401 = vsub.s32 %v2398, %v2400
      %v2402 = vrot.slane %v2395, %v2401
      %v2404 = vunpack.c.l.s4 1935823168
      %v2405 = vunpack.c.0.s8 %v2404
      %v2406 = vlaneseq
      %v2407 = vshrl.u32 %v2406, 7
      %v2408 = vsub.s32 %v2405, %v2407
      %v2409 = vrot.slane %v1094, %v2408
      %v2411 = vunpack.c.l.s4 1935823168
      %v2412 = vunpack.c.0.s8 %v2411
      %v2413 = vlaneseq
      %v2414 = vshrl.u32 %v2413, 7
      %v2415 = vsub.s32 %v2412, %v2414
      %v2416 = vrot.slane %v2409, %v2415
      %v2418 = vunpack.c.l.s4 1935823168
      %v2419 = vunpack.c.0.s8 %v2418
      %v2420 = vlaneseq
      %v2421 = vshrl.u32 %v2420, 7
      %v2422 = vsub.s32 %v2419, %v2421
      %v2423 = vrot.slane %v1095, %v2422
      %v2425 = vunpack.c.l.s4 1935823168
      %v2426 = vunpack.c.0.s8 %v2425
      %v2427 = vlaneseq
      %v2428 = vshrl.u32 %v2427, 7
      %v2429 = vsub.s32 %v2426, %v2428
      %v2430 = vrot.slane %v2423, %v2429
      %v2432 = vunpack.c.l.s4 1935823168
      %v2433 = vunpack.c.0.s8 %v2432
      %v2434 = vlaneseq
      %v2435 = vshrl.u32 %v2434, 7
      %v2436 = vsub.s32 %v2433, %v2435
      %v2437 = vrot.slane %v1096, %v2436
      %v2439 = vunpack.c.l.s4 1935823168
      %v2440 = vunpack.c.0.s8 %v2439
      %v2441 = vlaneseq
      %v2442 = vshrl.u32 %v2441, 7
      %v2443 = vsub.s32 %v2440, %v2442
      %v2444 = vrot.slane %v2437, %v2443
      %v2446 = vunpack.c.l.s4 1935823168
      %v2447 = vunpack.c.0.s8 %v2446
      %v2448 = vlaneseq
      %v2449 = vshrl.u32 %v2448, 7
      %v2450 = vsub.s32 %v2447, %v2449
      %v2451 = vrot.slane %v1097, %v2450
      %v2453 = vunpack.c.l.s4 1935823168
      %v2454 = vunpack.c.0.s8 %v2453
      %v2455 = vlaneseq
      %v2456 = vshrl.u32 %v2455, 7
      %v2457 = vsub.s32 %v2454, %v2456
      %v2458 = vrot.slane %v2451, %v2457
      %v2460 = vunpack.c.l.s4 1935823168
      %v2461 = vunpack.c.0.s8 %v2460
      %v2462 = vlaneseq
      %v2463 = vshrl.u32 %v2462, 7
      %v2464 = vsub.s32 %v2461, %v2463
      %v2465 = vrot.slane %v1098, %v2464
      %v2467 = vunpack.c.l.s4 1935823168
      %v2468 = vunpack.c.0.s8 %v2467
      %v2469 = vlaneseq
      %v2470 = vshrl.u32 %v2469, 7
      %v2471 = vsub.s32 %v2468, %v2470
      %v2472 = vrot.slane %v2465, %v2471
      %v2474 = vunpack.c.l.s4 1935823168
      %v2475 = vunpack.c.0.s8 %v2474
      %v2476 = vlaneseq
      %v2477 = vshrl.u32 %v2476, 7
      %v2478 = vsub.s32 %v2475, %v2477
      %v2479 = vrot.slane %v1099, %v2478
      %v2481 = vunpack.c.l.s4 1935823168
      %v2482 = vunpack.c.0.s8 %v2481
      %v2483 = vlaneseq
      %v2484 = vshrl.u32 %v2483, 7
      %v2485 = vsub.s32 %v2482, %v2484
      %v2486 = vrot.slane %v2479, %v2485
      %v2488 = vunpack.c.l.s4 1935823168
      %v2489 = vunpack.c.0.s8 %v2488
      %v2490 = vlaneseq
      %v2491 = vshrl.u32 %v2490, 7
      %v2492 = vsub.s32 %v2489, %v2491
      %v2493 = vrot.slane %v1100, %v2492
      %v2495 = vunpack.c.l.s4 1935823168
      %v2496 = vunpack.c.0.s8 %v2495
      %v2497 = vlaneseq
      %v2498 = vshrl.u32 %v2497, 7
      %v2499 = vsub.s32 %v2496, %v2498
      %v2500 = vrot.slane %v2493, %v2499
      %v2502 = vunpack.c.l.s4 1935823168
      %v2503 = vunpack.c.0.s8 %v2502
      %v2504 = vlaneseq
      %v2505 = vshrl.u32 %v2504, 7
      %v2506 = vsub.s32 %v2503, %v2505
      %v2507 = vrot.slane %v1101, %v2506
      %v2509 = vunpack.c.l.s4 1935823168
      %v2510 = vunpack.c.0.s8 %v2509
      %v2511 = vlaneseq
      %v2512 = vshrl.u32 %v2511, 7
      %v2513 = vsub.s32 %v2510, %v2512
      %v2514 = vrot.slane %v2507, %v2513
      %v2516 = vunpack.c.l.s4 1935823168
      %v2517 = vunpack.c.0.s8 %v2516
      %v2518 = vlaneseq
      %v2519 = vshrl.u32 %v2518, 7
      %v2520 = vsub.s32 %v2517, %v2519
      %v2521 = vrot.slane %v1102, %v2520
      %v2523 = vunpack.c.l.s4 1935823168
      %v2524 = vunpack.c.0.s8 %v2523
      %v2525 = vlaneseq
      %v2526 = vshrl.u32 %v2525, 7
      %v2527 = vsub.s32 %v2524, %v2526
      %v2528 = vrot.slane %v2521, %v2527
      %v2530 = vunpack.c.l.s4 1935823168
      %v2531 = vunpack.c.0.s8 %v2530
      %v2532 = vlaneseq
      %v2533 = vshrl.u32 %v2532, 7
      %v2534 = vsub.s32 %v2531, %v2533
      %v2535 = vrot.slane %v1103, %v2534
      %v2537 = vunpack.c.l.s4 1935823168
      %v2538 = vunpack.c.0.s8 %v2537
      %v2539 = vlaneseq
      %v2540 = vshrl.u32 %v2539, 7
      %v2541 = vsub.s32 %v2538, %v2540
      %v2542 = vrot.slane %v2535, %v2541
      %v2544 = vunpack.c.l.s4 1935823168
      %v2545 = vunpack.c.0.s8 %v2544
      %v2546 = vlaneseq
      %v2547 = vshrl.u32 %v2546, 7
      %v2548 = vsub.s32 %v2545, %v2547
      %v2549 = vrot.slane %v1104, %v2548
      %v2551 = vunpack.c.l.s4 1935823168
      %v2552 = vunpack.c.0.s8 %v2551
      %v2553 = vlaneseq
      %v2554 = vshrl.u32 %v2553, 7
      %v2555 = vsub.s32 %v2552, %v2554
      %v2556 = vrot.slane %v2549, %v2555
      %v2558 = vunpack.c.l.s4 1935823168
      %v2559 = vunpack.c.0.s8 %v2558
      %v2560 = vlaneseq
      %v2561 = vshrl.u32 %v2560, 7
      %v2562 = vsub.s32 %v2559, %v2561
      %v2563 = vrot.slane %v1105, %v2562
      %v2565 = vunpack.c.l.s4 1935823168
      %v2566 = vunpack.c.0.s8 %v2565
      %v2567 = vlaneseq
      %v2568 = vshrl.u32 %v2567, 7
      %v2569 = vsub.s32 %v2566, %v2568
      %v2570 = vrot.slane %v2563, %v2569
      %v2572 = vunpack.c.l.s4 1935823168
      %v2573 = vunpack.c.0.s8 %v2572
      %v2574 = vlaneseq
      %v2575 = vshrl.u32 %v2574, 7
      %v2576 = vsub.s32 %v2573, %v2575
      %v2577 = vrot.slane %v1106, %v2576
      %v2579 = vunpack.c.l.s4 1935823168
      %v2580 = vunpack.c.0.s8 %v2579
      %v2581 = vlaneseq
      %v2582 = vshrl.u32 %v2581, 7
      %v2583 = vsub.s32 %v2580, %v2582
      %v2584 = vrot.slane %v2577, %v2583
      %v2586 = vunpack.c.l.s4 1935823168
      %v2587 = vunpack.c.0.s8 %v2586
      %v2588 = vlaneseq
      %v2589 = vshrl.u32 %v2588, 7
      %v2590 = vsub.s32 %v2587, %v2589
      %v2591 = vrot.slane %v1107, %v2590
      %v2593 = vunpack.c.l.s4 1935823168
      %v2594 = vunpack.c.0.s8 %v2593
      %v2595 = vlaneseq
      %v2596 = vshrl.u32 %v2595, 7
      %v2597 = vsub.s32 %v2594, %v2596
      %v2598 = vrot.slane %v2591, %v2597
      %v2600 = vunpack.c.l.s4 1935823168
      %v2601 = vunpack.c.0.s8 %v2600
      %v2602 = vlaneseq
      %v2603 = vshrl.u32 %v2602, 7
      %v2604 = vsub.s32 %v2601, %v2603
      %v2605 = vrot.slane %v1108, %v2604
      %v2607 = vunpack.c.l.s4 1935823168
      %v2608 = vunpack.c.0.s8 %v2607
      %v2609 = vlaneseq
      %v2610 = vshrl.u32 %v2609, 7
      %v2611 = vsub.s32 %v2608, %v2610
      %v2612 = vrot.slane %v2605, %v2611
      %v2614 = vunpack.c.l.s4 1935823168
      %v2615 = vunpack.c.0.s8 %v2614
      %v2616 = vlaneseq
      %v2617 = vshrl.u32 %v2616, 7
      %v2618 = vsub.s32 %v2615, %v2617
      %v2619 = vrot.slane %v1109, %v2618
      %v2621 = vunpack.c.l.s4 1935823168
      %v2622 = vunpack.c.0.s8 %v2621
      %v2623 = vlaneseq
      %v2624 = vshrl.u32 %v2623, 7
      %v2625 = vsub.s32 %v2622, %v2624
      %v2626 = vrot.slane %v2619, %v2625
      %v2628 = vunpack.c.l.s4 1935823168
      %v2629 = vunpack.c.0.s8 %v2628
      %v2630 = vlaneseq
      %v2631 = vshrl.u32 %v2630, 7
      %v2632 = vsub.s32 %v2629, %v2631
      %v2633 = vrot.slane %v1110, %v2632
      %v2635 = vunpack.c.l.s4 1935823168
      %v2636 = vunpack.c.0.s8 %v2635
      %v2637 = vlaneseq
      %v2638 = vshrl.u32 %v2637, 7
      %v2639 = vsub.s32 %v2636, %v2638
      %v2640 = vrot.slane %v2633, %v2639
      %v2642 = vunpack.c.l.s4 1935823168
      %v2643 = vunpack.c.0.s8 %v2642
      %v2644 = vlaneseq
      %v2645 = vshrl.u32 %v2644, 7
      %v2646 = vsub.s32 %v2643, %v2645
      %v2647 = vrot.slane %v1111, %v2646
      %v2649 = vunpack.c.l.s4 1935823168
      %v2650 = vunpack.c.0.s8 %v2649
      %v2651 = vlaneseq
      %v2652 = vshrl.u32 %v2651, 7
      %v2653 = vsub.s32 %v2650, %v2652
      %v2654 = vrot.slane %v2647, %v2653
      %v2656 = vunpack.c.l.s4 1935823168
      %v2657 = vunpack.c.0.s8 %v2656
      %v2658 = vlaneseq
      %v2659 = vshrl.u32 %v2658, 7
      %v2660 = vsub.s32 %v2657, %v2659
      %v2661 = vrot.slane %v1112, %v2660
      %v2663 = vunpack.c.l.s4 1935823168
      %v2664 = vunpack.c.0.s8 %v2663
      %v2665 = vlaneseq
      %v2666 = vshrl.u32 %v2665, 7
      %v2667 = vsub.s32 %v2664, %v2666
      %v2668 = vrot.slane %v2661, %v2667
      %v2670 = vunpack.c.l.s4 1935823168
      %v2671 = vunpack.c.0.s8 %v2670
      %v2672 = vlaneseq
      %v2673 = vshrl.u32 %v2672, 7
      %v2674 = vsub.s32 %v2671, %v2673
      %v2675 = vrot.slane %v1113, %v2674
      %v2677 = vunpack.c.l.s4 1935823168
      %v2678 = vunpack.c.0.s8 %v2677
      %v2679 = vlaneseq
      %v2680 = vshrl.u32 %v2679, 7
      %v2681 = vsub.s32 %v2678, %v2680
      %v2682 = vrot.slane %v2675, %v2681
      %v2684 = vunpack.c.l.s4 1935823168
      %v2685 = vunpack.c.0.s8 %v2684
      %v2686 = vlaneseq
      %v2687 = vshrl.u32 %v2686, 7
      %v2688 = vsub.s32 %v2685, %v2687
      %v2689 = vrot.slane %v1114, %v2688
      %v2691 = vunpack.c.l.s4 1935823168
      %v2692 = vunpack.c.0.s8 %v2691
      %v2693 = vlaneseq
      %v2694 = vshrl.u32 %v2693, 7
      %v2695 = vsub.s32 %v2692, %v2694
      %v2696 = vrot.slane %v2689, %v2695
      %v2698 = vunpack.c.l.s4 1935823168
      %v2699 = vunpack.c.0.s8 %v2698
      %v2700 = vlaneseq
      %v2701 = vshrl.u32 %v2700, 7
      %v2702 = vsub.s32 %v2699, %v2701
      %v2703 = vrot.slane %v1115, %v2702
      %v2705 = vunpack.c.l.s4 1935823168
      %v2706 = vunpack.c.0.s8 %v2705
      %v2707 = vlaneseq
      %v2708 = vshrl.u32 %v2707, 7
      %v2709 = vsub.s32 %v2706, %v2708
      %v2710 = vrot.slane %v2703, %v2709
      %v2712 = vunpack.c.l.s4 1935823168
      %v2713 = vunpack.c.0.s8 %v2712
      %v2714 = vlaneseq
      %v2715 = vshrl.u32 %v2714, 7
      %v2716 = vsub.s32 %v2713, %v2715
      %v2717 = vrot.slane %v1116, %v2716
      %v2719 = vunpack.c.l.s4 1935823168
      %v2720 = vunpack.c.0.s8 %v2719
      %v2721 = vlaneseq
      %v2722 = vshrl.u32 %v2721, 7
      %v2723 = vsub.s32 %v2720, %v2722
      %v2724 = vrot.slane %v2717, %v2723
      %v2726 = vunpack.c.l.s4 1935823168
      %v2727 = vunpack.c.0.s8 %v2726
      %v2728 = vlaneseq
      %v2729 = vshrl.u32 %v2728, 7
      %v2730 = vsub.s32 %v2727, %v2729
      %v2731 = vrot.slane %v1117, %v2730
      %v2733 = vunpack.c.l.s4 1935823168
      %v2734 = vunpack.c.0.s8 %v2733
      %v2735 = vlaneseq
      %v2736 = vshrl.u32 %v2735, 7
      %v2737 = vsub.s32 %v2734, %v2736
      %v2738 = vrot.slane %v2731, %v2737
      %v2740 = vunpack.c.l.s4 1935823168
      %v2741 = vunpack.c.0.s8 %v2740
      %v2742 = vlaneseq
      %v2743 = vshrl.u32 %v2742, 7
      %v2744 = vsub.s32 %v2741, %v2743
      %v2745 = vrot.slane %v1118, %v2744
      %v2747 = vunpack.c.l.s4 1935823168
      %v2748 = vunpack.c.0.s8 %v2747
      %v2749 = vlaneseq
      %v2750 = vshrl.u32 %v2749, 7
      %v2751 = vsub.s32 %v2748, %v2750
      %v2752 = vrot.slane %v2745, %v2751
      %v2754 = vunpack.c.l.s4 1935823168
      %v2755 = vunpack.c.0.s8 %v2754
      %v2756 = vlaneseq
      %v2757 = vshrl.u32 %v2756, 7
      %v2758 = vsub.s32 %v2755, %v2757
      %v2759 = vrot.slane %v1119, %v2758
      %v2761 = vunpack.c.l.s4 1935823168
      %v2762 = vunpack.c.0.s8 %v2761
      %v2763 = vlaneseq
      %v2764 = vshrl.u32 %v2763, 7
      %v2765 = vsub.s32 %v2762, %v2764
      %v2766 = vrot.slane %v2759, %v2765
      %v2768 = vunpack.c.l.s4 1935823168
      %v2769 = vunpack.c.0.s8 %v2768
      %v2770 = vlaneseq
      %v2771 = vshrl.u32 %v2770, 7
      %v2772 = vsub.s32 %v2769, %v2771
      %v2773 = vrot.slane %v1120, %v2772
      %v2775 = vunpack.c.l.s4 1935823168
      %v2776 = vunpack.c.0.s8 %v2775
      %v2777 = vlaneseq
      %v2778 = vshrl.u32 %v2777, 7
      %v2779 = vsub.s32 %v2776, %v2778
      %v2780 = vrot.slane %v2773, %v2779
      %v2782 = vunpack.c.l.s4 1935823168
      %v2783 = vunpack.c.0.s8 %v2782
      %v2784 = vlaneseq
      %v2785 = vshrl.u32 %v2784, 7
      %v2786 = vsub.s32 %v2783, %v2785
      %v2787 = vrot.slane %v1121, %v2786
      %v2789 = vunpack.c.l.s4 1935823168
      %v2790 = vunpack.c.0.s8 %v2789
      %v2791 = vlaneseq
      %v2792 = vshrl.u32 %v2791, 7
      %v2793 = vsub.s32 %v2790, %v2792
      %v2794 = vrot.slane %v2787, %v2793
      %v2796 = vunpack.c.l.s4 1935823168
      %v2797 = vunpack.c.0.s8 %v2796
      %v2798 = vlaneseq
      %v2799 = vshrl.u32 %v2798, 7
      %v2800 = vsub.s32 %v2797, %v2799
      %v2801 = vrot.slane %v1122, %v2800
      %v2803 = vunpack.c.l.s4 1935823168
      %v2804 = vunpack.c.0.s8 %v2803
      %v2805 = vlaneseq
      %v2806 = vshrl.u32 %v2805, 7
      %v2807 = vsub.s32 %v2804, %v2806
      %v2808 = vrot.slane %v2801, %v2807
      %v2810 = vunpack.c.l.s4 1935823168
      %v2811 = vunpack.c.0.s8 %v2810
      %v2812 = vlaneseq
      %v2813 = vshrl.u32 %v2812, 7
      %v2814 = vsub.s32 %v2811, %v2813
      %v2815 = vrot.slane %v1123, %v2814
      %v2817 = vunpack.c.l.s4 1935823168
      %v2818 = vunpack.c.0.s8 %v2817
      %v2819 = vlaneseq
      %v2820 = vshrl.u32 %v2819, 7
      %v2821 = vsub.s32 %v2818, %v2820
      %v2822 = vrot.slane %v2815, %v2821
      %v2824 = vunpack.c.l.s4 1935823168
      %v2825 = vunpack.c.0.s8 %v2824
      %v2826 = vlaneseq
      %v2827 = vshrl.u32 %v2826, 7
      %v2828 = vsub.s32 %v2825, %v2827
      %v2829 = vrot.slane %v1124, %v2828
      %v2831 = vunpack.c.l.s4 1935823168
      %v2832 = vunpack.c.0.s8 %v2831
      %v2833 = vlaneseq
      %v2834 = vshrl.u32 %v2833, 7
      %v2835 = vsub.s32 %v2832, %v2834
      %v2836 = vrot.slane %v2829, %v2835
      %v2838 = vunpack.c.l.s4 1935823168
      %v2839 = vunpack.c.0.s8 %v2838
      %v2840 = vlaneseq
      %v2841 = vshrl.u32 %v2840, 7
      %v2842 = vsub.s32 %v2839, %v2841
      %v2843 = vrot.slane %v1125, %v2842
      %v2845 = vunpack.c.l.s4 1935823168
      %v2846 = vunpack.c.0.s8 %v2845
      %v2847 = vlaneseq
      %v2848 = vshrl.u32 %v2847, 7
      %v2849 = vsub.s32 %v2846, %v2848
      %v2850 = vrot.slane %v2843, %v2849
      %v2852 = vunpack.c.l.s4 1935823168
      %v2853 = vunpack.c.0.s8 %v2852
      %v2854 = vlaneseq
      %v2855 = vshrl.u32 %v2854, 7
      %v2856 = vsub.s32 %v2853, %v2855
      %v2857 = vrot.slane %v1126, %v2856
      %v2859 = vunpack.c.l.s4 1935823168
      %v2860 = vunpack.c.0.s8 %v2859
      %v2861 = vlaneseq
      %v2862 = vshrl.u32 %v2861, 7
      %v2863 = vsub.s32 %v2860, %v2862
      %v2864 = vrot.slane %v2857, %v2863
      %v2866 = vunpack.c.l.s4 1935823168
      %v2867 = vunpack.c.0.s8 %v2866
      %v2868 = vlaneseq
      %v2869 = vshrl.u32 %v2868, 7
      %v2870 = vsub.s32 %v2867, %v2869
      %v2871 = vrot.slane %v1127, %v2870
      %v2873 = vunpack.c.l.s4 1935823168
      %v2874 = vunpack.c.0.s8 %v2873
      %v2875 = vlaneseq
      %v2876 = vshrl.u32 %v2875, 7
      %v2877 = vsub.s32 %v2874, %v2876
      %v2878 = vrot.slane %v2871, %v2877
      %v2880 = vunpack.c.l.s4 1935823168
      %v2881 = vunpack.c.0.s8 %v2880
      %v2882 = vlaneseq
      %v2883 = vshrl.u32 %v2882, 7
      %v2884 = vsub.s32 %v2881, %v2883
      %v2885 = vrot.slane %v1128, %v2884
      %v2887 = vunpack.c.l.s4 1935823168
      %v2888 = vunpack.c.0.s8 %v2887
      %v2889 = vlaneseq
      %v2890 = vshrl.u32 %v2889, 7
      %v2891 = vsub.s32 %v2888, %v2890
      %v2892 = vrot.slane %v2885, %v2891
      %v2894 = vunpack.c.l.s4 1935823168
      %v2895 = vunpack.c.0.s8 %v2894
      %v2896 = vlaneseq
      %v2897 = vshrl.u32 %v2896, 7
      %v2898 = vsub.s32 %v2895, %v2897
      %v2899 = vrot.slane %v1129, %v2898
      %v2901 = vunpack.c.l.s4 1935823168
      %v2902 = vunpack.c.0.s8 %v2901
      %v2903 = vlaneseq
      %v2904 = vshrl.u32 %v2903, 7
      %v2905 = vsub.s32 %v2902, %v2904
      %v2906 = vrot.slane %v2899, %v2905
      %v2908 = vunpack.c.l.s4 1935823168
      %v2909 = vunpack.c.0.s8 %v2908
      %v2910 = vlaneseq
      %v2911 = vshrl.u32 %v2910, 7
      %v2912 = vsub.s32 %v2909, %v2911
      %v2913 = vrot.slane %v1130, %v2912
      %v2915 = vunpack.c.l.s4 1935823168
      %v2916 = vunpack.c.0.s8 %v2915
      %v2917 = vlaneseq
      %v2918 = vshrl.u32 %v2917, 7
      %v2919 = vsub.s32 %v2916, %v2918
      %v2920 = vrot.slane %v2913, %v2919
      %v2922 = vunpack.c.l.s4 1935823168
      %v2923 = vunpack.c.0.s8 %v2922
      %v2924 = vlaneseq
      %v2925 = vshrl.u32 %v2924, 7
      %v2926 = vsub.s32 %v2923, %v2925
      %v2927 = vrot.slane %v1131, %v2926
      %v2929 = vunpack.c.l.s4 1935823168
      %v2930 = vunpack.c.0.s8 %v2929
      %v2931 = vlaneseq
      %v2932 = vshrl.u32 %v2931, 7
      %v2933 = vsub.s32 %v2930, %v2932
      %v2934 = vrot.slane %v2927, %v2933
      %v2936 = vunpack.c.l.s4 1935823168
      %v2937 = vunpack.c.0.s8 %v2936
      %v2938 = vlaneseq
      %v2939 = vshrl.u32 %v2938, 7
      %v2940 = vsub.s32 %v2937, %v2939
      %v2941 = vrot.slane %v1132, %v2940
      %v2943 = vunpack.c.l.s4 1935823168
      %v2944 = vunpack.c.0.s8 %v2943
      %v2945 = vlaneseq
      %v2946 = vshrl.u32 %v2945, 7
      %v2947 = vsub.s32 %v2944, %v2946
      %v2948 = vrot.slane %v2941, %v2947
      %v2950 = vunpack.c.l.s4 1935823168
      %v2951 = vunpack.c.0.s8 %v2950
      %v2952 = vlaneseq
      %v2953 = vshrl.u32 %v2952, 7
      %v2954 = vsub.s32 %v2951, %v2953
      %v2955 = vrot.slane %v1133, %v2954
      %v2957 = vunpack.c.l.s4 1935823168
      %v2958 = vunpack.c.0.s8 %v2957
      %v2959 = vlaneseq
      %v2960 = vshrl.u32 %v2959, 7
      %v2961 = vsub.s32 %v2958, %v2960
      %v2962 = vrot.slane %v2955, %v2961
      %v2964 = vunpack.c.l.s4 1935823168
      %v2965 = vunpack.c.0.s8 %v2964
      %v2966 = vlaneseq
      %v2967 = vshrl.u32 %v2966, 7
      %v2968 = vsub.s32 %v2965, %v2967
      %v2969 = vrot.slane %v1134, %v2968
      %v2971 = vunpack.c.l.s4 1935823168
      %v2972 = vunpack.c.0.s8 %v2971
      %v2973 = vlaneseq
      %v2974 = vshrl.u32 %v2973, 7
      %v2975 = vsub.s32 %v2972, %v2974
      %v2976 = vrot.slane %v2969, %v2975
      %v2978 = vunpack.c.l.s4 1935823168
      %v2979 = vunpack.c.0.s8 %v2978
      %v2980 = vlaneseq
      %v2981 = vshrl.u32 %v2980, 7
      %v2982 = vsub.s32 %v2979, %v2981
      %v2983 = vrot.slane %v1135, %v2982
      %v2985 = vunpack.c.l.s4 1935823168
      %v2986 = vunpack.c.0.s8 %v2985
      %v2987 = vlaneseq
      %v2988 = vshrl.u32 %v2987, 7
      %v2989 = vsub.s32 %v2986, %v2988
      %v2990 = vrot.slane %v2983, %v2989
      %v2992 = vunpack.c.l.s4 1935823168
      %v2993 = vunpack.c.0.s8 %v2992
      %v2994 = vlaneseq
      %v2995 = vshrl.u32 %v2994, 7
      %v2996 = vsub.s32 %v2993, %v2995
      %v2997 = vrot.slane %v1136, %v2996
      %v2999 = vunpack.c.l.s4 1935823168
      %v3000 = vunpack.c.0.s8 %v2999
      %v3001 = vlaneseq
      %v3002 = vshrl.u32 %v3001, 7
      %v3003 = vsub.s32 %v3000, %v3002
      %v3004 = vrot.slane %v2997, %v3003
      %v3006 = vunpack.c.l.s4 1935823168
      %v3007 = vunpack.c.0.s8 %v3006
      %v3008 = vlaneseq
      %v3009 = vshrl.u32 %v3008, 7
      %v3010 = vsub.s32 %v3007, %v3009
      %v3011 = vrot.slane %v1137, %v3010
      %v3013 = vunpack.c.l.s4 1935823168
      %v3014 = vunpack.c.0.s8 %v3013
      %v3015 = vlaneseq
      %v3016 = vshrl.u32 %v3015, 7
      %v3017 = vsub.s32 %v3014, %v3016
      %v3018 = vrot.slane %v3011, %v3017
      %v3020 = vunpack.c.l.s4 1935823168
      %v3021 = vunpack.c.0.s8 %v3020
      %v3022 = vlaneseq
      %v3023 = vshrl.u32 %v3022, 7
      %v3024 = vsub.s32 %v3021, %v3023
      %v3025 = vrot.slane %v1138, %v3024
      %v3027 = vunpack.c.l.s4 1935823168
      %v3028 = vunpack.c.0.s8 %v3027
      %v3029 = vlaneseq
      %v3030 = vshrl.u32 %v3029, 7
      %v3031 = vsub.s32 %v3028, %v3030
      %v3032 = vrot.slane %v3025, %v3031
      %v3034 = vunpack.c.l.s4 1935823168
      %v3035 = vunpack.c.0.s8 %v3034
      %v3036 = vlaneseq
      %v3037 = vshrl.u32 %v3036, 7
      %v3038 = vsub.s32 %v3035, %v3037
      %v3039 = vrot.slane %v1139, %v3038
      %v3041 = vunpack.c.l.s4 1935823168
      %v3042 = vunpack.c.0.s8 %v3041
      %v3043 = vlaneseq
      %v3044 = vshrl.u32 %v3043, 7
      %v3045 = vsub.s32 %v3042, %v3044
      %v3046 = vrot.slane %v3039, %v3045
      %v3048 = vunpack.c.l.s4 1935823168
      %v3049 = vunpack.c.0.s8 %v3048
      %v3050 = vlaneseq
      %v3051 = vshrl.u32 %v3050, 7
      %v3052 = vsub.s32 %v3049, %v3051
      %v3053 = vrot.slane %v1140, %v3052
      %v3055 = vunpack.c.l.s4 1935823168
      %v3056 = vunpack.c.0.s8 %v3055
      %v3057 = vlaneseq
      %v3058 = vshrl.u32 %v3057, 7
      %v3059 = vsub.s32 %v3056, %v3058
      %v3060 = vrot.slane %v3053, %v3059
      %v3061 = vunpack.c.l.b16 %v1282
      %v3062 = vunpack.c.l.b16 %v1296
      %v3063 = vunpack.c.l.b16 %v1310
      %v3064 = vunpack.c.l.b16 %v1324
      %v3065 = vunpack.c.l.b16 %v1338
      %v3066 = vunpack.c.l.b16 %v1352
      %v3067 = vunpack.c.l.b16 %v1366
      %v3068 = vunpack.c.l.b16 %v1380
      %v3069 = vunpack.c.l.b16 %v1394
      %v3070 = vunpack.c.l.b16 %v1408
      %v3071 = vunpack.c.l.b16 %v1422
      %v3072 = vunpack.c.l.b16 %v1436
      %v3073 = vunpack.c.l.b16 %v1450
      %v3074 = vunpack.c.l.b16 %v1464
      %v3075 = vunpack.c.l.b16 %v1478
      %v3076 = vunpack.c.l.b16 %v1492
      %v3077 = vunpack.c.l.b16 %v1506
      %v3078 = vunpack.c.l.b16 %v1520
      %v3079 = vunpack.c.l.b16 %v1534
      %v3080 = vunpack.c.l.b16 %v1548
      %v3081 = vunpack.c.l.b16 %v1562
      %v3082 = vunpack.c.l.b16 %v1576
      %v3083 = vunpack.c.l.b16 %v1590
      %v3084 = vunpack.c.l.b16 %v1604
      %v3085 = vunpack.c.l.b16 %v1618
      %v3086 = vunpack.c.l.b16 %v1632
      %v3087 = vunpack.c.l.b16 %v1646
      %v3088 = vunpack.c.l.b16 %v1660
      %v3089 = vunpack.c.l.b16 %v1674
      %v3090 = vunpack.c.l.b16 %v1688
      %v3091 = vunpack.c.l.b16 %v1702
      %v3092 = vunpack.c.l.b16 %v1716
      %v3093 = vunpack.c.l.b16 %v1730
      %v3094 = vunpack.c.l.b16 %v1744
      %v3095 = vunpack.c.l.b16 %v1758
      %v3096 = vunpack.c.l.b16 %v1772
      %v3097 = vunpack.c.l.b16 %v1786
      %v3098 = vunpack.c.l.b16 %v1800
      %v3099 = vunpack.c.l.b16 %v1814
      %v3100 = vunpack.c.l.b16 %v1828
      %v3101 = vunpack.c.l.b16 %v1842
      %v3102 = vunpack.c.l.b16 %v1856
      %v3103 = vunpack.c.l.b16 %v1870
      %v3104 = vunpack.c.l.b16 %v1884
      %v3105 = vunpack.c.l.b16 %v1898
      %v3106 = vunpack.c.l.b16 %v1912
      %v3107 = vunpack.c.l.b16 %v1926
      %v3108 = vunpack.c.l.b16 %v1940
      %v3109 = vunpack.c.l.b16 %v1954
      %v3110 = vunpack.c.l.b16 %v1968
      %v3111 = vunpack.c.l.b16 %v1982
      %v3112 = vunpack.c.l.b16 %v1996
      %v3113 = vunpack.c.l.b16 %v2010
      %v3114 = vunpack.c.l.b16 %v2024
      %v3115 = vunpack.c.l.b16 %v2038
      %v3116 = vunpack.c.l.b16 %v2052
      %v3117 = vunpack.c.l.b16 %v2066
      %v3118 = vunpack.c.l.b16 %v2080
      %v3119 = vunpack.c.l.b16 %v2094
      %v3120 = vunpack.c.l.b16 %v2108
      %v3121 = vunpack.c.l.b16 %v2122
      %v3122 = vunpack.c.l.b16 %v2136
      %v3123 = vunpack.c.l.b16 %v2150
      %v3124 = vunpack.c.l.b16 %v2164
      %v3125 = vunpack.c.l.b16 %v2178
      %v3126 = vunpack.c.l.b16 %v2192
      %v3127 = vunpack.c.l.b16 %v2206
      %v3128 = vunpack.c.l.b16 %v2220
      %v3129 = vunpack.c.l.b16 %v2234
      %v3130 = vunpack.c.l.b16 %v2248
      %v3131 = vunpack.c.l.b16 %v2262
      %v3132 = vunpack.c.l.b16 %v2276
      %v3133 = vunpack.c.l.b16 %v2290
      %v3134 = vunpack.c.l.b16 %v2304
      %v3135 = vunpack.c.l.b16 %v2318
      %v3136 = vunpack.c.l.b16 %v2332
      %v3137 = vunpack.c.l.b16 %v2346
      %v3138 = vunpack.c.l.b16 %v2360
      %v3139 = vunpack.c.l.b16 %v2374
      %v3140 = vunpack.c.l.b16 %v2388
      %v3141 = vunpack.c.l.b16 %v2402
      %v3142 = vunpack.c.l.b16 %v2416
      %v3143 = vunpack.c.l.b16 %v2430
      %v3144 = vunpack.c.l.b16 %v2444
      %v3145 = vunpack.c.l.b16 %v2458
      %v3146 = vunpack.c.l.b16 %v2472
      %v3147 = vunpack.c.l.b16 %v2486
      %v3148 = vunpack.c.l.b16 %v2500
      %v3149 = vunpack.c.l.b16 %v2514
      %v3150 = vunpack.c.l.b16 %v2528
      %v3151 = vunpack.c.l.b16 %v2542
      %v3152 = vunpack.c.l.b16 %v2556
      %v3153 = vunpack.c.l.b16 %v2570
      %v3154 = vunpack.c.l.b16 %v2584
      %v3155 = vunpack.c.l.b16 %v2598
      %v3156 = vunpack.c.l.b16 %v2612
      %v3157 = vunpack.c.l.b16 %v2626
      %v3158 = vunpack.c.l.b16 %v2640
      %v3159 = vunpack.c.l.b16 %v2654
      %v3160 = vunpack.c.l.b16 %v2668
      %v3161 = vunpack.c.l.b16 %v2682
      %v3162 = vunpack.c.l.b16 %v2696
      %v3163 = vunpack.c.l.b16 %v2710
      %v3164 = vunpack.c.l.b16 %v2724
      %v3165 = vunpack.c.l.b16 %v2738
      %v3166 = vunpack.c.l.b16 %v2752
      %v3167 = vunpack.c.l.b16 %v2766
      %v3168 = vunpack.c.l.b16 %v2780
      %v3169 = vunpack.c.l.b16 %v2794
      %v3170 = vunpack.c.l.b16 %v2808
      %v3171 = vunpack.c.l.b16 %v2822
      %v3172 = vunpack.c.l.b16 %v2836
      %v3173 = vunpack.c.l.b16 %v2850
      %v3174 = vunpack.c.l.b16 %v2864
      %v3175 = vunpack.c.l.b16 %v2878
      %v3176 = vunpack.c.l.b16 %v2892
      %v3177 = vunpack.c.l.b16 %v2906
      %v3178 = vunpack.c.l.b16 %v2920
      %v3179 = vunpack.c.l.b16 %v2934
      %v3180 = vunpack.c.l.b16 %v2948
      %v3181 = vunpack.c.l.b16 %v2962
      %v3182 = vunpack.c.l.b16 %v2976
      %v3183 = vunpack.c.l.b16 %v2990
      %v3184 = vunpack.c.l.b16 %v3004
      %v3185 = vunpack.c.l.b16 %v3018
      %v3186 = vunpack.c.l.b16 %v3032
      %v3187 = vunpack.c.l.b16 %v3046
      %v3188 = vunpack.c.l.b16 %v3060
      %v3189 = vrot.slane %v3062, 7
      %vm3190 = vcmask 1041409
      %v3191 = vsel %vm3190, %v3189, %v3061
      %v3192 = vrot.slane %v3063, 6
      %vm3193 = vcmask 1042434
      %v3194 = vsel %vm3193, %v3192, %v3191
      %v3195 = vrot.slane %v3064, 5
      %vm3196 = vcmask 1043459
      %v3197 = vsel %vm3196, %v3195, %v3194
      %v3198 = vrot.slane %v3065, 4
      %vm3199 = vcmask 1044484
      %v3200 = vsel %vm3199, %v3198, %v3197
      %v3201 = vrot.slane %v3066, 3
      %vm3202 = vcmask 1045509
      %v3203 = vsel %vm3202, %v3201, %v3200
      %v3204 = vrot.slane %v3067, 2
      %vm3205 = vcmask 1046534
      %v3206 = vsel %vm3205, %v3204, %v3203
      %v3207 = vrot.slane %v3068, 1
      %vm3208 = vcmask 1047559
      %v3209 = vsel %vm3208, %v3207, %v3206
      %v3210 = vrot.slane %v3070, 7
      %v3211 = vsel %vm3190, %v3210, %v3069
      %v3212 = vrot.slane %v3071, 6
      %v3213 = vsel %vm3193, %v3212, %v3211
      %v3214 = vrot.slane %v3072, 5
      %v3215 = vsel %vm3196, %v3214, %v3213
      %v3216 = vrot.slane %v3073, 4
      %v3217 = vsel %vm3199, %v3216, %v3215
      %v3218 = vrot.slane %v3074, 3
      %v3219 = vsel %vm3202, %v3218, %v3217
      %v3220 = vrot.slane %v3075, 2
      %v3221 = vsel %vm3205, %v3220, %v3219
      %v3222 = vrot.slane %v3076, 1
      %v3223 = vsel %vm3208, %v3222, %v3221
      %v3224 = vrot.slane %v3078, 7
      %v3225 = vsel %vm3190, %v3224, %v3077
      %v3226 = vrot.slane %v3079, 6
      %v3227 = vsel %vm3193, %v3226, %v3225
      %v3228 = vrot.slane %v3080, 5
      %v3229 = vsel %vm3196, %v3228, %v3227
      %v3230 = vrot.slane %v3081, 4
      %v3231 = vsel %vm3199, %v3230, %v3229
      %v3232 = vrot.slane %v3082, 3
      %v3233 = vsel %vm3202, %v3232, %v3231
      %v3234 = vrot.slane %v3083, 2
      %v3235 = vsel %vm3205, %v3234, %v3233
      %v3236 = vrot.slane %v3084, 1
      %v3237 = vsel %vm3208, %v3236, %v3235
      %v3238 = vrot.slane %v3086, 7
      %v3239 = vsel %vm3190, %v3238, %v3085
      %v3240 = vrot.slane %v3087, 6
      %v3241 = vsel %vm3193, %v3240, %v3239
      %v3242 = vrot.slane %v3088, 5
      %v3243 = vsel %vm3196, %v3242, %v3241
      %v3244 = vrot.slane %v3089, 4
      %v3245 = vsel %vm3199, %v3244, %v3243
      %v3246 = vrot.slane %v3090, 3
      %v3247 = vsel %vm3202, %v3246, %v3245
      %v3248 = vrot.slane %v3091, 2
      %v3249 = vsel %vm3205, %v3248, %v3247
      %v3250 = vrot.slane %v3092, 1
      %v3251 = vsel %vm3208, %v3250, %v3249
      %v3252 = vrot.slane %v3094, 7
      %v3253 = vsel %vm3190, %v3252, %v3093
      %v3254 = vrot.slane %v3095, 6
      %v3255 = vsel %vm3193, %v3254, %v3253
      %v3256 = vrot.slane %v3096, 5
      %v3257 = vsel %vm3196, %v3256, %v3255
      %v3258 = vrot.slane %v3097, 4
      %v3259 = vsel %vm3199, %v3258, %v3257
      %v3260 = vrot.slane %v3098, 3
      %v3261 = vsel %vm3202, %v3260, %v3259
      %v3262 = vrot.slane %v3099, 2
      %v3263 = vsel %vm3205, %v3262, %v3261
      %v3264 = vrot.slane %v3100, 1
      %v3265 = vsel %vm3208, %v3264, %v3263
      %v3266 = vrot.slane %v3102, 7
      %v3267 = vsel %vm3190, %v3266, %v3101
      %v3268 = vrot.slane %v3103, 6
      %v3269 = vsel %vm3193, %v3268, %v3267
      %v3270 = vrot.slane %v3104, 5
      %v3271 = vsel %vm3196, %v3270, %v3269
      %v3272 = vrot.slane %v3105, 4
      %v3273 = vsel %vm3199, %v3272, %v3271
      %v3274 = vrot.slane %v3106, 3
      %v3275 = vsel %vm3202, %v3274, %v3273
      %v3276 = vrot.slane %v3107, 2
      %v3277 = vsel %vm3205, %v3276, %v3275
      %v3278 = vrot.slane %v3108, 1
      %v3279 = vsel %vm3208, %v3278, %v3277
      %v3280 = vrot.slane %v3110, 7
      %v3281 = vsel %vm3190, %v3280, %v3109
      %v3282 = vrot.slane %v3111, 6
      %v3283 = vsel %vm3193, %v3282, %v3281
      %v3284 = vrot.slane %v3112, 5
      %v3285 = vsel %vm3196, %v3284, %v3283
      %v3286 = vrot.slane %v3113, 4
      %v3287 = vsel %vm3199, %v3286, %v3285
      %v3288 = vrot.slane %v3114, 3
      %v3289 = vsel %vm3202, %v3288, %v3287
      %v3290 = vrot.slane %v3115, 2
      %v3291 = vsel %vm3205, %v3290, %v3289
      %v3292 = vrot.slane %v3116, 1
      %v3293 = vsel %vm3208, %v3292, %v3291
      %v3294 = vrot.slane %v3118, 7
      %v3295 = vsel %vm3190, %v3294, %v3117
      %v3296 = vrot.slane %v3119, 6
      %v3297 = vsel %vm3193, %v3296, %v3295
      %v3298 = vrot.slane %v3120, 5
      %v3299 = vsel %vm3196, %v3298, %v3297
      %v3300 = vrot.slane %v3121, 4
      %v3301 = vsel %vm3199, %v3300, %v3299
      %v3302 = vrot.slane %v3122, 3
      %v3303 = vsel %vm3202, %v3302, %v3301
      %v3304 = vrot.slane %v3123, 2
      %v3305 = vsel %vm3205, %v3304, %v3303
      %v3306 = vrot.slane %v3124, 1
      %v3307 = vsel %vm3208, %v3306, %v3305
      %v3308 = vrot.slane %v3126, 7
      %v3309 = vsel %vm3190, %v3308, %v3125
      %v3310 = vrot.slane %v3127, 6
      %v3311 = vsel %vm3193, %v3310, %v3309
      %v3312 = vrot.slane %v3128, 5
      %v3313 = vsel %vm3196, %v3312, %v3311
      %v3314 = vrot.slane %v3129, 4
      %v3315 = vsel %vm3199, %v3314, %v3313
      %v3316 = vrot.slane %v3130, 3
      %v3317 = vsel %vm3202, %v3316, %v3315
      %v3318 = vrot.slane %v3131, 2
      %v3319 = vsel %vm3205, %v3318, %v3317
      %v3320 = vrot.slane %v3132, 1
      %v3321 = vsel %vm3208, %v3320, %v3319
      %v3322 = vrot.slane %v3134, 7
      %v3323 = vsel %vm3190, %v3322, %v3133
      %v3324 = vrot.slane %v3135, 6
      %v3325 = vsel %vm3193, %v3324, %v3323
      %v3326 = vrot.slane %v3136, 5
      %v3327 = vsel %vm3196, %v3326, %v3325
      %v3328 = vrot.slane %v3137, 4
      %v3329 = vsel %vm3199, %v3328, %v3327
      %v3330 = vrot.slane %v3138, 3
      %v3331 = vsel %vm3202, %v3330, %v3329
      %v3332 = vrot.slane %v3139, 2
      %v3333 = vsel %vm3205, %v3332, %v3331
      %v3334 = vrot.slane %v3140, 1
      %v3335 = vsel %vm3208, %v3334, %v3333
      %v3336 = vrot.slane %v3142, 7
      %v3337 = vsel %vm3190, %v3336, %v3141
      %v3338 = vrot.slane %v3143, 6
      %v3339 = vsel %vm3193, %v3338, %v3337
      %v3340 = vrot.slane %v3144, 5
      %v3341 = vsel %vm3196, %v3340, %v3339
      %v3342 = vrot.slane %v3145, 4
      %v3343 = vsel %vm3199, %v3342, %v3341
      %v3344 = vrot.slane %v3146, 3
      %v3345 = vsel %vm3202, %v3344, %v3343
      %v3346 = vrot.slane %v3147, 2
      %v3347 = vsel %vm3205, %v3346, %v3345
      %v3348 = vrot.slane %v3148, 1
      %v3349 = vsel %vm3208, %v3348, %v3347
      %v3350 = vrot.slane %v3150, 7
      %v3351 = vsel %vm3190, %v3350, %v3149
      %v3352 = vrot.slane %v3151, 6
      %v3353 = vsel %vm3193, %v3352, %v3351
      %v3354 = vrot.slane %v3152, 5
      %v3355 = vsel %vm3196, %v3354, %v3353
      %v3356 = vrot.slane %v3153, 4
      %v3357 = vsel %vm3199, %v3356, %v3355
      %v3358 = vrot.slane %v3154, 3
      %v3359 = vsel %vm3202, %v3358, %v3357
      %v3360 = vrot.slane %v3155, 2
      %v3361 = vsel %vm3205, %v3360, %v3359
      %v3362 = vrot.slane %v3156, 1
      %v3363 = vsel %vm3208, %v3362, %v3361
      %v3364 = vrot.slane %v3158, 7
      %v3365 = vsel %vm3190, %v3364, %v3157
      %v3366 = vrot.slane %v3159, 6
      %v3367 = vsel %vm3193, %v3366, %v3365
      %v3368 = vrot.slane %v3160, 5
      %v3369 = vsel %vm3196, %v3368, %v3367
      %v3370 = vrot.slane %v3161, 4
      %v3371 = vsel %vm3199, %v3370, %v3369
      %v3372 = vrot.slane %v3162, 3
      %v3373 = vsel %vm3202, %v3372, %v3371
      %v3374 = vrot.slane %v3163, 2
      %v3375 = vsel %vm3205, %v3374, %v3373
      %v3376 = vrot.slane %v3164, 1
      %v3377 = vsel %vm3208, %v3376, %v3375
      %v3378 = vrot.slane %v3166, 7
      %v3379 = vsel %vm3190, %v3378, %v3165
      %v3380 = vrot.slane %v3167, 6
      %v3381 = vsel %vm3193, %v3380, %v3379
      %v3382 = vrot.slane %v3168, 5
      %v3383 = vsel %vm3196, %v3382, %v3381
      %v3384 = vrot.slane %v3169, 4
      %v3385 = vsel %vm3199, %v3384, %v3383
      %v3386 = vrot.slane %v3170, 3
      %v3387 = vsel %vm3202, %v3386, %v3385
      %v3388 = vrot.slane %v3171, 2
      %v3389 = vsel %vm3205, %v3388, %v3387
      %v3390 = vrot.slane %v3172, 1
      %v3391 = vsel %vm3208, %v3390, %v3389
      %v3392 = vrot.slane %v3174, 7
      %v3393 = vsel %vm3190, %v3392, %v3173
      %v3394 = vrot.slane %v3175, 6
      %v3395 = vsel %vm3193, %v3394, %v3393
      %v3396 = vrot.slane %v3176, 5
      %v3397 = vsel %vm3196, %v3396, %v3395
      %v3398 = vrot.slane %v3177, 4
      %v3399 = vsel %vm3199, %v3398, %v3397
      %v3400 = vrot.slane %v3178, 3
      %v3401 = vsel %vm3202, %v3400, %v3399
      %v3402 = vrot.slane %v3179, 2
      %v3403 = vsel %vm3205, %v3402, %v3401
      %v3404 = vrot.slane %v3180, 1
      %v3405 = vsel %vm3208, %v3404, %v3403
      %v3406 = vrot.slane %v3182, 7
      %v3407 = vsel %vm3190, %v3406, %v3181
      %v3408 = vrot.slane %v3183, 6
      %v3409 = vsel %vm3193, %v3408, %v3407
      %v3410 = vrot.slane %v3184, 5
      %v3411 = vsel %vm3196, %v3410, %v3409
      %v3412 = vrot.slane %v3185, 4
      %v3413 = vsel %vm3199, %v3412, %v3411
      %v3414 = vrot.slane %v3186, 3
      %v3415 = vsel %vm3202, %v3414, %v3413
      %v3416 = vrot.slane %v3187, 2
      %v3417 = vsel %vm3205, %v3416, %v3415
      %v3418 = vrot.slane %v3188, 1
      %v3419 = vsel %vm3208, %v3418, %v3417
      %v3420 = vpack.c.b16 %v3209, %v3209
      %v3421 = vpack.c.b16 %v3223, %v3223
      %v3422 = vpack.c.b16 %v3237, %v3237
      %v3423 = vpack.c.b16 %v3251, %v3251
      %v3424 = vpack.c.b16 %v3265, %v3265
      %v3425 = vpack.c.b16 %v3279, %v3279
      %v3426 = vpack.c.b16 %v3293, %v3293
      %v3427 = vpack.c.b16 %v3307, %v3307
      %v3428 = vpack.c.b16 %v3321, %v3321
      %v3429 = vpack.c.b16 %v3335, %v3335
      %v3430 = vpack.c.b16 %v3349, %v3349
      %v3431 = vpack.c.b16 %v3363, %v3363
      %v3432 = vpack.c.b16 %v3377, %v3377
      %v3433 = vpack.c.b16 %v3391, %v3391
      %v3434 = vpack.c.b16 %v3405, %v3405
      %v3435 = vpack.c.b16 %v3419, %v3419
      %vm3452 = vcmask 125952
      %3453 = vst.msk [vmem:[%s115] sm:$0xf] %vm3452, %v3420
      %3454 = vst.msk [vmem:[%s115 + $0x4] sm:$0xf] %vm3452, %v3421
      %3455 = vst.msk [vmem:[%s115 + $0x8] sm:$0xf] %vm3452, %v3422
      %3456 = vst.msk [vmem:[%s115 + $0xc] sm:$0xf] %vm3452, %v3423
      %3457 = vst.msk [vmem:[%s115 + $0x10] sm:$0xf] %vm3452, %v3424
      %3458 = vst.msk [vmem:[%s115 + $0x14] sm:$0xf] %vm3452, %v3425
      %3459 = vst.msk [vmem:[%s115 + $0x18] sm:$0xf] %vm3452, %v3426
      %3460 = vst.msk [vmem:[%s115 + $0x1c] sm:$0xf] %vm3452, %v3427
      %3461 = vst.msk [vmem:[%s115 + $0x20] sm:$0xf] %vm3452, %v3428
      %3462 = vst.msk [vmem:[%s115 + $0x24] sm:$0xf] %vm3452, %v3429
      %3463 = vst.msk [vmem:[%s115 + $0x28] sm:$0xf] %vm3452, %v3430
      %3464 = vst.msk [vmem:[%s115 + $0x2c] sm:$0xf] %vm3452, %v3431
      %3465 = vst.msk [vmem:[%s115 + $0x30] sm:$0xf] %vm3452, %v3432
      %3466 = vst.msk [vmem:[%s115 + $0x34] sm:$0xf] %vm3452, %v3433
      %3467 = vst.msk [vmem:[%s115 + $0x38] sm:$0xf] %vm3452, %v3434
      %3468 = vst.msk [vmem:[%s115 + $0x3c] sm:$0xf] %vm3452, %v3435
      %s3469 = smul.u32 16, %s12
      %p3470 = scmp.lt.s32.totalorder %s3469, 31
      %s3471 = scalar_select %p3470, %s3469, 31
      %s3472 = smul.addr %s3471, 4
      %s3473 = scalar_lea.vmem %s1, %s3472
      // Predicated region
      $region25: #{convnet_forward.14} parent=23 // pred_check
        %p3474 = pneg %p56
      $region26: #{convnet_forward.14} parent=23 // pred_check_branch
        %3476 = sbr.rel (%p3474) target = $region28
      $region27: #{convnet_forward.14} parent=23 // pred_region
        %s3477 = smul.u32 16, %s12
      $region28: #{convnet_forward.14} parent=23 // pred_fallthru
        _
    $region24: #{convnet_forward.14} parent=5 // pred_fallthru
      _
    %p3478 = scmp.le.s32.totalorder 2, %s7
    // Predicated region
    $region29: #{convnet_forward.14} parent=5 // pred_check
      %p3479 = pneg %p3478
    $region30: #{convnet_forward.14} parent=5 // pred_check_branch
      %3481 = sbr.rel (%p3479) target = $region32
    $region31: #{convnet_forward.14} parent=5 // pred_region
      %s3482 = ssub.s32 %s7, 2
      // Predicated region
      $region33: #{convnet_forward.14} parent=31 // pred_check
        %p3483 = pneg %p62
      $region34: #{convnet_forward.14} parent=31 // pred_check_branch
        %3485 = sbr.rel (%p3483) target = $region36
      $region35: #{convnet_forward.14} parent=31 // pred_region
        %s3486 = smul.u32 16, %s13
        %p3487 = scmp.lt.s32.totalorder %s3486, 31
        %s3488 = scalar_select %p3487, %s3486, 31
        %s3489 = smul.addr %s3488, 4
        %s3490 = scalar_lea.vmem %s1, %s3489
      $region36: #{convnet_forward.14} parent=31 // pred_fallthru
        _
    $region32: #{convnet_forward.14} parent=5 // pred_fallthru
      _
  $region6: #{convnet_forward.14} parent=0 // loop_footer
    %s11 = sadd.s32 1, %s7
  $region7: #{convnet_forward.14} parent=0 // loop_footer_branch
    %6 = sbr.rel target = $region3
  $region8: #{convnet_forward.14} parent=0 // loop_exit
    _

// kernel: convnet_forward.16
$region0: #{convnet_forward.16}
  #allocation0 [shape = 'u32[]', space=smem, size = 0x4, offset = 0x4, fixed_abs, tag = 'smem constant byte address 0x4 - core index']
  #allocation1 [shape = 'u32[144,128]{1,0:T(1,128)}', space=vmem, size = 0x12000, scoped, tag = 'internal scratch']
  #allocation2 [shape = 'f32[128,32]{1,0:T(8,128)}', space=vmem, size = 0x10000, scoped, tag = 'scratch operand']
  %s0 = inlined_call_operand.vmem [shape: bf16[128,144], index: 0, kind: input, shape index: {}]
  %s1 = inlined_call_operand.vmem [shape: bf16[144,32], index: 1, kind: input, shape index: {}]
  %s2 = inlined_call_operand.vmem [shape: f32[1,32], index: 2, kind: input, shape index: {}]
  %s3 = inlined_call_operand.vmem [shape: f32[1,32], index: 3, kind: input, shape index: {}]
  %s4 = inlined_call_operand.vmem [shape: bf16[128,32], index: 4, kind: output, shape index: {}]
  %s5 = sld [smem:[#allocation0]]
  $region34: #{convnet_forward.16} parent=0
    _
  %s7 = ssub.s32 1, %s5
  %s8 = scalar_select 0, %s7, %s5
  // Predicated region
  $region2: #{convnet_forward.16} parent=0 // pred_check
    _
  $region3: #{convnet_forward.16} parent=0 // pred_check_branch
    %10 = sbr.rel (0) target = $region5
  $region4: #{convnet_forward.16} parent=0 // pred_region
    _
  $region5: #{convnet_forward.16} parent=0 // pred_fallthru
    _
  // Predicated region
  $region6: #{convnet_forward.16} parent=0 // pred_check
    _
  $region7: #{convnet_forward.16} parent=0 // pred_check_branch
    %12 = sbr.rel (0) target = $region9
  $region8: #{convnet_forward.16} parent=0 // pred_region
    _
  $region9: #{convnet_forward.16} parent=0 // pred_fallthru
    _
  // Predicated region
  $region10: #{convnet_forward.16} parent=0 // pred_check
    _
  $region11: #{convnet_forward.16} parent=0 // pred_check_branch
    %14 = sbr.rel (0) target = $region13
  $region12: #{convnet_forward.16} parent=0 // pred_region
    _
  $region13: #{convnet_forward.16} parent=0 // pred_fallthru
    _
  // Predicated region
  $region14: #{convnet_forward.16} parent=0 // pred_check
    _
  $region15: #{convnet_forward.16} parent=0 // pred_check_branch
    %16 = sbr.rel (0) target = $region17
  $region16: #{convnet_forward.16} parent=0 // pred_region
    _
  $region17: #{convnet_forward.16} parent=0 // pred_fallthru
    _
  %p18 = scmp.eq.s32.totalorder 0, 0
  // Predicated region
  $region18: #{convnet_forward.16} parent=0 // pred_check
    %p19 = pneg %p18
  $region19: #{convnet_forward.16} parent=0 // pred_check_branch
    %21 = sbr.rel (%p19) target = $region21
  $region20: #{convnet_forward.16} parent=0 // pred_region
    %vm22 = vcmask 261120
    %23 = vst.msk [vmem:[#allocation2] sm:$0xff] %vm22, 0.0
    %24 = vst.msk [vmem:[#allocation2 + $0x8] sm:$0xff] %vm22, 0.0
    %25 = vst.msk [vmem:[#allocation2 + $0x10] sm:$0xff] %vm22, 0.0
    %26 = vst.msk [vmem:[#allocation2 + $0x18] sm:$0xff] %vm22, 0.0
    %27 = vst.msk [vmem:[#allocation2 + $0x20] sm:$0xff] %vm22, 0.0
    %28 = vst.msk [vmem:[#allocation2 + $0x28] sm:$0xff] %vm22, 0.0
    %29 = vst.msk [vmem:[#allocation2 + $0x30] sm:$0xff] %vm22, 0.0
    %30 = vst.msk [vmem:[#allocation2 + $0x38] sm:$0xff] %vm22, 0.0
    %31 = vst.msk [vmem:[#allocation2 + $0x40] sm:$0xff] %vm22, 0.0
    %32 = vst.msk [vmem:[#allocation2 + $0x48] sm:$0xff] %vm22, 0.0
    %33 = vst.msk [vmem:[#allocation2 + $0x50] sm:$0xff] %vm22, 0.0
    %34 = vst.msk [vmem:[#allocation2 + $0x58] sm:$0xff] %vm22, 0.0
    %35 = vst.msk [vmem:[#allocation2 + $0x60] sm:$0xff] %vm22, 0.0
    %36 = vst.msk [vmem:[#allocation2 + $0x68] sm:$0xff] %vm22, 0.0
    %37 = vst.msk [vmem:[#allocation2 + $0x70] sm:$0xff] %vm22, 0.0
    %38 = vst.msk [vmem:[#allocation2 + $0x78] sm:$0xff] %vm22, 0.0
  $region21: #{convnet_forward.16} parent=0 // pred_fallthru
    _
  %v39 = vld [vmem:[%s1] sm:$0xf]
  %v40 = vld [vmem:[%s1 + $0x4] sm:$0xf]
  %v41 = vld [vmem:[%s1 + $0x8] sm:$0xf]
  %v42 = vld [vmem:[%s1 + $0xc] sm:$0xf]
  %v43 = vld [vmem:[%s1 + $0x10] sm:$0xf]
  %v44 = vld [vmem:[%s1 + $0x14] sm:$0xf]
  %v45 = vld [vmem:[%s1 + $0x18] sm:$0xf]
  %v46 = vld [vmem:[%s1 + $0x1c] sm:$0xf]
  %v47 = vld [vmem:[%s1 + $0x20] sm:$0xf]
  %v48 = vld [vmem:[%s1 + $0x24] sm:$0xf]
  %v49 = vld [vmem:[%s1 + $0x28] sm:$0xf]
  %v50 = vld [vmem:[%s1 + $0x2c] sm:$0xf]
  %v51 = vld [vmem:[%s1 + $0x30] sm:$0xf]
  %v52 = vld [vmem:[%s1 + $0x34] sm:$0xf]
  %v53 = vld [vmem:[%s1 + $0x38] sm:$0xf]
  %v54 = vld [vmem:[%s1 + $0x3c] sm:$0xf]
  %v55 = vld [vmem:[%s1 + $0x40] sm:$0xf]
  %v56 = vld [vmem:[%s1 + $0x44] sm:$0xf]
  %v57 = vld [vmem:[#allocation2] sm:$0xff]
  %v58 = vld [vmem:[#allocation2 + $0x8] sm:$0xff]
  %v59 = vld [vmem:[#allocation2 + $0x10] sm:$0xff]
  %v60 = vld [vmem:[#allocation2 + $0x18] sm:$0xff]
  %v61 = vld [vmem:[#allocation2 + $0x20] sm:$0xff]
  %v62 = vld [vmem:[#allocation2 + $0x28] sm:$0xff]
  %v63 = vld [vmem:[#allocation2 + $0x30] sm:$0xff]
  %v64 = vld [vmem:[#allocation2 + $0x38] sm:$0xff]
  %v65 = vld [vmem:[#allocation2 + $0x40] sm:$0xff]
  %v66 = vld [vmem:[#allocation2 + $0x48] sm:$0xff]
  %v67 = vld [vmem:[#allocation2 + $0x50] sm:$0xff]
  %v68 = vld [vmem:[#allocation2 + $0x58] sm:$0xff]
  %v69 = vld [vmem:[#allocation2 + $0x60] sm:$0xff]
  %v70 = vld [vmem:[#allocation2 + $0x68] sm:$0xff]
  %v71 = vld [vmem:[#allocation2 + $0x70] sm:$0xff]
  %v72 = vld [vmem:[#allocation2 + $0x78] sm:$0xff]
  %v73 = vld [vmem:[%s0] sm:$0xff]
  %v74 = vld [vmem:[%s0 + $0x8] sm:$0xff]
  %v75 = vld [vmem:[%s0 + $0x10] sm:$0xff]
  %v76 = vld [vmem:[%s0 + $0x18] sm:$0xff]
  %v77 = vld [vmem:[%s0 + $0x20] sm:$0xff]
  %v78 = vld [vmem:[%s0 + $0x28] sm:$0xff]
  %v79 = vld [vmem:[%s0 + $0x30] sm:$0xff]
  %v80 = vld [vmem:[%s0 + $0x38] sm:$0xff]
  %v81 = vld [vmem:[%s0 + $0x40] sm:$0xff]
  %v82 = vld [vmem:[%s0 + $0x48] sm:$0xff]
  %v83 = vld [vmem:[%s0 + $0x50] sm:$0xff]
  %v84 = vld [vmem:[%s0 + $0x58] sm:$0xff]
  %v85 = vld [vmem:[%s0 + $0x60] sm:$0xff]
  %v86 = vld [vmem:[%s0 + $0x68] sm:$0xff]
  %v87 = vld [vmem:[%s0 + $0x70] sm:$0xff]
  %v88 = vld [vmem:[%s0 + $0x78] sm:$0xff]
  %v105 = vunpack.c.l.b16 %v73
  %v106 = vunpack.c.h.b16 %v73
  %v107 = vunpack.c.l.b16 %v74
  %v108 = vunpack.c.h.b16 %v74
  %v109 = vunpack.c.l.b16 %v75
  %v110 = vunpack.c.h.b16 %v75
  %v111 = vunpack.c.l.b16 %v76
  %v112 = vunpack.c.h.b16 %v76
  %v113 = vunpack.c.l.b16 %v77
  %v114 = vunpack.c.h.b16 %v77
  %v115 = vunpack.c.l.b16 %v78
  %v116 = vunpack.c.h.b16 %v78
  %v117 = vunpack.c.l.b16 %v79
  %v118 = vunpack.c.h.b16 %v79
  %v119 = vunpack.c.l.b16 %v80
  %v120 = vunpack.c.h.b16 %v80
  %v121 = vunpack.c.l.b16 %v81
  %v122 = vunpack.c.h.b16 %v81
  %v123 = vunpack.c.l.b16 %v82
  %v124 = vunpack.c.h.b16 %v82
  %v125 = vunpack.c.l.b16 %v83
  %v126 = vunpack.c.h.b16 %v83
  %v127 = vunpack.c.l.b16 %v84
  %v128 = vunpack.c.h.b16 %v84
  %v129 = vunpack.c.l.b16 %v85
  %v130 = vunpack.c.h.b16 %v85
  %v131 = vunpack.c.l.b16 %v86
  %v132 = vunpack.c.h.b16 %v86
  %v133 = vunpack.c.l.b16 %v87
  %v134 = vunpack.c.h.b16 %v87
  %v135 = vunpack.c.l.b16 %v88
  %v136 = vunpack.c.h.b16 %v88
  %v137 = vpack.c.b16 %v107, %v105
  %v138 = vpack.c.b16 %v108, %v106
  %v139 = vpack.c.b16 %v111, %v109
  %v140 = vpack.c.b16 %v112, %v110
  %v141 = vpack.c.b16 %v115, %v113
  %v142 = vpack.c.b16 %v116, %v114
  %v143 = vpack.c.b16 %v119, %v117
  %v144 = vpack.c.b16 %v120, %v118
  %v145 = vpack.c.b16 %v123, %v121
  %v146 = vpack.c.b16 %v124, %v122
  %v147 = vpack.c.b16 %v127, %v125
  %v148 = vpack.c.b16 %v128, %v126
  %v149 = vpack.c.b16 %v131, %v129
  %v150 = vpack.c.b16 %v132, %v130
  %v151 = vpack.c.b16 %v135, %v133
  %v152 = vpack.c.b16 %v136, %v134
  %v179 = vunpack.c.l.b16 %v39
  %v180 = vunpack.c.l.b16 %v40
  %v181 = vunpack.c.l.b16 %v41
  %v182 = vunpack.c.l.b16 %v42
  %v183 = vunpack.c.l.b16 %v43
  %v184 = vunpack.c.l.b16 %v44
  %v185 = vunpack.c.l.b16 %v45
  %v186 = vunpack.c.l.b16 %v46
  %v187 = vunpack.c.l.b16 %v47
  %v188 = vunpack.c.l.b16 %v48
  %v189 = vunpack.c.l.b16 %v49
  %v190 = vunpack.c.l.b16 %v50
  %v191 = vunpack.c.l.b16 %v51
  %v192 = vunpack.c.l.b16 %v52
  %v193 = vunpack.c.l.b16 %v53
  %v194 = vunpack.c.l.b16 %v54
  %v195 = vunpack.c.l.b16 %v55
  %v196 = vunpack.c.l.b16 %v56
  %v197 = vpack.c.b16 %v180, %v179
  %v198 = vpack.c.b16 %v182, %v181
  %v199 = vpack.c.b16 %v184, %v183
  %v200 = vpack.c.b16 %v186, %v185
  %v201 = vpack.c.b16 %v188, %v187
  %v202 = vpack.c.b16 %v190, %v189
  %v203 = vpack.c.b16 %v192, %v191
  %v204 = vpack.c.b16 %v194, %v193
  %v205 = vpack.c.b16 %v196, %v195
  %vm215 = vcmask 130048
  %v217 = vsel %vm215, %v138, 0
  %v220 = vsel %vm215, %v140, 0
  %v223 = vsel %vm215, %v142, 0
  %v226 = vsel %vm215, %v144, 0
  %v229 = vsel %vm215, %v146, 0
  %v232 = vsel %vm215, %v148, 0
  %v235 = vsel %vm215, %v150, 0
  %v238 = vsel %vm215, %v152, 0
  %240 = vmatprep.subr.bf16.mxu0 0
  %241 = vmatpush1.bf16.msra.mxu0 %v204
  %242 = vmatprep.subr.bf16.mxu0 0
  %243 = vmatpush1.bf16.msra.mxu0 %v203
  %244 = vmatprep.subr.bf16.mxu0 0
  %245 = vmatpush1.bf16.msra.mxu0 %v202
  %246 = vmatprep.subr.bf16.mxu0 0
  %247 = vmatpush1.bf16.msra.mxu0 %v201
  %248 = vmatprep.subr.bf16.mxu0 0
  %249 = vmatpush1.bf16.msra.mxu0 %v200
  %250 = vmatprep.subr.bf16.mxu0 0
  %251 = vmatpush1.bf16.msra.mxu0 %v199
  %252 = vmatprep.subr.bf16.mxu0 0
  %253 = vmatpush1.bf16.msra.mxu0 %v198
  %254 = vmatprep.subr.bf16.mxu0 0
  %255 = vmatpush1.bf16.msra.mxu0 %v197
  %256 = vmatprep.subr.bf16.mxu0 0
  %257 = vmatpush2.bf16.msra.mxu0 0
  %258 = vmatprep.subr.bf16.mxu0 0
  %259 = vmatpush2.bf16.msra.mxu0 0
  %260 = vmatprep.subr.bf16.mxu0 0
  %261 = vmatpush2.bf16.msra.mxu0 0
  %262 = vmatprep.subr.bf16.mxu0 0
  %263 = vmatpush2.bf16.msra.mxu0 0
  %264 = vmatprep.subr.bf16.mxu0 0
  %265 = vmatpush2.bf16.msra.mxu0 0
  %266 = vmatprep.subr.bf16.mxu0 0
  %267 = vmatpush2.bf16.msra.mxu0 0
  %268 = vmatprep.subr.bf16.mxu0 0
  %269 = vmatpush2.bf16.msra.mxu0 0
  %270 = vmatprep.subr.bf16.mxu0 0
  %271 = vmatpush2.bf16.msra.mxu0 %v205
  %272 = vmatprep.mubr.bf16.mxu0 %v217
  %273 = vmatmul.mubr.bf16.gmra.mxu0 %v137
  %v274 = vpop.f32.mrf.mxu0
  %v275 = vadd.f32 0.0, %v274
  %v276 = vpop.f32.mrf.mxu0
  %v277 = vpop.f32.mrf.mxu0
  %v278 = vadd.f32 0.0, %v277
  %v279 = vpop.f32.mrf.mxu0
  %280 = vmatprep.mubr.bf16.mxu0 %v220
  %281 = vmatmul.mubr.bf16.gmra.mxu0 %v139
  %v282 = vpop.f32.mrf.mxu0
  %v283 = vadd.f32 0.0, %v282
  %v284 = vpop.f32.mrf.mxu0
  %v285 = vpop.f32.mrf.mxu0
  %v286 = vadd.f32 0.0, %v285
  %v287 = vpop.f32.mrf.mxu0
  %288 = vmatprep.mubr.bf16.mxu0 %v223
  %289 = vmatmul.mubr.bf16.gmra.mxu0 %v141
  %v290 = vpop.f32.mrf.mxu0
  %v291 = vadd.f32 0.0, %v290
  %v292 = vpop.f32.mrf.mxu0
  %v293 = vpop.f32.mrf.mxu0
  %v294 = vadd.f32 0.0, %v293
  %v295 = vpop.f32.mrf.mxu0
  %296 = vmatprep.mubr.bf16.mxu0 %v226
  %297 = vmatmul.mubr.bf16.gmra.mxu0 %v143
  %v298 = vpop.f32.mrf.mxu0
  %v299 = vadd.f32 0.0, %v298
  %v300 = vpop.f32.mrf.mxu0
  %v301 = vpop.f32.mrf.mxu0
  %v302 = vadd.f32 0.0, %v301
  %v303 = vpop.f32.mrf.mxu0
  %304 = vmatprep.mubr.bf16.mxu0 %v229
  %305 = vmatmul.mubr.bf16.gmra.mxu0 %v145
  %v306 = vpop.f32.mrf.mxu0
  %v307 = vadd.f32 0.0, %v306
  %v308 = vpop.f32.mrf.mxu0
  %v309 = vpop.f32.mrf.mxu0
  %v310 = vadd.f32 0.0, %v309
  %v311 = vpop.f32.mrf.mxu0
  %312 = vmatprep.mubr.bf16.mxu0 %v232
  %313 = vmatmul.mubr.bf16.gmra.mxu0 %v147
  %v314 = vpop.f32.mrf.mxu0
  %v315 = vadd.f32 0.0, %v314
  %v316 = vpop.f32.mrf.mxu0
  %v317 = vpop.f32.mrf.mxu0
  %v318 = vadd.f32 0.0, %v317
  %v319 = vpop.f32.mrf.mxu0
  %320 = vmatprep.mubr.bf16.mxu0 %v235
  %321 = vmatmul.mubr.bf16.gmra.mxu0 %v149
  %v322 = vpop.f32.mrf.mxu0
  %v323 = vadd.f32 0.0, %v322
  %v324 = vpop.f32.mrf.mxu0
  %v325 = vpop.f32.mrf.mxu0
  %v326 = vadd.f32 0.0, %v325
  %v327 = vpop.f32.mrf.mxu0
  %328 = vmatprep.mubr.bf16.mxu0 %v238
  %329 = vmatmul.mubr.bf16.gmra.mxu0 %v151
  %v330 = vpop.f32.mrf.mxu0
  %v331 = vadd.f32 0.0, %v330
  %v332 = vpop.f32.mrf.mxu0
  %v333 = vpop.f32.mrf.mxu0
  %v334 = vadd.f32 0.0, %v333
  %v335 = vpop.f32.mrf.mxu0
  %336 = vdwg.mxu0
  %v337 = vadd.f32 %v57, %v275
  %v338 = vadd.f32 %v58, %v278
  %v339 = vadd.f32 %v59, %v283
  %v340 = vadd.f32 %v60, %v286
  %v341 = vadd.f32 %v61, %v291
  %v342 = vadd.f32 %v62, %v294
  %v343 = vadd.f32 %v63, %v299
  %v344 = vadd.f32 %v64, %v302
  %v345 = vadd.f32 %v65, %v307
  %v346 = vadd.f32 %v66, %v310
  %v347 = vadd.f32 %v67, %v315
  %v348 = vadd.f32 %v68, %v318
  %v349 = vadd.f32 %v69, %v323
  %v350 = vadd.f32 %v70, %v326
  %v351 = vadd.f32 %v71, %v331
  %v352 = vadd.f32 %v72, %v334
  %vm353 = vcmask 261120
  %354 = vst.msk [vmem:[#allocation2] sm:$0xff] %vm353, %v337
  %355 = vst.msk [vmem:[#allocation2 + $0x8] sm:$0xff] %vm353, %v338
  %356 = vst.msk [vmem:[#allocation2 + $0x10] sm:$0xff] %vm353, %v339
  %357 = vst.msk [vmem:[#allocation2 + $0x18] sm:$0xff] %vm353, %v340
  %358 = vst.msk [vmem:[#allocation2 + $0x20] sm:$0xff] %vm353, %v341
  %359 = vst.msk [vmem:[#allocation2 + $0x28] sm:$0xff] %vm353, %v342
  %360 = vst.msk [vmem:[#allocation2 + $0x30] sm:$0xff] %vm353, %v343
  %361 = vst.msk [vmem:[#allocation2 + $0x38] sm:$0xff] %vm353, %v344
  %362 = vst.msk [vmem:[#allocation2 + $0x40] sm:$0xff] %vm353, %v345
  %363 = vst.msk [vmem:[#allocation2 + $0x48] sm:$0xff] %vm353, %v346
  %364 = vst.msk [vmem:[#allocation2 + $0x50] sm:$0xff] %vm353, %v347
  %365 = vst.msk [vmem:[#allocation2 + $0x58] sm:$0xff] %vm353, %v348
  %366 = vst.msk [vmem:[#allocation2 + $0x60] sm:$0xff] %vm353, %v349
  %367 = vst.msk [vmem:[#allocation2 + $0x68] sm:$0xff] %vm353, %v350
  %368 = vst.msk [vmem:[#allocation2 + $0x70] sm:$0xff] %vm353, %v351
  %369 = vst.msk [vmem:[#allocation2 + $0x78] sm:$0xff] %vm353, %v352
  // Predicated region
  $region22: #{convnet_forward.16} parent=0 // pred_check
    %p370 = pneg %p18
  $region23: #{convnet_forward.16} parent=0 // pred_check_branch
    %372 = sbr.rel (%p370) target = $region25
  $region24: #{convnet_forward.16} parent=0 // pred_region
    %v373 = vld [vmem:[#allocation2] sm:$0xff]
    %v374 = vld [vmem:[#allocation2 + $0x8] sm:$0xff]
    %v375 = vld [vmem:[#allocation2 + $0x10] sm:$0xff]
    %v376 = vld [vmem:[#allocation2 + $0x18] sm:$0xff]
    %v377 = vld [vmem:[#allocation2 + $0x20] sm:$0xff]
    %v378 = vld [vmem:[#allocation2 + $0x28] sm:$0xff]
    %v379 = vld [vmem:[#allocation2 + $0x30] sm:$0xff]
    %v380 = vld [vmem:[#allocation2 + $0x38] sm:$0xff]
    %v381 = vld [vmem:[#allocation2 + $0x40] sm:$0xff]
    %v382 = vld [vmem:[#allocation2 + $0x48] sm:$0xff]
    %v383 = vld [vmem:[#allocation2 + $0x50] sm:$0xff]
    %v384 = vld [vmem:[#allocation2 + $0x58] sm:$0xff]
    %v385 = vld [vmem:[#allocation2 + $0x60] sm:$0xff]
    %v386 = vld [vmem:[#allocation2 + $0x68] sm:$0xff]
    %v387 = vld [vmem:[#allocation2 + $0x70] sm:$0xff]
    %v388 = vld [vmem:[#allocation2 + $0x78] sm:$0xff]
    %v389 = vld [vmem:[%s2] sm:$0x1]
    %v391 = vlaneseq
    %v392 = vshrl.u32 %v391, 7
    %v393 = vsub.s32 0, %v392
    %v394 = vrot.slane %v389, %v393
    %v396 = vmul.f32 %v373, %v394
    %v397 = vmul.f32 %v374, %v394
    %v398 = vmul.f32 %v375, %v394
    %v399 = vmul.f32 %v376, %v394
    %v400 = vmul.f32 %v377, %v394
    %v401 = vmul.f32 %v378, %v394
    %v402 = vmul.f32 %v379, %v394
    %v403 = vmul.f32 %v380, %v394
    %v404 = vmul.f32 %v381, %v394
    %v405 = vmul.f32 %v382, %v394
    %v406 = vmul.f32 %v383, %v394
    %v407 = vmul.f32 %v384, %v394
    %v408 = vmul.f32 %v385, %v394
    %v409 = vmul.f32 %v386, %v394
    %v410 = vmul.f32 %v387, %v394
    %v411 = vmul.f32 %v388, %v394
    %v412 = vld [vmem:[%s3] sm:$0x1]
    %v414 = vlaneseq
    %v415 = vshrl.u32 %v414, 7
    %v416 = vsub.s32 0, %v415
    %v417 = vrot.slane %v412, %v416
    %v419 = vadd.f32 %v396, %v417
    %v420 = vadd.f32 %v397, %v417
    %v421 = vadd.f32 %v398, %v417
    %v422 = vadd.f32 %v399, %v417
    %v423 = vadd.f32 %v400, %v417
    %v424 = vadd.f32 %v401, %v417
    %v425 = vadd.f32 %v402, %v417
    %v426 = vadd.f32 %v403, %v417
    %v427 = vadd.f32 %v404, %v417
    %v428 = vadd.f32 %v405, %v417
    %v429 = vadd.f32 %v406, %v417
    %v430 = vadd.f32 %v407, %v417
    %v431 = vadd.f32 %v408, %v417
    %v432 = vadd.f32 %v409, %v417
    %v433 = vadd.f32 %v410, %v417
    %v434 = vadd.f32 %v411, %v417
    %v435 = vmax.f32 %v419, 0.0
    %v436 = vmax.f32 %v420, 0.0
    %v437 = vmax.f32 %v421, 0.0
    %v438 = vmax.f32 %v422, 0.0
    %v439 = vmax.f32 %v423, 0.0
    %v440 = vmax.f32 %v424, 0.0
    %v441 = vmax.f32 %v425, 0.0
    %v442 = vmax.f32 %v426, 0.0
    %v443 = vmax.f32 %v427, 0.0
    %v444 = vmax.f32 %v428, 0.0
    %v445 = vmax.f32 %v429, 0.0
    %v446 = vmax.f32 %v430, 0.0
    %v447 = vmax.f32 %v431, 0.0
    %v448 = vmax.f32 %v432, 0.0
    %v449 = vmax.f32 %v433, 0.0
    %v450 = vmax.f32 %v434, 0.0
    %v451 = vpack.c.bf16 %v436, %v435
    %v452 = vpack.c.bf16 %v438, %v437
    %v453 = vpack.c.bf16 %v440, %v439
    %v454 = vpack.c.bf16 %v442, %v441
    %v455 = vpack.c.bf16 %v444, %v443
    %v456 = vpack.c.bf16 %v446, %v445
    %v457 = vpack.c.bf16 %v448, %v447
    %v458 = vpack.c.bf16 %v450, %v449
    %v467 = vunpack.c.l.b16 %v451
    %v468 = vunpack.c.h.b16 %v451
    %v469 = vunpack.c.l.b16 %v452
    %v470 = vunpack.c.h.b16 %v452
    %v471 = vunpack.c.l.b16 %v453
    %v472 = vunpack.c.h.b16 %v453
    %v473 = vunpack.c.l.b16 %v454
    %v474 = vunpack.c.h.b16 %v454
    %v475 = vunpack.c.l.b16 %v455
    %v476 = vunpack.c.h.b16 %v455
    %v477 = vunpack.c.l.b16 %v456
    %v478 = vunpack.c.h.b16 %v456
    %v479 = vunpack.c.l.b16 %v457
    %v480 = vunpack.c.h.b16 %v457
    %v481 = vunpack.c.l.b16 %v458
    %v482 = vunpack.c.h.b16 %v458
    %v483 = vpack.c.b16 %v467, %v467
    %v484 = vpack.c.b16 %v468, %v468
    %v485 = vpack.c.b16 %v469, %v469
    %v486 = vpack.c.b16 %v470, %v470
    %v487 = vpack.c.b16 %v471, %v471
    %v488 = vpack.c.b16 %v472, %v472
    %v489 = vpack.c.b16 %v473, %v473
    %v490 = vpack.c.b16 %v474, %v474
    %v491 = vpack.c.b16 %v475, %v475
    %v492 = vpack.c.b16 %v476, %v476
    %v493 = vpack.c.b16 %v477, %v477
    %v494 = vpack.c.b16 %v478, %v478
    %v495 = vpack.c.b16 %v479, %v479
    %v496 = vpack.c.b16 %v480, %v480
    %v497 = vpack.c.b16 %v481, %v481
    %v498 = vpack.c.b16 %v482, %v482
    %vm515 = vcmask 257024
    %516 = vst.msk [vmem:[%s4] sm:$0xf] %vm515, %v483
    %517 = vst.msk [vmem:[%s4 + $0x4] sm:$0xf] %vm515, %v484
    %518 = vst.msk [vmem:[%s4 + $0x8] sm:$0xf] %vm515, %v485
    %519 = vst.msk [vmem:[%s4 + $0xc] sm:$0xf] %vm515, %v486
    %520 = vst.msk [vmem:[%s4 + $0x10] sm:$0xf] %vm515, %v487
    %521 = vst.msk [vmem:[%s4 + $0x14] sm:$0xf] %vm515, %v488
    %522 = vst.msk [vmem:[%s4 + $0x18] sm:$0xf] %vm515, %v489
    %523 = vst.msk [vmem:[%s4 + $0x1c] sm:$0xf] %vm515, %v490
    %524 = vst.msk [vmem:[%s4 + $0x20] sm:$0xf] %vm515, %v491
    %525 = vst.msk [vmem:[%s4 + $0x24] sm:$0xf] %vm515, %v492
    %526 = vst.msk [vmem:[%s4 + $0x28] sm:$0xf] %vm515, %v493
    %527 = vst.msk [vmem:[%s4 + $0x2c] sm:$0xf] %vm515, %v494
    %528 = vst.msk [vmem:[%s4 + $0x30] sm:$0xf] %vm515, %v495
    %529 = vst.msk [vmem:[%s4 + $0x34] sm:$0xf] %vm515, %v496
    %530 = vst.msk [vmem:[%s4 + $0x38] sm:$0xf] %vm515, %v497
    %531 = vst.msk [vmem:[%s4 + $0x3c] sm:$0xf] %vm515, %v498
  $region25: #{convnet_forward.16} parent=0 // pred_fallthru
    _
  // Predicated region
  $region26: #{convnet_forward.16} parent=0 // pred_check
    _
  $region27: #{convnet_forward.16} parent=0 // pred_check_branch
    %533 = sbr.rel (0) target = $region29
  $region28: #{convnet_forward.16} parent=0 // pred_region
    _
  $region29: #{convnet_forward.16} parent=0 // pred_fallthru
    _
  // Predicated region
  $region30: #{convnet_forward.16} parent=0 // pred_check
    _
  $region31: #{convnet_forward.16} parent=0 // pred_check_branch
    %535 = sbr.rel (0) target = $region33
  $region32: #{convnet_forward.16} parent=0 // pred_region
    _
  $region33: #{convnet_forward.16} parent=0 // pred_fallthru
    _

// kernel: convnet_forward.17
$region0: #{convnet_forward.17}
  #allocation0 [shape = 'u32[]', space=smem, size = 0x4, offset = 0x4, fixed_abs, tag = 'smem constant byte address 0x4 - core index']
  #allocation1 [shape = 'u32[144,128]{1,0:T(1,128)}', space=vmem, size = 0x12000, scoped, tag = 'internal scratch']
  %s0 = inlined_call_operand.vmem [shape: bf16[64,2,32], index: 0, kind: input, shape index: {}]
  %s1 = inlined_call_operand.vmem [shape: bf16[64,32], index: 1, kind: output, shape index: {}]
  %s2 = sld [smem:[#allocation0]]
  $region37: #{convnet_forward.17} parent=0
    _
  %s4 = ssub.s32 1, %s2
  %s5 = scalar_select 0, %s4, %s2
  loop: start=0, step=1, limit=4
  $region2: #{convnet_forward.17} parent=0 // loop_pre_header
    _
  $region3: #{convnet_forward.17} parent=0 // loop_header
    %s7 = sphi 0, %s11
    %p8 = scmp.ge.s32.totalorder %s7, 4
    %s17 = sphi 0, %s19
    %s20 = sphi 0, %s17
    %s21 = sphi 0, %s20
    %s37 = sphi 0, %s21
    %s43 = sphi 0, %s45
    %s46 = sphi 0, %s43
    %s47 = sphi 0, %s46
    %s63 = sphi 0, %s47
  $region4: #{convnet_forward.17} parent=0 // loop_header_branch
    %10 = sbr.rel (%p8) target = $region8
  $region5: #{convnet_forward.17} parent=0 // loop_body
    %s12 = ssub.s32 %s7, 1
    %s13 = ssub.s32 %s7, 2
    %s14 = sadd.s32 %s7, 1
    %s15 = ssub.s32 %s7, %s14
    %p16 = scmp.eq.s32.totalorder %s15, 0
    %s18 = sadd.s32 %s17, 1
    %s19 = scalar_select %p16, %s17, %s18
    %p22 = pneg %p16
    %p23 = scmp.eq.s32.totalorder %s7, 1
    %p24 = por %p22, %p23
    %p25 = scmp.ne.s32.totalorder %s17, %s20
    %p26 = scmp.eq.s32.totalorder %s7, 0
    %p27 = por %p25, %p26
    %p28 = scmp.ne.s32.totalorder %s17, %s20
    %p29 = scmp.eq.s32.totalorder %s12, 1
    %p30 = por %p28, %p29
    %p31 = scmp.ne.s32.totalorder %s20, %s21
    %p32 = scmp.eq.s32.totalorder %s12, 0
    %p33 = por %p31, %p32
    %p34 = scmp.ne.s32.totalorder %s20, %s21
    %p35 = scmp.eq.s32.totalorder %s13, 1
    %p36 = por %p34, %p35
    %p38 = scmp.ne.s32.totalorder %s21, %s37
    %p39 = scmp.eq.s32.totalorder %s13, 0
    %p40 = por %p38, %p39
    %s41 = ssub.s32 %s7, %s14
    %p42 = scmp.eq.s32.totalorder %s41, 0
    %s44 = sadd.s32 %s43, 1
    %s45 = scalar_select %p42, %s43, %s44
    %p48 = pneg %p42
    %p49 = scmp.eq.s32.totalorder %s7, 1
    %p50 = por %p48, %p49
    %p51 = scmp.ne.s32.totalorder %s43, %s46
    %p52 = scmp.eq.s32.totalorder %s7, 0
    %p53 = por %p51, %p52
    %p54 = scmp.ne.s32.totalorder %s43, %s46
    %p55 = scmp.eq.s32.totalorder %s12, 1
    %p56 = por %p54, %p55
    %p57 = scmp.ne.s32.totalorder %s46, %s47
    %p58 = scmp.eq.s32.totalorder %s12, 0
    %p59 = por %p57, %p58
    %p60 = scmp.ne.s32.totalorder %s46, %s47
    %p61 = scmp.eq.s32.totalorder %s13, 1
    %p62 = por %p60, %p61
    %p64 = scmp.ne.s32.totalorder %s47, %s63
    %p65 = scmp.eq.s32.totalorder %s13, 0
    %p66 = por %p64, %p65
    %p67 = scmp.le.s32.totalorder 1, %s7
    %p68 = scmp.lt.s32.totalorder %s7, 3
    %p69 = pnand %p67, %p68
    %p70 = pneg %p69
    // Predicated region
    $region9: #{convnet_forward.17} parent=5 // pred_check
      _
    $region10: #{convnet_forward.17} parent=5 // pred_check_branch
      %72 = sbr.rel (%p69) target = $region12
    $region11: #{convnet_forward.17} parent=5 // pred_region
      %s73 = ssub.s32 %s7, 1
    $region12: #{convnet_forward.17} parent=5 // pred_fallthru
      _
    %p74 = scmp.lt.s32.totalorder %s7, 2
    // Predicated region
    $region13: #{convnet_forward.17} parent=5 // pred_check
      %p75 = pneg %p74
    $region14: #{convnet_forward.17} parent=5 // pred_check_branch
      %77 = sbr.rel (%p75) target = $region16
    $region15: #{convnet_forward.17} parent=5 // pred_region
      // Predicated region
      $region17: #{convnet_forward.17} parent=15 // pred_check
        %p78 = pneg %p27
      $region18: #{convnet_forward.17} parent=15 // pred_check_branch
        %80 = sbr.rel (%p78) target = $region20
      $region19: #{convnet_forward.17} parent=15 // pred_region
        %s81 = smul.u32 32, %s7
        %p82 = scmp.lt.s32.totalorder %s81, 63
        %s83 = scalar_select %p82, %s81, 63
        %s84 = scalar_lea.vmem %s0, %s83
        %s85 = smul.u32 32, %s7
      $region20: #{convnet_forward.17} parent=15 // pred_fallthru
        _
    $region16: #{convnet_forward.17} parent=5 // pred_fallthru
      _
    %p86 = scmp.le.s32.totalorder 1, %s7
    %p87 = scmp.lt.s32.totalorder %s7, 3
    %p88 = pnand %p86, %p87
    %p89 = pneg %p88
    // Predicated region
    $region21: #{convnet_forward.17} parent=5 // pred_check
      _
    $region22: #{convnet_forward.17} parent=5 // pred_check_branch
      %91 = sbr.rel (%p88) target = $region24
    $region23: #{convnet_forward.17} parent=5 // pred_region
      %s92 = ssub.s32 %s7, 1
      %s93 = smul.u32 32, %s12
      %p94 = scmp.lt.s32.totalorder %s93, 63
      %s95 = scalar_select %p94, %s93, 63
      %s96 = scalar_lea.vmem %s0, %s95
      %p97 = pneg %p33
      %p98 = pneg %p30
      %p99 = pneg %p59
      %p100 = pneg %p56
      %s101 = smul.u32 4, %s12
      %p102 = scmp.lt.s32.totalorder %s101, 7
      %s103 = scalar_select %p102, %s101, 7
      %s104 = smul.addr %s103, 4
      %s105 = scalar_lea.vmem %s1, %s104
      %s106 = smul.u32 32, %s12
      %p107 = scmp.lt.s32.totalorder %s106, 63
      %s108 = scalar_select %p107, %s106, 63
      %s109 = scalar_lea.vmem %s0, %s108
      %s110 = smul.u32 32, %s12
      %s111 = smul.u32 4, %s12
      %p112 = scmp.lt.s32.totalorder %s111, 7
      %s113 = scalar_select %p112, %s111, 7
      %s114 = smul.addr %s113, 4
      %s115 = scalar_lea.vmem %s1, %s114
      %s116 = smul.u32 4, %s12
      %v117 = vld [vmem:[%s109] sm:$0x1]
      %v118 = vld [vmem:[%s109 + $0x1] sm:$0x1]
      %v119 = vld [vmem:[%s109 + $0x2] sm:$0x1]
      %v120 = vld [vmem:[%s109 + $0x3] sm:$0x1]
      %v121 = vld [vmem:[%s109 + $0x4] sm:$0x1]
      %v122 = vld [vmem:[%s109 + $0x5] sm:$0x1]
      %v123 = vld [vmem:[%s109 + $0x6] sm:$0x1]
      %v124 = vld [vmem:[%s109 + $0x7] sm:$0x1]
      %v125 = vld [vmem:[%s109 + $0x8] sm:$0x1]
      %v126 = vld [vmem:[%s109 + $0x9] sm:$0x1]
      %v127 = vld [vmem:[%s109 + $0xa] sm:$0x1]
      %v128 = vld [vmem:[%s109 + $0xb] sm:$0x1]
      %v129 = vld [vmem:[%s109 + $0xc] sm:$0x1]
      %v130 = vld [vmem:[%s109 + $0xd] sm:$0x1]
      %v131 = vld [vmem:[%s109 + $0xe] sm:$0x1]
      %v132 = vld [vmem:[%s109 + $0xf] sm:$0x1]
      %v133 = vld [vmem:[%s109 + $0x10] sm:$0x1]
      %v134 = vld [vmem:[%s109 + $0x11] sm:$0x1]
      %v135 = vld [vmem:[%s109 + $0x12] sm:$0x1]
      %v136 = vld [vmem:[%s109 + $0x13] sm:$0x1]
      %v137 = vld [vmem:[%s109 + $0x14] sm:$0x1]
      %v138 = vld [vmem:[%s109 + $0x15] sm:$0x1]
      %v139 = vld [vmem:[%s109 + $0x16] sm:$0x1]
      %v140 = vld [vmem:[%s109 + $0x17] sm:$0x1]
      %v141 = vld [vmem:[%s109 + $0x18] sm:$0x1]
      %v142 = vld [vmem:[%s109 + $0x19] sm:$0x1]
      %v143 = vld [vmem:[%s109 + $0x1a] sm:$0x1]
      %v144 = vld [vmem:[%s109 + $0x1b] sm:$0x1]
      %v145 = vld [vmem:[%s109 + $0x1c] sm:$0x1]
      %v146 = vld [vmem:[%s109 + $0x1d] sm:$0x1]
      %v147 = vld [vmem:[%s109 + $0x1e] sm:$0x1]
      %v148 = vld [vmem:[%s109 + $0x1f] sm:$0x1]
      %v150 = vshrl.u32 %v117, 16
      %v152 = vrot.slane %v150, 7
      %v153 = vrot.slane %v152, 1
      %v155 = vshrl.u32 %v118, 16
      %v157 = vrot.slane %v155, 7
      %v158 = vrot.slane %v157, 1
      %v160 = vshrl.u32 %v119, 16
      %v162 = vrot.slane %v160, 7
      %v163 = vrot.slane %v162, 1
      %v165 = vshrl.u32 %v120, 16
      %v167 = vrot.slane %v165, 7
      %v168 = vrot.slane %v167, 1
      %v170 = vshrl.u32 %v121, 16
      %v172 = vrot.slane %v170, 7
      %v173 = vrot.slane %v172, 1
      %v175 = vshrl.u32 %v122, 16
      %v177 = vrot.slane %v175, 7
      %v178 = vrot.slane %v177, 1
      %v180 = vshrl.u32 %v123, 16
      %v182 = vrot.slane %v180, 7
      %v183 = vrot.slane %v182, 1
      %v185 = vshrl.u32 %v124, 16
      %v187 = vrot.slane %v185, 7
      %v188 = vrot.slane %v187, 1
      %v190 = vshrl.u32 %v125, 16
      %v192 = vrot.slane %v190, 7
      %v193 = vrot.slane %v192, 1
      %v195 = vshrl.u32 %v126, 16
      %v197 = vrot.slane %v195, 7
      %v198 = vrot.slane %v197, 1
      %v200 = vshrl.u32 %v127, 16
      %v202 = vrot.slane %v200, 7
      %v203 = vrot.slane %v202, 1
      %v205 = vshrl.u32 %v128, 16
      %v207 = vrot.slane %v205, 7
      %v208 = vrot.slane %v207, 1
      %v210 = vshrl.u32 %v129, 16
      %v212 = vrot.slane %v210, 7
      %v213 = vrot.slane %v212, 1
      %v215 = vshrl.u32 %v130, 16
      %v217 = vrot.slane %v215, 7
      %v218 = vrot.slane %v217, 1
      %v220 = vshrl.u32 %v131, 16
      %v222 = vrot.slane %v220, 7
      %v223 = vrot.slane %v222, 1
      %v225 = vshrl.u32 %v132, 16
      %v227 = vrot.slane %v225, 7
      %v228 = vrot.slane %v227, 1
      %v230 = vshrl.u32 %v133, 16
      %v232 = vrot.slane %v230, 7
      %v233 = vrot.slane %v232, 1
      %v235 = vshrl.u32 %v134, 16
      %v237 = vrot.slane %v235, 7
      %v238 = vrot.slane %v237, 1
      %v240 = vshrl.u32 %v135, 16
      %v242 = vrot.slane %v240, 7
      %v243 = vrot.slane %v242, 1
      %v245 = vshrl.u32 %v136, 16
      %v247 = vrot.slane %v245, 7
      %v248 = vrot.slane %v247, 1
      %v250 = vshrl.u32 %v137, 16
      %v252 = vrot.slane %v250, 7
      %v253 = vrot.slane %v252, 1
      %v255 = vshrl.u32 %v138, 16
      %v257 = vrot.slane %v255, 7
      %v258 = vrot.slane %v257, 1
      %v260 = vshrl.u32 %v139, 16
      %v262 = vrot.slane %v260, 7
      %v263 = vrot.slane %v262, 1
      %v265 = vshrl.u32 %v140, 16
      %v267 = vrot.slane %v265, 7
      %v268 = vrot.slane %v267, 1
      %v270 = vshrl.u32 %v141, 16
      %v272 = vrot.slane %v270, 7
      %v273 = vrot.slane %v272, 1
      %v275 = vshrl.u32 %v142, 16
      %v277 = vrot.slane %v275, 7
      %v278 = vrot.slane %v277, 1
      %v280 = vshrl.u32 %v143, 16
      %v282 = vrot.slane %v280, 7
      %v283 = vrot.slane %v282, 1
      %v285 = vshrl.u32 %v144, 16
      %v287 = vrot.slane %v285, 7
      %v288 = vrot.slane %v287, 1
      %v290 = vshrl.u32 %v145, 16
      %v292 = vrot.slane %v290, 7
      %v293 = vrot.slane %v292, 1
      %v295 = vshrl.u32 %v146, 16
      %v297 = vrot.slane %v295, 7
      %v298 = vrot.slane %v297, 1
      %v300 = vshrl.u32 %v147, 16
      %v302 = vrot.slane %v300, 7
      %v303 = vrot.slane %v302, 1
      %v305 = vshrl.u32 %v148, 16
      %v307 = vrot.slane %v305, 7
      %v308 = vrot.slane %v307, 1
      %v341 = vmax.bf16 %v117, %v153
      %v342 = vmax.bf16 %v118, %v158
      %v343 = vmax.bf16 %v119, %v163
      %v344 = vmax.bf16 %v120, %v168
      %v345 = vmax.bf16 %v121, %v173
      %v346 = vmax.bf16 %v122, %v178
      %v347 = vmax.bf16 %v123, %v183
      %v348 = vmax.bf16 %v124, %v188
      %v349 = vmax.bf16 %v125, %v193
      %v350 = vmax.bf16 %v126, %v198
      %v351 = vmax.bf16 %v127, %v203
      %v352 = vmax.bf16 %v128, %v208
      %v353 = vmax.bf16 %v129, %v213
      %v354 = vmax.bf16 %v130, %v218
      %v355 = vmax.bf16 %v131, %v223
      %v356 = vmax.bf16 %v132, %v228
      %v357 = vmax.bf16 %v133, %v233
      %v358 = vmax.bf16 %v134, %v238
      %v359 = vmax.bf16 %v135, %v243
      %v360 = vmax.bf16 %v136, %v248
      %v361 = vmax.bf16 %v137, %v253
      %v362 = vmax.bf16 %v138, %v258
      %v363 = vmax.bf16 %v139, %v263
      %v364 = vmax.bf16 %v140, %v268
      %v365 = vmax.bf16 %v141, %v273
      %v366 = vmax.bf16 %v142, %v278
      %v367 = vmax.bf16 %v143, %v283
      %v368 = vmax.bf16 %v144, %v288
      %v369 = vmax.bf16 %v145, %v293
      %v370 = vmax.bf16 %v146, %v298
      %v371 = vmax.bf16 %v147, %v303
      %v372 = vmax.bf16 %v148, %v308
      %v406 = vunpack.c.l.s4 1935823168
      %v407 = vunpack.c.0.s8 %v406
      %v408 = vlaneseq
      %v409 = vshrl.u32 %v408, 7
      %v410 = vsub.s32 %v407, %v409
      %v411 = vrot.slane %v341, %v410
      %v413 = vunpack.c.l.s4 1935823168
      %v414 = vunpack.c.0.s8 %v413
      %v415 = vlaneseq
      %v416 = vshrl.u32 %v415, 7
      %v417 = vsub.s32 %v414, %v416
      %v418 = vrot.slane %v411, %v417
      %v420 = vunpack.c.l.s4 1935823168
      %v421 = vunpack.c.0.s8 %v420
      %v422 = vlaneseq
      %v423 = vshrl.u32 %v422, 7
      %v424 = vsub.s32 %v421, %v423
      %v425 = vrot.slane %v342, %v424
      %v427 = vunpack.c.l.s4 1935823168
      %v428 = vunpack.c.0.s8 %v427
      %v429 = vlaneseq
      %v430 = vshrl.u32 %v429, 7
      %v431 = vsub.s32 %v428, %v430
      %v432 = vrot.slane %v425, %v431
      %v434 = vunpack.c.l.s4 1935823168
      %v435 = vunpack.c.0.s8 %v434
      %v436 = vlaneseq
      %v437 = vshrl.u32 %v436, 7
      %v438 = vsub.s32 %v435, %v437
      %v439 = vrot.slane %v343, %v438
      %v441 = vunpack.c.l.s4 1935823168
      %v442 = vunpack.c.0.s8 %v441
      %v443 = vlaneseq
      %v444 = vshrl.u32 %v443, 7
      %v445 = vsub.s32 %v442, %v444
      %v446 = vrot.slane %v439, %v445
      %v448 = vunpack.c.l.s4 1935823168
      %v449 = vunpack.c.0.s8 %v448
      %v450 = vlaneseq
      %v451 = vshrl.u32 %v450, 7
      %v452 = vsub.s32 %v449, %v451
      %v453 = vrot.slane %v344, %v452
      %v455 = vunpack.c.l.s4 1935823168
      %v456 = vunpack.c.0.s8 %v455
      %v457 = vlaneseq
      %v458 = vshrl.u32 %v457, 7
      %v459 = vsub.s32 %v456, %v458
      %v460 = vrot.slane %v453, %v459
      %v462 = vunpack.c.l.s4 1935823168
      %v463 = vunpack.c.0.s8 %v462
      %v464 = vlaneseq
      %v465 = vshrl.u32 %v464, 7
      %v466 = vsub.s32 %v463, %v465
      %v467 = vrot.slane %v345, %v466
      %v469 = vunpack.c.l.s4 1935823168
      %v470 = vunpack.c.0.s8 %v469
      %v471 = vlaneseq
      %v472 = vshrl.u32 %v471, 7
      %v473 = vsub.s32 %v470, %v472
      %v474 = vrot.slane %v467, %v473
      %v476 = vunpack.c.l.s4 1935823168
      %v477 = vunpack.c.0.s8 %v476
      %v478 = vlaneseq
      %v479 = vshrl.u32 %v478, 7
      %v480 = vsub.s32 %v477, %v479
      %v481 = vrot.slane %v346, %v480
      %v483 = vunpack.c.l.s4 1935823168
      %v484 = vunpack.c.0.s8 %v483
      %v485 = vlaneseq
      %v486 = vshrl.u32 %v485, 7
      %v487 = vsub.s32 %v484, %v486
      %v488 = vrot.slane %v481, %v487
      %v490 = vunpack.c.l.s4 1935823168
      %v491 = vunpack.c.0.s8 %v490
      %v492 = vlaneseq
      %v493 = vshrl.u32 %v492, 7
      %v494 = vsub.s32 %v491, %v493
      %v495 = vrot.slane %v347, %v494
      %v497 = vunpack.c.l.s4 1935823168
      %v498 = vunpack.c.0.s8 %v497
      %v499 = vlaneseq
      %v500 = vshrl.u32 %v499, 7
      %v501 = vsub.s32 %v498, %v500
      %v502 = vrot.slane %v495, %v501
      %v504 = vunpack.c.l.s4 1935823168
      %v505 = vunpack.c.0.s8 %v504
      %v506 = vlaneseq
      %v507 = vshrl.u32 %v506, 7
      %v508 = vsub.s32 %v505, %v507
      %v509 = vrot.slane %v348, %v508
      %v511 = vunpack.c.l.s4 1935823168
      %v512 = vunpack.c.0.s8 %v511
      %v513 = vlaneseq
      %v514 = vshrl.u32 %v513, 7
      %v515 = vsub.s32 %v512, %v514
      %v516 = vrot.slane %v509, %v515
      %v518 = vunpack.c.l.s4 1935823168
      %v519 = vunpack.c.0.s8 %v518
      %v520 = vlaneseq
      %v521 = vshrl.u32 %v520, 7
      %v522 = vsub.s32 %v519, %v521
      %v523 = vrot.slane %v349, %v522
      %v525 = vunpack.c.l.s4 1935823168
      %v526 = vunpack.c.0.s8 %v525
      %v527 = vlaneseq
      %v528 = vshrl.u32 %v527, 7
      %v529 = vsub.s32 %v526, %v528
      %v530 = vrot.slane %v523, %v529
      %v532 = vunpack.c.l.s4 1935823168
      %v533 = vunpack.c.0.s8 %v532
      %v534 = vlaneseq
      %v535 = vshrl.u32 %v534, 7
      %v536 = vsub.s32 %v533, %v535
      %v537 = vrot.slane %v350, %v536
      %v539 = vunpack.c.l.s4 1935823168
      %v540 = vunpack.c.0.s8 %v539
      %v541 = vlaneseq
      %v542 = vshrl.u32 %v541, 7
      %v543 = vsub.s32 %v540, %v542
      %v544 = vrot.slane %v537, %v543
      %v546 = vunpack.c.l.s4 1935823168
      %v547 = vunpack.c.0.s8 %v546
      %v548 = vlaneseq
      %v549 = vshrl.u32 %v548, 7
      %v550 = vsub.s32 %v547, %v549
      %v551 = vrot.slane %v351, %v550
      %v553 = vunpack.c.l.s4 1935823168
      %v554 = vunpack.c.0.s8 %v553
      %v555 = vlaneseq
      %v556 = vshrl.u32 %v555, 7
      %v557 = vsub.s32 %v554, %v556
      %v558 = vrot.slane %v551, %v557
      %v560 = vunpack.c.l.s4 1935823168
      %v561 = vunpack.c.0.s8 %v560
      %v562 = vlaneseq
      %v563 = vshrl.u32 %v562, 7
      %v564 = vsub.s32 %v561, %v563
      %v565 = vrot.slane %v352, %v564
      %v567 = vunpack.c.l.s4 1935823168
      %v568 = vunpack.c.0.s8 %v567
      %v569 = vlaneseq
      %v570 = vshrl.u32 %v569, 7
      %v571 = vsub.s32 %v568, %v570
      %v572 = vrot.slane %v565, %v571
      %v574 = vunpack.c.l.s4 1935823168
      %v575 = vunpack.c.0.s8 %v574
      %v576 = vlaneseq
      %v577 = vshrl.u32 %v576, 7
      %v578 = vsub.s32 %v575, %v577
      %v579 = vrot.slane %v353, %v578
      %v581 = vunpack.c.l.s4 1935823168
      %v582 = vunpack.c.0.s8 %v581
      %v583 = vlaneseq
      %v584 = vshrl.u32 %v583, 7
      %v585 = vsub.s32 %v582, %v584
      %v586 = vrot.slane %v579, %v585
      %v588 = vunpack.c.l.s4 1935823168
      %v589 = vunpack.c.0.s8 %v588
      %v590 = vlaneseq
      %v591 = vshrl.u32 %v590, 7
      %v592 = vsub.s32 %v589, %v591
      %v593 = vrot.slane %v354, %v592
      %v595 = vunpack.c.l.s4 1935823168
      %v596 = vunpack.c.0.s8 %v595
      %v597 = vlaneseq
      %v598 = vshrl.u32 %v597, 7
      %v599 = vsub.s32 %v596, %v598
      %v600 = vrot.slane %v593, %v599
      %v602 = vunpack.c.l.s4 1935823168
      %v603 = vunpack.c.0.s8 %v602
      %v604 = vlaneseq
      %v605 = vshrl.u32 %v604, 7
      %v606 = vsub.s32 %v603, %v605
      %v607 = vrot.slane %v355, %v606
      %v609 = vunpack.c.l.s4 1935823168
      %v610 = vunpack.c.0.s8 %v609
      %v611 = vlaneseq
      %v612 = vshrl.u32 %v611, 7
      %v613 = vsub.s32 %v610, %v612
      %v614 = vrot.slane %v607, %v613
      %v616 = vunpack.c.l.s4 1935823168
      %v617 = vunpack.c.0.s8 %v616
      %v618 = vlaneseq
      %v619 = vshrl.u32 %v618, 7
      %v620 = vsub.s32 %v617, %v619
      %v621 = vrot.slane %v356, %v620
      %v623 = vunpack.c.l.s4 1935823168
      %v624 = vunpack.c.0.s8 %v623
      %v625 = vlaneseq
      %v626 = vshrl.u32 %v625, 7
      %v627 = vsub.s32 %v624, %v626
      %v628 = vrot.slane %v621, %v627
      %v630 = vunpack.c.l.s4 1935823168
      %v631 = vunpack.c.0.s8 %v630
      %v632 = vlaneseq
      %v633 = vshrl.u32 %v632, 7
      %v634 = vsub.s32 %v631, %v633
      %v635 = vrot.slane %v357, %v634
      %v637 = vunpack.c.l.s4 1935823168
      %v638 = vunpack.c.0.s8 %v637
      %v639 = vlaneseq
      %v640 = vshrl.u32 %v639, 7
      %v641 = vsub.s32 %v638, %v640
      %v642 = vrot.slane %v635, %v641
      %v644 = vunpack.c.l.s4 1935823168
      %v645 = vunpack.c.0.s8 %v644
      %v646 = vlaneseq
      %v647 = vshrl.u32 %v646, 7
      %v648 = vsub.s32 %v645, %v647
      %v649 = vrot.slane %v358, %v648
      %v651 = vunpack.c.l.s4 1935823168
      %v652 = vunpack.c.0.s8 %v651
      %v653 = vlaneseq
      %v654 = vshrl.u32 %v653, 7
      %v655 = vsub.s32 %v652, %v654
      %v656 = vrot.slane %v649, %v655
      %v658 = vunpack.c.l.s4 1935823168
      %v659 = vunpack.c.0.s8 %v658
      %v660 = vlaneseq
      %v661 = vshrl.u32 %v660, 7
      %v662 = vsub.s32 %v659, %v661
      %v663 = vrot.slane %v359, %v662
      %v665 = vunpack.c.l.s4 1935823168
      %v666 = vunpack.c.0.s8 %v665
      %v667 = vlaneseq
      %v668 = vshrl.u32 %v667, 7
      %v669 = vsub.s32 %v666, %v668
      %v670 = vrot.slane %v663, %v669
      %v672 = vunpack.c.l.s4 1935823168
      %v673 = vunpack.c.0.s8 %v672
      %v674 = vlaneseq
      %v675 = vshrl.u32 %v674, 7
      %v676 = vsub.s32 %v673, %v675
      %v677 = vrot.slane %v360, %v676
      %v679 = vunpack.c.l.s4 1935823168
      %v680 = vunpack.c.0.s8 %v679
      %v681 = vlaneseq
      %v682 = vshrl.u32 %v681, 7
      %v683 = vsub.s32 %v680, %v682
      %v684 = vrot.slane %v677, %v683
      %v686 = vunpack.c.l.s4 1935823168
      %v687 = vunpack.c.0.s8 %v686
      %v688 = vlaneseq
      %v689 = vshrl.u32 %v688, 7
      %v690 = vsub.s32 %v687, %v689
      %v691 = vrot.slane %v361, %v690
      %v693 = vunpack.c.l.s4 1935823168
      %v694 = vunpack.c.0.s8 %v693
      %v695 = vlaneseq
      %v696 = vshrl.u32 %v695, 7
      %v697 = vsub.s32 %v694, %v696
      %v698 = vrot.slane %v691, %v697
      %v700 = vunpack.c.l.s4 1935823168
      %v701 = vunpack.c.0.s8 %v700
      %v702 = vlaneseq
      %v703 = vshrl.u32 %v702, 7
      %v704 = vsub.s32 %v701, %v703
      %v705 = vrot.slane %v362, %v704
      %v707 = vunpack.c.l.s4 1935823168
      %v708 = vunpack.c.0.s8 %v707
      %v709 = vlaneseq
      %v710 = vshrl.u32 %v709, 7
      %v711 = vsub.s32 %v708, %v710
      %v712 = vrot.slane %v705, %v711
      %v714 = vunpack.c.l.s4 1935823168
      %v715 = vunpack.c.0.s8 %v714
      %v716 = vlaneseq
      %v717 = vshrl.u32 %v716, 7
      %v718 = vsub.s32 %v715, %v717
      %v719 = vrot.slane %v363, %v718
      %v721 = vunpack.c.l.s4 1935823168
      %v722 = vunpack.c.0.s8 %v721
      %v723 = vlaneseq
      %v724 = vshrl.u32 %v723, 7
      %v725 = vsub.s32 %v722, %v724
      %v726 = vrot.slane %v719, %v725
      %v728 = vunpack.c.l.s4 1935823168
      %v729 = vunpack.c.0.s8 %v728
      %v730 = vlaneseq
      %v731 = vshrl.u32 %v730, 7
      %v732 = vsub.s32 %v729, %v731
      %v733 = vrot.slane %v364, %v732
      %v735 = vunpack.c.l.s4 1935823168
      %v736 = vunpack.c.0.s8 %v735
      %v737 = vlaneseq
      %v738 = vshrl.u32 %v737, 7
      %v739 = vsub.s32 %v736, %v738
      %v740 = vrot.slane %v733, %v739
      %v742 = vunpack.c.l.s4 1935823168
      %v743 = vunpack.c.0.s8 %v742
      %v744 = vlaneseq
      %v745 = vshrl.u32 %v744, 7
      %v746 = vsub.s32 %v743, %v745
      %v747 = vrot.slane %v365, %v746
      %v749 = vunpack.c.l.s4 1935823168
      %v750 = vunpack.c.0.s8 %v749
      %v751 = vlaneseq
      %v752 = vshrl.u32 %v751, 7
      %v753 = vsub.s32 %v750, %v752
      %v754 = vrot.slane %v747, %v753
      %v756 = vunpack.c.l.s4 1935823168
      %v757 = vunpack.c.0.s8 %v756
      %v758 = vlaneseq
      %v759 = vshrl.u32 %v758, 7
      %v760 = vsub.s32 %v757, %v759
      %v761 = vrot.slane %v366, %v760
      %v763 = vunpack.c.l.s4 1935823168
      %v764 = vunpack.c.0.s8 %v763
      %v765 = vlaneseq
      %v766 = vshrl.u32 %v765, 7
      %v767 = vsub.s32 %v764, %v766
      %v768 = vrot.slane %v761, %v767
      %v770 = vunpack.c.l.s4 1935823168
      %v771 = vunpack.c.0.s8 %v770
      %v772 = vlaneseq
      %v773 = vshrl.u32 %v772, 7
      %v774 = vsub.s32 %v771, %v773
      %v775 = vrot.slane %v367, %v774
      %v777 = vunpack.c.l.s4 1935823168
      %v778 = vunpack.c.0.s8 %v777
      %v779 = vlaneseq
      %v780 = vshrl.u32 %v779, 7
      %v781 = vsub.s32 %v778, %v780
      %v782 = vrot.slane %v775, %v781
      %v784 = vunpack.c.l.s4 1935823168
      %v785 = vunpack.c.0.s8 %v784
      %v786 = vlaneseq
      %v787 = vshrl.u32 %v786, 7
      %v788 = vsub.s32 %v785, %v787
      %v789 = vrot.slane %v368, %v788
      %v791 = vunpack.c.l.s4 1935823168
      %v792 = vunpack.c.0.s8 %v791
      %v793 = vlaneseq
      %v794 = vshrl.u32 %v793, 7
      %v795 = vsub.s32 %v792, %v794
      %v796 = vrot.slane %v789, %v795
      %v798 = vunpack.c.l.s4 1935823168
      %v799 = vunpack.c.0.s8 %v798
      %v800 = vlaneseq
      %v801 = vshrl.u32 %v800, 7
      %v802 = vsub.s32 %v799, %v801
      %v803 = vrot.slane %v369, %v802
      %v805 = vunpack.c.l.s4 1935823168
      %v806 = vunpack.c.0.s8 %v805
      %v807 = vlaneseq
      %v808 = vshrl.u32 %v807, 7
      %v809 = vsub.s32 %v806, %v808
      %v810 = vrot.slane %v803, %v809
      %v812 = vunpack.c.l.s4 1935823168
      %v813 = vunpack.c.0.s8 %v812
      %v814 = vlaneseq
      %v815 = vshrl.u32 %v814, 7
      %v816 = vsub.s32 %v813, %v815
      %v817 = vrot.slane %v370, %v816
      %v819 = vunpack.c.l.s4 1935823168
      %v820 = vunpack.c.0.s8 %v819
      %v821 = vlaneseq
      %v822 = vshrl.u32 %v821, 7
      %v823 = vsub.s32 %v820, %v822
      %v824 = vrot.slane %v817, %v823
      %v826 = vunpack.c.l.s4 1935823168
      %v827 = vunpack.c.0.s8 %v826
      %v828 = vlaneseq
      %v829 = vshrl.u32 %v828, 7
      %v830 = vsub.s32 %v827, %v829
      %v831 = vrot.slane %v371, %v830
      %v833 = vunpack.c.l.s4 1935823168
      %v834 = vunpack.c.0.s8 %v833
      %v835 = vlaneseq
      %v836 = vshrl.u32 %v835, 7
      %v837 = vsub.s32 %v834, %v836
      %v838 = vrot.slane %v831, %v837
      %v840 = vunpack.c.l.s4 1935823168
      %v841 = vunpack.c.0.s8 %v840
      %v842 = vlaneseq
      %v843 = vshrl.u32 %v842, 7
      %v844 = vsub.s32 %v841, %v843
      %v845 = vrot.slane %v372, %v844
      %v847 = vunpack.c.l.s4 1935823168
      %v848 = vunpack.c.0.s8 %v847
      %v849 = vlaneseq
      %v850 = vshrl.u32 %v849, 7
      %v851 = vsub.s32 %v848, %v850
      %v852 = vrot.slane %v845, %v851
      %v853 = vunpack.c.l.b16 %v418
      %v854 = vunpack.c.l.b16 %v432
      %v855 = vunpack.c.l.b16 %v446
      %v856 = vunpack.c.l.b16 %v460
      %v857 = vunpack.c.l.b16 %v474
      %v858 = vunpack.c.l.b16 %v488
      %v859 = vunpack.c.l.b16 %v502
      %v860 = vunpack.c.l.b16 %v516
      %v861 = vunpack.c.l.b16 %v530
      %v862 = vunpack.c.l.b16 %v544
      %v863 = vunpack.c.l.b16 %v558
      %v864 = vunpack.c.l.b16 %v572
      %v865 = vunpack.c.l.b16 %v586
      %v866 = vunpack.c.l.b16 %v600
      %v867 = vunpack.c.l.b16 %v614
      %v868 = vunpack.c.l.b16 %v628
      %v869 = vunpack.c.l.b16 %v642
      %v870 = vunpack.c.l.b16 %v656
      %v871 = vunpack.c.l.b16 %v670
      %v872 = vunpack.c.l.b16 %v684
      %v873 = vunpack.c.l.b16 %v698
      %v874 = vunpack.c.l.b16 %v712
      %v875 = vunpack.c.l.b16 %v726
      %v876 = vunpack.c.l.b16 %v740
      %v877 = vunpack.c.l.b16 %v754
      %v878 = vunpack.c.l.b16 %v768
      %v879 = vunpack.c.l.b16 %v782
      %v880 = vunpack.c.l.b16 %v796
      %v881 = vunpack.c.l.b16 %v810
      %v882 = vunpack.c.l.b16 %v824
      %v883 = vunpack.c.l.b16 %v838
      %v884 = vunpack.c.l.b16 %v852
      %v885 = vrot.slane %v854, 7
      %vm886 = vcmask 1041409
      %v887 = vsel %vm886, %v885, %v853
      %v888 = vrot.slane %v855, 6
      %vm889 = vcmask 1042434
      %v890 = vsel %vm889, %v888, %v887
      %v891 = vrot.slane %v856, 5
      %vm892 = vcmask 1043459
      %v893 = vsel %vm892, %v891, %v890
      %v894 = vrot.slane %v857, 4
      %vm895 = vcmask 1044484
      %v896 = vsel %vm895, %v894, %v893
      %v897 = vrot.slane %v858, 3
      %vm898 = vcmask 1045509
      %v899 = vsel %vm898, %v897, %v896
      %v900 = vrot.slane %v859, 2
      %vm901 = vcmask 1046534
      %v902 = vsel %vm901, %v900, %v899
      %v903 = vrot.slane %v860, 1
      %vm904 = vcmask 1047559
      %v905 = vsel %vm904, %v903, %v902
      %v906 = vrot.slane %v862, 7
      %v907 = vsel %vm886, %v906, %v861
      %v908 = vrot.slane %v863, 6
      %v909 = vsel %vm889, %v908, %v907
      %v910 = vrot.slane %v864, 5
      %v911 = vsel %vm892, %v910, %v909
      %v912 = vrot.slane %v865, 4
      %v913 = vsel %vm895, %v912, %v911
      %v914 = vrot.slane %v866, 3
      %v915 = vsel %vm898, %v914, %v913
      %v916 = vrot.slane %v867, 2
      %v917 = vsel %vm901, %v916, %v915
      %v918 = vrot.slane %v868, 1
      %v919 = vsel %vm904, %v918, %v917
      %v920 = vrot.slane %v870, 7
      %v921 = vsel %vm886, %v920, %v869
      %v922 = vrot.slane %v871, 6
      %v923 = vsel %vm889, %v922, %v921
      %v924 = vrot.slane %v872, 5
      %v925 = vsel %vm892, %v924, %v923
      %v926 = vrot.slane %v873, 4
      %v927 = vsel %vm895, %v926, %v925
      %v928 = vrot.slane %v874, 3
      %v929 = vsel %vm898, %v928, %v927
      %v930 = vrot.slane %v875, 2
      %v931 = vsel %vm901, %v930, %v929
      %v932 = vrot.slane %v876, 1
      %v933 = vsel %vm904, %v932, %v931
      %v934 = vrot.slane %v878, 7
      %v935 = vsel %vm886, %v934, %v877
      %v936 = vrot.slane %v879, 6
      %v937 = vsel %vm889, %v936, %v935
      %v938 = vrot.slane %v880, 5
      %v939 = vsel %vm892, %v938, %v937
      %v940 = vrot.slane %v881, 4
      %v941 = vsel %vm895, %v940, %v939
      %v942 = vrot.slane %v882, 3
      %v943 = vsel %vm898, %v942, %v941
      %v944 = vrot.slane %v883, 2
      %v945 = vsel %vm901, %v944, %v943
      %v946 = vrot.slane %v884, 1
      %v947 = vsel %vm904, %v946, %v945
      %v948 = vpack.c.b16 %v905, %v905
      %v949 = vpack.c.b16 %v919, %v919
      %v950 = vpack.c.b16 %v933, %v933
      %v951 = vpack.c.b16 %v947, %v947
      %vm956 = vcmask 257024
      %957 = vst.msk [vmem:[%s115] sm:$0xf] %vm956, %v948
      %958 = vst.msk [vmem:[%s115 + $0x4] sm:$0xf] %vm956, %v949
      %959 = vst.msk [vmem:[%s115 + $0x8] sm:$0xf] %vm956, %v950
      %960 = vst.msk [vmem:[%s115 + $0xc] sm:$0xf] %vm956, %v951
      %s961 = smul.u32 4, %s12
      %p962 = scmp.lt.s32.totalorder %s961, 7
      %s963 = scalar_select %p962, %s961, 7
      %s964 = smul.addr %s963, 4
      %s965 = scalar_lea.vmem %s1, %s964
      // Predicated region
      $region25: #{convnet_forward.17} parent=23 // pred_check
        %p966 = pneg %p56
      $region26: #{convnet_forward.17} parent=23 // pred_check_branch
        %968 = sbr.rel (%p966) target = $region28
      $region27: #{convnet_forward.17} parent=23 // pred_region
        %s969 = smul.u32 4, %s12
      $region28: #{convnet_forward.17} parent=23 // pred_fallthru
        _
    $region24: #{convnet_forward.17} parent=5 // pred_fallthru
      _
    %p970 = scmp.le.s32.totalorder 2, %s7
    // Predicated region
    $region29: #{convnet_forward.17} parent=5 // pred_check
      %p971 = pneg %p970
    $region30: #{convnet_forward.17} parent=5 // pred_check_branch
      %973 = sbr.rel (%p971) target = $region32
    $region31: #{convnet_forward.17} parent=5 // pred_region
      %s974 = ssub.s32 %s7, 2
      // Predicated region
      $region33: #{convnet_forward.17} parent=31 // pred_check
        %p975 = pneg %p62
      $region34: #{convnet_forward.17} parent=31 // pred_check_branch
        %977 = sbr.rel (%p975) target = $region36
      $region35: #{convnet_forward.17} parent=31 // pred_region
        %s978 = smul.u32 4, %s13
        %p979 = scmp.lt.s32.totalorder %s978, 7
        %s980 = scalar_select %p979, %s978, 7
        %s981 = smul.addr %s980, 4
        %s982 = scalar_lea.vmem %s1, %s981
      $region36: #{convnet_forward.17} parent=31 // pred_fallthru
        _
    $region32: #{convnet_forward.17} parent=5 // pred_fallthru
      _
  $region6: #{convnet_forward.17} parent=0 // loop_footer
    %s11 = sadd.s32 1, %s7
  $region7: #{convnet_forward.17} parent=0 // loop_footer_branch
    %6 = sbr.rel target = $region3
  $region8: #{convnet_forward.17} parent=0 // loop_exit
    _

// kernel: convnet_forward.18
$region0: #{convnet_forward.18}
  #allocation0 [shape = 'u32[]', space=smem, size = 0x4, offset = 0x4, fixed_abs, tag = 'smem constant byte address 0x4 - core index']
  #allocation1 [shape = 'u32[144,128]{1,0:T(1,128)}', space=vmem, size = 0x12000, scoped, tag = 'internal scratch']
  %s0 = inlined_call_operand.vmem [shape: bf16[8,2,128], index: 0, kind: input, shape index: {}]
  %s1 = inlined_call_operand.vmem [shape: bf16[8,128], index: 1, kind: output, shape index: {}]
  %s2 = sld [smem:[#allocation0]]
  $region14: #{convnet_forward.18} parent=0
    _
  %s4 = ssub.s32 1, %s2
  %s5 = scalar_select 0, %s4, %s2
  // Predicated region
  $region2: #{convnet_forward.18} parent=0 // pred_check
    _
  $region3: #{convnet_forward.18} parent=0 // pred_check_branch
    %7 = sbr.rel (0) target = $region5
  $region4: #{convnet_forward.18} parent=0 // pred_region
    _
  $region5: #{convnet_forward.18} parent=0 // pred_fallthru
    _
  %v8 = vld [vmem:[%s0] sm:$0x1]
  %v9 = vld [vmem:[%s0 + $0x1] sm:$0x1]
  %v10 = vld [vmem:[%s0 + $0x2] sm:$0x1]
  %v11 = vld [vmem:[%s0 + $0x3] sm:$0x1]
  %v12 = vld [vmem:[%s0 + $0x4] sm:$0x1]
  %v13 = vld [vmem:[%s0 + $0x5] sm:$0x1]
  %v14 = vld [vmem:[%s0 + $0x6] sm:$0x1]
  %v15 = vld [vmem:[%s0 + $0x7] sm:$0x1]
  %v17 = vshrl.u32 %v8, 16
  %v19 = vrot.slane %v17, 7
  %v20 = vrot.slane %v19, 1
  %v22 = vshrl.u32 %v9, 16
  %v24 = vrot.slane %v22, 7
  %v25 = vrot.slane %v24, 1
  %v27 = vshrl.u32 %v10, 16
  %v29 = vrot.slane %v27, 7
  %v30 = vrot.slane %v29, 1
  %v32 = vshrl.u32 %v11, 16
  %v34 = vrot.slane %v32, 7
  %v35 = vrot.slane %v34, 1
  %v37 = vshrl.u32 %v12, 16
  %v39 = vrot.slane %v37, 7
  %v40 = vrot.slane %v39, 1
  %v42 = vshrl.u32 %v13, 16
  %v44 = vrot.slane %v42, 7
  %v45 = vrot.slane %v44, 1
  %v47 = vshrl.u32 %v14, 16
  %v49 = vrot.slane %v47, 7
  %v50 = vrot.slane %v49, 1
  %v52 = vshrl.u32 %v15, 16
  %v54 = vrot.slane %v52, 7
  %v55 = vrot.slane %v54, 1
  %v64 = vmax.bf16 %v8, %v20
  %v65 = vmax.bf16 %v9, %v25
  %v66 = vmax.bf16 %v10, %v30
  %v67 = vmax.bf16 %v11, %v35
  %v68 = vmax.bf16 %v12, %v40
  %v69 = vmax.bf16 %v13, %v45
  %v70 = vmax.bf16 %v14, %v50
  %v71 = vmax.bf16 %v15, %v55
  %v81 = vunpack.c.l.s4 1935823168
  %v82 = vunpack.c.0.s8 %v81
  %v83 = vlaneseq
  %v84 = vshrl.u32 %v83, 7
  %v85 = vsub.s32 %v82, %v84
  %v86 = vrot.slane %v64, %v85
  %v88 = vunpack.c.l.s4 1935823168
  %v89 = vunpack.c.0.s8 %v88
  %v90 = vlaneseq
  %v91 = vshrl.u32 %v90, 7
  %v92 = vsub.s32 %v89, %v91
  %v93 = vrot.slane %v86, %v92
  %v95 = vunpack.c.l.s4 1935823168
  %v96 = vunpack.c.0.s8 %v95
  %v97 = vlaneseq
  %v98 = vshrl.u32 %v97, 7
  %v99 = vsub.s32 %v96, %v98
  %v100 = vrot.slane %v65, %v99
  %v102 = vunpack.c.l.s4 1935823168
  %v103 = vunpack.c.0.s8 %v102
  %v104 = vlaneseq
  %v105 = vshrl.u32 %v104, 7
  %v106 = vsub.s32 %v103, %v105
  %v107 = vrot.slane %v100, %v106
  %v109 = vunpack.c.l.s4 1935823168
  %v110 = vunpack.c.0.s8 %v109
  %v111 = vlaneseq
  %v112 = vshrl.u32 %v111, 7
  %v113 = vsub.s32 %v110, %v112
  %v114 = vrot.slane %v66, %v113
  %v116 = vunpack.c.l.s4 1935823168
  %v117 = vunpack.c.0.s8 %v116
  %v118 = vlaneseq
  %v119 = vshrl.u32 %v118, 7
  %v120 = vsub.s32 %v117, %v119
  %v121 = vrot.slane %v114, %v120
  %v123 = vunpack.c.l.s4 1935823168
  %v124 = vunpack.c.0.s8 %v123
  %v125 = vlaneseq
  %v126 = vshrl.u32 %v125, 7
  %v127 = vsub.s32 %v124, %v126
  %v128 = vrot.slane %v67, %v127
  %v130 = vunpack.c.l.s4 1935823168
  %v131 = vunpack.c.0.s8 %v130
  %v132 = vlaneseq
  %v133 = vshrl.u32 %v132, 7
  %v134 = vsub.s32 %v131, %v133
  %v135 = vrot.slane %v128, %v134
  %v137 = vunpack.c.l.s4 1935823168
  %v138 = vunpack.c.0.s8 %v137
  %v139 = vlaneseq
  %v140 = vshrl.u32 %v139, 7
  %v141 = vsub.s32 %v138, %v140
  %v142 = vrot.slane %v68, %v141
  %v144 = vunpack.c.l.s4 1935823168
  %v145 = vunpack.c.0.s8 %v144
  %v146 = vlaneseq
  %v147 = vshrl.u32 %v146, 7
  %v148 = vsub.s32 %v145, %v147
  %v149 = vrot.slane %v142, %v148
  %v151 = vunpack.c.l.s4 1935823168
  %v152 = vunpack.c.0.s8 %v151
  %v153 = vlaneseq
  %v154 = vshrl.u32 %v153, 7
  %v155 = vsub.s32 %v152, %v154
  %v156 = vrot.slane %v69, %v155
  %v158 = vunpack.c.l.s4 1935823168
  %v159 = vunpack.c.0.s8 %v158
  %v160 = vlaneseq
  %v161 = vshrl.u32 %v160, 7
  %v162 = vsub.s32 %v159, %v161
  %v163 = vrot.slane %v156, %v162
  %v165 = vunpack.c.l.s4 1935823168
  %v166 = vunpack.c.0.s8 %v165
  %v167 = vlaneseq
  %v168 = vshrl.u32 %v167, 7
  %v169 = vsub.s32 %v166, %v168
  %v170 = vrot.slane %v70, %v169
  %v172 = vunpack.c.l.s4 1935823168
  %v173 = vunpack.c.0.s8 %v172
  %v174 = vlaneseq
  %v175 = vshrl.u32 %v174, 7
  %v176 = vsub.s32 %v173, %v175
  %v177 = vrot.slane %v170, %v176
  %v179 = vunpack.c.l.s4 1935823168
  %v180 = vunpack.c.0.s8 %v179
  %v181 = vlaneseq
  %v182 = vshrl.u32 %v181, 7
  %v183 = vsub.s32 %v180, %v182
  %v184 = vrot.slane %v71, %v183
  %v186 = vunpack.c.l.s4 1935823168
  %v187 = vunpack.c.0.s8 %v186
  %v188 = vlaneseq
  %v189 = vshrl.u32 %v188, 7
  %v190 = vsub.s32 %v187, %v189
  %v191 = vrot.slane %v184, %v190
  %v192 = vunpack.c.l.b16 %v93
  %v193 = vunpack.c.l.b16 %v107
  %v194 = vunpack.c.l.b16 %v121
  %v195 = vunpack.c.l.b16 %v135
  %v196 = vunpack.c.l.b16 %v149
  %v197 = vunpack.c.l.b16 %v163
  %v198 = vunpack.c.l.b16 %v177
  %v199 = vunpack.c.l.b16 %v191
  %v200 = vrot.slane %v193, 7
  %vm201 = vcmask 1041409
  %v202 = vsel %vm201, %v200, %v192
  %v203 = vrot.slane %v194, 6
  %vm204 = vcmask 1042434
  %v205 = vsel %vm204, %v203, %v202
  %v206 = vrot.slane %v195, 5
  %vm207 = vcmask 1043459
  %v208 = vsel %vm207, %v206, %v205
  %v209 = vrot.slane %v196, 4
  %vm210 = vcmask 1044484
  %v211 = vsel %vm210, %v209, %v208
  %v212 = vrot.slane %v197, 3
  %vm213 = vcmask 1045509
  %v214 = vsel %vm213, %v212, %v211
  %v215 = vrot.slane %v198, 2
  %vm216 = vcmask 1046534
  %v217 = vsel %vm216, %v215, %v214
  %v218 = vrot.slane %v199, 1
  %vm219 = vcmask 1047559
  %v220 = vsel %vm219, %v218, %v217
  %v221 = vpack.c.b16 %v220, %v220
  %223 = vst [vmem:[%s1] sm:$0xf] %v221
  // Predicated region
  $region6: #{convnet_forward.18} parent=0 // pred_check
    _
  $region7: #{convnet_forward.18} parent=0 // pred_check_branch
    %225 = sbr.rel (0) target = $region9
  $region8: #{convnet_forward.18} parent=0 // pred_region
    _
  $region9: #{convnet_forward.18} parent=0 // pred_fallthru
    _
  // Predicated region
  $region10: #{convnet_forward.18} parent=0 // pred_check
    _
  $region11: #{convnet_forward.18} parent=0 // pred_check_branch
    %227 = sbr.rel (0) target = $region13
  $region12: #{convnet_forward.18} parent=0 // pred_region
    _
  $region13: #{convnet_forward.18} parent=0 // pred_fallthru
    _

// kernel: convnet_forward.19
$region0: #{convnet_forward.19}
  #allocation0 [shape = 'u32[]', space=smem, size = 0x4, offset = 0x4, fixed_abs, tag = 'smem constant byte address 0x4 - core index']
  #allocation1 [shape = 'u32[144,128]{1,0:T(1,128)}', space=vmem, size = 0x12000, scoped, tag = 'internal scratch']
  #allocation2 [shape = 'f32[32,64]{1,0:T(8,128)}', space=vmem, size = 0x4000, scoped, tag = 'scratch operand']
  %s0 = inlined_call_operand.vmem [shape: bf16[32,288], index: 0, kind: input, shape index: {}]
  %s1 = inlined_call_operand.vmem [shape: bf16[288,64], index: 1, kind: input, shape index: {}]
  %s2 = inlined_call_operand.vmem [shape: f32[1,64], index: 2, kind: input, shape index: {}]
  %s3 = inlined_call_operand.vmem [shape: bf16[32,64], index: 3, kind: output, shape index: {}]
  %s4 = sld [smem:[#allocation0]]
  $region30: #{convnet_forward.19} parent=0
    _
  %s6 = ssub.s32 1, %s4
  %s7 = scalar_select 0, %s6, %s4
  // Predicated region
  $region2: #{convnet_forward.19} parent=0 // pred_check
    _
  $region3: #{convnet_forward.19} parent=0 // pred_check_branch
    %9 = sbr.rel (0) target = $region5
  $region4: #{convnet_forward.19} parent=0 // pred_region
    _
  $region5: #{convnet_forward.19} parent=0 // pred_fallthru
    _
  // Predicated region
  $region6: #{convnet_forward.19} parent=0 // pred_check
    _
  $region7: #{convnet_forward.19} parent=0 // pred_check_branch
    %11 = sbr.rel (0) target = $region9
  $region8: #{convnet_forward.19} parent=0 // pred_region
    _
  $region9: #{convnet_forward.19} parent=0 // pred_fallthru
    _
  // Predicated region
  $region10: #{convnet_forward.19} parent=0 // pred_check
    _
  $region11: #{convnet_forward.19} parent=0 // pred_check_branch
    %13 = sbr.rel (0) target = $region13
  $region12: #{convnet_forward.19} parent=0 // pred_region
    _
  $region13: #{convnet_forward.19} parent=0 // pred_fallthru
    _
  %p15 = scmp.eq.s32.totalorder 0, 0
  // Predicated region
  $region14: #{convnet_forward.19} parent=0 // pred_check
    %p16 = pneg %p15
  $region15: #{convnet_forward.19} parent=0 // pred_check_branch
    %18 = sbr.rel (%p16) target = $region17
  $region16: #{convnet_forward.19} parent=0 // pred_region
    %vm19 = vcmask 523264
    %20 = vst.msk [vmem:[#allocation2] sm:$0xff] %vm19, 0.0
    %21 = vst.msk [vmem:[#allocation2 + $0x8] sm:$0xff] %vm19, 0.0
    %22 = vst.msk [vmem:[#allocation2 + $0x10] sm:$0xff] %vm19, 0.0
    %23 = vst.msk [vmem:[#allocation2 + $0x18] sm:$0xff] %vm19, 0.0
  $region17: #{convnet_forward.19} parent=0 // pred_fallthru
    _
  %v24 = vld [vmem:[%s1] sm:$0xf]
  %v25 = vld [vmem:[%s1 + $0x4] sm:$0xf]
  %v26 = vld [vmem:[%s1 + $0x8] sm:$0xf]
  %v27 = vld [vmem:[%s1 + $0xc] sm:$0xf]
  %v28 = vld [vmem:[%s1 + $0x10] sm:$0xf]
  %v29 = vld [vmem:[%s1 + $0x14] sm:$0xf]
  %v30 = vld [vmem:[%s1 + $0x18] sm:$0xf]
  %v31 = vld [vmem:[%s1 + $0x1c] sm:$0xf]
  %v32 = vld [vmem:[%s1 + $0x20] sm:$0xf]
  %v33 = vld [vmem:[%s1 + $0x24] sm:$0xf]
  %v34 = vld [vmem:[%s1 + $0x28] sm:$0xf]
  %v35 = vld [vmem:[%s1 + $0x2c] sm:$0xf]
  %v36 = vld [vmem:[%s1 + $0x30] sm:$0xf]
  %v37 = vld [vmem:[%s1 + $0x34] sm:$0xf]
  %v38 = vld [vmem:[%s1 + $0x38] sm:$0xf]
  %v39 = vld [vmem:[%s1 + $0x3c] sm:$0xf]
  %v40 = vld [vmem:[%s1 + $0x40] sm:$0xf]
  %v41 = vld [vmem:[%s1 + $0x44] sm:$0xf]
  %v42 = vld [vmem:[%s1 + $0x48] sm:$0xf]
  %v43 = vld [vmem:[%s1 + $0x4c] sm:$0xf]
  %v44 = vld [vmem:[%s1 + $0x50] sm:$0xf]
  %v45 = vld [vmem:[%s1 + $0x54] sm:$0xf]
  %v46 = vld [vmem:[%s1 + $0x58] sm:$0xf]
  %v47 = vld [vmem:[%s1 + $0x5c] sm:$0xf]
  %v48 = vld [vmem:[%s1 + $0x60] sm:$0xf]
  %v49 = vld [vmem:[%s1 + $0x64] sm:$0xf]
  %v50 = vld [vmem:[%s1 + $0x68] sm:$0xf]
  %v51 = vld [vmem:[%s1 + $0x6c] sm:$0xf]
  %v52 = vld [vmem:[%s1 + $0x70] sm:$0xf]
  %v53 = vld [vmem:[%s1 + $0x74] sm:$0xf]
  %v54 = vld [vmem:[%s1 + $0x78] sm:$0xf]
  %v55 = vld [vmem:[%s1 + $0x7c] sm:$0xf]
  %v56 = vld [vmem:[%s1 + $0x80] sm:$0xf]
  %v57 = vld [vmem:[%s1 + $0x84] sm:$0xf]
  %v58 = vld [vmem:[%s1 + $0x88] sm:$0xf]
  %v59 = vld [vmem:[%s1 + $0x8c] sm:$0xf]
  %v60 = vld [vmem:[#allocation2] sm:$0xff]
  %v61 = vld [vmem:[#allocation2 + $0x8] sm:$0xff]
  %v62 = vld [vmem:[#allocation2 + $0x10] sm:$0xff]
  %v63 = vld [vmem:[#allocation2 + $0x18] sm:$0xff]
  %v64 = vld [vmem:[%s0] sm:$0xff]
  %v65 = vld [vmem:[%s0 + $0x8] sm:$0xf]
  %v66 = vld [vmem:[%s0 + $0xc] sm:$0xff]
  %v67 = vld [vmem:[%s0 + $0x14] sm:$0xf]
  %v68 = vld [vmem:[%s0 + $0x18] sm:$0xff]
  %v69 = vld [vmem:[%s0 + $0x20] sm:$0xf]
  %v70 = vld [vmem:[%s0 + $0x24] sm:$0xff]
  %v71 = vld [vmem:[%s0 + $0x2c] sm:$0xf]
  %v80 = vunpack.c.l.b16 %v64
  %v81 = vunpack.c.h.b16 %v64
  %v82 = vunpack.c.l.b16 %v65
  %v83 = vunpack.c.l.b16 %v66
  %v84 = vunpack.c.h.b16 %v66
  %v85 = vunpack.c.l.b16 %v67
  %v86 = vunpack.c.l.b16 %v68
  %v87 = vunpack.c.h.b16 %v68
  %v88 = vunpack.c.l.b16 %v69
  %v89 = vunpack.c.l.b16 %v70
  %v90 = vunpack.c.h.b16 %v70
  %v91 = vunpack.c.l.b16 %v71
  %v92 = vpack.c.b16 %v83, %v80
  %v93 = vpack.c.b16 %v84, %v81
  %v94 = vpack.c.b16 %v85, %v82
  %v95 = vpack.c.b16 %v89, %v86
  %v96 = vpack.c.b16 %v90, %v87
  %v97 = vpack.c.b16 %v91, %v88
  %v138 = vunpack.c.l.b16 %v24
  %v139 = vunpack.c.l.b16 %v25
  %v140 = vunpack.c.l.b16 %v26
  %v141 = vunpack.c.l.b16 %v27
  %v142 = vunpack.c.l.b16 %v28
  %v143 = vunpack.c.l.b16 %v29
  %v144 = vunpack.c.l.b16 %v30
  %v145 = vunpack.c.l.b16 %v31
  %v146 = vunpack.c.l.b16 %v32
  %v147 = vunpack.c.l.b16 %v33
  %v148 = vunpack.c.l.b16 %v34
  %v149 = vunpack.c.l.b16 %v35
  %v150 = vunpack.c.l.b16 %v36
  %v151 = vunpack.c.l.b16 %v37
  %v152 = vunpack.c.l.b16 %v38
  %v153 = vunpack.c.l.b16 %v39
  %v154 = vunpack.c.l.b16 %v40
  %v155 = vunpack.c.l.b16 %v41
  %v156 = vunpack.c.l.b16 %v42
  %v157 = vunpack.c.l.b16 %v43
  %v158 = vunpack.c.l.b16 %v44
  %v159 = vunpack.c.l.b16 %v45
  %v160 = vunpack.c.l.b16 %v46
  %v161 = vunpack.c.l.b16 %v47
  %v162 = vunpack.c.l.b16 %v48
  %v163 = vunpack.c.l.b16 %v49
  %v164 = vunpack.c.l.b16 %v50
  %v165 = vunpack.c.l.b16 %v51
  %v166 = vunpack.c.l.b16 %v52
  %v167 = vunpack.c.l.b16 %v53
  %v168 = vunpack.c.l.b16 %v54
  %v169 = vunpack.c.l.b16 %v55
  %v170 = vunpack.c.l.b16 %v56
  %v171 = vunpack.c.l.b16 %v57
  %v172 = vunpack.c.l.b16 %v58
  %v173 = vunpack.c.l.b16 %v59
  %v174 = vpack.c.b16 %v139, %v138
  %v175 = vpack.c.b16 %v141, %v140
  %v176 = vpack.c.b16 %v143, %v142
  %v177 = vpack.c.b16 %v145, %v144
  %v178 = vpack.c.b16 %v147, %v146
  %v179 = vpack.c.b16 %v149, %v148
  %v180 = vpack.c.b16 %v151, %v150
  %v181 = vpack.c.b16 %v153, %v152
  %v182 = vpack.c.b16 %v155, %v154
  %v183 = vpack.c.b16 %v157, %v156
  %v184 = vpack.c.b16 %v159, %v158
  %v185 = vpack.c.b16 %v161, %v160
  %v186 = vpack.c.b16 %v163, %v162
  %v187 = vpack.c.b16 %v165, %v164
  %v188 = vpack.c.b16 %v167, %v166
  %v189 = vpack.c.b16 %v169, %v168
  %v190 = vpack.c.b16 %v171, %v170
  %v191 = vpack.c.b16 %v173, %v172
  %vm210 = vcmask 261120
  %v212 = vsel %vm210, %v94, 0
  %v215 = vsel %vm210, %v97, 0
  %217 = vmatprep.subr.bf16.mxu0 0
  %218 = vmatpush1.bf16.msra.mxu0 %v181
  %219 = vmatprep.subr.bf16.mxu0 0
  %220 = vmatpush1.bf16.msra.mxu0 %v180
  %221 = vmatprep.subr.bf16.mxu0 0
  %222 = vmatpush1.bf16.msra.mxu0 %v179
  %223 = vmatprep.subr.bf16.mxu0 0
  %224 = vmatpush1.bf16.msra.mxu0 %v178
  %225 = vmatprep.subr.bf16.mxu0 0
  %226 = vmatpush1.bf16.msra.mxu0 %v177
  %227 = vmatprep.subr.bf16.mxu0 0
  %228 = vmatpush1.bf16.msra.mxu0 %v176
  %229 = vmatprep.subr.bf16.mxu0 0
  %230 = vmatpush1.bf16.msra.mxu0 %v175
  %231 = vmatprep.subr.bf16.mxu0 0
  %232 = vmatpush1.bf16.msra.mxu0 %v174
  %233 = vmatprep.subr.bf16.mxu0 0
  %234 = vmatpush2.bf16.msra.mxu0 %v189
  %235 = vmatprep.subr.bf16.mxu0 0
  %236 = vmatpush2.bf16.msra.mxu0 %v188
  %237 = vmatprep.subr.bf16.mxu0 0
  %238 = vmatpush2.bf16.msra.mxu0 %v187
  %239 = vmatprep.subr.bf16.mxu0 0
  %240 = vmatpush2.bf16.msra.mxu0 %v186
  %241 = vmatprep.subr.bf16.mxu0 0
  %242 = vmatpush2.bf16.msra.mxu0 %v185
  %243 = vmatprep.subr.bf16.mxu0 0
  %244 = vmatpush2.bf16.msra.mxu0 %v184
  %245 = vmatprep.subr.bf16.mxu0 0
  %246 = vmatpush2.bf16.msra.mxu0 %v183
  %247 = vmatprep.subr.bf16.mxu0 0
  %248 = vmatpush2.bf16.msra.mxu0 %v182
  %249 = vmatprep.mubr.bf16.mxu0 %v93
  %250 = vmatmul.mubr.bf16.gmra.mxu0 %v92
  %v251 = vpop.f32.mrf.mxu0
  %v252 = vadd.f32 0.0, %v251
  %v253 = vpop.f32.mrf.mxu0
  %v254 = vpop.f32.mrf.mxu0
  %v255 = vadd.f32 0.0, %v254
  %v256 = vpop.f32.mrf.mxu0
  %257 = vmatprep.mubr.bf16.mxu0 %v96
  %258 = vmatmul.mubr.bf16.gmra.mxu0 %v95
  %v259 = vpop.f32.mrf.mxu0
  %v260 = vadd.f32 0.0, %v259
  %v261 = vpop.f32.mrf.mxu0
  %v262 = vpop.f32.mrf.mxu0
  %v263 = vadd.f32 0.0, %v262
  %v264 = vpop.f32.mrf.mxu0
  %265 = vdwg.mxu0
  %266 = vmatprep.subr.bf16.mxu0 0
  %267 = vmatpush1.bf16.msra.mxu0 0
  %268 = vmatprep.subr.bf16.mxu0 0
  %269 = vmatpush1.bf16.msra.mxu0 0
  %270 = vmatprep.subr.bf16.mxu0 0
  %271 = vmatpush1.bf16.msra.mxu0 0
  %272 = vmatprep.subr.bf16.mxu0 0
  %273 = vmatpush1.bf16.msra.mxu0 0
  %274 = vmatprep.subr.bf16.mxu0 0
  %275 = vmatpush1.bf16.msra.mxu0 0
  %276 = vmatprep.subr.bf16.mxu0 0
  %277 = vmatpush1.bf16.msra.mxu0 0
  %278 = vmatprep.subr.bf16.mxu0 0
  %279 = vmatpush1.bf16.msra.mxu0 %v191
  %280 = vmatprep.subr.bf16.mxu0 0
  %281 = vmatpush1.bf16.msra.mxu0 %v190
  %282 = vmatprep.subr.bf16.mxu0 0
  %283 = vmatpush2.bf16.msra.mxu0 0
  %284 = vmatprep.subr.bf16.mxu0 0
  %285 = vmatpush2.bf16.msra.mxu0 0
  %286 = vmatprep.subr.bf16.mxu0 0
  %287 = vmatpush2.bf16.msra.mxu0 0
  %288 = vmatprep.subr.bf16.mxu0 0
  %289 = vmatpush2.bf16.msra.mxu0 0
  %290 = vmatprep.subr.bf16.mxu0 0
  %291 = vmatpush2.bf16.msra.mxu0 0
  %292 = vmatprep.subr.bf16.mxu0 0
  %293 = vmatpush2.bf16.msra.mxu0 0
  %294 = vmatprep.subr.bf16.mxu0 0
  %295 = vmatpush2.bf16.msra.mxu0 0
  %296 = vmatprep.subr.bf16.mxu0 0
  %297 = vmatpush2.bf16.msra.mxu0 0
  %298 = vmatprep.mubr.bf16.mxu0 0
  %299 = vmatmul.mubr.bf16.gmra.mxu0 %v212
  %v300 = vpop.f32.mrf.mxu0
  %v301 = vadd.f32 %v252, %v300
  %v302 = vpop.f32.mrf.mxu0
  %v303 = vpop.f32.mrf.mxu0
  %v304 = vadd.f32 %v255, %v303
  %v305 = vpop.f32.mrf.mxu0
  %306 = vmatprep.mubr.bf16.mxu0 0
  %307 = vmatmul.mubr.bf16.gmra.mxu0 %v215
  %v308 = vpop.f32.mrf.mxu0
  %v309 = vadd.f32 %v260, %v308
  %v310 = vpop.f32.mrf.mxu0
  %v311 = vpop.f32.mrf.mxu0
  %v312 = vadd.f32 %v263, %v311
  %v313 = vpop.f32.mrf.mxu0
  %314 = vdwg.mxu0
  %v315 = vadd.f32 %v60, %v301
  %v316 = vadd.f32 %v61, %v304
  %v317 = vadd.f32 %v62, %v309
  %v318 = vadd.f32 %v63, %v312
  %vm319 = vcmask 523264
  %320 = vst.msk [vmem:[#allocation2] sm:$0xff] %vm319, %v315
  %321 = vst.msk [vmem:[#allocation2 + $0x8] sm:$0xff] %vm319, %v316
  %322 = vst.msk [vmem:[#allocation2 + $0x10] sm:$0xff] %vm319, %v317
  %323 = vst.msk [vmem:[#allocation2 + $0x18] sm:$0xff] %vm319, %v318
  // Predicated region
  $region18: #{convnet_forward.19} parent=0 // pred_check
    %p324 = pneg %p15
  $region19: #{convnet_forward.19} parent=0 // pred_check_branch
    %326 = sbr.rel (%p324) target = $region21
  $region20: #{convnet_forward.19} parent=0 // pred_region
    %v327 = vld [vmem:[#allocation2] sm:$0xff]
    %v328 = vld [vmem:[#allocation2 + $0x8] sm:$0xff]
    %v329 = vld [vmem:[#allocation2 + $0x10] sm:$0xff]
    %v330 = vld [vmem:[#allocation2 + $0x18] sm:$0xff]
    %v331 = vld [vmem:[%s2] sm:$0x1]
    %v333 = vlaneseq
    %v334 = vshrl.u32 %v333, 7
    %v335 = vsub.s32 0, %v334
    %v336 = vrot.slane %v331, %v335
    %v338 = vadd.f32 %v327, %v336
    %v339 = vadd.f32 %v328, %v336
    %v340 = vadd.f32 %v329, %v336
    %v341 = vadd.f32 %v330, %v336
    %v342 = vpack.c.bf16 %v339, %v338
    %v343 = vpack.c.bf16 %v341, %v340
    %v346 = vunpack.c.l.b16 %v342
    %v347 = vunpack.c.h.b16 %v342
    %v348 = vunpack.c.l.b16 %v343
    %v349 = vunpack.c.h.b16 %v343
    %v350 = vpack.c.b16 %v346, %v346
    %v351 = vpack.c.b16 %v347, %v347
    %v352 = vpack.c.b16 %v348, %v348
    %v353 = vpack.c.b16 %v349, %v349
    %vm358 = vcmask 519168
    %359 = vst.msk [vmem:[%s3] sm:$0xf] %vm358, %v350
    %360 = vst.msk [vmem:[%s3 + $0x4] sm:$0xf] %vm358, %v351
    %361 = vst.msk [vmem:[%s3 + $0x8] sm:$0xf] %vm358, %v352
    %362 = vst.msk [vmem:[%s3 + $0xc] sm:$0xf] %vm358, %v353
  $region21: #{convnet_forward.19} parent=0 // pred_fallthru
    _
  // Predicated region
  $region22: #{convnet_forward.19} parent=0 // pred_check
    _
  $region23: #{convnet_forward.19} parent=0 // pred_check_branch
    %364 = sbr.rel (0) target = $region25
  $region24: #{convnet_forward.19} parent=0 // pred_region
    _
  $region25: #{convnet_forward.19} parent=0 // pred_fallthru
    _
  // Predicated region
  $region26: #{convnet_forward.19} parent=0 // pred_check
    _
  $region27: #{convnet_forward.19} parent=0 // pred_check_branch
    %366 = sbr.rel (0) target = $region29
  $region28: #{convnet_forward.19} parent=0 // pred_region
    _
  $region29: #{convnet_forward.19} parent=0 // pred_fallthru
    _

// kernel: convnet_forward.22
$region0: #{convnet_forward.22}
  #allocation0 [shape = 'u32[]', space=smem, size = 0x4, offset = 0x4, fixed_abs, tag = 'smem constant byte address 0x4 - core index']
  #allocation1 [shape = 'u32[144,128]{1,0:T(1,128)}', space=vmem, size = 0x12000, scoped, tag = 'internal scratch']
  %s0 = inlined_call_operand.vmem [shape: bf16[4,2,128], index: 0, kind: input, shape index: {}]
  %s1 = inlined_call_operand.vmem [shape: bf16[4,128], index: 1, kind: output, shape index: {}]
  %s2 = sld [smem:[#allocation0]]
  $region14: #{convnet_forward.22} parent=0
    _
  %s4 = ssub.s32 1, %s2
  %s5 = scalar_select 0, %s4, %s2
  // Predicated region
  $region2: #{convnet_forward.22} parent=0 // pred_check
    _
  $region3: #{convnet_forward.22} parent=0 // pred_check_branch
    %7 = sbr.rel (0) target = $region5
  $region4: #{convnet_forward.22} parent=0 // pred_region
    _
  $region5: #{convnet_forward.22} parent=0 // pred_fallthru
    _
  %v8 = vld [vmem:[%s0] sm:$0x1]
  %v9 = vld [vmem:[%s0 + $0x1] sm:$0x1]
  %v10 = vld [vmem:[%s0 + $0x2] sm:$0x1]
  %v11 = vld [vmem:[%s0 + $0x3] sm:$0x1]
  %v13 = vshrl.u32 %v8, 16
  %v15 = vrot.slane %v13, 7
  %v16 = vrot.slane %v15, 1
  %v18 = vshrl.u32 %v9, 16
  %v20 = vrot.slane %v18, 7
  %v21 = vrot.slane %v20, 1
  %v23 = vshrl.u32 %v10, 16
  %v25 = vrot.slane %v23, 7
  %v26 = vrot.slane %v25, 1
  %v28 = vshrl.u32 %v11, 16
  %v30 = vrot.slane %v28, 7
  %v31 = vrot.slane %v30, 1
  %v36 = vmax.bf16 %v8, %v16
  %v37 = vmax.bf16 %v9, %v21
  %v38 = vmax.bf16 %v10, %v26
  %v39 = vmax.bf16 %v11, %v31
  %v45 = vunpack.c.l.s4 1935823168
  %v46 = vunpack.c.0.s8 %v45
  %v47 = vlaneseq
  %v48 = vshrl.u32 %v47, 7
  %v49 = vsub.s32 %v46, %v48
  %v50 = vrot.slane %v36, %v49
  %v52 = vunpack.c.l.s4 1935823168
  %v53 = vunpack.c.0.s8 %v52
  %v54 = vlaneseq
  %v55 = vshrl.u32 %v54, 7
  %v56 = vsub.s32 %v53, %v55
  %v57 = vrot.slane %v37, %v56
  %v59 = vunpack.c.l.s4 1935823168
  %v60 = vunpack.c.0.s8 %v59
  %v61 = vlaneseq
  %v62 = vshrl.u32 %v61, 7
  %v63 = vsub.s32 %v60, %v62
  %v64 = vrot.slane %v38, %v63
  %v66 = vunpack.c.l.s4 1935823168
  %v67 = vunpack.c.0.s8 %v66
  %v68 = vlaneseq
  %v69 = vshrl.u32 %v68, 7
  %v70 = vsub.s32 %v67, %v69
  %v71 = vrot.slane %v39, %v70
  %v73 = vunpack.c.l.s4 1983009808
  %v74 = vunpack.c.0.s8 %v73
  %v75 = vlaneseq
  %v76 = vshrl.u32 %v75, 7
  %v77 = vsub.s32 %v74, %v76
  %v78 = vrot.slane %v50, %v77
  %v80 = vunpack.c.l.s4 1983009808
  %v81 = vunpack.c.0.s8 %v80
  %v82 = vlaneseq
  %v83 = vshrl.u32 %v82, 7
  %v84 = vsub.s32 %v81, %v83
  %v85 = vrot.slane %v57, %v84
  %v87 = vunpack.c.l.s4 1983009808
  %v88 = vunpack.c.0.s8 %v87
  %v89 = vlaneseq
  %v90 = vshrl.u32 %v89, 7
  %v91 = vsub.s32 %v88, %v90
  %v92 = vrot.slane %v64, %v91
  %v94 = vunpack.c.l.s4 1983009808
  %v95 = vunpack.c.0.s8 %v94
  %v96 = vlaneseq
  %v97 = vshrl.u32 %v96, 7
  %v98 = vsub.s32 %v95, %v97
  %v99 = vrot.slane %v71, %v98
  %v100 = vunpack.c.l.b16 %v78
  %v101 = vunpack.c.l.b16 %v85
  %v102 = vunpack.c.l.b16 %v92
  %v103 = vunpack.c.l.b16 %v99
  %v104 = vrot.slane %v101, 7
  %vm105 = vcmask 1041409
  %v106 = vsel %vm105, %v104, %v100
  %v107 = vrot.slane %v102, 6
  %vm108 = vcmask 1042434
  %v109 = vsel %vm108, %v107, %v106
  %v110 = vrot.slane %v103, 5
  %vm111 = vcmask 1043459
  %v112 = vsel %vm111, %v110, %v109
  %v113 = vpack.c.b16 %v112, %v112
  %v115 = vunpack.c.l.s4 1983009808
  %v116 = vunpack.c.0.s8 %v115
  %v117 = vlaneseq
  %v118 = vshrl.u32 %v117, 7
  %v119 = vsub.s32 %v116, %v118
  %v120 = vrot.slane %v113, %v119
  %122 = vst [vmem:[%s1] sm:$0x3] %v120
  // Predicated region
  $region6: #{convnet_forward.22} parent=0 // pred_check
    _
  $region7: #{convnet_forward.22} parent=0 // pred_check_branch
    %124 = sbr.rel (0) target = $region9
  $region8: #{convnet_forward.22} parent=0 // pred_region
    _
  $region9: #{convnet_forward.22} parent=0 // pred_fallthru
    _
  // Predicated region
  $region10: #{convnet_forward.22} parent=0 // pred_check
    _
  $region11: #{convnet_forward.22} parent=0 // pred_check_branch
    %126 = sbr.rel (0) target = $region13
  $region12: #{convnet_forward.22} parent=0 // pred_region
    _
  $region13: #{convnet_forward.22} parent=0 // pred_fallthru
    _

// kernel: convnet_forward.21
$region0: #{convnet_forward.21}
  #allocation0 [shape = 'u32[]', space=smem, size = 0x4, offset = 0x4, fixed_abs, tag = 'smem constant byte address 0x4 - core index']
  #allocation1 [shape = 'u32[144,128]{1,0:T(1,128)}', space=vmem, size = 0x12000, scoped, tag = 'internal scratch']
  %s0 = inlined_call_operand.vmem [shape: bf16[16,2,64], index: 0, kind: input, shape index: {}]
  %s1 = inlined_call_operand.vmem [shape: bf16[16,64], index: 1, kind: output, shape index: {}]
  %s2 = sld [smem:[#allocation0]]
  $region14: #{convnet_forward.21} parent=0
    _
  %s4 = ssub.s32 1, %s2
  %s5 = scalar_select 0, %s4, %s2
  // Predicated region
  $region2: #{convnet_forward.21} parent=0 // pred_check
    _
  $region3: #{convnet_forward.21} parent=0 // pred_check_branch
    %7 = sbr.rel (0) target = $region5
  $region4: #{convnet_forward.21} parent=0 // pred_region
    _
  $region5: #{convnet_forward.21} parent=0 // pred_fallthru
    _
  %v8 = vld [vmem:[%s0] sm:$0x1]
  %v9 = vld [vmem:[%s0 + $0x1] sm:$0x1]
  %v10 = vld [vmem:[%s0 + $0x2] sm:$0x1]
  %v11 = vld [vmem:[%s0 + $0x3] sm:$0x1]
  %v12 = vld [vmem:[%s0 + $0x4] sm:$0x1]
  %v13 = vld [vmem:[%s0 + $0x5] sm:$0x1]
  %v14 = vld [vmem:[%s0 + $0x6] sm:$0x1]
  %v15 = vld [vmem:[%s0 + $0x7] sm:$0x1]
  %v16 = vld [vmem:[%s0 + $0x8] sm:$0x1]
  %v17 = vld [vmem:[%s0 + $0x9] sm:$0x1]
  %v18 = vld [vmem:[%s0 + $0xa] sm:$0x1]
  %v19 = vld [vmem:[%s0 + $0xb] sm:$0x1]
  %v20 = vld [vmem:[%s0 + $0xc] sm:$0x1]
  %v21 = vld [vmem:[%s0 + $0xd] sm:$0x1]
  %v22 = vld [vmem:[%s0 + $0xe] sm:$0x1]
  %v23 = vld [vmem:[%s0 + $0xf] sm:$0x1]
  %v25 = vshrl.u32 %v8, 16
  %v27 = vrot.slane %v25, 7
  %v28 = vrot.slane %v27, 1
  %v30 = vshrl.u32 %v9, 16
  %v32 = vrot.slane %v30, 7
  %v33 = vrot.slane %v32, 1
  %v35 = vshrl.u32 %v10, 16
  %v37 = vrot.slane %v35, 7
  %v38 = vrot.slane %v37, 1
  %v40 = vshrl.u32 %v11, 16
  %v42 = vrot.slane %v40, 7
  %v43 = vrot.slane %v42, 1
  %v45 = vshrl.u32 %v12, 16
  %v47 = vrot.slane %v45, 7
  %v48 = vrot.slane %v47, 1
  %v50 = vshrl.u32 %v13, 16
  %v52 = vrot.slane %v50, 7
  %v53 = vrot.slane %v52, 1
  %v55 = vshrl.u32 %v14, 16
  %v57 = vrot.slane %v55, 7
  %v58 = vrot.slane %v57, 1
  %v60 = vshrl.u32 %v15, 16
  %v62 = vrot.slane %v60, 7
  %v63 = vrot.slane %v62, 1
  %v65 = vshrl.u32 %v16, 16
  %v67 = vrot.slane %v65, 7
  %v68 = vrot.slane %v67, 1
  %v70 = vshrl.u32 %v17, 16
  %v72 = vrot.slane %v70, 7
  %v73 = vrot.slane %v72, 1
  %v75 = vshrl.u32 %v18, 16
  %v77 = vrot.slane %v75, 7
  %v78 = vrot.slane %v77, 1
  %v80 = vshrl.u32 %v19, 16
  %v82 = vrot.slane %v80, 7
  %v83 = vrot.slane %v82, 1
  %v85 = vshrl.u32 %v20, 16
  %v87 = vrot.slane %v85, 7
  %v88 = vrot.slane %v87, 1
  %v90 = vshrl.u32 %v21, 16
  %v92 = vrot.slane %v90, 7
  %v93 = vrot.slane %v92, 1
  %v95 = vshrl.u32 %v22, 16
  %v97 = vrot.slane %v95, 7
  %v98 = vrot.slane %v97, 1
  %v100 = vshrl.u32 %v23, 16
  %v102 = vrot.slane %v100, 7
  %v103 = vrot.slane %v102, 1
  %v120 = vmax.bf16 %v8, %v28
  %v121 = vmax.bf16 %v9, %v33
  %v122 = vmax.bf16 %v10, %v38
  %v123 = vmax.bf16 %v11, %v43
  %v124 = vmax.bf16 %v12, %v48
  %v125 = vmax.bf16 %v13, %v53
  %v126 = vmax.bf16 %v14, %v58
  %v127 = vmax.bf16 %v15, %v63
  %v128 = vmax.bf16 %v16, %v68
  %v129 = vmax.bf16 %v17, %v73
  %v130 = vmax.bf16 %v18, %v78
  %v131 = vmax.bf16 %v19, %v83
  %v132 = vmax.bf16 %v20, %v88
  %v133 = vmax.bf16 %v21, %v93
  %v134 = vmax.bf16 %v22, %v98
  %v135 = vmax.bf16 %v23, %v103
  %v153 = vunpack.c.l.s4 1935823168
  %v154 = vunpack.c.0.s8 %v153
  %v155 = vlaneseq
  %v156 = vshrl.u32 %v155, 7
  %v157 = vsub.s32 %v154, %v156
  %v158 = vrot.slane %v120, %v157
  %v160 = vunpack.c.l.s4 1935823168
  %v161 = vunpack.c.0.s8 %v160
  %v162 = vlaneseq
  %v163 = vshrl.u32 %v162, 7
  %v164 = vsub.s32 %v161, %v163
  %v165 = vrot.slane %v158, %v164
  %v167 = vunpack.c.l.s4 1935823168
  %v168 = vunpack.c.0.s8 %v167
  %v169 = vlaneseq
  %v170 = vshrl.u32 %v169, 7
  %v171 = vsub.s32 %v168, %v170
  %v172 = vrot.slane %v121, %v171
  %v174 = vunpack.c.l.s4 1935823168
  %v175 = vunpack.c.0.s8 %v174
  %v176 = vlaneseq
  %v177 = vshrl.u32 %v176, 7
  %v178 = vsub.s32 %v175, %v177
  %v179 = vrot.slane %v172, %v178
  %v181 = vunpack.c.l.s4 1935823168
  %v182 = vunpack.c.0.s8 %v181
  %v183 = vlaneseq
  %v184 = vshrl.u32 %v183, 7
  %v185 = vsub.s32 %v182, %v184
  %v186 = vrot.slane %v122, %v185
  %v188 = vunpack.c.l.s4 1935823168
  %v189 = vunpack.c.0.s8 %v188
  %v190 = vlaneseq
  %v191 = vshrl.u32 %v190, 7
  %v192 = vsub.s32 %v189, %v191
  %v193 = vrot.slane %v186, %v192
  %v195 = vunpack.c.l.s4 1935823168
  %v196 = vunpack.c.0.s8 %v195
  %v197 = vlaneseq
  %v198 = vshrl.u32 %v197, 7
  %v199 = vsub.s32 %v196, %v198
  %v200 = vrot.slane %v123, %v199
  %v202 = vunpack.c.l.s4 1935823168
  %v203 = vunpack.c.0.s8 %v202
  %v204 = vlaneseq
  %v205 = vshrl.u32 %v204, 7
  %v206 = vsub.s32 %v203, %v205
  %v207 = vrot.slane %v200, %v206
  %v209 = vunpack.c.l.s4 1935823168
  %v210 = vunpack.c.0.s8 %v209
  %v211 = vlaneseq
  %v212 = vshrl.u32 %v211, 7
  %v213 = vsub.s32 %v210, %v212
  %v214 = vrot.slane %v124, %v213
  %v216 = vunpack.c.l.s4 1935823168
  %v217 = vunpack.c.0.s8 %v216
  %v218 = vlaneseq
  %v219 = vshrl.u32 %v218, 7
  %v220 = vsub.s32 %v217, %v219
  %v221 = vrot.slane %v214, %v220
  %v223 = vunpack.c.l.s4 1935823168
  %v224 = vunpack.c.0.s8 %v223
  %v225 = vlaneseq
  %v226 = vshrl.u32 %v225, 7
  %v227 = vsub.s32 %v224, %v226
  %v228 = vrot.slane %v125, %v227
  %v230 = vunpack.c.l.s4 1935823168
  %v231 = vunpack.c.0.s8 %v230
  %v232 = vlaneseq
  %v233 = vshrl.u32 %v232, 7
  %v234 = vsub.s32 %v231, %v233
  %v235 = vrot.slane %v228, %v234
  %v237 = vunpack.c.l.s4 1935823168
  %v238 = vunpack.c.0.s8 %v237
  %v239 = vlaneseq
  %v240 = vshrl.u32 %v239, 7
  %v241 = vsub.s32 %v238, %v240
  %v242 = vrot.slane %v126, %v241
  %v244 = vunpack.c.l.s4 1935823168
  %v245 = vunpack.c.0.s8 %v244
  %v246 = vlaneseq
  %v247 = vshrl.u32 %v246, 7
  %v248 = vsub.s32 %v245, %v247
  %v249 = vrot.slane %v242, %v248
  %v251 = vunpack.c.l.s4 1935823168
  %v252 = vunpack.c.0.s8 %v251
  %v253 = vlaneseq
  %v254 = vshrl.u32 %v253, 7
  %v255 = vsub.s32 %v252, %v254
  %v256 = vrot.slane %v127, %v255
  %v258 = vunpack.c.l.s4 1935823168
  %v259 = vunpack.c.0.s8 %v258
  %v260 = vlaneseq
  %v261 = vshrl.u32 %v260, 7
  %v262 = vsub.s32 %v259, %v261
  %v263 = vrot.slane %v256, %v262
  %v265 = vunpack.c.l.s4 1935823168
  %v266 = vunpack.c.0.s8 %v265
  %v267 = vlaneseq
  %v268 = vshrl.u32 %v267, 7
  %v269 = vsub.s32 %v266, %v268
  %v270 = vrot.slane %v128, %v269
  %v272 = vunpack.c.l.s4 1935823168
  %v273 = vunpack.c.0.s8 %v272
  %v274 = vlaneseq
  %v275 = vshrl.u32 %v274, 7
  %v276 = vsub.s32 %v273, %v275
  %v277 = vrot.slane %v270, %v276
  %v279 = vunpack.c.l.s4 1935823168
  %v280 = vunpack.c.0.s8 %v279
  %v281 = vlaneseq
  %v282 = vshrl.u32 %v281, 7
  %v283 = vsub.s32 %v280, %v282
  %v284 = vrot.slane %v129, %v283
  %v286 = vunpack.c.l.s4 1935823168
  %v287 = vunpack.c.0.s8 %v286
  %v288 = vlaneseq
  %v289 = vshrl.u32 %v288, 7
  %v290 = vsub.s32 %v287, %v289
  %v291 = vrot.slane %v284, %v290
  %v293 = vunpack.c.l.s4 1935823168
  %v294 = vunpack.c.0.s8 %v293
  %v295 = vlaneseq
  %v296 = vshrl.u32 %v295, 7
  %v297 = vsub.s32 %v294, %v296
  %v298 = vrot.slane %v130, %v297
  %v300 = vunpack.c.l.s4 1935823168
  %v301 = vunpack.c.0.s8 %v300
  %v302 = vlaneseq
  %v303 = vshrl.u32 %v302, 7
  %v304 = vsub.s32 %v301, %v303
  %v305 = vrot.slane %v298, %v304
  %v307 = vunpack.c.l.s4 1935823168
  %v308 = vunpack.c.0.s8 %v307
  %v309 = vlaneseq
  %v310 = vshrl.u32 %v309, 7
  %v311 = vsub.s32 %v308, %v310
  %v312 = vrot.slane %v131, %v311
  %v314 = vunpack.c.l.s4 1935823168
  %v315 = vunpack.c.0.s8 %v314
  %v316 = vlaneseq
  %v317 = vshrl.u32 %v316, 7
  %v318 = vsub.s32 %v315, %v317
  %v319 = vrot.slane %v312, %v318
  %v321 = vunpack.c.l.s4 1935823168
  %v322 = vunpack.c.0.s8 %v321
  %v323 = vlaneseq
  %v324 = vshrl.u32 %v323, 7
  %v325 = vsub.s32 %v322, %v324
  %v326 = vrot.slane %v132, %v325
  %v328 = vunpack.c.l.s4 1935823168
  %v329 = vunpack.c.0.s8 %v328
  %v330 = vlaneseq
  %v331 = vshrl.u32 %v330, 7
  %v332 = vsub.s32 %v329, %v331
  %v333 = vrot.slane %v326, %v332
  %v335 = vunpack.c.l.s4 1935823168
  %v336 = vunpack.c.0.s8 %v335
  %v337 = vlaneseq
  %v338 = vshrl.u32 %v337, 7
  %v339 = vsub.s32 %v336, %v338
  %v340 = vrot.slane %v133, %v339
  %v342 = vunpack.c.l.s4 1935823168
  %v343 = vunpack.c.0.s8 %v342
  %v344 = vlaneseq
  %v345 = vshrl.u32 %v344, 7
  %v346 = vsub.s32 %v343, %v345
  %v347 = vrot.slane %v340, %v346
  %v349 = vunpack.c.l.s4 1935823168
  %v350 = vunpack.c.0.s8 %v349
  %v351 = vlaneseq
  %v352 = vshrl.u32 %v351, 7
  %v353 = vsub.s32 %v350, %v352
  %v354 = vrot.slane %v134, %v353
  %v356 = vunpack.c.l.s4 1935823168
  %v357 = vunpack.c.0.s8 %v356
  %v358 = vlaneseq
  %v359 = vshrl.u32 %v358, 7
  %v360 = vsub.s32 %v357, %v359
  %v361 = vrot.slane %v354, %v360
  %v363 = vunpack.c.l.s4 1935823168
  %v364 = vunpack.c.0.s8 %v363
  %v365 = vlaneseq
  %v366 = vshrl.u32 %v365, 7
  %v367 = vsub.s32 %v364, %v366
  %v368 = vrot.slane %v135, %v367
  %v370 = vunpack.c.l.s4 1935823168
  %v371 = vunpack.c.0.s8 %v370
  %v372 = vlaneseq
  %v373 = vshrl.u32 %v372, 7
  %v374 = vsub.s32 %v371, %v373
  %v375 = vrot.slane %v368, %v374
  %v376 = vunpack.c.l.b16 %v165
  %v377 = vunpack.c.l.b16 %v179
  %v378 = vunpack.c.l.b16 %v193
  %v379 = vunpack.c.l.b16 %v207
  %v380 = vunpack.c.l.b16 %v221
  %v381 = vunpack.c.l.b16 %v235
  %v382 = vunpack.c.l.b16 %v249
  %v383 = vunpack.c.l.b16 %v263
  %v384 = vunpack.c.l.b16 %v277
  %v385 = vunpack.c.l.b16 %v291
  %v386 = vunpack.c.l.b16 %v305
  %v387 = vunpack.c.l.b16 %v319
  %v388 = vunpack.c.l.b16 %v333
  %v389 = vunpack.c.l.b16 %v347
  %v390 = vunpack.c.l.b16 %v361
  %v391 = vunpack.c.l.b16 %v375
  %v392 = vrot.slane %v377, 7
  %vm393 = vcmask 1041409
  %v394 = vsel %vm393, %v392, %v376
  %v395 = vrot.slane %v378, 6
  %vm396 = vcmask 1042434
  %v397 = vsel %vm396, %v395, %v394
  %v398 = vrot.slane %v379, 5
  %vm399 = vcmask 1043459
  %v400 = vsel %vm399, %v398, %v397
  %v401 = vrot.slane %v380, 4
  %vm402 = vcmask 1044484
  %v403 = vsel %vm402, %v401, %v400
  %v404 = vrot.slane %v381, 3
  %vm405 = vcmask 1045509
  %v406 = vsel %vm405, %v404, %v403
  %v407 = vrot.slane %v382, 2
  %vm408 = vcmask 1046534
  %v409 = vsel %vm408, %v407, %v406
  %v410 = vrot.slane %v383, 1
  %vm411 = vcmask 1047559
  %v412 = vsel %vm411, %v410, %v409
  %v413 = vrot.slane %v385, 7
  %v414 = vsel %vm393, %v413, %v384
  %v415 = vrot.slane %v386, 6
  %v416 = vsel %vm396, %v415, %v414
  %v417 = vrot.slane %v387, 5
  %v418 = vsel %vm399, %v417, %v416
  %v419 = vrot.slane %v388, 4
  %v420 = vsel %vm402, %v419, %v418
  %v421 = vrot.slane %v389, 3
  %v422 = vsel %vm405, %v421, %v420
  %v423 = vrot.slane %v390, 2
  %v424 = vsel %vm408, %v423, %v422
  %v425 = vrot.slane %v391, 1
  %v426 = vsel %vm411, %v425, %v424
  %v427 = vpack.c.b16 %v412, %v412
  %v428 = vpack.c.b16 %v426, %v426
  %vm431 = vcmask 519168
  %432 = vst.msk [vmem:[%s1] sm:$0xf] %vm431, %v427
  %433 = vst.msk [vmem:[%s1 + $0x4] sm:$0xf] %vm431, %v428
  // Predicated region
  $region6: #{convnet_forward.21} parent=0 // pred_check
    _
  $region7: #{convnet_forward.21} parent=0 // pred_check_branch
    %435 = sbr.rel (0) target = $region9
  $region8: #{convnet_forward.21} parent=0 // pred_region
    _
  $region9: #{convnet_forward.21} parent=0 // pred_fallthru
    _
  // Predicated region
  $region10: #{convnet_forward.21} parent=0 // pred_check
    _
  $region11: #{convnet_forward.21} parent=0 // pred_check_branch
    %437 = sbr.rel (0) target = $region13
  $region12: #{convnet_forward.21} parent=0 // pred_region
    _
  $region13: #{convnet_forward.21} parent=0 // pred_fallthru
    _

// kernel: convnet_forward.20
$region0: #{convnet_forward.20}
  #allocation0 [shape = 'u32[]', space=smem, size = 0x4, offset = 0x4, fixed_abs, tag = 'smem constant byte address 0x4 - core index']
  #allocation1 [shape = 'u32[144,128]{1,0:T(1,128)}', space=vmem, size = 0x12000, scoped, tag = 'internal scratch']
  #allocation2 [shape = 'f32[32,64]{1,0:T(8,128)}', space=vmem, size = 0x4000, scoped, tag = 'scratch operand']
  %s0 = inlined_call_operand.vmem [shape: bf16[32,576], index: 0, kind: input, shape index: {}]
  %s1 = inlined_call_operand.vmem [shape: bf16[576,64], index: 1, kind: input, shape index: {}]
  %s2 = inlined_call_operand.vmem [shape: f32[1,64], index: 2, kind: input, shape index: {}]
  %s3 = inlined_call_operand.vmem [shape: f32[1,64], index: 3, kind: input, shape index: {}]
  %s4 = inlined_call_operand.vmem [shape: bf16[32,64], index: 4, kind: output, shape index: {}]
  %s5 = sld [smem:[#allocation0]]
  $region34: #{convnet_forward.20} parent=0
    _
  %s7 = ssub.s32 1, %s5
  %s8 = scalar_select 0, %s7, %s5
  // Predicated region
  $region2: #{convnet_forward.20} parent=0 // pred_check
    _
  $region3: #{convnet_forward.20} parent=0 // pred_check_branch
    %10 = sbr.rel (0) target = $region5
  $region4: #{convnet_forward.20} parent=0 // pred_region
    _
  $region5: #{convnet_forward.20} parent=0 // pred_fallthru
    _
  // Predicated region
  $region6: #{convnet_forward.20} parent=0 // pred_check
    _
  $region7: #{convnet_forward.20} parent=0 // pred_check_branch
    %12 = sbr.rel (0) target = $region9
  $region8: #{convnet_forward.20} parent=0 // pred_region
    _
  $region9: #{convnet_forward.20} parent=0 // pred_fallthru
    _
  // Predicated region
  $region10: #{convnet_forward.20} parent=0 // pred_check
    _
  $region11: #{convnet_forward.20} parent=0 // pred_check_branch
    %14 = sbr.rel (0) target = $region13
  $region12: #{convnet_forward.20} parent=0 // pred_region
    _
  $region13: #{convnet_forward.20} parent=0 // pred_fallthru
    _
  // Predicated region
  $region14: #{convnet_forward.20} parent=0 // pred_check
    _
  $region15: #{convnet_forward.20} parent=0 // pred_check_branch
    %16 = sbr.rel (0) target = $region17
  $region16: #{convnet_forward.20} parent=0 // pred_region
    _
  $region17: #{convnet_forward.20} parent=0 // pred_fallthru
    _
  %p18 = scmp.eq.s32.totalorder 0, 0
  // Predicated region
  $region18: #{convnet_forward.20} parent=0 // pred_check
    %p19 = pneg %p18
  $region19: #{convnet_forward.20} parent=0 // pred_check_branch
    %21 = sbr.rel (%p19) target = $region21
  $region20: #{convnet_forward.20} parent=0 // pred_region
    %vm22 = vcmask 523264
    %23 = vst.msk [vmem:[#allocation2] sm:$0xff] %vm22, 0.0
    %24 = vst.msk [vmem:[#allocation2 + $0x8] sm:$0xff] %vm22, 0.0
    %25 = vst.msk [vmem:[#allocation2 + $0x10] sm:$0xff] %vm22, 0.0
    %26 = vst.msk [vmem:[#allocation2 + $0x18] sm:$0xff] %vm22, 0.0
  $region21: #{convnet_forward.20} parent=0 // pred_fallthru
    _
  %v27 = vld [vmem:[%s1] sm:$0xf]
  %v28 = vld [vmem:[%s1 + $0x4] sm:$0xf]
  %v29 = vld [vmem:[%s1 + $0x8] sm:$0xf]
  %v30 = vld [vmem:[%s1 + $0xc] sm:$0xf]
  %v31 = vld [vmem:[%s1 + $0x10] sm:$0xf]
  %v32 = vld [vmem:[%s1 + $0x14] sm:$0xf]
  %v33 = vld [vmem:[%s1 + $0x18] sm:$0xf]
  %v34 = vld [vmem:[%s1 + $0x1c] sm:$0xf]
  %v35 = vld [vmem:[%s1 + $0x20] sm:$0xf]
  %v36 = vld [vmem:[%s1 + $0x24] sm:$0xf]
  %v37 = vld [vmem:[%s1 + $0x28] sm:$0xf]
  %v38 = vld [vmem:[%s1 + $0x2c] sm:$0xf]
  %v39 = vld [vmem:[%s1 + $0x30] sm:$0xf]
  %v40 = vld [vmem:[%s1 + $0x34] sm:$0xf]
  %v41 = vld [vmem:[%s1 + $0x38] sm:$0xf]
  %v42 = vld [vmem:[%s1 + $0x3c] sm:$0xf]
  %v43 = vld [vmem:[%s1 + $0x40] sm:$0xf]
  %v44 = vld [vmem:[%s1 + $0x44] sm:$0xf]
  %v45 = vld [vmem:[%s1 + $0x48] sm:$0xf]
  %v46 = vld [vmem:[%s1 + $0x4c] sm:$0xf]
  %v47 = vld [vmem:[%s1 + $0x50] sm:$0xf]
  %v48 = vld [vmem:[%s1 + $0x54] sm:$0xf]
  %v49 = vld [vmem:[%s1 + $0x58] sm:$0xf]
  %v50 = vld [vmem:[%s1 + $0x5c] sm:$0xf]
  %v51 = vld [vmem:[%s1 + $0x60] sm:$0xf]
  %v52 = vld [vmem:[%s1 + $0x64] sm:$0xf]
  %v53 = vld [vmem:[%s1 + $0x68] sm:$0xf]
  %v54 = vld [vmem:[%s1 + $0x6c] sm:$0xf]
  %v55 = vld [vmem:[%s1 + $0x70] sm:$0xf]
  %v56 = vld [vmem:[%s1 + $0x74] sm:$0xf]
  %v57 = vld [vmem:[%s1 + $0x78] sm:$0xf]
  %v58 = vld [vmem:[%s1 + $0x7c] sm:$0xf]
  %v59 = vld [vmem:[%s1 + $0x80] sm:$0xf]
  %v60 = vld [vmem:[%s1 + $0x84] sm:$0xf]
  %v61 = vld [vmem:[%s1 + $0x88] sm:$0xf]
  %v62 = vld [vmem:[%s1 + $0x8c] sm:$0xf]
  %v63 = vld [vmem:[%s1 + $0x90] sm:$0xf]
  %v64 = vld [vmem:[%s1 + $0x94] sm:$0xf]
  %v65 = vld [vmem:[%s1 + $0x98] sm:$0xf]
  %v66 = vld [vmem:[%s1 + $0x9c] sm:$0xf]
  %v67 = vld [vmem:[%s1 + $0xa0] sm:$0xf]
  %v68 = vld [vmem:[%s1 + $0xa4] sm:$0xf]
  %v69 = vld [vmem:[%s1 + $0xa8] sm:$0xf]
  %v70 = vld [vmem:[%s1 + $0xac] sm:$0xf]
  %v71 = vld [vmem:[%s1 + $0xb0] sm:$0xf]
  %v72 = vld [vmem:[%s1 + $0xb4] sm:$0xf]
  %v73 = vld [vmem:[%s1 + $0xb8] sm:$0xf]
  %v74 = vld [vmem:[%s1 + $0xbc] sm:$0xf]
  %v75 = vld [vmem:[%s1 + $0xc0] sm:$0xf]
  %v76 = vld [vmem:[%s1 + $0xc4] sm:$0xf]
  %v77 = vld [vmem:[%s1 + $0xc8] sm:$0xf]
  %v78 = vld [vmem:[%s1 + $0xcc] sm:$0xf]
  %v79 = vld [vmem:[%s1 + $0xd0] sm:$0xf]
  %v80 = vld [vmem:[%s1 + $0xd4] sm:$0xf]
  %v81 = vld [vmem:[%s1 + $0xd8] sm:$0xf]
  %v82 = vld [vmem:[%s1 + $0xdc] sm:$0xf]
  %v83 = vld [vmem:[%s1 + $0xe0] sm:$0xf]
  %v84 = vld [vmem:[%s1 + $0xe4] sm:$0xf]
  %v85 = vld [vmem:[%s1 + $0xe8] sm:$0xf]
  %v86 = vld [vmem:[%s1 + $0xec] sm:$0xf]
  %v87 = vld [vmem:[%s1 + $0xf0] sm:$0xf]
  %v88 = vld [vmem:[%s1 + $0xf4] sm:$0xf]
  %v89 = vld [vmem:[%s1 + $0xf8] sm:$0xf]
  %v90 = vld [vmem:[%s1 + $0xfc] sm:$0xf]
  %v91 = vld [vmem:[%s1 + $0x100] sm:$0xf]
  %v92 = vld [vmem:[%s1 + $0x104] sm:$0xf]
  %v93 = vld [vmem:[%s1 + $0x108] sm:$0xf]
  %v94 = vld [vmem:[%s1 + $0x10c] sm:$0xf]
  %v95 = vld [vmem:[%s1 + $0x110] sm:$0xf]
  %v96 = vld [vmem:[%s1 + $0x114] sm:$0xf]
  %v97 = vld [vmem:[%s1 + $0x118] sm:$0xf]
  %v98 = vld [vmem:[%s1 + $0x11c] sm:$0xf]
  %v99 = vld [vmem:[#allocation2] sm:$0xff]
  %v100 = vld [vmem:[#allocation2 + $0x8] sm:$0xff]
  %v101 = vld [vmem:[#allocation2 + $0x10] sm:$0xff]
  %v102 = vld [vmem:[#allocation2 + $0x18] sm:$0xff]
  %v103 = vld [vmem:[%s0] sm:$0xff]
  %v104 = vld [vmem:[%s0 + $0x8] sm:$0xff]
  %v105 = vld [vmem:[%s0 + $0x10] sm:$0xf]
  %v106 = vld [vmem:[%s0 + $0x14] sm:$0xff]
  %v107 = vld [vmem:[%s0 + $0x1c] sm:$0xff]
  %v108 = vld [vmem:[%s0 + $0x24] sm:$0xf]
  %v109 = vld [vmem:[%s0 + $0x28] sm:$0xff]
  %v110 = vld [vmem:[%s0 + $0x30] sm:$0xff]
  %v111 = vld [vmem:[%s0 + $0x38] sm:$0xf]
  %v112 = vld [vmem:[%s0 + $0x3c] sm:$0xff]
  %v113 = vld [vmem:[%s0 + $0x44] sm:$0xff]
  %v114 = vld [vmem:[%s0 + $0x4c] sm:$0xf]
  %v127 = vunpack.c.l.b16 %v103
  %v128 = vunpack.c.h.b16 %v103
  %v129 = vunpack.c.l.b16 %v104
  %v130 = vunpack.c.h.b16 %v104
  %v131 = vunpack.c.l.b16 %v105
  %v132 = vunpack.c.l.b16 %v106
  %v133 = vunpack.c.h.b16 %v106
  %v134 = vunpack.c.l.b16 %v107
  %v135 = vunpack.c.h.b16 %v107
  %v136 = vunpack.c.l.b16 %v108
  %v137 = vunpack.c.l.b16 %v109
  %v138 = vunpack.c.h.b16 %v109
  %v139 = vunpack.c.l.b16 %v110
  %v140 = vunpack.c.h.b16 %v110
  %v141 = vunpack.c.l.b16 %v111
  %v142 = vunpack.c.l.b16 %v112
  %v143 = vunpack.c.h.b16 %v112
  %v144 = vunpack.c.l.b16 %v113
  %v145 = vunpack.c.h.b16 %v113
  %v146 = vunpack.c.l.b16 %v114
  %v147 = vpack.c.b16 %v132, %v127
  %v148 = vpack.c.b16 %v133, %v128
  %v149 = vpack.c.b16 %v134, %v129
  %v150 = vpack.c.b16 %v135, %v130
  %v151 = vpack.c.b16 %v136, %v131
  %v152 = vpack.c.b16 %v142, %v137
  %v153 = vpack.c.b16 %v143, %v138
  %v154 = vpack.c.b16 %v144, %v139
  %v155 = vpack.c.b16 %v145, %v140
  %v156 = vpack.c.b16 %v146, %v141
  %v237 = vunpack.c.l.b16 %v27
  %v238 = vunpack.c.l.b16 %v28
  %v239 = vunpack.c.l.b16 %v29
  %v240 = vunpack.c.l.b16 %v30
  %v241 = vunpack.c.l.b16 %v31
  %v242 = vunpack.c.l.b16 %v32
  %v243 = vunpack.c.l.b16 %v33
  %v244 = vunpack.c.l.b16 %v34
  %v245 = vunpack.c.l.b16 %v35
  %v246 = vunpack.c.l.b16 %v36
  %v247 = vunpack.c.l.b16 %v37
  %v248 = vunpack.c.l.b16 %v38
  %v249 = vunpack.c.l.b16 %v39
  %v250 = vunpack.c.l.b16 %v40
  %v251 = vunpack.c.l.b16 %v41
  %v252 = vunpack.c.l.b16 %v42
  %v253 = vunpack.c.l.b16 %v43
  %v254 = vunpack.c.l.b16 %v44
  %v255 = vunpack.c.l.b16 %v45
  %v256 = vunpack.c.l.b16 %v46
  %v257 = vunpack.c.l.b16 %v47
  %v258 = vunpack.c.l.b16 %v48
  %v259 = vunpack.c.l.b16 %v49
  %v260 = vunpack.c.l.b16 %v50
  %v261 = vunpack.c.l.b16 %v51
  %v262 = vunpack.c.l.b16 %v52
  %v263 = vunpack.c.l.b16 %v53
  %v264 = vunpack.c.l.b16 %v54
  %v265 = vunpack.c.l.b16 %v55
  %v266 = vunpack.c.l.b16 %v56
  %v267 = vunpack.c.l.b16 %v57
  %v268 = vunpack.c.l.b16 %v58
  %v269 = vunpack.c.l.b16 %v59
  %v270 = vunpack.c.l.b16 %v60
  %v271 = vunpack.c.l.b16 %v61
  %v272 = vunpack.c.l.b16 %v62
  %v273 = vunpack.c.l.b16 %v63
  %v274 = vunpack.c.l.b16 %v64
  %v275 = vunpack.c.l.b16 %v65
  %v276 = vunpack.c.l.b16 %v66
  %v277 = vunpack.c.l.b16 %v67
  %v278 = vunpack.c.l.b16 %v68
  %v279 = vunpack.c.l.b16 %v69
  %v280 = vunpack.c.l.b16 %v70
  %v281 = vunpack.c.l.b16 %v71
  %v282 = vunpack.c.l.b16 %v72
  %v283 = vunpack.c.l.b16 %v73
  %v284 = vunpack.c.l.b16 %v74
  %v285 = vunpack.c.l.b16 %v75
  %v286 = vunpack.c.l.b16 %v76
  %v287 = vunpack.c.l.b16 %v77
  %v288 = vunpack.c.l.b16 %v78
  %v289 = vunpack.c.l.b16 %v79
  %v290 = vunpack.c.l.b16 %v80
  %v291 = vunpack.c.l.b16 %v81
  %v292 = vunpack.c.l.b16 %v82
  %v293 = vunpack.c.l.b16 %v83
  %v294 = vunpack.c.l.b16 %v84
  %v295 = vunpack.c.l.b16 %v85
  %v296 = vunpack.c.l.b16 %v86
  %v297 = vunpack.c.l.b16 %v87
  %v298 = vunpack.c.l.b16 %v88
  %v299 = vunpack.c.l.b16 %v89
  %v300 = vunpack.c.l.b16 %v90
  %v301 = vunpack.c.l.b16 %v91
  %v302 = vunpack.c.l.b16 %v92
  %v303 = vunpack.c.l.b16 %v93
  %v304 = vunpack.c.l.b16 %v94
  %v305 = vunpack.c.l.b16 %v95
  %v306 = vunpack.c.l.b16 %v96
  %v307 = vunpack.c.l.b16 %v97
  %v308 = vunpack.c.l.b16 %v98
  %v309 = vpack.c.b16 %v238, %v237
  %v310 = vpack.c.b16 %v240, %v239
  %v311 = vpack.c.b16 %v242, %v241
  %v312 = vpack.c.b16 %v244, %v243
  %v313 = vpack.c.b16 %v246, %v245
  %v314 = vpack.c.b16 %v248, %v247
  %v315 = vpack.c.b16 %v250, %v249
  %v316 = vpack.c.b16 %v252, %v251
  %v317 = vpack.c.b16 %v254, %v253
  %v318 = vpack.c.b16 %v256, %v255
  %v319 = vpack.c.b16 %v258, %v257
  %v320 = vpack.c.b16 %v260, %v259
  %v321 = vpack.c.b16 %v262, %v261
  %v322 = vpack.c.b16 %v264, %v263
  %v323 = vpack.c.b16 %v266, %v265
  %v324 = vpack.c.b16 %v268, %v267
  %v325 = vpack.c.b16 %v270, %v269
  %v326 = vpack.c.b16 %v272, %v271
  %v327 = vpack.c.b16 %v274, %v273
  %v328 = vpack.c.b16 %v276, %v275
  %v329 = vpack.c.b16 %v278, %v277
  %v330 = vpack.c.b16 %v280, %v279
  %v331 = vpack.c.b16 %v282, %v281
  %v332 = vpack.c.b16 %v284, %v283
  %v333 = vpack.c.b16 %v286, %v285
  %v334 = vpack.c.b16 %v288, %v287
  %v335 = vpack.c.b16 %v290, %v289
  %v336 = vpack.c.b16 %v292, %v291
  %v337 = vpack.c.b16 %v294, %v293
  %v338 = vpack.c.b16 %v296, %v295
  %v339 = vpack.c.b16 %v298, %v297
  %v340 = vpack.c.b16 %v300, %v299
  %v341 = vpack.c.b16 %v302, %v301
  %v342 = vpack.c.b16 %v304, %v303
  %v343 = vpack.c.b16 %v306, %v305
  %v344 = vpack.c.b16 %v308, %v307
  %vm381 = vcmask 523264
  %v383 = vsel %vm381, %v151, 0
  %v386 = vsel %vm381, %v156, 0
  %388 = vmatprep.subr.bf16.mxu0 0
  %389 = vmatpush1.bf16.msra.mxu0 %v316
  %390 = vmatprep.subr.bf16.mxu0 0
  %391 = vmatpush1.bf16.msra.mxu0 %v315
  %392 = vmatprep.subr.bf16.mxu0 0
  %393 = vmatpush1.bf16.msra.mxu0 %v314
  %394 = vmatprep.subr.bf16.mxu0 0
  %395 = vmatpush1.bf16.msra.mxu0 %v313
  %396 = vmatprep.subr.bf16.mxu0 0
  %397 = vmatpush1.bf16.msra.mxu0 %v312
  %398 = vmatprep.subr.bf16.mxu0 0
  %399 = vmatpush1.bf16.msra.mxu0 %v311
  %400 = vmatprep.subr.bf16.mxu0 0
  %401 = vmatpush1.bf16.msra.mxu0 %v310
  %402 = vmatprep.subr.bf16.mxu0 0
  %403 = vmatpush1.bf16.msra.mxu0 %v309
  %404 = vmatprep.subr.bf16.mxu0 0
  %405 = vmatpush2.bf16.msra.mxu0 %v324
  %406 = vmatprep.subr.bf16.mxu0 0
  %407 = vmatpush2.bf16.msra.mxu0 %v323
  %408 = vmatprep.subr.bf16.mxu0 0
  %409 = vmatpush2.bf16.msra.mxu0 %v322
  %410 = vmatprep.subr.bf16.mxu0 0
  %411 = vmatpush2.bf16.msra.mxu0 %v321
  %412 = vmatprep.subr.bf16.mxu0 0
  %413 = vmatpush2.bf16.msra.mxu0 %v320
  %414 = vmatprep.subr.bf16.mxu0 0
  %415 = vmatpush2.bf16.msra.mxu0 %v319
  %416 = vmatprep.subr.bf16.mxu0 0
  %417 = vmatpush2.bf16.msra.mxu0 %v318
  %418 = vmatprep.subr.bf16.mxu0 0
  %419 = vmatpush2.bf16.msra.mxu0 %v317
  %420 = vmatprep.mubr.bf16.mxu0 %v148
  %421 = vmatmul.mubr.bf16.gmra.mxu0 %v147
  %v422 = vpop.f32.mrf.mxu0
  %v423 = vadd.f32 0.0, %v422
  %v424 = vpop.f32.mrf.mxu0
  %v425 = vpop.f32.mrf.mxu0
  %v426 = vadd.f32 0.0, %v425
  %v427 = vpop.f32.mrf.mxu0
  %428 = vmatprep.mubr.bf16.mxu0 %v153
  %429 = vmatmul.mubr.bf16.gmra.mxu0 %v152
  %v430 = vpop.f32.mrf.mxu0
  %v431 = vadd.f32 0.0, %v430
  %v432 = vpop.f32.mrf.mxu0
  %v433 = vpop.f32.mrf.mxu0
  %v434 = vadd.f32 0.0, %v433
  %v435 = vpop.f32.mrf.mxu0
  %436 = vdwg.mxu0
  %437 = vmatprep.subr.bf16.mxu0 0
  %438 = vmatpush1.bf16.msra.mxu0 %v332
  %439 = vmatprep.subr.bf16.mxu0 0
  %440 = vmatpush1.bf16.msra.mxu0 %v331
  %441 = vmatprep.subr.bf16.mxu0 0
  %442 = vmatpush1.bf16.msra.mxu0 %v330
  %443 = vmatprep.subr.bf16.mxu0 0
  %444 = vmatpush1.bf16.msra.mxu0 %v329
  %445 = vmatprep.subr.bf16.mxu0 0
  %446 = vmatpush1.bf16.msra.mxu0 %v328
  %447 = vmatprep.subr.bf16.mxu0 0
  %448 = vmatpush1.bf16.msra.mxu0 %v327
  %449 = vmatprep.subr.bf16.mxu0 0
  %450 = vmatpush1.bf16.msra.mxu0 %v326
  %451 = vmatprep.subr.bf16.mxu0 0
  %452 = vmatpush1.bf16.msra.mxu0 %v325
  %453 = vmatprep.subr.bf16.mxu0 0
  %454 = vmatpush2.bf16.msra.mxu0 %v340
  %455 = vmatprep.subr.bf16.mxu0 0
  %456 = vmatpush2.bf16.msra.mxu0 %v339
  %457 = vmatprep.subr.bf16.mxu0 0
  %458 = vmatpush2.bf16.msra.mxu0 %v338
  %459 = vmatprep.subr.bf16.mxu0 0
  %460 = vmatpush2.bf16.msra.mxu0 %v337
  %461 = vmatprep.subr.bf16.mxu0 0
  %462 = vmatpush2.bf16.msra.mxu0 %v336
  %463 = vmatprep.subr.bf16.mxu0 0
  %464 = vmatpush2.bf16.msra.mxu0 %v335
  %465 = vmatprep.subr.bf16.mxu0 0
  %466 = vmatpush2.bf16.msra.mxu0 %v334
  %467 = vmatprep.subr.bf16.mxu0 0
  %468 = vmatpush2.bf16.msra.mxu0 %v333
  %469 = vmatprep.mubr.bf16.mxu0 %v150
  %470 = vmatmul.mubr.bf16.gmra.mxu0 %v149
  %v471 = vpop.f32.mrf.mxu0
  %v472 = vadd.f32 %v423, %v471
  %v473 = vpop.f32.mrf.mxu0
  %v474 = vpop.f32.mrf.mxu0
  %v475 = vadd.f32 %v426, %v474
  %v476 = vpop.f32.mrf.mxu0
  %477 = vmatprep.mubr.bf16.mxu0 %v155
  %478 = vmatmul.mubr.bf16.gmra.mxu0 %v154
  %v479 = vpop.f32.mrf.mxu0
  %v480 = vadd.f32 %v431, %v479
  %v481 = vpop.f32.mrf.mxu0
  %v482 = vpop.f32.mrf.mxu0
  %v483 = vadd.f32 %v434, %v482
  %v484 = vpop.f32.mrf.mxu0
  %485 = vdwg.mxu0
  %486 = vmatprep.subr.bf16.mxu0 0
  %487 = vmatpush1.bf16.msra.mxu0 0
  %488 = vmatprep.subr.bf16.mxu0 0
  %489 = vmatpush1.bf16.msra.mxu0 0
  %490 = vmatprep.subr.bf16.mxu0 0
  %491 = vmatpush1.bf16.msra.mxu0 0
  %492 = vmatprep.subr.bf16.mxu0 0
  %493 = vmatpush1.bf16.msra.mxu0 0
  %494 = vmatprep.subr.bf16.mxu0 0
  %495 = vmatpush1.bf16.msra.mxu0 %v344
  %496 = vmatprep.subr.bf16.mxu0 0
  %497 = vmatpush1.bf16.msra.mxu0 %v343
  %498 = vmatprep.subr.bf16.mxu0 0
  %499 = vmatpush1.bf16.msra.mxu0 %v342
  %500 = vmatprep.subr.bf16.mxu0 0
  %501 = vmatpush1.bf16.msra.mxu0 %v341
  %502 = vmatprep.subr.bf16.mxu0 0
  %503 = vmatpush2.bf16.msra.mxu0 0
  %504 = vmatprep.subr.bf16.mxu0 0
  %505 = vmatpush2.bf16.msra.mxu0 0
  %506 = vmatprep.subr.bf16.mxu0 0
  %507 = vmatpush2.bf16.msra.mxu0 0
  %508 = vmatprep.subr.bf16.mxu0 0
  %509 = vmatpush2.bf16.msra.mxu0 0
  %510 = vmatprep.subr.bf16.mxu0 0
  %511 = vmatpush2.bf16.msra.mxu0 0
  %512 = vmatprep.subr.bf16.mxu0 0
  %513 = vmatpush2.bf16.msra.mxu0 0
  %514 = vmatprep.subr.bf16.mxu0 0
  %515 = vmatpush2.bf16.msra.mxu0 0
  %516 = vmatprep.subr.bf16.mxu0 0
  %517 = vmatpush2.bf16.msra.mxu0 0
  %518 = vmatprep.mubr.bf16.mxu0 0
  %519 = vmatmul.mubr.bf16.gmra.mxu0 %v383
  %v520 = vpop.f32.mrf.mxu0
  %v521 = vadd.f32 %v472, %v520
  %v522 = vpop.f32.mrf.mxu0
  %v523 = vpop.f32.mrf.mxu0
  %v524 = vadd.f32 %v475, %v523
  %v525 = vpop.f32.mrf.mxu0
  %526 = vmatprep.mubr.bf16.mxu0 0
  %527 = vmatmul.mubr.bf16.gmra.mxu0 %v386
  %v528 = vpop.f32.mrf.mxu0
  %v529 = vadd.f32 %v480, %v528
  %v530 = vpop.f32.mrf.mxu0
  %v531 = vpop.f32.mrf.mxu0
  %v532 = vadd.f32 %v483, %v531
  %v533 = vpop.f32.mrf.mxu0
  %534 = vdwg.mxu0
  %v535 = vadd.f32 %v99, %v521
  %v536 = vadd.f32 %v100, %v524
  %v537 = vadd.f32 %v101, %v529
  %v538 = vadd.f32 %v102, %v532
  %539 = vst.msk [vmem:[#allocation2] sm:$0xff] %vm381, %v535
  %540 = vst.msk [vmem:[#allocation2 + $0x8] sm:$0xff] %vm381, %v536
  %541 = vst.msk [vmem:[#allocation2 + $0x10] sm:$0xff] %vm381, %v537
  %542 = vst.msk [vmem:[#allocation2 + $0x18] sm:$0xff] %vm381, %v538
  // Predicated region
  $region22: #{convnet_forward.20} parent=0 // pred_check
    %p543 = pneg %p18
  $region23: #{convnet_forward.20} parent=0 // pred_check_branch
    %545 = sbr.rel (%p543) target = $region25
  $region24: #{convnet_forward.20} parent=0 // pred_region
    %v546 = vld [vmem:[#allocation2] sm:$0xff]
    %v547 = vld [vmem:[#allocation2 + $0x8] sm:$0xff]
    %v548 = vld [vmem:[#allocation2 + $0x10] sm:$0xff]
    %v549 = vld [vmem:[#allocation2 + $0x18] sm:$0xff]
    %v550 = vld [vmem:[%s2] sm:$0x1]
    %v552 = vlaneseq
    %v553 = vshrl.u32 %v552, 7
    %v554 = vsub.s32 0, %v553
    %v555 = vrot.slane %v550, %v554
    %v557 = vmul.f32 %v546, %v555
    %v558 = vmul.f32 %v547, %v555
    %v559 = vmul.f32 %v548, %v555
    %v560 = vmul.f32 %v549, %v555
    %v561 = vld [vmem:[%s3] sm:$0x1]
    %v563 = vlaneseq
    %v564 = vshrl.u32 %v563, 7
    %v565 = vsub.s32 0, %v564
    %v566 = vrot.slane %v561, %v565
    %v568 = vadd.f32 %v557, %v566
    %v569 = vadd.f32 %v558, %v566
    %v570 = vadd.f32 %v559, %v566
    %v571 = vadd.f32 %v560, %v566
    %v572 = vmax.f32 %v568, 0.0
    %v573 = vmax.f32 %v569, 0.0
    %v574 = vmax.f32 %v570, 0.0
    %v575 = vmax.f32 %v571, 0.0
    %v576 = vpack.c.bf16 %v573, %v572
    %v577 = vpack.c.bf16 %v575, %v574
    %v580 = vunpack.c.l.b16 %v576
    %v581 = vunpack.c.h.b16 %v576
    %v582 = vunpack.c.l.b16 %v577
    %v583 = vunpack.c.h.b16 %v577
    %v584 = vpack.c.b16 %v580, %v580
    %v585 = vpack.c.b16 %v581, %v581
    %v586 = vpack.c.b16 %v582, %v582
    %v587 = vpack.c.b16 %v583, %v583
    %vm592 = vcmask 519168
    %593 = vst.msk [vmem:[%s4] sm:$0xf] %vm592, %v584
    %594 = vst.msk [vmem:[%s4 + $0x4] sm:$0xf] %vm592, %v585
    %595 = vst.msk [vmem:[%s4 + $0x8] sm:$0xf] %vm592, %v586
    %596 = vst.msk [vmem:[%s4 + $0xc] sm:$0xf] %vm592, %v587
  $region25: #{convnet_forward.20} parent=0 // pred_fallthru
    _
  // Predicated region
  $region26: #{convnet_forward.20} parent=0 // pred_check
    _
  $region27: #{convnet_forward.20} parent=0 // pred_check_branch
    %598 = sbr.rel (0) target = $region29
  $region28: #{convnet_forward.20} parent=0 // pred_region
    _
  $region29: #{convnet_forward.20} parent=0 // pred_fallthru
    _
  // Predicated region
  $region30: #{convnet_forward.20} parent=0 // pred_check
    _
  $region31: #{convnet_forward.20} parent=0 // pred_check_branch
    %600 = sbr.rel (0) target = $region33
  $region32: #{convnet_forward.20} parent=0 // pred_region
    _
  $region33: #{convnet_forward.20} parent=0 // pred_fallthru
    _

// kernel: convnet_forward.24
$region0: #{convnet_forward.24}
  #allocation0 [shape = 'u32[]', space=smem, size = 0x4, offset = 0x4, fixed_abs, tag = 'smem constant byte address 0x4 - core index']
  #allocation1 [shape = 'u32[144,128]{1,0:T(1,128)}', space=vmem, size = 0x12000, scoped, tag = 'internal scratch']
  #allocation2 [shape = 'f32[2,128]{1,0:T(2,128)}', space=vmem, size = 0x400, scoped, tag = 'scratch operand']
  %s0 = inlined_call_operand.vmem [shape: bf16[2,128], index: 0, kind: input, shape index: {}]
  %s1 = inlined_call_operand.vmem [shape: s8[128,128], index: 1, kind: input, shape index: {}]
  %s2 = inlined_call_operand.vmem [shape: f32[1,128], index: 2, kind: input, shape index: {}]
  %s3 = inlined_call_operand.vmem [shape: f32[1,128], index: 3, kind: input, shape index: {}]
  %s4 = inlined_call_operand.vmem [shape: bf16[2,128], index: 4, kind: output, shape index: {}]
  %s5 = sld [smem:[#allocation0]]
  $region34: #{convnet_forward.24} parent=0
    _
  %s7 = ssub.s32 1, %s5
  %s8 = scalar_select 0, %s7, %s5
  // Predicated region
  $region2: #{convnet_forward.24} parent=0 // pred_check
    _
  $region3: #{convnet_forward.24} parent=0 // pred_check_branch
    %10 = sbr.rel (0) target = $region5
  $region4: #{convnet_forward.24} parent=0 // pred_region
    _
  $region5: #{convnet_forward.24} parent=0 // pred_fallthru
    _
  // Predicated region
  $region6: #{convnet_forward.24} parent=0 // pred_check
    _
  $region7: #{convnet_forward.24} parent=0 // pred_check_branch
    %12 = sbr.rel (0) target = $region9
  $region8: #{convnet_forward.24} parent=0 // pred_region
    _
  $region9: #{convnet_forward.24} parent=0 // pred_fallthru
    _
  // Predicated region
  $region10: #{convnet_forward.24} parent=0 // pred_check
    _
  $region11: #{convnet_forward.24} parent=0 // pred_check_branch
    %14 = sbr.rel (0) target = $region13
  $region12: #{convnet_forward.24} parent=0 // pred_region
    _
  $region13: #{convnet_forward.24} parent=0 // pred_fallthru
    _
  // Predicated region
  $region14: #{convnet_forward.24} parent=0 // pred_check
    _
  $region15: #{convnet_forward.24} parent=0 // pred_check_branch
    %16 = sbr.rel (0) target = $region17
  $region16: #{convnet_forward.24} parent=0 // pred_region
    _
  $region17: #{convnet_forward.24} parent=0 // pred_fallthru
    _
  %p18 = scmp.eq.s32.totalorder 0, 0
  // Predicated region
  $region18: #{convnet_forward.24} parent=0 // pred_check
    %p19 = pneg %p18
  $region19: #{convnet_forward.24} parent=0 // pred_check_branch
    %21 = sbr.rel (%p19) target = $region21
  $region20: #{convnet_forward.24} parent=0 // pred_region
    %22 = vst [vmem:[#allocation2] sm:$0x3] 0.0
  $region21: #{convnet_forward.24} parent=0 // pred_fallthru
    _
  %v23 = vld [vmem:[%s1] sm:$0xff]
  %v24 = vld [vmem:[%s1 + $0x8] sm:$0xff]
  %v25 = vld [vmem:[%s1 + $0x10] sm:$0xff]
  %v26 = vld [vmem:[%s1 + $0x18] sm:$0xff]
  %v27 = vunpack.c.l.s8.bf16 %v23
  %v28 = vunpack.c.h.s8.bf16 %v23
  %v29 = vunpack.c.l.s8.bf16 %v24
  %v30 = vunpack.c.h.s8.bf16 %v24
  %v31 = vunpack.c.l.s8.bf16 %v25
  %v32 = vunpack.c.h.s8.bf16 %v25
  %v33 = vunpack.c.l.s8.bf16 %v26
  %v34 = vunpack.c.h.s8.bf16 %v26
  %v35 = vld [vmem:[#allocation2] sm:$0x3]
  %v36 = vld [vmem:[%s0] sm:$0x1]
  %37 = vmatprep.subr.bf16.mxu0 0
  %38 = vmatpush1.bf16.msra.mxu0 %v34
  %39 = vmatprep.subr.bf16.mxu0 0
  %40 = vmatpush1.bf16.msra.mxu0 %v33
  %41 = vmatprep.subr.bf16.mxu0 0
  %42 = vmatpush1.bf16.msra.mxu0 %v32
  %43 = vmatprep.subr.bf16.mxu0 0
  %44 = vmatpush1.bf16.msra.mxu0 %v31
  %45 = vmatprep.subr.bf16.mxu0 0
  %46 = vmatpush1.bf16.msra.mxu0 %v30
  %47 = vmatprep.subr.bf16.mxu0 0
  %48 = vmatpush1.bf16.msra.mxu0 %v29
  %49 = vmatprep.subr.bf16.mxu0 0
  %50 = vmatpush1.bf16.msra.mxu0 %v28
  %51 = vmatprep.subr.bf16.mxu0 0
  %52 = vmatpush1.bf16.msra.mxu0 %v27
  %53 = vmatprep.subr.bf16.mxu0 0
  %54 = vmatpush2.bf16.msra.mxu0 0
  %55 = vmatprep.subr.bf16.mxu0 0
  %56 = vmatpush2.bf16.msra.mxu0 0
  %57 = vmatprep.subr.bf16.mxu0 0
  %58 = vmatpush2.bf16.msra.mxu0 0
  %59 = vmatprep.subr.bf16.mxu0 0
  %60 = vmatpush2.bf16.msra.mxu0 0
  %61 = vmatprep.subr.bf16.mxu0 0
  %62 = vmatpush2.bf16.msra.mxu0 0
  %63 = vmatprep.subr.bf16.mxu0 0
  %64 = vmatpush2.bf16.msra.mxu0 0
  %65 = vmatprep.subr.bf16.mxu0 0
  %66 = vmatpush2.bf16.msra.mxu0 0
  %67 = vmatprep.subr.bf16.mxu0 0
  %68 = vmatpush2.bf16.msra.mxu0 0
  %69 = vmatprep.mubr.bf16.mxu0 0
  %70 = vmatmul.mubr.bf16.gmra.mxu0 %v36
  %v71 = vpop.f32.mrf.mxu0
  %v72 = vadd.f32 0.0, %v71
  %v73 = vpop.f32.mrf.mxu0
  %v74 = vpop.f32.mrf.mxu0
  %v75 = vpop.f32.mrf.mxu0
  %76 = vdwg.mxu0
  %v77 = vadd.f32 %v35, %v72
  %78 = vst [vmem:[#allocation2] sm:$0x3] %v77
  // Predicated region
  $region22: #{convnet_forward.24} parent=0 // pred_check
    %p79 = pneg %p18
  $region23: #{convnet_forward.24} parent=0 // pred_check_branch
    %81 = sbr.rel (%p79) target = $region25
  $region24: #{convnet_forward.24} parent=0 // pred_region
    %v82 = vld [vmem:[#allocation2] sm:$0x3]
    %v83 = vld [vmem:[%s2] sm:$0x1]
    %v85 = vlaneseq
    %v86 = vshrl.u32 %v85, 7
    %v87 = vsub.s32 0, %v86
    %v88 = vrot.slane %v83, %v87
    %v90 = vmul.f32 %v82, %v88
    %v91 = vld [vmem:[%s3] sm:$0x1]
    %v93 = vlaneseq
    %v94 = vshrl.u32 %v93, 7
    %v95 = vsub.s32 0, %v94
    %v96 = vrot.slane %v91, %v95
    %v98 = vadd.f32 %v90, %v96
    %v99 = vpack.c.bf16 %v98, %v98
    %100 = vst [vmem:[%s4] sm:$0x1] %v99
  $region25: #{convnet_forward.24} parent=0 // pred_fallthru
    _
  // Predicated region
  $region26: #{convnet_forward.24} parent=0 // pred_check
    _
  $region27: #{convnet_forward.24} parent=0 // pred_check_branch
    %102 = sbr.rel (0) target = $region29
  $region28: #{convnet_forward.24} parent=0 // pred_region
    _
  $region29: #{convnet_forward.24} parent=0 // pred_fallthru
    _
  // Predicated region
  $region30: #{convnet_forward.24} parent=0 // pred_check
    _
  $region31: #{convnet_forward.24} parent=0 // pred_check_branch
    %104 = sbr.rel (0) target = $region33
  $region32: #{convnet_forward.24} parent=0 // pred_region
    _
  $region33: #{convnet_forward.24} parent=0 // pred_fallthru
    _

// kernel: convnet_forward.23
$region0: #{convnet_forward.23}
  #allocation0 [shape = 'u32[]', space=smem, size = 0x4, offset = 0x4, fixed_abs, tag = 'smem constant byte address 0x4 - core index']
  #allocation1 [shape = 'u32[144,128]{1,0:T(1,128)}', space=vmem, size = 0x12000, scoped, tag = 'internal scratch']
  #allocation2 [shape = 'f32[2,128]{1,0:T(2,128)}', space=vmem, size = 0x400, scoped, tag = 'scratch operand']
  %s0 = inlined_call_operand.vmem [shape: bf16[2,256], index: 0, kind: input, shape index: {}]
  %s1 = inlined_call_operand.vmem [shape: s8[256,128], index: 1, kind: input, shape index: {}]
  %s2 = inlined_call_operand.vmem [shape: f32[1,128], index: 2, kind: input, shape index: {}]
  %s3 = inlined_call_operand.vmem [shape: f32[1,128], index: 3, kind: input, shape index: {}]
  %s4 = inlined_call_operand.vmem [shape: bf16[2,128], index: 4, kind: output, shape index: {}]
  %s5 = sld [smem:[#allocation0]]
  $region34: #{convnet_forward.23} parent=0
    _
  %s7 = ssub.s32 1, %s5
  %s8 = scalar_select 0, %s7, %s5
  // Predicated region
  $region2: #{convnet_forward.23} parent=0 // pred_check
    _
  $region3: #{convnet_forward.23} parent=0 // pred_check_branch
    %10 = sbr.rel (0) target = $region5
  $region4: #{convnet_forward.23} parent=0 // pred_region
    _
  $region5: #{convnet_forward.23} parent=0 // pred_fallthru
    _
  // Predicated region
  $region6: #{convnet_forward.23} parent=0 // pred_check
    _
  $region7: #{convnet_forward.23} parent=0 // pred_check_branch
    %12 = sbr.rel (0) target = $region9
  $region8: #{convnet_forward.23} parent=0 // pred_region
    _
  $region9: #{convnet_forward.23} parent=0 // pred_fallthru
    _
  // Predicated region
  $region10: #{convnet_forward.23} parent=0 // pred_check
    _
  $region11: #{convnet_forward.23} parent=0 // pred_check_branch
    %14 = sbr.rel (0) target = $region13
  $region12: #{convnet_forward.23} parent=0 // pred_region
    _
  $region13: #{convnet_forward.23} parent=0 // pred_fallthru
    _
  // Predicated region
  $region14: #{convnet_forward.23} parent=0 // pred_check
    _
  $region15: #{convnet_forward.23} parent=0 // pred_check_branch
    %16 = sbr.rel (0) target = $region17
  $region16: #{convnet_forward.23} parent=0 // pred_region
    _
  $region17: #{convnet_forward.23} parent=0 // pred_fallthru
    _
  %p18 = scmp.eq.s32.totalorder 0, 0
  // Predicated region
  $region18: #{convnet_forward.23} parent=0 // pred_check
    %p19 = pneg %p18
  $region19: #{convnet_forward.23} parent=0 // pred_check_branch
    %21 = sbr.rel (%p19) target = $region21
  $region20: #{convnet_forward.23} parent=0 // pred_region
    %22 = vst [vmem:[#allocation2] sm:$0x3] 0.0
  $region21: #{convnet_forward.23} parent=0 // pred_fallthru
    _
  %v23 = vld [vmem:[%s1] sm:$0xff]
  %v24 = vld [vmem:[%s1 + $0x8] sm:$0xff]
  %v25 = vld [vmem:[%s1 + $0x10] sm:$0xff]
  %v26 = vld [vmem:[%s1 + $0x18] sm:$0xff]
  %v27 = vld [vmem:[%s1 + $0x20] sm:$0xff]
  %v28 = vld [vmem:[%s1 + $0x28] sm:$0xff]
  %v29 = vld [vmem:[%s1 + $0x30] sm:$0xff]
  %v30 = vld [vmem:[%s1 + $0x38] sm:$0xff]
  %v31 = vunpack.c.l.s8.bf16 %v23
  %v32 = vunpack.c.h.s8.bf16 %v23
  %v33 = vunpack.c.l.s8.bf16 %v24
  %v34 = vunpack.c.h.s8.bf16 %v24
  %v35 = vunpack.c.l.s8.bf16 %v25
  %v36 = vunpack.c.h.s8.bf16 %v25
  %v37 = vunpack.c.l.s8.bf16 %v26
  %v38 = vunpack.c.h.s8.bf16 %v26
  %v39 = vunpack.c.l.s8.bf16 %v27
  %v40 = vunpack.c.h.s8.bf16 %v27
  %v41 = vunpack.c.l.s8.bf16 %v28
  %v42 = vunpack.c.h.s8.bf16 %v28
  %v43 = vunpack.c.l.s8.bf16 %v29
  %v44 = vunpack.c.h.s8.bf16 %v29
  %v45 = vunpack.c.l.s8.bf16 %v30
  %v46 = vunpack.c.h.s8.bf16 %v30
  %v47 = vld [vmem:[#allocation2] sm:$0x3]
  %v48 = vld [vmem:[%s0] sm:$0x3]
  %v51 = vunpack.c.l.s4 1966171168
  %v52 = vunpack.c.0.s8 %v51
  %v53 = vlaneseq
  %v54 = vshrl.u32 %v53, 7
  %v55 = vsub.s32 %v52, %v54
  %v56 = vrot.slane %v48, %v55
  %v57 = vcombine.high %v56, %v56
  %v59 = vunpack.c.l.s4 1966171168
  %v60 = vunpack.c.0.s8 %v59
  %v61 = vlaneseq
  %v62 = vshrl.u32 %v61, 7
  %v63 = vsub.s32 %v60, %v62
  %v64 = vrot.slane %v56, %v63
  %v66 = vunpack.c.l.s4 1966171168
  %v67 = vunpack.c.0.s8 %v66
  %v68 = vlaneseq
  %v69 = vshrl.u32 %v68, 7
  %v70 = vsub.s32 %v67, %v69
  %v71 = vrot.slane %v57, %v70
  %74 = vmatprep.subr.bf16.mxu0 0
  %75 = vmatpush1.bf16.msra.mxu0 %v38
  %76 = vmatprep.subr.bf16.mxu0 0
  %77 = vmatpush1.bf16.msra.mxu0 %v37
  %78 = vmatprep.subr.bf16.mxu0 0
  %79 = vmatpush1.bf16.msra.mxu0 %v36
  %80 = vmatprep.subr.bf16.mxu0 0
  %81 = vmatpush1.bf16.msra.mxu0 %v35
  %82 = vmatprep.subr.bf16.mxu0 0
  %83 = vmatpush1.bf16.msra.mxu0 %v34
  %84 = vmatprep.subr.bf16.mxu0 0
  %85 = vmatpush1.bf16.msra.mxu0 %v33
  %86 = vmatprep.subr.bf16.mxu0 0
  %87 = vmatpush1.bf16.msra.mxu0 %v32
  %88 = vmatprep.subr.bf16.mxu0 0
  %89 = vmatpush1.bf16.msra.mxu0 %v31
  %90 = vmatprep.subr.bf16.mxu0 0
  %91 = vmatpush2.bf16.msra.mxu0 %v46
  %92 = vmatprep.subr.bf16.mxu0 0
  %93 = vmatpush2.bf16.msra.mxu0 %v45
  %94 = vmatprep.subr.bf16.mxu0 0
  %95 = vmatpush2.bf16.msra.mxu0 %v44
  %96 = vmatprep.subr.bf16.mxu0 0
  %97 = vmatpush2.bf16.msra.mxu0 %v43
  %98 = vmatprep.subr.bf16.mxu0 0
  %99 = vmatpush2.bf16.msra.mxu0 %v42
  %100 = vmatprep.subr.bf16.mxu0 0
  %101 = vmatpush2.bf16.msra.mxu0 %v41
  %102 = vmatprep.subr.bf16.mxu0 0
  %103 = vmatpush2.bf16.msra.mxu0 %v40
  %104 = vmatprep.subr.bf16.mxu0 0
  %105 = vmatpush2.bf16.msra.mxu0 %v39
  %106 = vmatprep.mubr.bf16.mxu0 %v71
  %107 = vmatmul.mubr.bf16.gmra.mxu0 %v64
  %v108 = vpop.f32.mrf.mxu0
  %v109 = vadd.f32 0.0, %v108
  %v110 = vpop.f32.mrf.mxu0
  %v111 = vpop.f32.mrf.mxu0
  %v112 = vpop.f32.mrf.mxu0
  %113 = vdwg.mxu0
  %v114 = vadd.f32 %v47, %v109
  %115 = vst [vmem:[#allocation2] sm:$0x3] %v114
  // Predicated region
  $region22: #{convnet_forward.23} parent=0 // pred_check
    %p116 = pneg %p18
  $region23: #{convnet_forward.23} parent=0 // pred_check_branch
    %118 = sbr.rel (%p116) target = $region25
  $region24: #{convnet_forward.23} parent=0 // pred_region
    %v119 = vld [vmem:[#allocation2] sm:$0x3]
    %v120 = vld [vmem:[%s2] sm:$0x1]
    %v122 = vlaneseq
    %v123 = vshrl.u32 %v122, 7
    %v124 = vsub.s32 0, %v123
    %v125 = vrot.slane %v120, %v124
    %v127 = vmul.f32 %v119, %v125
    %v128 = vld [vmem:[%s3] sm:$0x1]
    %v130 = vlaneseq
    %v131 = vshrl.u32 %v130, 7
    %v132 = vsub.s32 0, %v131
    %v133 = vrot.slane %v128, %v132
    %v135 = vadd.f32 %v127, %v133
    %v136 = vpack.c.bf16 %v135, %v135
    %137 = vst [vmem:[%s4] sm:$0x1] %v136
  $region25: #{convnet_forward.23} parent=0 // pred_fallthru
    _
  // Predicated region
  $region26: #{convnet_forward.23} parent=0 // pred_check
    _
  $region27: #{convnet_forward.23} parent=0 // pred_check_branch
    %139 = sbr.rel (0) target = $region29
  $region28: #{convnet_forward.23} parent=0 // pred_region
    _
  $region29: #{convnet_forward.23} parent=0 // pred_fallthru
    _
  // Predicated region
  $region30: #{convnet_forward.23} parent=0 // pred_check
    _
  $region31: #{convnet_forward.23} parent=0 // pred_check_branch
    %141 = sbr.rel (0) target = $region33
  $region32: #{convnet_forward.23} parent=0 // pred_region
    _
  $region33: #{convnet_forward.23} parent=0 // pred_fallthru
    _

// kernel: convnet_forward.25
$region0: #{convnet_forward.25}
  #allocation0 [shape = 'u32[]', space=smem, size = 0x4, offset = 0x4, fixed_abs, tag = 'smem constant byte address 0x4 - core index']
  #allocation1 [shape = 'u32[144,128]{1,0:T(1,128)}', space=vmem, size = 0x12000, scoped, tag = 'internal scratch']
  #allocation2 [shape = 'f32[2,10]{1,0:T(2,128)}', space=vmem, size = 0x400, scoped, tag = 'scratch operand']
  %s0 = inlined_call_operand.vmem [shape: bf16[2,128], index: 0, kind: input, shape index: {}]
  %s1 = inlined_call_operand.vmem [shape: bf16[128,10], index: 1, kind: input, shape index: {}]
  %s2 = inlined_call_operand.vmem [shape: f32[1,10], index: 2, kind: input, shape index: {}]
  %s3 = inlined_call_operand.hbm [shape: f32[2,10], index: 3, kind: output, shape index: {}]
  %s4 = sld [smem:[#allocation0]]
  $region30: #{convnet_forward.25} parent=0
    _
  %s6 = ssub.s32 1, %s4
  %s7 = scalar_select 0, %s6, %s4
  $region1: #{convnet_forward.25} parent=0
    #allocation3 [shape = 'u8[1024]{0}', space=vmem, size = 0x400, scoped, tag = 'output window, operand 0, single buffered']
    #allocation4 [shape = 's32[1]{0}', space=sflag, size = 0x4, scoped, tag = 'scoped memory for convnet_forward.25']
    %8 = vsyncpa [#allocation4], 0
    // Predicated region
    $region2: #{convnet_forward.25} parent=1 // pred_check
      _
    $region3: #{convnet_forward.25} parent=1 // pred_check_branch
      %10 = sbr.rel (0) target = $region5
    $region4: #{convnet_forward.25} parent=1 // pred_region
      _
    $region5: #{convnet_forward.25} parent=1 // pred_fallthru
      _
    // Predicated region
    $region6: #{convnet_forward.25} parent=1 // pred_check
      _
    $region7: #{convnet_forward.25} parent=1 // pred_check_branch
      %12 = sbr.rel (0) target = $region9
    $region8: #{convnet_forward.25} parent=1 // pred_region
      _
    $region9: #{convnet_forward.25} parent=1 // pred_fallthru
      _
    // Predicated region
    $region10: #{convnet_forward.25} parent=1 // pred_check
      _
    $region11: #{convnet_forward.25} parent=1 // pred_check_branch
      %14 = sbr.rel (0) target = $region13
    $region12: #{convnet_forward.25} parent=1 // pred_region
      _
    $region13: #{convnet_forward.25} parent=1 // pred_fallthru
      _
    %p16 = scmp.eq.s32.totalorder 0, 0
    // Predicated region
    $region14: #{convnet_forward.25} parent=1 // pred_check
      %p17 = pneg %p16
    $region15: #{convnet_forward.25} parent=1 // pred_check_branch
      %19 = sbr.rel (%p17) target = $region17
    $region16: #{convnet_forward.25} parent=1 // pred_region
      %vm20 = vcmask 74752
      %21 = vst.msk [vmem:[#allocation2] sm:$0x3] %vm20, 0.0
    $region17: #{convnet_forward.25} parent=1 // pred_fallthru
      _
    %v22 = vld [vmem:[%s1] sm:$0xf]
    %v23 = vld [vmem:[%s1 + $0x4] sm:$0xf]
    %v24 = vld [vmem:[%s1 + $0x8] sm:$0xf]
    %v25 = vld [vmem:[%s1 + $0xc] sm:$0xf]
    %v26 = vld [vmem:[%s1 + $0x10] sm:$0xf]
    %v27 = vld [vmem:[%s1 + $0x14] sm:$0xf]
    %v28 = vld [vmem:[%s1 + $0x18] sm:$0xf]
    %v29 = vld [vmem:[%s1 + $0x1c] sm:$0xf]
    %v30 = vld [vmem:[%s1 + $0x20] sm:$0xf]
    %v31 = vld [vmem:[%s1 + $0x24] sm:$0xf]
    %v32 = vld [vmem:[%s1 + $0x28] sm:$0xf]
    %v33 = vld [vmem:[%s1 + $0x2c] sm:$0xf]
    %v34 = vld [vmem:[%s1 + $0x30] sm:$0xf]
    %v35 = vld [vmem:[%s1 + $0x34] sm:$0xf]
    %v36 = vld [vmem:[%s1 + $0x38] sm:$0xf]
    %v37 = vld [vmem:[%s1 + $0x3c] sm:$0xf]
    %v38 = vld [vmem:[#allocation2] sm:$0x3]
    %v39 = vld [vmem:[%s0] sm:$0x1]
    %v56 = vunpack.c.l.b16 %v22
    %v57 = vunpack.c.l.b16 %v23
    %v58 = vunpack.c.l.b16 %v24
    %v59 = vunpack.c.l.b16 %v25
    %v60 = vunpack.c.l.b16 %v26
    %v61 = vunpack.c.l.b16 %v27
    %v62 = vunpack.c.l.b16 %v28
    %v63 = vunpack.c.l.b16 %v29
    %v64 = vunpack.c.l.b16 %v30
    %v65 = vunpack.c.l.b16 %v31
    %v66 = vunpack.c.l.b16 %v32
    %v67 = vunpack.c.l.b16 %v33
    %v68 = vunpack.c.l.b16 %v34
    %v69 = vunpack.c.l.b16 %v35
    %v70 = vunpack.c.l.b16 %v36
    %v71 = vunpack.c.l.b16 %v37
    %v72 = vpack.c.b16 %v57, %v56
    %v73 = vpack.c.b16 %v59, %v58
    %v74 = vpack.c.b16 %v61, %v60
    %v75 = vpack.c.b16 %v63, %v62
    %v76 = vpack.c.b16 %v65, %v64
    %v77 = vpack.c.b16 %v67, %v66
    %v78 = vpack.c.b16 %v69, %v68
    %v79 = vpack.c.b16 %v71, %v70
    %88 = vmatprep.subr.bf16.mxu0 0
    %89 = vmatpush1.bf16.msra.mxu0 %v79
    %90 = vmatprep.subr.bf16.mxu0 0
    %91 = vmatpush1.bf16.msra.mxu0 %v78
    %92 = vmatprep.subr.bf16.mxu0 0
    %93 = vmatpush1.bf16.msra.mxu0 %v77
    %94 = vmatprep.subr.bf16.mxu0 0
    %95 = vmatpush1.bf16.msra.mxu0 %v76
    %96 = vmatprep.subr.bf16.mxu0 0
    %97 = vmatpush1.bf16.msra.mxu0 %v75
    %98 = vmatprep.subr.bf16.mxu0 0
    %99 = vmatpush1.bf16.msra.mxu0 %v74
    %100 = vmatprep.subr.bf16.mxu0 0
    %101 = vmatpush1.bf16.msra.mxu0 %v73
    %102 = vmatprep.subr.bf16.mxu0 0
    %103 = vmatpush1.bf16.msra.mxu0 %v72
    %104 = vmatprep.subr.bf16.mxu0 0
    %105 = vmatpush2.bf16.msra.mxu0 0
    %106 = vmatprep.subr.bf16.mxu0 0
    %107 = vmatpush2.bf16.msra.mxu0 0
    %108 = vmatprep.subr.bf16.mxu0 0
    %109 = vmatpush2.bf16.msra.mxu0 0
    %110 = vmatprep.subr.bf16.mxu0 0
    %111 = vmatpush2.bf16.msra.mxu0 0
    %112 = vmatprep.subr.bf16.mxu0 0
    %113 = vmatpush2.bf16.msra.mxu0 0
    %114 = vmatprep.subr.bf16.mxu0 0
    %115 = vmatpush2.bf16.msra.mxu0 0
    %116 = vmatprep.subr.bf16.mxu0 0
    %117 = vmatpush2.bf16.msra.mxu0 0
    %118 = vmatprep.subr.bf16.mxu0 0
    %119 = vmatpush2.bf16.msra.mxu0 0
    %120 = vmatprep.mubr.bf16.mxu0 0
    %121 = vmatmul.mubr.bf16.gmra.mxu0 %v39
    %v122 = vpop.f32.mrf.mxu0
    %v123 = vadd.f32 0.0, %v122
    %v124 = vpop.f32.mrf.mxu0
    %v125 = vpop.f32.mrf.mxu0
    %v126 = vpop.f32.mrf.mxu0
    %127 = vdwg.mxu0
    %v128 = vadd.f32 %v38, %v123
    %vm129 = vcmask 74752
    %130 = vst.msk [vmem:[#allocation2] sm:$0x3] %vm129, %v128
    // Predicated region
    $region18: #{convnet_forward.25} parent=1 // pred_check
      %p131 = pneg %p16
    $region19: #{convnet_forward.25} parent=1 // pred_check_branch
      %133 = sbr.rel (%p131) target = $region21
    $region20: #{convnet_forward.25} parent=1 // pred_region
      %v134 = vld [vmem:[#allocation2] sm:$0x3]
      %v135 = vld [vmem:[%s2] sm:$0x1]
      %v137 = vlaneseq
      %v138 = vshrl.u32 %v137, 7
      %v139 = vsub.s32 0, %v138
      %v140 = vrot.slane %v135, %v139
      %v142 = vadd.f32 %v134, %v140
      %143 = vst.msk [vmem:[#allocation3] sm:$0x3] %vm129, %v142
    $region21: #{convnet_forward.25} parent=1 // pred_fallthru
      _
    // Predicated region
    $region22: #{convnet_forward.25} parent=1 // pred_check
      _
    $region23: #{convnet_forward.25} parent=1 // pred_check_branch
      %145 = sbr.rel (0) target = $region25
    $region24: #{convnet_forward.25} parent=1 // pred_region
      %s147 = ssub.s32 32, 32
      %148 = vsyncadd [#allocation4], %s147
      %s150 = sshll.u32 [#allocation3], 4
      %s151 = int_to_ptr.vmem [resolvable:$true] %s150
      %153 = dma.vmem_to_hbm [thread:$0]  %s151, 32, %s3, [#allocation4]
    $region25: #{convnet_forward.25} parent=1 // pred_fallthru
      _
    // Predicated region
    $region26: #{convnet_forward.25} parent=1 // pred_check
      _
    $region27: #{convnet_forward.25} parent=1 // pred_check_branch
      %155 = sbr.rel (0) target = $region29
    $region28: #{convnet_forward.25} parent=1 // pred_region
      %156 = dma.done [#allocation4], 32
    $region29: #{convnet_forward.25} parent=1 // pred_fallthru
      _
    %157 = vsyncpa [#allocation4], 1

</llo_original>
